<compile_context>
chip_gen: v6e
topology: v6e:2x2x1
jax: 0.10.0
libtpu: 0.0.40
codegen_flags: <defaults>
</compile_context>

<pallas_src>
import jax
import jax.numpy as jnp
import numpy as np
from jax import lax
from jax.experimental import pallas as pl
from jax.experimental.pallas import tpu as pltpu


# ----------------------------- fused kernel ---------------------------------

def _dqn_fused_kernel(p1_ref, w1_ref, b1_ref, w2_ref, b2_ref, w3_ref, b3_ref,
                      wl_ref, bl_ref, wo_ref, bo_ref, o_ref):
    """Whole DeepQNetwork forward for ONE image (grid iterates the batch).

    p1_ref : (400, C*16) bf16  conv1 patches, row r = h*20 + (w%4)*5 + w//4
    w1_ref : (C*16, 32)  bf16  conv1 weight (flattened OIHW columns)
    w2_ref : (16, 32, 64) bf16 conv2 per-tap (in, out) slabs, tap = dy*4+dx
    w3_ref : (9, 64, 64)  bf16 conv3 per-tap slabs, tap = dy*3+dx
    wl_ref : (4, 64, 512) bf16 fc1 weight with NCHW flatten order folded in
    wo_ref : (512, 2)     bf16 fc2 weight (transposed)
    b*_ref : (1, K) f32 biases;  o_ref : (1, 2) f32 output row for this image
    """
    f32 = jnp.float32
    bf16 = jnp.bfloat16

    # ---- conv1 (k=4, s=4) + bias + ReLU: one MXU matmul over 400 positions.
    a1 = jnp.dot(p1_ref[...], w1_ref[...], preferred_element_type=f32)
    a1 = jnp.maximum(a1 + b1_ref[...], 0.0)                # (400, 32) f32

    # ---- fused 2x2 max-pool.
    # a1 row r = h*20 + s*5 + q encodes conv1 output (h, w1 = 4*q + s);
    # pooled (ph, ow = 2*q + wp) reduces h in {2ph, 2ph+1}, s in {2wp, 2wp+1}.
    m_pieces = []                                          # [ph*2+wp] -> (5, 32) f32, rows = q
    for ph in range(10):
        top = a1[40 * ph: 40 * ph + 20]                    # h = 2*ph,   rows = s*5+q
        bot = a1[40 * ph + 20: 40 * ph + 40]               # h = 2*ph+1
        hmax = jnp.maximum(top, bot)                       # (20, 32)
        m_pieces.append(jnp.maximum(hmax[0:5], hmax[5:10]))      # wp = 0 (s = 0, 1)
        m_pieces.append(jnp.maximum(hmax[10:15], hmax[15:20]))   # wp = 1 (s = 2, 3)

    # ---- conv2 (k=4, s=2, 32 -> 64): in-VMEM im2col, per-tap accumulation.
    acc2 = [jnp.zeros((4, 64), f32) for _ in range(4)]     # one accumulator per output row y2
    for dy in range(4):
        for dx in range(4):
            w_tap = w2_ref[dy * 4 + dx]                    # (32, 64) bf16
            for y2 in range(4):
                piece = m_pieces[(2 * y2 + dy) * 2 + (dx % 2)]
                patch = piece[dx // 2: dx // 2 + 4]        # (4, 32), rows = x2
                acc2[y2] = acc2[y2] + jnp.dot(patch.astype(bf16), w_tap,
                                              preferred_element_type=f32)
    a2 = [jnp.maximum(acc2[y2] + b2_ref[...], 0.0) for y2 in range(4)]   # (4, 64) f32 each

    # ---- conv3 (k=3, s=1, 64 -> 64).
    acc3 = [jnp.zeros((2, 64), f32) for _ in range(2)]     # per output row y3
    for dy in range(3):
        for dx in range(3):
            w_tap = w3_ref[dy * 3 + dx]                    # (64, 64) bf16
            for y3 in range(2):
                patch = a2[y3 + dy][dx: dx + 2]            # (2, 64), rows = x3
                acc3[y3] = acc3[y3] + jnp.dot(patch.astype(bf16), w_tap,
                                              preferred_element_type=f32)
    a3 = [jnp.maximum(acc3[y3] + b3_ref[...], 0.0) for y3 in range(2)]   # (2, 64) f32 each

    # ---- fc1 (256 -> 512): NCHW flatten order already folded into wl_ref.
    y1 = jnp.zeros((1, 512), f32)
    for y3 in range(2):
        for x3 in range(2):
            vec = a3[y3][x3: x3 + 1].astype(bf16)          # (1, 64)
            y1 = y1 + jnp.dot(vec, wl_ref[y3 * 2 + x3],
                              preferred_element_type=f32)
    y1 = jnp.maximum(y1 + bl_ref[...], 0.0).astype(bf16)   # (1, 512)

    # ---- fc2 (512 -> 2).
    out = jnp.dot(y1, wo_ref[...], preferred_element_type=f32) + bo_ref[...]
    o_ref[...] = out.astype(o_ref.dtype)                   # (1, 2)


# ----------------------------- wrapper ---------------------------------------

def _conv1_patches(x_nchw):
    """(N, C, 80, 80) -> (N, 400, C*16) bf16 conv1 patch matrix.

    Row r = h*20 + (w1 % 4)*5 + (w1 // 4) for conv1 output position (h, w1);
    column k = c*16 + dy*4 + dx matches the flattened OIHW conv1 weight.
    Pure layout transform (one XLA transpose), no data duplication.
    """
    n, c, h, w = x_nchw.shape
    assert h == 80 and w == 80, "DeepQNetwork flatten-to-256 requires 80x80 input"
    x = x_nchw.reshape(n, c, 20, 4, 5, 4, 4)           # (n, c, h1, dy, q, s, dx)
    x = jnp.transpose(x, (0, 2, 5, 4, 1, 3, 6))        # (n, h1, s, q, c, dy, dx)
    return x.reshape(n, 400, c * 16).astype(jnp.bfloat16)


def _prep_params(params):
    w1, b1, w2, b2, w3, b3, wl, bl, wo, bo = params
    bf16, f32 = jnp.bfloat16, jnp.float32
    c_in = w1.shape[1]
    out_dim = wo.shape[0]
    w1m = w1.reshape(32, c_in * 16).T.astype(bf16)                        # (C*16, 32)
    w2m = jnp.transpose(w2, (2, 3, 1, 0)).reshape(16, 32, 64).astype(bf16)
    w3m = jnp.transpose(w3, (2, 3, 1, 0)).reshape(9, 64, 64).astype(bf16)
    # fold the PyTorch NCHW view(-1, 256) order (c*4 + y*2 + x) into fc1:
    wlm = jnp.transpose(wl.reshape(512, 64, 4), (2, 1, 0)).astype(bf16)   # (4, 64, 512)
    wom = wo.T.astype(bf16)                                               # (512, out_dim)
    return (w1m, w2m, w3m, wlm, wom,
            b1.reshape(1, 32).astype(f32), b2.reshape(1, 64).astype(f32),
            b3.reshape(1, 64).astype(f32), bl.reshape(1, 512).astype(f32),
            bo.reshape(1, out_dim).astype(f32))


@jax.jit
def deep_q_forward(x_nchw, params):
    n = x_nchw.shape[0]
    p1 = _conv1_patches(x_nchw)
    (w1m, w2m, w3m, wlm, wom, b1r, b2r, b3r, blr, bor) = _prep_params(params)
    k1 = p1.shape[-1]
    out_dim = wom.shape[-1]

    flops = 2 * n * (400 * k1 * 32 + 16 * 512 * 64 + 4 * 576 * 64
                     + 256 * 512 + 512 * out_dim)
    bytes_accessed = (p1.size * 2 + 2 * (w1m.size + w2m.size + w3m.size
                                         + wlm.size + wom.size)
                      + 4 * (32 + 64 + 64 + 512 + out_dim) + 4 * n * out_dim)

    out = pl.pallas_call(
        _dqn_fused_kernel,
        out_shape=jax.ShapeDtypeStruct((n, 1, out_dim), jnp.float32),
        grid=(n,),
        in_specs=[
            pl.BlockSpec((None, 400, k1), lambda i: (i, 0, 0)),   # per-image conv1 patches
            pl.BlockSpec((k1, 32), lambda i: (0, 0)),             # conv1 weight
            pl.BlockSpec((1, 32), lambda i: (0, 0)),
            pl.BlockSpec((16, 32, 64), lambda i: (0, 0, 0)),      # conv2 weight (per tap)
            pl.BlockSpec((1, 64), lambda i: (0, 0)),
            pl.BlockSpec((9, 64, 64), lambda i: (0, 0, 0)),       # conv3 weight (per tap)
            pl.BlockSpec((1, 64), lambda i: (0, 0)),
            pl.BlockSpec((4, 64, 512), lambda i: (0, 0, 0)),      # fc1 weight (flatten folded)
            pl.BlockSpec((1, 512), lambda i: (0, 0)),
            pl.BlockSpec((512, out_dim), lambda i: (0, 0)),       # fc2 weight
            pl.BlockSpec((1, out_dim), lambda i: (0, 0)),
        ],
        out_specs=pl.BlockSpec((None, 1, out_dim), lambda i: (i, 0, 0)),
        compiler_params=pltpu.CompilerParams(
            dimension_semantics=("parallel",)),
        cost_estimate=pl.CostEstimate(flops=flops, transcendentals=0,
                                      bytes_accessed=bytes_accessed),
    )(p1, w1m, b1r, w2m, b2r, w3m, b3r, wlm, blr, wom, bor)
    return out.reshape(n, out_dim)


# ------------------------- Params & pure-JAX reference -----------------------

def init_params(key, in_channels, out_dim):
    ks = jax.random.split(key, 10)

    def w(k, shape, fan_in):
        return jax.random.normal(k, shape, jnp.float32) / jnp.sqrt(float(fan_in))

    w1 = w(ks[0], (32, in_channels, 4, 4), in_channels * 16)
    b1 = w(ks[1], (32,), in_channels * 16)
    w2 = w(ks[2], (64, 32, 4, 4), 32 * 16)
    b2 = w(ks[3], (64,), 32 * 16)
    w3 = w(ks[4], (64, 64, 3, 3), 64 * 9)
    b3 = w(ks[5], (64,), 64 * 9)
    wl = w(ks[6], (512, 256), 256)
    bl = w(ks[7], (512,), 256)
    wo = w(ks[8], (out_dim, 512), 512)
    bo = w(ks[9], (out_dim,), 512)
    return (w1, b1, w2, b2, w3, b3, wl, bl, wo, bo)


def reference_forward(x_nchw, params):
    (w1, b1, w2, b2, w3, b3, wl, bl, wo, bo) = params
    dn = ("NCHW", "OIHW", "NCHW")
    prec = lax.Precision.HIGHEST

    def conv(x, w, b, s):
        y = lax.conv_general_dilated(x, w, (s, s), "VALID",
                                     dimension_numbers=dn, precision=prec)
        return y + b[None, :, None, None]

    y = jnp.maximum(conv(x_nchw, w1, b1, 4), 0.0)
    y = lax.reduce_window(y, -jnp.inf, lax.max, (1, 1, 2, 2), (1, 1, 2, 2), "VALID")
    y = jnp.maximum(conv(y, w2, b2, 2), 0.0)
    y = jnp.maximum(conv(y, w3, b3, 1), 0.0)
    y = y.reshape(-1, 256)
    y = jnp.maximum(jnp.dot(y, wl.T, precision=prec) + bl, 0.0)
    return jnp.dot(y, wo.T, precision=prec) + bo


if __name__ == "__main__":
    key = jax.random.PRNGKey(0)
    k_in, k_par = jax.random.split(key)

    # batch=2, channels=4; 80x80 spatial is forced by the flatten-to-256.
    N, C, H, W = 2, 4, 80, 80
    x = jax.random.normal(k_in, (N, C, H, W), jnp.float32)
    params = init_params(k_par, C, 2)  # module hardcodes a 2-wide output buffer

    out = jax.block_until_ready(deep_q_forward(x, params))
    ref = jax.block_until_ready(reference_forward(x, params))

    assert out.shape == (N, 2) and out.dtype == jnp.float32
    np.testing.assert_allclose(np.asarray(out), np.asarray(ref), rtol=2e-2, atol=2e-2)
    print("KERNEL_OK")
</pallas_src>

<mosaic_0001>
module attributes {stable_mosaic.version = 11 : i64} {
  func.func @_dqn_fused_kernel(%arg0: i32, %arg1: memref<1x400x64xbf16, #tpu.memory_space<vmem>>, %arg2: memref<64x32xbf16, #tpu.memory_space<vmem>>, %arg3: memref<1x32xf32, #tpu.memory_space<vmem>>, %arg4: memref<16x32x64xbf16, #tpu.memory_space<vmem>>, %arg5: memref<1x64xf32, #tpu.memory_space<vmem>>, %arg6: memref<9x64x64xbf16, #tpu.memory_space<vmem>>, %arg7: memref<1x64xf32, #tpu.memory_space<vmem>>, %arg8: memref<4x64x512xbf16, #tpu.memory_space<vmem>>, %arg9: memref<1x512xf32, #tpu.memory_space<vmem>>, %arg10: memref<512x2xbf16, #tpu.memory_space<vmem>>, %arg11: memref<1x2xf32, #tpu.memory_space<vmem>>, %arg12: memref<1x1x2xf32, #tpu.memory_space<vmem>>) attributes {dimension_semantics = [#tpu.dimension_semantics<parallel>], iteration_bounds = array<i64: 2>, scalar_prefetch = 0 : i64, scratch_operands = 0 : i64, tpu.core_type = #tpu.core_type<tc>, window_params = [{transform_indices = @transform_0, window_bounds = array<i64: 1, 400, 64>}, {pipeline_mode = #tpu.pipeline_mode<synchronous>, transform_indices = @transform_1, window_bounds = array<i64: 64, 32>}, {pipeline_mode = #tpu.pipeline_mode<synchronous>, transform_indices = @transform_2, window_bounds = array<i64: 1, 32>}, {pipeline_mode = #tpu.pipeline_mode<synchronous>, transform_indices = @transform_3, window_bounds = array<i64: 16, 32, 64>}, {pipeline_mode = #tpu.pipeline_mode<synchronous>, transform_indices = @transform_4, window_bounds = array<i64: 1, 64>}, {pipeline_mode = #tpu.pipeline_mode<synchronous>, transform_indices = @transform_5, window_bounds = array<i64: 9, 64, 64>}, {pipeline_mode = #tpu.pipeline_mode<synchronous>, transform_indices = @transform_6, window_bounds = array<i64: 1, 64>}, {pipeline_mode = #tpu.pipeline_mode<synchronous>, transform_indices = @transform_7, window_bounds = array<i64: 4, 64, 512>}, {pipeline_mode = #tpu.pipeline_mode<synchronous>, transform_indices = @transform_8, window_bounds = array<i64: 1, 512>}, {pipeline_mode = #tpu.pipeline_mode<synchronous>, transform_indices = @transform_9, window_bounds = array<i64: 512, 2>}, {pipeline_mode = #tpu.pipeline_mode<synchronous>, transform_indices = @transform_10, window_bounds = array<i64: 1, 2>}, {transform_indices = @transform_11, window_bounds = array<i64: 1, 1, 2>}]} {
    %c0 = arith.constant 0 : index
    %c0_0 = arith.constant 0 : index
    %c0_1 = arith.constant 0 : index
    %0 = vector.load %arg1[%c0, %c0_0, %c0_1] : memref<1x400x64xbf16, #tpu.memory_space<vmem>>, vector<1x400x64xbf16>
    %1 = vector.shape_cast %0 : vector<1x400x64xbf16> to vector<400x64xbf16>
    %c0_2 = arith.constant 0 : index
    %c0_3 = arith.constant 0 : index
    %2 = vector.load %arg2[%c0_2, %c0_3] : memref<64x32xbf16, #tpu.memory_space<vmem>>, vector<64x32xbf16>
    %cst = arith.constant dense<0.000000e+00> : vector<400x32xf32>
    %3 = tpu.matmul %1, %2, %cst {dimension_numbers = #tpu.dot_dimension_numbers<[1], [0], [0], [1], [0, 0, 1, 1], [], []>} : vector<400x64xbf16>, vector<64x32xbf16>, vector<400x32xf32> -> vector<400x32xf32>
    %c0_4 = arith.constant 0 : index
    %c0_5 = arith.constant 0 : index
    %4 = vector.load %arg3[%c0_4, %c0_5] : memref<1x32xf32, #tpu.memory_space<vmem>>, vector<1x32xf32>
    %5 = vector.broadcast %4 : vector<1x32xf32> to vector<400x32xf32>
    %6 = arith.addf %3, %5 : vector<400x32xf32>
    %cst_6 = arith.constant 0.000000e+00 : f32
    %7 = vector.broadcast %cst_6 : f32 to vector<400x32xf32>
    %8 = arith.maximumf %6, %7 : vector<400x32xf32>
    %9 = vector.extract_strided_slice %8 {offsets = [0, 0], sizes = [20, 32], strides = [1, 1]} : vector<400x32xf32> to vector<20x32xf32>
    %10 = vector.extract_strided_slice %8 {offsets = [20, 0], sizes = [20, 32], strides = [1, 1]} : vector<400x32xf32> to vector<20x32xf32>
    %11 = arith.maximumf %9, %10 : vector<20x32xf32>
    %12 = vector.extract_strided_slice %11 {offsets = [0, 0], sizes = [5, 32], strides = [1, 1]} : vector<20x32xf32> to vector<5x32xf32>
    %13 = vector.extract_strided_slice %11 {offsets = [5, 0], sizes = [5, 32], strides = [1, 1]} : vector<20x32xf32> to vector<5x32xf32>
    %14 = arith.maximumf %12, %13 : vector<5x32xf32>
    %15 = vector.extract_strided_slice %11 {offsets = [10, 0], sizes = [5, 32], strides = [1, 1]} : vector<20x32xf32> to vector<5x32xf32>
    %16 = vector.extract_strided_slice %11 {offsets = [15, 0], sizes = [5, 32], strides = [1, 1]} : vector<20x32xf32> to vector<5x32xf32>
    %17 = arith.maximumf %15, %16 : vector<5x32xf32>
    %18 = vector.extract_strided_slice %8 {offsets = [40, 0], sizes = [20, 32], strides = [1, 1]} : vector<400x32xf32> to vector<20x32xf32>
    %19 = vector.extract_strided_slice %8 {offsets = [60, 0], sizes = [20, 32], strides = [1, 1]} : vector<400x32xf32> to vector<20x32xf32>
    %20 = arith.maximumf %18, %19 : vector<20x32xf32>
    %21 = vector.extract_strided_slice %20 {offsets = [0, 0], sizes = [5, 32], strides = [1, 1]} : vector<20x32xf32> to vector<5x32xf32>
    %22 = vector.extract_strided_slice %20 {offsets = [5, 0], sizes = [5, 32], strides = [1, 1]} : vector<20x32xf32> to vector<5x32xf32>
    %23 = arith.maximumf %21, %22 : vector<5x32xf32>
    %24 = vector.extract_strided_slice %20 {offsets = [10, 0], sizes = [5, 32], strides = [1, 1]} : vector<20x32xf32> to vector<5x32xf32>
    %25 = vector.extract_strided_slice %20 {offsets = [15, 0], sizes = [5, 32], strides = [1, 1]} : vector<20x32xf32> to vector<5x32xf32>
    %26 = arith.maximumf %24, %25 : vector<5x32xf32>
    %27 = vector.extract_strided_slice %8 {offsets = [80, 0], sizes = [20, 32], strides = [1, 1]} : vector<400x32xf32> to vector<20x32xf32>
    %28 = vector.extract_strided_slice %8 {offsets = [100, 0], sizes = [20, 32], strides = [1, 1]} : vector<400x32xf32> to vector<20x32xf32>
    %29 = arith.maximumf %27, %28 : vector<20x32xf32>
    %30 = vector.extract_strided_slice %29 {offsets = [0, 0], sizes = [5, 32], strides = [1, 1]} : vector<20x32xf32> to vector<5x32xf32>
    %31 = vector.extract_strided_slice %29 {offsets = [5, 0], sizes = [5, 32], strides = [1, 1]} : vector<20x32xf32> to vector<5x32xf32>
    %32 = arith.maximumf %30, %31 : vector<5x32xf32>
    %33 = vector.extract_strided_slice %29 {offsets = [10, 0], sizes = [5, 32], strides = [1, 1]} : vector<20x32xf32> to vector<5x32xf32>
    %34 = vector.extract_strided_slice %29 {offsets = [15, 0], sizes = [5, 32], strides = [1, 1]} : vector<20x32xf32> to vector<5x32xf32>
    %35 = arith.maximumf %33, %34 : vector<5x32xf32>
    %36 = vector.extract_strided_slice %8 {offsets = [120, 0], sizes = [20, 32], strides = [1, 1]} : vector<400x32xf32> to vector<20x32xf32>
    %37 = vector.extract_strided_slice %8 {offsets = [140, 0], sizes = [20, 32], strides = [1, 1]} : vector<400x32xf32> to vector<20x32xf32>
    %38 = arith.maximumf %36, %37 : vector<20x32xf32>
    %39 = vector.extract_strided_slice %38 {offsets = [0, 0], sizes = [5, 32], strides = [1, 1]} : vector<20x32xf32> to vector<5x32xf32>
    %40 = vector.extract_strided_slice %38 {offsets = [5, 0], sizes = [5, 32], strides = [1, 1]} : vector<20x32xf32> to vector<5x32xf32>
    %41 = arith.maximumf %39, %40 : vector<5x32xf32>
    %42 = vector.extract_strided_slice %38 {offsets = [10, 0], sizes = [5, 32], strides = [1, 1]} : vector<20x32xf32> to vector<5x32xf32>
    %43 = vector.extract_strided_slice %38 {offsets = [15, 0], sizes = [5, 32], strides = [1, 1]} : vector<20x32xf32> to vector<5x32xf32>
    %44 = arith.maximumf %42, %43 : vector<5x32xf32>
    %45 = vector.extract_strided_slice %8 {offsets = [160, 0], sizes = [20, 32], strides = [1, 1]} : vector<400x32xf32> to vector<20x32xf32>
    %46 = vector.extract_strided_slice %8 {offsets = [180, 0], sizes = [20, 32], strides = [1, 1]} : vector<400x32xf32> to vector<20x32xf32>
    %47 = arith.maximumf %45, %46 : vector<20x32xf32>
    %48 = vector.extract_strided_slice %47 {offsets = [0, 0], sizes = [5, 32], strides = [1, 1]} : vector<20x32xf32> to vector<5x32xf32>
    %49 = vector.extract_strided_slice %47 {offsets = [5, 0], sizes = [5, 32], strides = [1, 1]} : vector<20x32xf32> to vector<5x32xf32>
    %50 = arith.maximumf %48, %49 : vector<5x32xf32>
    %51 = vector.extract_strided_slice %47 {offsets = [10, 0], sizes = [5, 32], strides = [1, 1]} : vector<20x32xf32> to vector<5x32xf32>
    %52 = vector.extract_strided_slice %47 {offsets = [15, 0], sizes = [5, 32], strides = [1, 1]} : vector<20x32xf32> to vector<5x32xf32>
    %53 = arith.maximumf %51, %52 : vector<5x32xf32>
    %54 = vector.extract_strided_slice %8 {offsets = [200, 0], sizes = [20, 32], strides = [1, 1]} : vector<400x32xf32> to vector<20x32xf32>
    %55 = vector.extract_strided_slice %8 {offsets = [220, 0], sizes = [20, 32], strides = [1, 1]} : vector<400x32xf32> to vector<20x32xf32>
    %56 = arith.maximumf %54, %55 : vector<20x32xf32>
    %57 = vector.extract_strided_slice %56 {offsets = [0, 0], sizes = [5, 32], strides = [1, 1]} : vector<20x32xf32> to vector<5x32xf32>
    %58 = vector.extract_strided_slice %56 {offsets = [5, 0], sizes = [5, 32], strides = [1, 1]} : vector<20x32xf32> to vector<5x32xf32>
    %59 = arith.maximumf %57, %58 : vector<5x32xf32>
    %60 = vector.extract_strided_slice %56 {offsets = [10, 0], sizes = [5, 32], strides = [1, 1]} : vector<20x32xf32> to vector<5x32xf32>
    %61 = vector.extract_strided_slice %56 {offsets = [15, 0], sizes = [5, 32], strides = [1, 1]} : vector<20x32xf32> to vector<5x32xf32>
    %62 = arith.maximumf %60, %61 : vector<5x32xf32>
    %63 = vector.extract_strided_slice %8 {offsets = [240, 0], sizes = [20, 32], strides = [1, 1]} : vector<400x32xf32> to vector<20x32xf32>
    %64 = vector.extract_strided_slice %8 {offsets = [260, 0], sizes = [20, 32], strides = [1, 1]} : vector<400x32xf32> to vector<20x32xf32>
    %65 = arith.maximumf %63, %64 : vector<20x32xf32>
    %66 = vector.extract_strided_slice %65 {offsets = [0, 0], sizes = [5, 32], strides = [1, 1]} : vector<20x32xf32> to vector<5x32xf32>
    %67 = vector.extract_strided_slice %65 {offsets = [5, 0], sizes = [5, 32], strides = [1, 1]} : vector<20x32xf32> to vector<5x32xf32>
    %68 = arith.maximumf %66, %67 : vector<5x32xf32>
    %69 = vector.extract_strided_slice %65 {offsets = [10, 0], sizes = [5, 32], strides = [1, 1]} : vector<20x32xf32> to vector<5x32xf32>
    %70 = vector.extract_strided_slice %65 {offsets = [15, 0], sizes = [5, 32], strides = [1, 1]} : vector<20x32xf32> to vector<5x32xf32>
    %71 = arith.maximumf %69, %70 : vector<5x32xf32>
    %72 = vector.extract_strided_slice %8 {offsets = [280, 0], sizes = [20, 32], strides = [1, 1]} : vector<400x32xf32> to vector<20x32xf32>
    %73 = vector.extract_strided_slice %8 {offsets = [300, 0], sizes = [20, 32], strides = [1, 1]} : vector<400x32xf32> to vector<20x32xf32>
    %74 = arith.maximumf %72, %73 : vector<20x32xf32>
    %75 = vector.extract_strided_slice %74 {offsets = [0, 0], sizes = [5, 32], strides = [1, 1]} : vector<20x32xf32> to vector<5x32xf32>
    %76 = vector.extract_strided_slice %74 {offsets = [5, 0], sizes = [5, 32], strides = [1, 1]} : vector<20x32xf32> to vector<5x32xf32>
    %77 = arith.maximumf %75, %76 : vector<5x32xf32>
    %78 = vector.extract_strided_slice %74 {offsets = [10, 0], sizes = [5, 32], strides = [1, 1]} : vector<20x32xf32> to vector<5x32xf32>
    %79 = vector.extract_strided_slice %74 {offsets = [15, 0], sizes = [5, 32], strides = [1, 1]} : vector<20x32xf32> to vector<5x32xf32>
    %80 = arith.maximumf %78, %79 : vector<5x32xf32>
    %81 = vector.extract_strided_slice %8 {offsets = [320, 0], sizes = [20, 32], strides = [1, 1]} : vector<400x32xf32> to vector<20x32xf32>
    %82 = vector.extract_strided_slice %8 {offsets = [340, 0], sizes = [20, 32], strides = [1, 1]} : vector<400x32xf32> to vector<20x32xf32>
    %83 = arith.maximumf %81, %82 : vector<20x32xf32>
    %84 = vector.extract_strided_slice %83 {offsets = [0, 0], sizes = [5, 32], strides = [1, 1]} : vector<20x32xf32> to vector<5x32xf32>
    %85 = vector.extract_strided_slice %83 {offsets = [5, 0], sizes = [5, 32], strides = [1, 1]} : vector<20x32xf32> to vector<5x32xf32>
    %86 = arith.maximumf %84, %85 : vector<5x32xf32>
    %87 = vector.extract_strided_slice %83 {offsets = [10, 0], sizes = [5, 32], strides = [1, 1]} : vector<20x32xf32> to vector<5x32xf32>
    %88 = vector.extract_strided_slice %83 {offsets = [15, 0], sizes = [5, 32], strides = [1, 1]} : vector<20x32xf32> to vector<5x32xf32>
    %89 = arith.maximumf %87, %88 : vector<5x32xf32>
    %90 = vector.extract_strided_slice %8 {offsets = [360, 0], sizes = [20, 32], strides = [1, 1]} : vector<400x32xf32> to vector<20x32xf32>
    %91 = vector.extract_strided_slice %8 {offsets = [380, 0], sizes = [20, 32], strides = [1, 1]} : vector<400x32xf32> to vector<20x32xf32>
    %92 = arith.maximumf %90, %91 : vector<20x32xf32>
    %93 = vector.extract_strided_slice %92 {offsets = [0, 0], sizes = [5, 32], strides = [1, 1]} : vector<20x32xf32> to vector<5x32xf32>
    %94 = vector.extract_strided_slice %92 {offsets = [5, 0], sizes = [5, 32], strides = [1, 1]} : vector<20x32xf32> to vector<5x32xf32>
    %95 = arith.maximumf %93, %94 : vector<5x32xf32>
    %96 = vector.extract_strided_slice %92 {offsets = [10, 0], sizes = [5, 32], strides = [1, 1]} : vector<20x32xf32> to vector<5x32xf32>
    %97 = vector.extract_strided_slice %92 {offsets = [15, 0], sizes = [5, 32], strides = [1, 1]} : vector<20x32xf32> to vector<5x32xf32>
    %98 = arith.maximumf %96, %97 : vector<5x32xf32>
    %cst_7 = arith.constant 0.000000e+00 : f32
    %99 = vector.broadcast %cst_7 : f32 to vector<4x64xf32>
    %cst_8 = arith.constant 0.000000e+00 : f32
    %100 = vector.broadcast %cst_8 : f32 to vector<4x64xf32>
    %cst_9 = arith.constant 0.000000e+00 : f32
    %101 = vector.broadcast %cst_9 : f32 to vector<4x64xf32>
    %cst_10 = arith.constant 0.000000e+00 : f32
    %102 = vector.broadcast %cst_10 : f32 to vector<4x64xf32>
    %c0_11 = arith.constant 0 : index
    %c0_12 = arith.constant 0 : index
    %c0_13 = arith.constant 0 : index
    %103 = vector.load %arg4[%c0_11, %c0_12, %c0_13] : memref<16x32x64xbf16, #tpu.memory_space<vmem>>, vector<1x32x64xbf16>
    %104 = vector.shape_cast %103 : vector<1x32x64xbf16> to vector<32x64xbf16>
    %105 = vector.extract_strided_slice %14 {offsets = [0, 0], sizes = [4, 32], strides = [1, 1]} : vector<5x32xf32> to vector<4x32xf32>
    %106 = arith.truncf %105 : vector<4x32xf32> to vector<4x32xbf16>
    %cst_14 = arith.constant dense<0.000000e+00> : vector<4x64xf32>
    %107 = tpu.matmul %106, %104, %cst_14 {dimension_numbers = #tpu.dot_dimension_numbers<[1], [0], [0], [1], [0, 0, 1, 1], [], []>} : vector<4x32xbf16>, vector<32x64xbf16>, vector<4x64xf32> -> vector<4x64xf32>
    %108 = arith.addf %99, %107 : vector<4x64xf32>
    %109 = vector.extract_strided_slice %32 {offsets = [0, 0], sizes = [4, 32], strides = [1, 1]} : vector<5x32xf32> to vector<4x32xf32>
    %110 = arith.truncf %109 : vector<4x32xf32> to vector<4x32xbf16>
    %cst_15 = arith.constant dense<0.000000e+00> : vector<4x64xf32>
    %111 = tpu.matmul %110, %104, %cst_15 {dimension_numbers = #tpu.dot_dimension_numbers<[1], [0], [0], [1], [0, 0, 1, 1], [], []>} : vector<4x32xbf16>, vector<32x64xbf16>, vector<4x64xf32> -> vector<4x64xf32>
    %112 = arith.addf %100, %111 : vector<4x64xf32>
    %113 = vector.extract_strided_slice %50 {offsets = [0, 0], sizes = [4, 32], strides = [1, 1]} : vector<5x32xf32> to vector<4x32xf32>
    %114 = arith.truncf %113 : vector<4x32xf32> to vector<4x32xbf16>
    %cst_16 = arith.constant dense<0.000000e+00> : vector<4x64xf32>
    %115 = tpu.matmul %114, %104, %cst_16 {dimension_numbers = #tpu.dot_dimension_numbers<[1], [0], [0], [1], [0, 0, 1, 1], [], []>} : vector<4x32xbf16>, vector<32x64xbf16>, vector<4x64xf32> -> vector<4x64xf32>
    %116 = arith.addf %101, %115 : vector<4x64xf32>
    %117 = vector.extract_strided_slice %68 {offsets = [0, 0], sizes = [4, 32], strides = [1, 1]} : vector<5x32xf32> to vector<4x32xf32>
    %118 = arith.truncf %117 : vector<4x32xf32> to vector<4x32xbf16>
    %cst_17 = arith.constant dense<0.000000e+00> : vector<4x64xf32>
    %119 = tpu.matmul %118, %104, %cst_17 {dimension_numbers = #tpu.dot_dimension_numbers<[1], [0], [0], [1], [0, 0, 1, 1], [], []>} : vector<4x32xbf16>, vector<32x64xbf16>, vector<4x64xf32> -> vector<4x64xf32>
    %120 = arith.addf %102, %119 : vector<4x64xf32>
    %c1 = arith.constant 1 : index
    %c0_18 = arith.constant 0 : index
    %c0_19 = arith.constant 0 : index
    %121 = vector.load %arg4[%c1, %c0_18, %c0_19] : memref<16x32x64xbf16, #tpu.memory_space<vmem>>, vector<1x32x64xbf16>
    %122 = vector.shape_cast %121 : vector<1x32x64xbf16> to vector<32x64xbf16>
    %123 = vector.extract_strided_slice %17 {offsets = [0, 0], sizes = [4, 32], strides = [1, 1]} : vector<5x32xf32> to vector<4x32xf32>
    %124 = arith.truncf %123 : vector<4x32xf32> to vector<4x32xbf16>
    %cst_20 = arith.constant dense<0.000000e+00> : vector<4x64xf32>
    %125 = tpu.matmul %124, %122, %cst_20 {dimension_numbers = #tpu.dot_dimension_numbers<[1], [0], [0], [1], [0, 0, 1, 1], [], []>} : vector<4x32xbf16>, vector<32x64xbf16>, vector<4x64xf32> -> vector<4x64xf32>
    %126 = arith.addf %108, %125 : vector<4x64xf32>
    %127 = vector.extract_strided_slice %35 {offsets = [0, 0], sizes = [4, 32], strides = [1, 1]} : vector<5x32xf32> to vector<4x32xf32>
    %128 = arith.truncf %127 : vector<4x32xf32> to vector<4x32xbf16>
    %cst_21 = arith.constant dense<0.000000e+00> : vector<4x64xf32>
    %129 = tpu.matmul %128, %122, %cst_21 {dimension_numbers = #tpu.dot_dimension_numbers<[1], [0], [0], [1], [0, 0, 1, 1], [], []>} : vector<4x32xbf16>, vector<32x64xbf16>, vector<4x64xf32> -> vector<4x64xf32>
    %130 = arith.addf %112, %129 : vector<4x64xf32>
    %131 = vector.extract_strided_slice %53 {offsets = [0, 0], sizes = [4, 32], strides = [1, 1]} : vector<5x32xf32> to vector<4x32xf32>
    %132 = arith.truncf %131 : vector<4x32xf32> to vector<4x32xbf16>
    %cst_22 = arith.constant dense<0.000000e+00> : vector<4x64xf32>
    %133 = tpu.matmul %132, %122, %cst_22 {dimension_numbers = #tpu.dot_dimension_numbers<[1], [0], [0], [1], [0, 0, 1, 1], [], []>} : vector<4x32xbf16>, vector<32x64xbf16>, vector<4x64xf32> -> vector<4x64xf32>
    %134 = arith.addf %116, %133 : vector<4x64xf32>
    %135 = vector.extract_strided_slice %71 {offsets = [0, 0], sizes = [4, 32], strides = [1, 1]} : vector<5x32xf32> to vector<4x32xf32>
    %136 = arith.truncf %135 : vector<4x32xf32> to vector<4x32xbf16>
    %cst_23 = arith.constant dense<0.000000e+00> : vector<4x64xf32>
    %137 = tpu.matmul %136, %122, %cst_23 {dimension_numbers = #tpu.dot_dimension_numbers<[1], [0], [0], [1], [0, 0, 1, 1], [], []>} : vector<4x32xbf16>, vector<32x64xbf16>, vector<4x64xf32> -> vector<4x64xf32>
    %138 = arith.addf %120, %137 : vector<4x64xf32>
    %c2 = arith.constant 2 : index
    %c0_24 = arith.constant 0 : index
    %c0_25 = arith.constant 0 : index
    %139 = vector.load %arg4[%c2, %c0_24, %c0_25] : memref<16x32x64xbf16, #tpu.memory_space<vmem>>, vector<1x32x64xbf16>
    %140 = vector.shape_cast %139 : vector<1x32x64xbf16> to vector<32x64xbf16>
    %141 = vector.extract_strided_slice %14 {offsets = [1, 0], sizes = [4, 32], strides = [1, 1]} : vector<5x32xf32> to vector<4x32xf32>
    %142 = arith.truncf %141 : vector<4x32xf32> to vector<4x32xbf16>
    %cst_26 = arith.constant dense<0.000000e+00> : vector<4x64xf32>
    %143 = tpu.matmul %142, %140, %cst_26 {dimension_numbers = #tpu.dot_dimension_numbers<[1], [0], [0], [1], [0, 0, 1, 1], [], []>} : vector<4x32xbf16>, vector<32x64xbf16>, vector<4x64xf32> -> vector<4x64xf32>
    %144 = arith.addf %126, %143 : vector<4x64xf32>
    %145 = vector.extract_strided_slice %32 {offsets = [1, 0], sizes = [4, 32], strides = [1, 1]} : vector<5x32xf32> to vector<4x32xf32>
    %146 = arith.truncf %145 : vector<4x32xf32> to vector<4x32xbf16>
    %cst_27 = arith.constant dense<0.000000e+00> : vector<4x64xf32>
    %147 = tpu.matmul %146, %140, %cst_27 {dimension_numbers = #tpu.dot_dimension_numbers<[1], [0], [0], [1], [0, 0, 1, 1], [], []>} : vector<4x32xbf16>, vector<32x64xbf16>, vector<4x64xf32> -> vector<4x64xf32>
    %148 = arith.addf %130, %147 : vector<4x64xf32>
    %149 = vector.extract_strided_slice %50 {offsets = [1, 0], sizes = [4, 32], strides = [1, 1]} : vector<5x32xf32> to vector<4x32xf32>
    %150 = arith.truncf %149 : vector<4x32xf32> to vector<4x32xbf16>
    %cst_28 = arith.constant dense<0.000000e+00> : vector<4x64xf32>
    %151 = tpu.matmul %150, %140, %cst_28 {dimension_numbers = #tpu.dot_dimension_numbers<[1], [0], [0], [1], [0, 0, 1, 1], [], []>} : vector<4x32xbf16>, vector<32x64xbf16>, vector<4x64xf32> -> vector<4x64xf32>
    %152 = arith.addf %134, %151 : vector<4x64xf32>
    %153 = vector.extract_strided_slice %68 {offsets = [1, 0], sizes = [4, 32], strides = [1, 1]} : vector<5x32xf32> to vector<4x32xf32>
    %154 = arith.truncf %153 : vector<4x32xf32> to vector<4x32xbf16>
    %cst_29 = arith.constant dense<0.000000e+00> : vector<4x64xf32>
    %155 = tpu.matmul %154, %140, %cst_29 {dimension_numbers = #tpu.dot_dimension_numbers<[1], [0], [0], [1], [0, 0, 1, 1], [], []>} : vector<4x32xbf16>, vector<32x64xbf16>, vector<4x64xf32> -> vector<4x64xf32>
    %156 = arith.addf %138, %155 : vector<4x64xf32>
    %c3 = arith.constant 3 : index
    %c0_30 = arith.constant 0 : index
    %c0_31 = arith.constant 0 : index
    %157 = vector.load %arg4[%c3, %c0_30, %c0_31] : memref<16x32x64xbf16, #tpu.memory_space<vmem>>, vector<1x32x64xbf16>
    %158 = vector.shape_cast %157 : vector<1x32x64xbf16> to vector<32x64xbf16>
    %159 = vector.extract_strided_slice %17 {offsets = [1, 0], sizes = [4, 32], strides = [1, 1]} : vector<5x32xf32> to vector<4x32xf32>
    %160 = arith.truncf %159 : vector<4x32xf32> to vector<4x32xbf16>
    %cst_32 = arith.constant dense<0.000000e+00> : vector<4x64xf32>
    %161 = tpu.matmul %160, %158, %cst_32 {dimension_numbers = #tpu.dot_dimension_numbers<[1], [0], [0], [1], [0, 0, 1, 1], [], []>} : vector<4x32xbf16>, vector<32x64xbf16>, vector<4x64xf32> -> vector<4x64xf32>
    %162 = arith.addf %144, %161 : vector<4x64xf32>
    %163 = vector.extract_strided_slice %35 {offsets = [1, 0], sizes = [4, 32], strides = [1, 1]} : vector<5x32xf32> to vector<4x32xf32>
    %164 = arith.truncf %163 : vector<4x32xf32> to vector<4x32xbf16>
    %cst_33 = arith.constant dense<0.000000e+00> : vector<4x64xf32>
    %165 = tpu.matmul %164, %158, %cst_33 {dimension_numbers = #tpu.dot_dimension_numbers<[1], [0], [0], [1], [0, 0, 1, 1], [], []>} : vector<4x32xbf16>, vector<32x64xbf16>, vector<4x64xf32> -> vector<4x64xf32>
    %166 = arith.addf %148, %165 : vector<4x64xf32>
    %167 = vector.extract_strided_slice %53 {offsets = [1, 0], sizes = [4, 32], strides = [1, 1]} : vector<5x32xf32> to vector<4x32xf32>
    %168 = arith.truncf %167 : vector<4x32xf32> to vector<4x32xbf16>
    %cst_34 = arith.constant dense<0.000000e+00> : vector<4x64xf32>
    %169 = tpu.matmul %168, %158, %cst_34 {dimension_numbers = #tpu.dot_dimension_numbers<[1], [0], [0], [1], [0, 0, 1, 1], [], []>} : vector<4x32xbf16>, vector<32x64xbf16>, vector<4x64xf32> -> vector<4x64xf32>
    %170 = arith.addf %152, %169 : vector<4x64xf32>
    %171 = vector.extract_strided_slice %71 {offsets = [1, 0], sizes = [4, 32], strides = [1, 1]} : vector<5x32xf32> to vector<4x32xf32>
    %172 = arith.truncf %171 : vector<4x32xf32> to vector<4x32xbf16>
    %cst_35 = arith.constant dense<0.000000e+00> : vector<4x64xf32>
    %173 = tpu.matmul %172, %158, %cst_35 {dimension_numbers = #tpu.dot_dimension_numbers<[1], [0], [0], [1], [0, 0, 1, 1], [], []>} : vector<4x32xbf16>, vector<32x64xbf16>, vector<4x64xf32> -> vector<4x64xf32>
    %174 = arith.addf %156, %173 : vector<4x64xf32>
    %c4 = arith.constant 4 : index
    %c0_36 = arith.constant 0 : index
    %c0_37 = arith.constant 0 : index
    %175 = vector.load %arg4[%c4, %c0_36, %c0_37] : memref<16x32x64xbf16, #tpu.memory_space<vmem>>, vector<1x32x64xbf16>
    %176 = vector.shape_cast %175 : vector<1x32x64xbf16> to vector<32x64xbf16>
    %177 = vector.extract_strided_slice %23 {offsets = [0, 0], sizes = [4, 32], strides = [1, 1]} : vector<5x32xf32> to vector<4x32xf32>
    %178 = arith.truncf %177 : vector<4x32xf32> to vector<4x32xbf16>
    %cst_38 = arith.constant dense<0.000000e+00> : vector<4x64xf32>
    %179 = tpu.matmul %178, %176, %cst_38 {dimension_numbers = #tpu.dot_dimension_numbers<[1], [0], [0], [1], [0, 0, 1, 1], [], []>} : vector<4x32xbf16>, vector<32x64xbf16>, vector<4x64xf32> -> vector<4x64xf32>
    %180 = arith.addf %162, %179 : vector<4x64xf32>
    %181 = vector.extract_strided_slice %41 {offsets = [0, 0], sizes = [4, 32], strides = [1, 1]} : vector<5x32xf32> to vector<4x32xf32>
    %182 = arith.truncf %181 : vector<4x32xf32> to vector<4x32xbf16>
    %cst_39 = arith.constant dense<0.000000e+00> : vector<4x64xf32>
    %183 = tpu.matmul %182, %176, %cst_39 {dimension_numbers = #tpu.dot_dimension_numbers<[1], [0], [0], [1], [0, 0, 1, 1], [], []>} : vector<4x32xbf16>, vector<32x64xbf16>, vector<4x64xf32> -> vector<4x64xf32>
    %184 = arith.addf %166, %183 : vector<4x64xf32>
    %185 = vector.extract_strided_slice %59 {offsets = [0, 0], sizes = [4, 32], strides = [1, 1]} : vector<5x32xf32> to vector<4x32xf32>
    %186 = arith.truncf %185 : vector<4x32xf32> to vector<4x32xbf16>
    %cst_40 = arith.constant dense<0.000000e+00> : vector<4x64xf32>
    %187 = tpu.matmul %186, %176, %cst_40 {dimension_numbers = #tpu.dot_dimension_numbers<[1], [0], [0], [1], [0, 0, 1, 1], [], []>} : vector<4x32xbf16>, vector<32x64xbf16>, vector<4x64xf32> -> vector<4x64xf32>
    %188 = arith.addf %170, %187 : vector<4x64xf32>
    %189 = vector.extract_strided_slice %77 {offsets = [0, 0], sizes = [4, 32], strides = [1, 1]} : vector<5x32xf32> to vector<4x32xf32>
    %190 = arith.truncf %189 : vector<4x32xf32> to vector<4x32xbf16>
    %cst_41 = arith.constant dense<0.000000e+00> : vector<4x64xf32>
    %191 = tpu.matmul %190, %176, %cst_41 {dimension_numbers = #tpu.dot_dimension_numbers<[1], [0], [0], [1], [0, 0, 1, 1], [], []>} : vector<4x32xbf16>, vector<32x64xbf16>, vector<4x64xf32> -> vector<4x64xf32>
    %192 = arith.addf %174, %191 : vector<4x64xf32>
    %c5 = arith.constant 5 : index
    %c0_42 = arith.constant 0 : index
    %c0_43 = arith.constant 0 : index
    %193 = vector.load %arg4[%c5, %c0_42, %c0_43] : memref<16x32x64xbf16, #tpu.memory_space<vmem>>, vector<1x32x64xbf16>
    %194 = vector.shape_cast %193 : vector<1x32x64xbf16> to vector<32x64xbf16>
    %195 = vector.extract_strided_slice %26 {offsets = [0, 0], sizes = [4, 32], strides = [1, 1]} : vector<5x32xf32> to vector<4x32xf32>
    %196 = arith.truncf %195 : vector<4x32xf32> to vector<4x32xbf16>
    %cst_44 = arith.constant dense<0.000000e+00> : vector<4x64xf32>
    %197 = tpu.matmul %196, %194, %cst_44 {dimension_numbers = #tpu.dot_dimension_numbers<[1], [0], [0], [1], [0, 0, 1, 1], [], []>} : vector<4x32xbf16>, vector<32x64xbf16>, vector<4x64xf32> -> vector<4x64xf32>
    %198 = arith.addf %180, %197 : vector<4x64xf32>
    %199 = vector.extract_strided_slice %44 {offsets = [0, 0], sizes = [4, 32], strides = [1, 1]} : vector<5x32xf32> to vector<4x32xf32>
    %200 = arith.truncf %199 : vector<4x32xf32> to vector<4x32xbf16>
    %cst_45 = arith.constant dense<0.000000e+00> : vector<4x64xf32>
    %201 = tpu.matmul %200, %194, %cst_45 {dimension_numbers = #tpu.dot_dimension_numbers<[1], [0], [0], [1], [0, 0, 1, 1], [], []>} : vector<4x32xbf16>, vector<32x64xbf16>, vector<4x64xf32> -> vector<4x64xf32>
    %202 = arith.addf %184, %201 : vector<4x64xf32>
    %203 = vector.extract_strided_slice %62 {offsets = [0, 0], sizes = [4, 32], strides = [1, 1]} : vector<5x32xf32> to vector<4x32xf32>
    %204 = arith.truncf %203 : vector<4x32xf32> to vector<4x32xbf16>
    %cst_46 = arith.constant dense<0.000000e+00> : vector<4x64xf32>
    %205 = tpu.matmul %204, %194, %cst_46 {dimension_numbers = #tpu.dot_dimension_numbers<[1], [0], [0], [1], [0, 0, 1, 1], [], []>} : vector<4x32xbf16>, vector<32x64xbf16>, vector<4x64xf32> -> vector<4x64xf32>
    %206 = arith.addf %188, %205 : vector<4x64xf32>
    %207 = vector.extract_strided_slice %80 {offsets = [0, 0], sizes = [4, 32], strides = [1, 1]} : vector<5x32xf32> to vector<4x32xf32>
    %208 = arith.truncf %207 : vector<4x32xf32> to vector<4x32xbf16>
    %cst_47 = arith.constant dense<0.000000e+00> : vector<4x64xf32>
    %209 = tpu.matmul %208, %194, %cst_47 {dimension_numbers = #tpu.dot_dimension_numbers<[1], [0], [0], [1], [0, 0, 1, 1], [], []>} : vector<4x32xbf16>, vector<32x64xbf16>, vector<4x64xf32> -> vector<4x64xf32>
    %210 = arith.addf %192, %209 : vector<4x64xf32>
    %c6 = arith.constant 6 : index
    %c0_48 = arith.constant 0 : index
    %c0_49 = arith.constant 0 : index
    %211 = vector.load %arg4[%c6, %c0_48, %c0_49] : memref<16x32x64xbf16, #tpu.memory_space<vmem>>, vector<1x32x64xbf16>
    %212 = vector.shape_cast %211 : vector<1x32x64xbf16> to vector<32x64xbf16>
    %213 = vector.extract_strided_slice %23 {offsets = [1, 0], sizes = [4, 32], strides = [1, 1]} : vector<5x32xf32> to vector<4x32xf32>
    %214 = arith.truncf %213 : vector<4x32xf32> to vector<4x32xbf16>
    %cst_50 = arith.constant dense<0.000000e+00> : vector<4x64xf32>
    %215 = tpu.matmul %214, %212, %cst_50 {dimension_numbers = #tpu.dot_dimension_numbers<[1], [0], [0], [1], [0, 0, 1, 1], [], []>} : vector<4x32xbf16>, vector<32x64xbf16>, vector<4x64xf32> -> vector<4x64xf32>
    %216 = arith.addf %198, %215 : vector<4x64xf32>
    %217 = vector.extract_strided_slice %41 {offsets = [1, 0], sizes = [4, 32], strides = [1, 1]} : vector<5x32xf32> to vector<4x32xf32>
    %218 = arith.truncf %217 : vector<4x32xf32> to vector<4x32xbf16>
    %cst_51 = arith.constant dense<0.000000e+00> : vector<4x64xf32>
    %219 = tpu.matmul %218, %212, %cst_51 {dimension_numbers = #tpu.dot_dimension_numbers<[1], [0], [0], [1], [0, 0, 1, 1], [], []>} : vector<4x32xbf16>, vector<32x64xbf16>, vector<4x64xf32> -> vector<4x64xf32>
    %220 = arith.addf %202, %219 : vector<4x64xf32>
    %221 = vector.extract_strided_slice %59 {offsets = [1, 0], sizes = [4, 32], strides = [1, 1]} : vector<5x32xf32> to vector<4x32xf32>
    %222 = arith.truncf %221 : vector<4x32xf32> to vector<4x32xbf16>
    %cst_52 = arith.constant dense<0.000000e+00> : vector<4x64xf32>
    %223 = tpu.matmul %222, %212, %cst_52 {dimension_numbers = #tpu.dot_dimension_numbers<[1], [0], [0], [1], [0, 0, 1, 1], [], []>} : vector<4x32xbf16>, vector<32x64xbf16>, vector<4x64xf32> -> vector<4x64xf32>
    %224 = arith.addf %206, %223 : vector<4x64xf32>
    %225 = vector.extract_strided_slice %77 {offsets = [1, 0], sizes = [4, 32], strides = [1, 1]} : vector<5x32xf32> to vector<4x32xf32>
    %226 = arith.truncf %225 : vector<4x32xf32> to vector<4x32xbf16>
    %cst_53 = arith.constant dense<0.000000e+00> : vector<4x64xf32>
    %227 = tpu.matmul %226, %212, %cst_53 {dimension_numbers = #tpu.dot_dimension_numbers<[1], [0], [0], [1], [0, 0, 1, 1], [], []>} : vector<4x32xbf16>, vector<32x64xbf16>, vector<4x64xf32> -> vector<4x64xf32>
    %228 = arith.addf %210, %227 : vector<4x64xf32>
    %c7 = arith.constant 7 : index
    %c0_54 = arith.constant 0 : index
    %c0_55 = arith.constant 0 : index
    %229 = vector.load %arg4[%c7, %c0_54, %c0_55] : memref<16x32x64xbf16, #tpu.memory_space<vmem>>, vector<1x32x64xbf16>
    %230 = vector.shape_cast %229 : vector<1x32x64xbf16> to vector<32x64xbf16>
    %231 = vector.extract_strided_slice %26 {offsets = [1, 0], sizes = [4, 32], strides = [1, 1]} : vector<5x32xf32> to vector<4x32xf32>
    %232 = arith.truncf %231 : vector<4x32xf32> to vector<4x32xbf16>
    %cst_56 = arith.constant dense<0.000000e+00> : vector<4x64xf32>
    %233 = tpu.matmul %232, %230, %cst_56 {dimension_numbers = #tpu.dot_dimension_numbers<[1], [0], [0], [1], [0, 0, 1, 1], [], []>} : vector<4x32xbf16>, vector<32x64xbf16>, vector<4x64xf32> -> vector<4x64xf32>
    %234 = arith.addf %216, %233 : vector<4x64xf32>
    %235 = vector.extract_strided_slice %44 {offsets = [1, 0], sizes = [4, 32], strides = [1, 1]} : vector<5x32xf32> to vector<4x32xf32>
    %236 = arith.truncf %235 : vector<4x32xf32> to vector<4x32xbf16>
    %cst_57 = arith.constant dense<0.000000e+00> : vector<4x64xf32>
    %237 = tpu.matmul %236, %230, %cst_57 {dimension_numbers = #tpu.dot_dimension_numbers<[1], [0], [0], [1], [0, 0, 1, 1], [], []>} : vector<4x32xbf16>, vector<32x64xbf16>, vector<4x64xf32> -> vector<4x64xf32>
    %238 = arith.addf %220, %237 : vector<4x64xf32>
    %239 = vector.extract_strided_slice %62 {offsets = [1, 0], sizes = [4, 32], strides = [1, 1]} : vector<5x32xf32> to vector<4x32xf32>
    %240 = arith.truncf %239 : vector<4x32xf32> to vector<4x32xbf16>
    %cst_58 = arith.constant dense<0.000000e+00> : vector<4x64xf32>
    %241 = tpu.matmul %240, %230, %cst_58 {dimension_numbers = #tpu.dot_dimension_numbers<[1], [0], [0], [1], [0, 0, 1, 1], [], []>} : vector<4x32xbf16>, vector<32x64xbf16>, vector<4x64xf32> -> vector<4x64xf32>
    %242 = arith.addf %224, %241 : vector<4x64xf32>
    %243 = vector.extract_strided_slice %80 {offsets = [1, 0], sizes = [4, 32], strides = [1, 1]} : vector<5x32xf32> to vector<4x32xf32>
    %244 = arith.truncf %243 : vector<4x32xf32> to vector<4x32xbf16>
    %cst_59 = arith.constant dense<0.000000e+00> : vector<4x64xf32>
    %245 = tpu.matmul %244, %230, %cst_59 {dimension_numbers = #tpu.dot_dimension_numbers<[1], [0], [0], [1], [0, 0, 1, 1], [], []>} : vector<4x32xbf16>, vector<32x64xbf16>, vector<4x64xf32> -> vector<4x64xf32>
    %246 = arith.addf %228, %245 : vector<4x64xf32>
    %c8 = arith.constant 8 : index
    %c0_60 = arith.constant 0 : index
    %c0_61 = arith.constant 0 : index
    %247 = vector.load %arg4[%c8, %c0_60, %c0_61] : memref<16x32x64xbf16, #tpu.memory_space<vmem>>, vector<1x32x64xbf16>
    %248 = vector.shape_cast %247 : vector<1x32x64xbf16> to vector<32x64xbf16>
    %249 = vector.extract_strided_slice %32 {offsets = [0, 0], sizes = [4, 32], strides = [1, 1]} : vector<5x32xf32> to vector<4x32xf32>
    %250 = arith.truncf %249 : vector<4x32xf32> to vector<4x32xbf16>
    %cst_62 = arith.constant dense<0.000000e+00> : vector<4x64xf32>
    %251 = tpu.matmul %250, %248, %cst_62 {dimension_numbers = #tpu.dot_dimension_numbers<[1], [0], [0], [1], [0, 0, 1, 1], [], []>} : vector<4x32xbf16>, vector<32x64xbf16>, vector<4x64xf32> -> vector<4x64xf32>
    %252 = arith.addf %234, %251 : vector<4x64xf32>
    %253 = vector.extract_strided_slice %50 {offsets = [0, 0], sizes = [4, 32], strides = [1, 1]} : vector<5x32xf32> to vector<4x32xf32>
    %254 = arith.truncf %253 : vector<4x32xf32> to vector<4x32xbf16>
    %cst_63 = arith.constant dense<0.000000e+00> : vector<4x64xf32>
    %255 = tpu.matmul %254, %248, %cst_63 {dimension_numbers = #tpu.dot_dimension_numbers<[1], [0], [0], [1], [0, 0, 1, 1], [], []>} : vector<4x32xbf16>, vector<32x64xbf16>, vector<4x64xf32> -> vector<4x64xf32>
    %256 = arith.addf %238, %255 : vector<4x64xf32>
    %257 = vector.extract_strided_slice %68 {offsets = [0, 0], sizes = [4, 32], strides = [1, 1]} : vector<5x32xf32> to vector<4x32xf32>
    %258 = arith.truncf %257 : vector<4x32xf32> to vector<4x32xbf16>
    %cst_64 = arith.constant dense<0.000000e+00> : vector<4x64xf32>
    %259 = tpu.matmul %258, %248, %cst_64 {dimension_numbers = #tpu.dot_dimension_numbers<[1], [0], [0], [1], [0, 0, 1, 1], [], []>} : vector<4x32xbf16>, vector<32x64xbf16>, vector<4x64xf32> -> vector<4x64xf32>
    %260 = arith.addf %242, %259 : vector<4x64xf32>
    %261 = vector.extract_strided_slice %86 {offsets = [0, 0], sizes = [4, 32], strides = [1, 1]} : vector<5x32xf32> to vector<4x32xf32>
    %262 = arith.truncf %261 : vector<4x32xf32> to vector<4x32xbf16>
    %cst_65 = arith.constant dense<0.000000e+00> : vector<4x64xf32>
    %263 = tpu.matmul %262, %248, %cst_65 {dimension_numbers = #tpu.dot_dimension_numbers<[1], [0], [0], [1], [0, 0, 1, 1], [], []>} : vector<4x32xbf16>, vector<32x64xbf16>, vector<4x64xf32> -> vector<4x64xf32>
    %264 = arith.addf %246, %263 : vector<4x64xf32>
    %c9 = arith.constant 9 : index
    %c0_66 = arith.constant 0 : index
    %c0_67 = arith.constant 0 : index
    %265 = vector.load %arg4[%c9, %c0_66, %c0_67] : memref<16x32x64xbf16, #tpu.memory_space<vmem>>, vector<1x32x64xbf16>
    %266 = vector.shape_cast %265 : vector<1x32x64xbf16> to vector<32x64xbf16>
    %267 = vector.extract_strided_slice %35 {offsets = [0, 0], sizes = [4, 32], strides = [1, 1]} : vector<5x32xf32> to vector<4x32xf32>
    %268 = arith.truncf %267 : vector<4x32xf32> to vector<4x32xbf16>
    %cst_68 = arith.constant dense<0.000000e+00> : vector<4x64xf32>
    %269 = tpu.matmul %268, %266, %cst_68 {dimension_numbers = #tpu.dot_dimension_numbers<[1], [0], [0], [1], [0, 0, 1, 1], [], []>} : vector<4x32xbf16>, vector<32x64xbf16>, vector<4x64xf32> -> vector<4x64xf32>
    %270 = arith.addf %252, %269 : vector<4x64xf32>
    %271 = vector.extract_strided_slice %53 {offsets = [0, 0], sizes = [4, 32], strides = [1, 1]} : vector<5x32xf32> to vector<4x32xf32>
    %272 = arith.truncf %271 : vector<4x32xf32> to vector<4x32xbf16>
    %cst_69 = arith.constant dense<0.000000e+00> : vector<4x64xf32>
    %273 = tpu.matmul %272, %266, %cst_69 {dimension_numbers = #tpu.dot_dimension_numbers<[1], [0], [0], [1], [0, 0, 1, 1], [], []>} : vector<4x32xbf16>, vector<32x64xbf16>, vector<4x64xf32> -> vector<4x64xf32>
    %274 = arith.addf %256, %273 : vector<4x64xf32>
    %275 = vector.extract_strided_slice %71 {offsets = [0, 0], sizes = [4, 32], strides = [1, 1]} : vector<5x32xf32> to vector<4x32xf32>
    %276 = arith.truncf %275 : vector<4x32xf32> to vector<4x32xbf16>
    %cst_70 = arith.constant dense<0.000000e+00> : vector<4x64xf32>
    %277 = tpu.matmul %276, %266, %cst_70 {dimension_numbers = #tpu.dot_dimension_numbers<[1], [0], [0], [1], [0, 0, 1, 1], [], []>} : vector<4x32xbf16>, vector<32x64xbf16>, vector<4x64xf32> -> vector<4x64xf32>
    %278 = arith.addf %260, %277 : vector<4x64xf32>
    %279 = vector.extract_strided_slice %89 {offsets = [0, 0], sizes = [4, 32], strides = [1, 1]} : vector<5x32xf32> to vector<4x32xf32>
    %280 = arith.truncf %279 : vector<4x32xf32> to vector<4x32xbf16>
    %cst_71 = arith.constant dense<0.000000e+00> : vector<4x64xf32>
    %281 = tpu.matmul %280, %266, %cst_71 {dimension_numbers = #tpu.dot_dimension_numbers<[1], [0], [0], [1], [0, 0, 1, 1], [], []>} : vector<4x32xbf16>, vector<32x64xbf16>, vector<4x64xf32> -> vector<4x64xf32>
    %282 = arith.addf %264, %281 : vector<4x64xf32>
    %c10 = arith.constant 10 : index
    %c0_72 = arith.constant 0 : index
    %c0_73 = arith.constant 0 : index
    %283 = vector.load %arg4[%c10, %c0_72, %c0_73] : memref<16x32x64xbf16, #tpu.memory_space<vmem>>, vector<1x32x64xbf16>
    %284 = vector.shape_cast %283 : vector<1x32x64xbf16> to vector<32x64xbf16>
    %285 = vector.extract_strided_slice %32 {offsets = [1, 0], sizes = [4, 32], strides = [1, 1]} : vector<5x32xf32> to vector<4x32xf32>
    %286 = arith.truncf %285 : vector<4x32xf32> to vector<4x32xbf16>
    %cst_74 = arith.constant dense<0.000000e+00> : vector<4x64xf32>
    %287 = tpu.matmul %286, %284, %cst_74 {dimension_numbers = #tpu.dot_dimension_numbers<[1], [0], [0], [1], [0, 0, 1, 1], [], []>} : vector<4x32xbf16>, vector<32x64xbf16>, vector<4x64xf32> -> vector<4x64xf32>
    %288 = arith.addf %270, %287 : vector<4x64xf32>
    %289 = vector.extract_strided_slice %50 {offsets = [1, 0], sizes = [4, 32], strides = [1, 1]} : vector<5x32xf32> to vector<4x32xf32>
    %290 = arith.truncf %289 : vector<4x32xf32> to vector<4x32xbf16>
    %cst_75 = arith.constant dense<0.000000e+00> : vector<4x64xf32>
    %291 = tpu.matmul %290, %284, %cst_75 {dimension_numbers = #tpu.dot_dimension_numbers<[1], [0], [0], [1], [0, 0, 1, 1], [], []>} : vector<4x32xbf16>, vector<32x64xbf16>, vector<4x64xf32> -> vector<4x64xf32>
    %292 = arith.addf %274, %291 : vector<4x64xf32>
    %293 = vector.extract_strided_slice %68 {offsets = [1, 0], sizes = [4, 32], strides = [1, 1]} : vector<5x32xf32> to vector<4x32xf32>
    %294 = arith.truncf %293 : vector<4x32xf32> to vector<4x32xbf16>
    %cst_76 = arith.constant dense<0.000000e+00> : vector<4x64xf32>
    %295 = tpu.matmul %294, %284, %cst_76 {dimension_numbers = #tpu.dot_dimension_numbers<[1], [0], [0], [1], [0, 0, 1, 1], [], []>} : vector<4x32xbf16>, vector<32x64xbf16>, vector<4x64xf32> -> vector<4x64xf32>
    %296 = arith.addf %278, %295 : vector<4x64xf32>
    %297 = vector.extract_strided_slice %86 {offsets = [1, 0], sizes = [4, 32], strides = [1, 1]} : vector<5x32xf32> to vector<4x32xf32>
    %298 = arith.truncf %297 : vector<4x32xf32> to vector<4x32xbf16>
    %cst_77 = arith.constant dense<0.000000e+00> : vector<4x64xf32>
    %299 = tpu.matmul %298, %284, %cst_77 {dimension_numbers = #tpu.dot_dimension_numbers<[1], [0], [0], [1], [0, 0, 1, 1], [], []>} : vector<4x32xbf16>, vector<32x64xbf16>, vector<4x64xf32> -> vector<4x64xf32>
    %300 = arith.addf %282, %299 : vector<4x64xf32>
    %c11 = arith.constant 11 : index
    %c0_78 = arith.constant 0 : index
    %c0_79 = arith.constant 0 : index
    %301 = vector.load %arg4[%c11, %c0_78, %c0_79] : memref<16x32x64xbf16, #tpu.memory_space<vmem>>, vector<1x32x64xbf16>
    %302 = vector.shape_cast %301 : vector<1x32x64xbf16> to vector<32x64xbf16>
    %303 = vector.extract_strided_slice %35 {offsets = [1, 0], sizes = [4, 32], strides = [1, 1]} : vector<5x32xf32> to vector<4x32xf32>
    %304 = arith.truncf %303 : vector<4x32xf32> to vector<4x32xbf16>
    %cst_80 = arith.constant dense<0.000000e+00> : vector<4x64xf32>
    %305 = tpu.matmul %304, %302, %cst_80 {dimension_numbers = #tpu.dot_dimension_numbers<[1], [0], [0], [1], [0, 0, 1, 1], [], []>} : vector<4x32xbf16>, vector<32x64xbf16>, vector<4x64xf32> -> vector<4x64xf32>
    %306 = arith.addf %288, %305 : vector<4x64xf32>
    %307 = vector.extract_strided_slice %53 {offsets = [1, 0], sizes = [4, 32], strides = [1, 1]} : vector<5x32xf32> to vector<4x32xf32>
    %308 = arith.truncf %307 : vector<4x32xf32> to vector<4x32xbf16>
    %cst_81 = arith.constant dense<0.000000e+00> : vector<4x64xf32>
    %309 = tpu.matmul %308, %302, %cst_81 {dimension_numbers = #tpu.dot_dimension_numbers<[1], [0], [0], [1], [0, 0, 1, 1], [], []>} : vector<4x32xbf16>, vector<32x64xbf16>, vector<4x64xf32> -> vector<4x64xf32>
    %310 = arith.addf %292, %309 : vector<4x64xf32>
    %311 = vector.extract_strided_slice %71 {offsets = [1, 0], sizes = [4, 32], strides = [1, 1]} : vector<5x32xf32> to vector<4x32xf32>
    %312 = arith.truncf %311 : vector<4x32xf32> to vector<4x32xbf16>
    %cst_82 = arith.constant dense<0.000000e+00> : vector<4x64xf32>
    %313 = tpu.matmul %312, %302, %cst_82 {dimension_numbers = #tpu.dot_dimension_numbers<[1], [0], [0], [1], [0, 0, 1, 1], [], []>} : vector<4x32xbf16>, vector<32x64xbf16>, vector<4x64xf32> -> vector<4x64xf32>
    %314 = arith.addf %296, %313 : vector<4x64xf32>
    %315 = vector.extract_strided_slice %89 {offsets = [1, 0], sizes = [4, 32], strides = [1, 1]} : vector<5x32xf32> to vector<4x32xf32>
    %316 = arith.truncf %315 : vector<4x32xf32> to vector<4x32xbf16>
    %cst_83 = arith.constant dense<0.000000e+00> : vector<4x64xf32>
    %317 = tpu.matmul %316, %302, %cst_83 {dimension_numbers = #tpu.dot_dimension_numbers<[1], [0], [0], [1], [0, 0, 1, 1], [], []>} : vector<4x32xbf16>, vector<32x64xbf16>, vector<4x64xf32> -> vector<4x64xf32>
    %318 = arith.addf %300, %317 : vector<4x64xf32>
    %c12 = arith.constant 12 : index
    %c0_84 = arith.constant 0 : index
    %c0_85 = arith.constant 0 : index
    %319 = vector.load %arg4[%c12, %c0_84, %c0_85] : memref<16x32x64xbf16, #tpu.memory_space<vmem>>, vector<1x32x64xbf16>
    %320 = vector.shape_cast %319 : vector<1x32x64xbf16> to vector<32x64xbf16>
    %321 = vector.extract_strided_slice %41 {offsets = [0, 0], sizes = [4, 32], strides = [1, 1]} : vector<5x32xf32> to vector<4x32xf32>
    %322 = arith.truncf %321 : vector<4x32xf32> to vector<4x32xbf16>
    %cst_86 = arith.constant dense<0.000000e+00> : vector<4x64xf32>
    %323 = tpu.matmul %322, %320, %cst_86 {dimension_numbers = #tpu.dot_dimension_numbers<[1], [0], [0], [1], [0, 0, 1, 1], [], []>} : vector<4x32xbf16>, vector<32x64xbf16>, vector<4x64xf32> -> vector<4x64xf32>
    %324 = arith.addf %306, %323 : vector<4x64xf32>
    %325 = vector.extract_strided_slice %59 {offsets = [0, 0], sizes = [4, 32], strides = [1, 1]} : vector<5x32xf32> to vector<4x32xf32>
    %326 = arith.truncf %325 : vector<4x32xf32> to vector<4x32xbf16>
    %cst_87 = arith.constant dense<0.000000e+00> : vector<4x64xf32>
    %327 = tpu.matmul %326, %320, %cst_87 {dimension_numbers = #tpu.dot_dimension_numbers<[1], [0], [0], [1], [0, 0, 1, 1], [], []>} : vector<4x32xbf16>, vector<32x64xbf16>, vector<4x64xf32> -> vector<4x64xf32>
    %328 = arith.addf %310, %327 : vector<4x64xf32>
    %329 = vector.extract_strided_slice %77 {offsets = [0, 0], sizes = [4, 32], strides = [1, 1]} : vector<5x32xf32> to vector<4x32xf32>
    %330 = arith.truncf %329 : vector<4x32xf32> to vector<4x32xbf16>
    %cst_88 = arith.constant dense<0.000000e+00> : vector<4x64xf32>
    %331 = tpu.matmul %330, %320, %cst_88 {dimension_numbers = #tpu.dot_dimension_numbers<[1], [0], [0], [1], [0, 0, 1, 1], [], []>} : vector<4x32xbf16>, vector<32x64xbf16>, vector<4x64xf32> -> vector<4x64xf32>
    %332 = arith.addf %314, %331 : vector<4x64xf32>
    %333 = vector.extract_strided_slice %95 {offsets = [0, 0], sizes = [4, 32], strides = [1, 1]} : vector<5x32xf32> to vector<4x32xf32>
    %334 = arith.truncf %333 : vector<4x32xf32> to vector<4x32xbf16>
    %cst_89 = arith.constant dense<0.000000e+00> : vector<4x64xf32>
    %335 = tpu.matmul %334, %320, %cst_89 {dimension_numbers = #tpu.dot_dimension_numbers<[1], [0], [0], [1], [0, 0, 1, 1], [], []>} : vector<4x32xbf16>, vector<32x64xbf16>, vector<4x64xf32> -> vector<4x64xf32>
    %336 = arith.addf %318, %335 : vector<4x64xf32>
    %c13 = arith.constant 13 : index
    %c0_90 = arith.constant 0 : index
    %c0_91 = arith.constant 0 : index
    %337 = vector.load %arg4[%c13, %c0_90, %c0_91] : memref<16x32x64xbf16, #tpu.memory_space<vmem>>, vector<1x32x64xbf16>
    %338 = vector.shape_cast %337 : vector<1x32x64xbf16> to vector<32x64xbf16>
    %339 = vector.extract_strided_slice %44 {offsets = [0, 0], sizes = [4, 32], strides = [1, 1]} : vector<5x32xf32> to vector<4x32xf32>
    %340 = arith.truncf %339 : vector<4x32xf32> to vector<4x32xbf16>
    %cst_92 = arith.constant dense<0.000000e+00> : vector<4x64xf32>
    %341 = tpu.matmul %340, %338, %cst_92 {dimension_numbers = #tpu.dot_dimension_numbers<[1], [0], [0], [1], [0, 0, 1, 1], [], []>} : vector<4x32xbf16>, vector<32x64xbf16>, vector<4x64xf32> -> vector<4x64xf32>
    %342 = arith.addf %324, %341 : vector<4x64xf32>
    %343 = vector.extract_strided_slice %62 {offsets = [0, 0], sizes = [4, 32], strides = [1, 1]} : vector<5x32xf32> to vector<4x32xf32>
    %344 = arith.truncf %343 : vector<4x32xf32> to vector<4x32xbf16>
    %cst_93 = arith.constant dense<0.000000e+00> : vector<4x64xf32>
    %345 = tpu.matmul %344, %338, %cst_93 {dimension_numbers = #tpu.dot_dimension_numbers<[1], [0], [0], [1], [0, 0, 1, 1], [], []>} : vector<4x32xbf16>, vector<32x64xbf16>, vector<4x64xf32> -> vector<4x64xf32>
    %346 = arith.addf %328, %345 : vector<4x64xf32>
    %347 = vector.extract_strided_slice %80 {offsets = [0, 0], sizes = [4, 32], strides = [1, 1]} : vector<5x32xf32> to vector<4x32xf32>
    %348 = arith.truncf %347 : vector<4x32xf32> to vector<4x32xbf16>
    %cst_94 = arith.constant dense<0.000000e+00> : vector<4x64xf32>
    %349 = tpu.matmul %348, %338, %cst_94 {dimension_numbers = #tpu.dot_dimension_numbers<[1], [0], [0], [1], [0, 0, 1, 1], [], []>} : vector<4x32xbf16>, vector<32x64xbf16>, vector<4x64xf32> -> vector<4x64xf32>
    %350 = arith.addf %332, %349 : vector<4x64xf32>
    %351 = vector.extract_strided_slice %98 {offsets = [0, 0], sizes = [4, 32], strides = [1, 1]} : vector<5x32xf32> to vector<4x32xf32>
    %352 = arith.truncf %351 : vector<4x32xf32> to vector<4x32xbf16>
    %cst_95 = arith.constant dense<0.000000e+00> : vector<4x64xf32>
    %353 = tpu.matmul %352, %338, %cst_95 {dimension_numbers = #tpu.dot_dimension_numbers<[1], [0], [0], [1], [0, 0, 1, 1], [], []>} : vector<4x32xbf16>, vector<32x64xbf16>, vector<4x64xf32> -> vector<4x64xf32>
    %354 = arith.addf %336, %353 : vector<4x64xf32>
    %c14 = arith.constant 14 : index
    %c0_96 = arith.constant 0 : index
    %c0_97 = arith.constant 0 : index
    %355 = vector.load %arg4[%c14, %c0_96, %c0_97] : memref<16x32x64xbf16, #tpu.memory_space<vmem>>, vector<1x32x64xbf16>
    %356 = vector.shape_cast %355 : vector<1x32x64xbf16> to vector<32x64xbf16>
    %357 = vector.extract_strided_slice %41 {offsets = [1, 0], sizes = [4, 32], strides = [1, 1]} : vector<5x32xf32> to vector<4x32xf32>
    %358 = arith.truncf %357 : vector<4x32xf32> to vector<4x32xbf16>
    %cst_98 = arith.constant dense<0.000000e+00> : vector<4x64xf32>
    %359 = tpu.matmul %358, %356, %cst_98 {dimension_numbers = #tpu.dot_dimension_numbers<[1], [0], [0], [1], [0, 0, 1, 1], [], []>} : vector<4x32xbf16>, vector<32x64xbf16>, vector<4x64xf32> -> vector<4x64xf32>
    %360 = arith.addf %342, %359 : vector<4x64xf32>
    %361 = vector.extract_strided_slice %59 {offsets = [1, 0], sizes = [4, 32], strides = [1, 1]} : vector<5x32xf32> to vector<4x32xf32>
    %362 = arith.truncf %361 : vector<4x32xf32> to vector<4x32xbf16>
    %cst_99 = arith.constant dense<0.000000e+00> : vector<4x64xf32>
    %363 = tpu.matmul %362, %356, %cst_99 {dimension_numbers = #tpu.dot_dimension_numbers<[1], [0], [0], [1], [0, 0, 1, 1], [], []>} : vector<4x32xbf16>, vector<32x64xbf16>, vector<4x64xf32> -> vector<4x64xf32>
    %364 = arith.addf %346, %363 : vector<4x64xf32>
    %365 = vector.extract_strided_slice %77 {offsets = [1, 0], sizes = [4, 32], strides = [1, 1]} : vector<5x32xf32> to vector<4x32xf32>
    %366 = arith.truncf %365 : vector<4x32xf32> to vector<4x32xbf16>
    %cst_100 = arith.constant dense<0.000000e+00> : vector<4x64xf32>
    %367 = tpu.matmul %366, %356, %cst_100 {dimension_numbers = #tpu.dot_dimension_numbers<[1], [0], [0], [1], [0, 0, 1, 1], [], []>} : vector<4x32xbf16>, vector<32x64xbf16>, vector<4x64xf32> -> vector<4x64xf32>
    %368 = arith.addf %350, %367 : vector<4x64xf32>
    %369 = vector.extract_strided_slice %95 {offsets = [1, 0], sizes = [4, 32], strides = [1, 1]} : vector<5x32xf32> to vector<4x32xf32>
    %370 = arith.truncf %369 : vector<4x32xf32> to vector<4x32xbf16>
    %cst_101 = arith.constant dense<0.000000e+00> : vector<4x64xf32>
    %371 = tpu.matmul %370, %356, %cst_101 {dimension_numbers = #tpu.dot_dimension_numbers<[1], [0], [0], [1], [0, 0, 1, 1], [], []>} : vector<4x32xbf16>, vector<32x64xbf16>, vector<4x64xf32> -> vector<4x64xf32>
    %372 = arith.addf %354, %371 : vector<4x64xf32>
    %c15 = arith.constant 15 : index
    %c0_102 = arith.constant 0 : index
    %c0_103 = arith.constant 0 : index
    %373 = vector.load %arg4[%c15, %c0_102, %c0_103] : memref<16x32x64xbf16, #tpu.memory_space<vmem>>, vector<1x32x64xbf16>
    %374 = vector.shape_cast %373 : vector<1x32x64xbf16> to vector<32x64xbf16>
    %375 = vector.extract_strided_slice %44 {offsets = [1, 0], sizes = [4, 32], strides = [1, 1]} : vector<5x32xf32> to vector<4x32xf32>
    %376 = arith.truncf %375 : vector<4x32xf32> to vector<4x32xbf16>
    %cst_104 = arith.constant dense<0.000000e+00> : vector<4x64xf32>
    %377 = tpu.matmul %376, %374, %cst_104 {dimension_numbers = #tpu.dot_dimension_numbers<[1], [0], [0], [1], [0, 0, 1, 1], [], []>} : vector<4x32xbf16>, vector<32x64xbf16>, vector<4x64xf32> -> vector<4x64xf32>
    %378 = arith.addf %360, %377 : vector<4x64xf32>
    %379 = vector.extract_strided_slice %62 {offsets = [1, 0], sizes = [4, 32], strides = [1, 1]} : vector<5x32xf32> to vector<4x32xf32>
    %380 = arith.truncf %379 : vector<4x32xf32> to vector<4x32xbf16>
    %cst_105 = arith.constant dense<0.000000e+00> : vector<4x64xf32>
    %381 = tpu.matmul %380, %374, %cst_105 {dimension_numbers = #tpu.dot_dimension_numbers<[1], [0], [0], [1], [0, 0, 1, 1], [], []>} : vector<4x32xbf16>, vector<32x64xbf16>, vector<4x64xf32> -> vector<4x64xf32>
    %382 = arith.addf %364, %381 : vector<4x64xf32>
    %383 = vector.extract_strided_slice %80 {offsets = [1, 0], sizes = [4, 32], strides = [1, 1]} : vector<5x32xf32> to vector<4x32xf32>
    %384 = arith.truncf %383 : vector<4x32xf32> to vector<4x32xbf16>
    %cst_106 = arith.constant dense<0.000000e+00> : vector<4x64xf32>
    %385 = tpu.matmul %384, %374, %cst_106 {dimension_numbers = #tpu.dot_dimension_numbers<[1], [0], [0], [1], [0, 0, 1, 1], [], []>} : vector<4x32xbf16>, vector<32x64xbf16>, vector<4x64xf32> -> vector<4x64xf32>
    %386 = arith.addf %368, %385 : vector<4x64xf32>
    %387 = vector.extract_strided_slice %98 {offsets = [1, 0], sizes = [4, 32], strides = [1, 1]} : vector<5x32xf32> to vector<4x32xf32>
    %388 = arith.truncf %387 : vector<4x32xf32> to vector<4x32xbf16>
    %cst_107 = arith.constant dense<0.000000e+00> : vector<4x64xf32>
    %389 = tpu.matmul %388, %374, %cst_107 {dimension_numbers = #tpu.dot_dimension_numbers<[1], [0], [0], [1], [0, 0, 1, 1], [], []>} : vector<4x32xbf16>, vector<32x64xbf16>, vector<4x64xf32> -> vector<4x64xf32>
    %390 = arith.addf %372, %389 : vector<4x64xf32>
    %c0_108 = arith.constant 0 : index
    %c0_109 = arith.constant 0 : index
    %391 = vector.load %arg5[%c0_108, %c0_109] : memref<1x64xf32, #tpu.memory_space<vmem>>, vector<1x64xf32>
    %392 = vector.broadcast %391 : vector<1x64xf32> to vector<4x64xf32>
    %393 = arith.addf %378, %392 : vector<4x64xf32>
    %cst_110 = arith.constant 0.000000e+00 : f32
    %394 = vector.broadcast %cst_110 : f32 to vector<4x64xf32>
    %395 = arith.maximumf %393, %394 : vector<4x64xf32>
    %c0_111 = arith.constant 0 : index
    %c0_112 = arith.constant 0 : index
    %396 = vector.load %arg5[%c0_111, %c0_112] : memref<1x64xf32, #tpu.memory_space<vmem>>, vector<1x64xf32>
    %397 = vector.broadcast %396 : vector<1x64xf32> to vector<4x64xf32>
    %398 = arith.addf %382, %397 : vector<4x64xf32>
    %cst_113 = arith.constant 0.000000e+00 : f32
    %399 = vector.broadcast %cst_113 : f32 to vector<4x64xf32>
    %400 = arith.maximumf %398, %399 : vector<4x64xf32>
    %c0_114 = arith.constant 0 : index
    %c0_115 = arith.constant 0 : index
    %401 = vector.load %arg5[%c0_114, %c0_115] : memref<1x64xf32, #tpu.memory_space<vmem>>, vector<1x64xf32>
    %402 = vector.broadcast %401 : vector<1x64xf32> to vector<4x64xf32>
    %403 = arith.addf %386, %402 : vector<4x64xf32>
    %cst_116 = arith.constant 0.000000e+00 : f32
    %404 = vector.broadcast %cst_116 : f32 to vector<4x64xf32>
    %405 = arith.maximumf %403, %404 : vector<4x64xf32>
    %c0_117 = arith.constant 0 : index
    %c0_118 = arith.constant 0 : index
    %406 = vector.load %arg5[%c0_117, %c0_118] : memref<1x64xf32, #tpu.memory_space<vmem>>, vector<1x64xf32>
    %407 = vector.broadcast %406 : vector<1x64xf32> to vector<4x64xf32>
    %408 = arith.addf %390, %407 : vector<4x64xf32>
    %cst_119 = arith.constant 0.000000e+00 : f32
    %409 = vector.broadcast %cst_119 : f32 to vector<4x64xf32>
    %410 = arith.maximumf %408, %409 : vector<4x64xf32>
    %cst_120 = arith.constant 0.000000e+00 : f32
    %411 = vector.broadcast %cst_120 : f32 to vector<2x64xf32>
    %cst_121 = arith.constant 0.000000e+00 : f32
    %412 = vector.broadcast %cst_121 : f32 to vector<2x64xf32>
    %c0_122 = arith.constant 0 : index
    %c0_123 = arith.constant 0 : index
    %c0_124 = arith.constant 0 : index
    %413 = vector.load %arg6[%c0_122, %c0_123, %c0_124] : memref<9x64x64xbf16, #tpu.memory_space<vmem>>, vector<1x64x64xbf16>
    %414 = vector.shape_cast %413 : vector<1x64x64xbf16> to vector<64x64xbf16>
    %415 = vector.extract_strided_slice %395 {offsets = [0, 0], sizes = [2, 64], strides = [1, 1]} : vector<4x64xf32> to vector<2x64xf32>
    %416 = arith.truncf %415 : vector<2x64xf32> to vector<2x64xbf16>
    %cst_125 = arith.constant dense<0.000000e+00> : vector<2x64xf32>
    %417 = tpu.matmul %416, %414, %cst_125 {dimension_numbers = #tpu.dot_dimension_numbers<[1], [0], [0], [1], [0, 0, 1, 1], [], []>} : vector<2x64xbf16>, vector<64x64xbf16>, vector<2x64xf32> -> vector<2x64xf32>
    %418 = arith.addf %411, %417 : vector<2x64xf32>
    %419 = vector.extract_strided_slice %400 {offsets = [0, 0], sizes = [2, 64], strides = [1, 1]} : vector<4x64xf32> to vector<2x64xf32>
    %420 = arith.truncf %419 : vector<2x64xf32> to vector<2x64xbf16>
    %cst_126 = arith.constant dense<0.000000e+00> : vector<2x64xf32>
    %421 = tpu.matmul %420, %414, %cst_126 {dimension_numbers = #tpu.dot_dimension_numbers<[1], [0], [0], [1], [0, 0, 1, 1], [], []>} : vector<2x64xbf16>, vector<64x64xbf16>, vector<2x64xf32> -> vector<2x64xf32>
    %422 = arith.addf %412, %421 : vector<2x64xf32>
    %c1_127 = arith.constant 1 : index
    %c0_128 = arith.constant 0 : index
    %c0_129 = arith.constant 0 : index
    %423 = vector.load %arg6[%c1_127, %c0_128, %c0_129] : memref<9x64x64xbf16, #tpu.memory_space<vmem>>, vector<1x64x64xbf16>
    %424 = vector.shape_cast %423 : vector<1x64x64xbf16> to vector<64x64xbf16>
    %425 = vector.extract_strided_slice %395 {offsets = [1, 0], sizes = [2, 64], strides = [1, 1]} : vector<4x64xf32> to vector<2x64xf32>
    %426 = arith.truncf %425 : vector<2x64xf32> to vector<2x64xbf16>
    %cst_130 = arith.constant dense<0.000000e+00> : vector<2x64xf32>
    %427 = tpu.matmul %426, %424, %cst_130 {dimension_numbers = #tpu.dot_dimension_numbers<[1], [0], [0], [1], [0, 0, 1, 1], [], []>} : vector<2x64xbf16>, vector<64x64xbf16>, vector<2x64xf32> -> vector<2x64xf32>
    %428 = arith.addf %418, %427 : vector<2x64xf32>
    %429 = vector.extract_strided_slice %400 {offsets = [1, 0], sizes = [2, 64], strides = [1, 1]} : vector<4x64xf32> to vector<2x64xf32>
    %430 = arith.truncf %429 : vector<2x64xf32> to vector<2x64xbf16>
    %cst_131 = arith.constant dense<0.000000e+00> : vector<2x64xf32>
    %431 = tpu.matmul %430, %424, %cst_131 {dimension_numbers = #tpu.dot_dimension_numbers<[1], [0], [0], [1], [0, 0, 1, 1], [], []>} : vector<2x64xbf16>, vector<64x64xbf16>, vector<2x64xf32> -> vector<2x64xf32>
    %432 = arith.addf %422, %431 : vector<2x64xf32>
    %c2_132 = arith.constant 2 : index
    %c0_133 = arith.constant 0 : index
    %c0_134 = arith.constant 0 : index
    %433 = vector.load %arg6[%c2_132, %c0_133, %c0_134] : memref<9x64x64xbf16, #tpu.memory_space<vmem>>, vector<1x64x64xbf16>
    %434 = vector.shape_cast %433 : vector<1x64x64xbf16> to vector<64x64xbf16>
    %435 = vector.extract_strided_slice %395 {offsets = [2, 0], sizes = [2, 64], strides = [1, 1]} : vector<4x64xf32> to vector<2x64xf32>
    %436 = arith.truncf %435 : vector<2x64xf32> to vector<2x64xbf16>
    %cst_135 = arith.constant dense<0.000000e+00> : vector<2x64xf32>
    %437 = tpu.matmul %436, %434, %cst_135 {dimension_numbers = #tpu.dot_dimension_numbers<[1], [0], [0], [1], [0, 0, 1, 1], [], []>} : vector<2x64xbf16>, vector<64x64xbf16>, vector<2x64xf32> -> vector<2x64xf32>
    %438 = arith.addf %428, %437 : vector<2x64xf32>
    %439 = vector.extract_strided_slice %400 {offsets = [2, 0], sizes = [2, 64], strides = [1, 1]} : vector<4x64xf32> to vector<2x64xf32>
    %440 = arith.truncf %439 : vector<2x64xf32> to vector<2x64xbf16>
    %cst_136 = arith.constant dense<0.000000e+00> : vector<2x64xf32>
    %441 = tpu.matmul %440, %434, %cst_136 {dimension_numbers = #tpu.dot_dimension_numbers<[1], [0], [0], [1], [0, 0, 1, 1], [], []>} : vector<2x64xbf16>, vector<64x64xbf16>, vector<2x64xf32> -> vector<2x64xf32>
    %442 = arith.addf %432, %441 : vector<2x64xf32>
    %c3_137 = arith.constant 3 : index
    %c0_138 = arith.constant 0 : index
    %c0_139 = arith.constant 0 : index
    %443 = vector.load %arg6[%c3_137, %c0_138, %c0_139] : memref<9x64x64xbf16, #tpu.memory_space<vmem>>, vector<1x64x64xbf16>
    %444 = vector.shape_cast %443 : vector<1x64x64xbf16> to vector<64x64xbf16>
    %445 = vector.extract_strided_slice %400 {offsets = [0, 0], sizes = [2, 64], strides = [1, 1]} : vector<4x64xf32> to vector<2x64xf32>
    %446 = arith.truncf %445 : vector<2x64xf32> to vector<2x64xbf16>
    %cst_140 = arith.constant dense<0.000000e+00> : vector<2x64xf32>
    %447 = tpu.matmul %446, %444, %cst_140 {dimension_numbers = #tpu.dot_dimension_numbers<[1], [0], [0], [1], [0, 0, 1, 1], [], []>} : vector<2x64xbf16>, vector<64x64xbf16>, vector<2x64xf32> -> vector<2x64xf32>
    %448 = arith.addf %438, %447 : vector<2x64xf32>
    %449 = vector.extract_strided_slice %405 {offsets = [0, 0], sizes = [2, 64], strides = [1, 1]} : vector<4x64xf32> to vector<2x64xf32>
    %450 = arith.truncf %449 : vector<2x64xf32> to vector<2x64xbf16>
    %cst_141 = arith.constant dense<0.000000e+00> : vector<2x64xf32>
    %451 = tpu.matmul %450, %444, %cst_141 {dimension_numbers = #tpu.dot_dimension_numbers<[1], [0], [0], [1], [0, 0, 1, 1], [], []>} : vector<2x64xbf16>, vector<64x64xbf16>, vector<2x64xf32> -> vector<2x64xf32>
    %452 = arith.addf %442, %451 : vector<2x64xf32>
    %c4_142 = arith.constant 4 : index
    %c0_143 = arith.constant 0 : index
    %c0_144 = arith.constant 0 : index
    %453 = vector.load %arg6[%c4_142, %c0_143, %c0_144] : memref<9x64x64xbf16, #tpu.memory_space<vmem>>, vector<1x64x64xbf16>
    %454 = vector.shape_cast %453 : vector<1x64x64xbf16> to vector<64x64xbf16>
    %455 = vector.extract_strided_slice %400 {offsets = [1, 0], sizes = [2, 64], strides = [1, 1]} : vector<4x64xf32> to vector<2x64xf32>
    %456 = arith.truncf %455 : vector<2x64xf32> to vector<2x64xbf16>
    %cst_145 = arith.constant dense<0.000000e+00> : vector<2x64xf32>
    %457 = tpu.matmul %456, %454, %cst_145 {dimension_numbers = #tpu.dot_dimension_numbers<[1], [0], [0], [1], [0, 0, 1, 1], [], []>} : vector<2x64xbf16>, vector<64x64xbf16>, vector<2x64xf32> -> vector<2x64xf32>
    %458 = arith.addf %448, %457 : vector<2x64xf32>
    %459 = vector.extract_strided_slice %405 {offsets = [1, 0], sizes = [2, 64], strides = [1, 1]} : vector<4x64xf32> to vector<2x64xf32>
    %460 = arith.truncf %459 : vector<2x64xf32> to vector<2x64xbf16>
    %cst_146 = arith.constant dense<0.000000e+00> : vector<2x64xf32>
    %461 = tpu.matmul %460, %454, %cst_146 {dimension_numbers = #tpu.dot_dimension_numbers<[1], [0], [0], [1], [0, 0, 1, 1], [], []>} : vector<2x64xbf16>, vector<64x64xbf16>, vector<2x64xf32> -> vector<2x64xf32>
    %462 = arith.addf %452, %461 : vector<2x64xf32>
    %c5_147 = arith.constant 5 : index
    %c0_148 = arith.constant 0 : index
    %c0_149 = arith.constant 0 : index
    %463 = vector.load %arg6[%c5_147, %c0_148, %c0_149] : memref<9x64x64xbf16, #tpu.memory_space<vmem>>, vector<1x64x64xbf16>
    %464 = vector.shape_cast %463 : vector<1x64x64xbf16> to vector<64x64xbf16>
    %465 = vector.extract_strided_slice %400 {offsets = [2, 0], sizes = [2, 64], strides = [1, 1]} : vector<4x64xf32> to vector<2x64xf32>
    %466 = arith.truncf %465 : vector<2x64xf32> to vector<2x64xbf16>
    %cst_150 = arith.constant dense<0.000000e+00> : vector<2x64xf32>
    %467 = tpu.matmul %466, %464, %cst_150 {dimension_numbers = #tpu.dot_dimension_numbers<[1], [0], [0], [1], [0, 0, 1, 1], [], []>} : vector<2x64xbf16>, vector<64x64xbf16>, vector<2x64xf32> -> vector<2x64xf32>
    %468 = arith.addf %458, %467 : vector<2x64xf32>
    %469 = vector.extract_strided_slice %405 {offsets = [2, 0], sizes = [2, 64], strides = [1, 1]} : vector<4x64xf32> to vector<2x64xf32>
    %470 = arith.truncf %469 : vector<2x64xf32> to vector<2x64xbf16>
    %cst_151 = arith.constant dense<0.000000e+00> : vector<2x64xf32>
    %471 = tpu.matmul %470, %464, %cst_151 {dimension_numbers = #tpu.dot_dimension_numbers<[1], [0], [0], [1], [0, 0, 1, 1], [], []>} : vector<2x64xbf16>, vector<64x64xbf16>, vector<2x64xf32> -> vector<2x64xf32>
    %472 = arith.addf %462, %471 : vector<2x64xf32>
    %c6_152 = arith.constant 6 : index
    %c0_153 = arith.constant 0 : index
    %c0_154 = arith.constant 0 : index
    %473 = vector.load %arg6[%c6_152, %c0_153, %c0_154] : memref<9x64x64xbf16, #tpu.memory_space<vmem>>, vector<1x64x64xbf16>
    %474 = vector.shape_cast %473 : vector<1x64x64xbf16> to vector<64x64xbf16>
    %475 = vector.extract_strided_slice %405 {offsets = [0, 0], sizes = [2, 64], strides = [1, 1]} : vector<4x64xf32> to vector<2x64xf32>
    %476 = arith.truncf %475 : vector<2x64xf32> to vector<2x64xbf16>
    %cst_155 = arith.constant dense<0.000000e+00> : vector<2x64xf32>
    %477 = tpu.matmul %476, %474, %cst_155 {dimension_numbers = #tpu.dot_dimension_numbers<[1], [0], [0], [1], [0, 0, 1, 1], [], []>} : vector<2x64xbf16>, vector<64x64xbf16>, vector<2x64xf32> -> vector<2x64xf32>
    %478 = arith.addf %468, %477 : vector<2x64xf32>
    %479 = vector.extract_strided_slice %410 {offsets = [0, 0], sizes = [2, 64], strides = [1, 1]} : vector<4x64xf32> to vector<2x64xf32>
    %480 = arith.truncf %479 : vector<2x64xf32> to vector<2x64xbf16>
    %cst_156 = arith.constant dense<0.000000e+00> : vector<2x64xf32>
    %481 = tpu.matmul %480, %474, %cst_156 {dimension_numbers = #tpu.dot_dimension_numbers<[1], [0], [0], [1], [0, 0, 1, 1], [], []>} : vector<2x64xbf16>, vector<64x64xbf16>, vector<2x64xf32> -> vector<2x64xf32>
    %482 = arith.addf %472, %481 : vector<2x64xf32>
    %c7_157 = arith.constant 7 : index
    %c0_158 = arith.constant 0 : index
    %c0_159 = arith.constant 0 : index
    %483 = vector.load %arg6[%c7_157, %c0_158, %c0_159] : memref<9x64x64xbf16, #tpu.memory_space<vmem>>, vector<1x64x64xbf16>
    %484 = vector.shape_cast %483 : vector<1x64x64xbf16> to vector<64x64xbf16>
    %485 = vector.extract_strided_slice %405 {offsets = [1, 0], sizes = [2, 64], strides = [1, 1]} : vector<4x64xf32> to vector<2x64xf32>
    %486 = arith.truncf %485 : vector<2x64xf32> to vector<2x64xbf16>
    %cst_160 = arith.constant dense<0.000000e+00> : vector<2x64xf32>
    %487 = tpu.matmul %486, %484, %cst_160 {dimension_numbers = #tpu.dot_dimension_numbers<[1], [0], [0], [1], [0, 0, 1, 1], [], []>} : vector<2x64xbf16>, vector<64x64xbf16>, vector<2x64xf32> -> vector<2x64xf32>
    %488 = arith.addf %478, %487 : vector<2x64xf32>
    %489 = vector.extract_strided_slice %410 {offsets = [1, 0], sizes = [2, 64], strides = [1, 1]} : vector<4x64xf32> to vector<2x64xf32>
    %490 = arith.truncf %489 : vector<2x64xf32> to vector<2x64xbf16>
    %cst_161 = arith.constant dense<0.000000e+00> : vector<2x64xf32>
    %491 = tpu.matmul %490, %484, %cst_161 {dimension_numbers = #tpu.dot_dimension_numbers<[1], [0], [0], [1], [0, 0, 1, 1], [], []>} : vector<2x64xbf16>, vector<64x64xbf16>, vector<2x64xf32> -> vector<2x64xf32>
    %492 = arith.addf %482, %491 : vector<2x64xf32>
    %c8_162 = arith.constant 8 : index
    %c0_163 = arith.constant 0 : index
    %c0_164 = arith.constant 0 : index
    %493 = vector.load %arg6[%c8_162, %c0_163, %c0_164] : memref<9x64x64xbf16, #tpu.memory_space<vmem>>, vector<1x64x64xbf16>
    %494 = vector.shape_cast %493 : vector<1x64x64xbf16> to vector<64x64xbf16>
    %495 = vector.extract_strided_slice %405 {offsets = [2, 0], sizes = [2, 64], strides = [1, 1]} : vector<4x64xf32> to vector<2x64xf32>
    %496 = arith.truncf %495 : vector<2x64xf32> to vector<2x64xbf16>
    %cst_165 = arith.constant dense<0.000000e+00> : vector<2x64xf32>
    %497 = tpu.matmul %496, %494, %cst_165 {dimension_numbers = #tpu.dot_dimension_numbers<[1], [0], [0], [1], [0, 0, 1, 1], [], []>} : vector<2x64xbf16>, vector<64x64xbf16>, vector<2x64xf32> -> vector<2x64xf32>
    %498 = arith.addf %488, %497 : vector<2x64xf32>
    %499 = vector.extract_strided_slice %410 {offsets = [2, 0], sizes = [2, 64], strides = [1, 1]} : vector<4x64xf32> to vector<2x64xf32>
    %500 = arith.truncf %499 : vector<2x64xf32> to vector<2x64xbf16>
    %cst_166 = arith.constant dense<0.000000e+00> : vector<2x64xf32>
    %501 = tpu.matmul %500, %494, %cst_166 {dimension_numbers = #tpu.dot_dimension_numbers<[1], [0], [0], [1], [0, 0, 1, 1], [], []>} : vector<2x64xbf16>, vector<64x64xbf16>, vector<2x64xf32> -> vector<2x64xf32>
    %502 = arith.addf %492, %501 : vector<2x64xf32>
    %c0_167 = arith.constant 0 : index
    %c0_168 = arith.constant 0 : index
    %503 = vector.load %arg7[%c0_167, %c0_168] : memref<1x64xf32, #tpu.memory_space<vmem>>, vector<1x64xf32>
    %504 = vector.broadcast %503 : vector<1x64xf32> to vector<2x64xf32>
    %505 = arith.addf %498, %504 : vector<2x64xf32>
    %cst_169 = arith.constant 0.000000e+00 : f32
    %506 = vector.broadcast %cst_169 : f32 to vector<2x64xf32>
    %507 = arith.maximumf %505, %506 : vector<2x64xf32>
    %c0_170 = arith.constant 0 : index
    %c0_171 = arith.constant 0 : index
    %508 = vector.load %arg7[%c0_170, %c0_171] : memref<1x64xf32, #tpu.memory_space<vmem>>, vector<1x64xf32>
    %509 = vector.broadcast %508 : vector<1x64xf32> to vector<2x64xf32>
    %510 = arith.addf %502, %509 : vector<2x64xf32>
    %cst_172 = arith.constant 0.000000e+00 : f32
    %511 = vector.broadcast %cst_172 : f32 to vector<2x64xf32>
    %512 = arith.maximumf %510, %511 : vector<2x64xf32>
    %cst_173 = arith.constant 0.000000e+00 : f32
    %513 = vector.broadcast %cst_173 : f32 to vector<1x512xf32>
    %514 = vector.extract_strided_slice %507 {offsets = [0, 0], sizes = [1, 64], strides = [1, 1]} : vector<2x64xf32> to vector<1x64xf32>
    %515 = arith.truncf %514 : vector<1x64xf32> to vector<1x64xbf16>
    %c0_174 = arith.constant 0 : index
    %c0_175 = arith.constant 0 : index
    %c0_176 = arith.constant 0 : index
    %516 = vector.load %arg8[%c0_174, %c0_175, %c0_176] : memref<4x64x512xbf16, #tpu.memory_space<vmem>>, vector<1x64x512xbf16>
    %517 = vector.shape_cast %516 : vector<1x64x512xbf16> to vector<64x512xbf16>
    %cst_177 = arith.constant dense<0.000000e+00> : vector<1x512xf32>
    %518 = tpu.matmul %515, %517, %cst_177 {dimension_numbers = #tpu.dot_dimension_numbers<[1], [0], [0], [1], [0, 0, 1, 1], [], []>} : vector<1x64xbf16>, vector<64x512xbf16>, vector<1x512xf32> -> vector<1x512xf32>
    %519 = arith.addf %513, %518 : vector<1x512xf32>
    %520 = vector.extract_strided_slice %507 {offsets = [1, 0], sizes = [1, 64], strides = [1, 1]} : vector<2x64xf32> to vector<1x64xf32>
    %521 = arith.truncf %520 : vector<1x64xf32> to vector<1x64xbf16>
    %c1_178 = arith.constant 1 : index
    %c0_179 = arith.constant 0 : index
    %c0_180 = arith.constant 0 : index
    %522 = vector.load %arg8[%c1_178, %c0_179, %c0_180] : memref<4x64x512xbf16, #tpu.memory_space<vmem>>, vector<1x64x512xbf16>
    %523 = vector.shape_cast %522 : vector<1x64x512xbf16> to vector<64x512xbf16>
    %cst_181 = arith.constant dense<0.000000e+00> : vector<1x512xf32>
    %524 = tpu.matmul %521, %523, %cst_181 {dimension_numbers = #tpu.dot_dimension_numbers<[1], [0], [0], [1], [0, 0, 1, 1], [], []>} : vector<1x64xbf16>, vector<64x512xbf16>, vector<1x512xf32> -> vector<1x512xf32>
    %525 = arith.addf %519, %524 : vector<1x512xf32>
    %526 = vector.extract_strided_slice %512 {offsets = [0, 0], sizes = [1, 64], strides = [1, 1]} : vector<2x64xf32> to vector<1x64xf32>
    %527 = arith.truncf %526 : vector<1x64xf32> to vector<1x64xbf16>
    %c2_182 = arith.constant 2 : index
    %c0_183 = arith.constant 0 : index
    %c0_184 = arith.constant 0 : index
    %528 = vector.load %arg8[%c2_182, %c0_183, %c0_184] : memref<4x64x512xbf16, #tpu.memory_space<vmem>>, vector<1x64x512xbf16>
    %529 = vector.shape_cast %528 : vector<1x64x512xbf16> to vector<64x512xbf16>
    %cst_185 = arith.constant dense<0.000000e+00> : vector<1x512xf32>
    %530 = tpu.matmul %527, %529, %cst_185 {dimension_numbers = #tpu.dot_dimension_numbers<[1], [0], [0], [1], [0, 0, 1, 1], [], []>} : vector<1x64xbf16>, vector<64x512xbf16>, vector<1x512xf32> -> vector<1x512xf32>
    %531 = arith.addf %525, %530 : vector<1x512xf32>
    %532 = vector.extract_strided_slice %512 {offsets = [1, 0], sizes = [1, 64], strides = [1, 1]} : vector<2x64xf32> to vector<1x64xf32>
    %533 = arith.truncf %532 : vector<1x64xf32> to vector<1x64xbf16>
    %c3_186 = arith.constant 3 : index
    %c0_187 = arith.constant 0 : index
    %c0_188 = arith.constant 0 : index
    %534 = vector.load %arg8[%c3_186, %c0_187, %c0_188] : memref<4x64x512xbf16, #tpu.memory_space<vmem>>, vector<1x64x512xbf16>
    %535 = vector.shape_cast %534 : vector<1x64x512xbf16> to vector<64x512xbf16>
    %cst_189 = arith.constant dense<0.000000e+00> : vector<1x512xf32>
    %536 = tpu.matmul %533, %535, %cst_189 {dimension_numbers = #tpu.dot_dimension_numbers<[1], [0], [0], [1], [0, 0, 1, 1], [], []>} : vector<1x64xbf16>, vector<64x512xbf16>, vector<1x512xf32> -> vector<1x512xf32>
    %537 = arith.addf %531, %536 : vector<1x512xf32>
    %c0_190 = arith.constant 0 : index
    %c0_191 = arith.constant 0 : index
    %538 = vector.load %arg9[%c0_190, %c0_191] : memref<1x512xf32, #tpu.memory_space<vmem>>, vector<1x512xf32>
    %539 = arith.addf %537, %538 : vector<1x512xf32>
    %cst_192 = arith.constant 0.000000e+00 : f32
    %540 = vector.broadcast %cst_192 : f32 to vector<1x512xf32>
    %541 = arith.maximumf %539, %540 : vector<1x512xf32>
    %542 = arith.truncf %541 : vector<1x512xf32> to vector<1x512xbf16>
    %c0_193 = arith.constant 0 : index
    %c0_194 = arith.constant 0 : index
    %543 = vector.load %arg10[%c0_193, %c0_194] : memref<512x2xbf16, #tpu.memory_space<vmem>>, vector<512x2xbf16>
    %cst_195 = arith.constant dense<0.000000e+00> : vector<1x2xf32>
    %544 = tpu.matmul %542, %543, %cst_195 {dimension_numbers = #tpu.dot_dimension_numbers<[1], [0], [0], [1], [0, 0, 1, 1], [], []>} : vector<1x512xbf16>, vector<512x2xbf16>, vector<1x2xf32> -> vector<1x2xf32>
    %c0_196 = arith.constant 0 : index
    %c0_197 = arith.constant 0 : index
    %545 = vector.load %arg11[%c0_196, %c0_197] : memref<1x2xf32, #tpu.memory_space<vmem>>, vector<1x2xf32>
    %546 = arith.addf %544, %545 : vector<1x2xf32>
    %c0_198 = arith.constant 0 : index
    %c0_199 = arith.constant 0 : index
    %c0_200 = arith.constant 0 : index
    %547 = vector.load %arg12[%c0_198, %c0_199, %c0_200] : memref<1x1x2xf32, #tpu.memory_space<vmem>>, vector<1x1x2xf32>
    %548 = vector.shape_cast %547 : vector<1x1x2xf32> to vector<1x2xf32>
    %549 = vector.shape_cast %546 : vector<1x2xf32> to vector<1x1x2xf32>
    tpu.vector_store %arg12[%c0_198, %c0_199, %c0_200], %549 {strides = array<i32>} : memref<1x1x2xf32, #tpu.memory_space<vmem>>, vector<1x1x2xf32>,
    return
  }
  func.func @transform_0(%arg0: i32) -> (i32, i32, i32) {
    %c0_i32 = arith.constant 0 : i32
    %c0_i32_0 = arith.constant 0 : i32
    %c0_i32_1 = arith.constant 0 : i32
    return %arg0, %c0_i32, %c0_i32_0 : i32, i32, i32
  }
  func.func @transform_1(%arg0: i32) -> (i32, i32) {
    %c0_i32 = arith.constant 0 : i32
    %c0_i32_0 = arith.constant 0 : i32
    %c0_i32_1 = arith.constant 0 : i32
    return %c0_i32, %c0_i32_0 : i32, i32
  }
  func.func @transform_2(%arg0: i32) -> (i32, i32) {
    %c0_i32 = arith.constant 0 : i32
    %c0_i32_0 = arith.constant 0 : i32
    %c0_i32_1 = arith.constant 0 : i32
    return %c0_i32, %c0_i32_0 : i32, i32
  }
  func.func @transform_3(%arg0: i32) -> (i32, i32, i32) {
    %c0_i32 = arith.constant 0 : i32
    %c0_i32_0 = arith.constant 0 : i32
    %c0_i32_1 = arith.constant 0 : i32
    %c0_i32_2 = arith.constant 0 : i32
    return %c0_i32, %c0_i32_0, %c0_i32_1 : i32, i32, i32
  }
  func.func @transform_4(%arg0: i32) -> (i32, i32) {
    %c0_i32 = arith.constant 0 : i32
    %c0_i32_0 = arith.constant 0 : i32
    %c0_i32_1 = arith.constant 0 : i32
    return %c0_i32, %c0_i32_0 : i32, i32
  }
  func.func @transform_5(%arg0: i32) -> (i32, i32, i32) {
    %c0_i32 = arith.constant 0 : i32
    %c0_i32_0 = arith.constant 0 : i32
    %c0_i32_1 = arith.constant 0 : i32
    %c0_i32_2 = arith.constant 0 : i32
    return %c0_i32, %c0_i32_0, %c0_i32_1 : i32, i32, i32
  }
  func.func @transform_6(%arg0: i32) -> (i32, i32) {
    %c0_i32 = arith.constant 0 : i32
    %c0_i32_0 = arith.constant 0 : i32
    %c0_i32_1 = arith.constant 0 : i32
    return %c0_i32, %c0_i32_0 : i32, i32
  }
  func.func @transform_7(%arg0: i32) -> (i32, i32, i32) {
    %c0_i32 = arith.constant 0 : i32
    %c0_i32_0 = arith.constant 0 : i32
    %c0_i32_1 = arith.constant 0 : i32
    %c0_i32_2 = arith.constant 0 : i32
    return %c0_i32, %c0_i32_0, %c0_i32_1 : i32, i32, i32
  }
  func.func @transform_8(%arg0: i32) -> (i32, i32) {
    %c0_i32 = arith.constant 0 : i32
    %c0_i32_0 = arith.constant 0 : i32
    %c0_i32_1 = arith.constant 0 : i32
    return %c0_i32, %c0_i32_0 : i32, i32
  }
  func.func @transform_9(%arg0: i32) -> (i32, i32) {
    %c0_i32 = arith.constant 0 : i32
    %c0_i32_0 = arith.constant 0 : i32
    %c0_i32_1 = arith.constant 0 : i32
    return %c0_i32, %c0_i32_0 : i32, i32
  }
  func.func @transform_10(%arg0: i32) -> (i32, i32) {
    %c0_i32 = arith.constant 0 : i32
    %c0_i32_0 = arith.constant 0 : i32
    %c0_i32_1 = arith.constant 0 : i32
    return %c0_i32, %c0_i32_0 : i32, i32
  }
  func.func @transform_11(%arg0: i32) -> (i32, i32, i32) {
    %c0_i32 = arith.constant 0 : i32
    %c0_i32_0 = arith.constant 0 : i32
    %c0_i32_1 = arith.constant 0 : i32
    return %arg0, %c0_i32, %c0_i32_0 : i32, i32, i32
  }
}

</mosaic_0001>

<llo_original>
// kernel: deep_q_forward.1
$region0: #{deep_q_forward.1}
  #allocation0 [shape = 'u32[]', space=smem, size = 0x4, offset = 0x4, fixed_abs, tag = 'smem constant byte address 0x4 - core index']
  #allocation1 [shape = 'u32[144,128]{1,0:T(1,128)}', space=vmem, size = 0x12000, scoped, tag = 'internal scratch']
  %s0 = inlined_call_operand.vmem [shape: bf16[2,400,64], index: 0, kind: input, shape index: {}]
  %s1 = inlined_call_operand.vmem [shape: bf16[64,32], index: 1, kind: input, shape index: {}]
  %s2 = inlined_call_operand.vmem [shape: f32[1,32], index: 2, kind: input, shape index: {}]
  %s3 = inlined_call_operand.vmem [shape: bf16[16,32,64], index: 3, kind: input, shape index: {}]
  %s4 = inlined_call_operand.vmem [shape: f32[1,64], index: 4, kind: input, shape index: {}]
  %s5 = inlined_call_operand.vmem [shape: bf16[9,64,64], index: 5, kind: input, shape index: {}]
  %s6 = inlined_call_operand.vmem [shape: f32[1,64], index: 6, kind: input, shape index: {}]
  %s7 = inlined_call_operand.vmem [shape: bf16[4,64,512], index: 7, kind: input, shape index: {}]
  %s8 = inlined_call_operand.vmem [shape: f32[1,512], index: 8, kind: input, shape index: {}]
  %s9 = inlined_call_operand.vmem [shape: bf16[512,2], index: 9, kind: input, shape index: {}]
  %s10 = inlined_call_operand.vmem [shape: f32[1,2], index: 10, kind: input, shape index: {}]
  %s11 = inlined_call_operand.hbm [shape: f32[2,1,2], index: 11, kind: output, shape index: {}]
  %s12 = sld [smem:[#allocation0]]
  $region77: #{deep_q_forward.1} parent=0
    _
  %s14 = ssub.s32 1, %s12
  %s15 = scalar_select 0, %s14, %s12
  $region1: #{deep_q_forward.1} parent=0
    #allocation2 [shape = 'u8[1024]{0}', space=vmem, size = 0x400, scoped, tag = 'output window, operand 0']
    #allocation3 [shape = 's32[2]{0}', space=sflag, size = 0x8, scoped, tag = 'scoped memory for deep_q_forward.1']
    %16 = vsyncpa [#allocation3], 0
    %s17 = scalar_lea.sflag [#allocation3], 1
    %18 = vsyncpa %s17, 0
    loop: start=0, step=1, limit=4
    $region2: #{deep_q_forward.1} parent=1 // loop_pre_header
      _
    $region3: #{deep_q_forward.1} parent=1 // loop_header
      %s20 = sphi 0, %s24
      %p21 = scmp.ge.s32.totalorder %s20, 4
      %s30 = sphi 0, %s32
      %s33 = sphi 0, %s30
      %s34 = sphi 0, %s33
      %s50 = sphi 0, %s34
      %s54 = sphi 0, %s54
      %s56 = sphi 0, %s54
      %s57 = sphi 0, %s56
      %s71 = sphi 0, %s57
      %s75 = sphi 0, %s75
      %s77 = sphi 0, %s75
      %s78 = sphi 0, %s77
      %s92 = sphi 0, %s78
      %s96 = sphi 0, %s96
      %s98 = sphi 0, %s96
      %s99 = sphi 0, %s98
      %s113 = sphi 0, %s99
      %s117 = sphi 0, %s117
      %s119 = sphi 0, %s117
      %s120 = sphi 0, %s119
      %s134 = sphi 0, %s120
      %s138 = sphi 0, %s138
      %s140 = sphi 0, %s138
      %s141 = sphi 0, %s140
      %s155 = sphi 0, %s141
      %s159 = sphi 0, %s159
      %s161 = sphi 0, %s159
      %s162 = sphi 0, %s161
      %s176 = sphi 0, %s162
      %s180 = sphi 0, %s180
      %s182 = sphi 0, %s180
      %s183 = sphi 0, %s182
      %s197 = sphi 0, %s183
      %s201 = sphi 0, %s201
      %s203 = sphi 0, %s201
      %s204 = sphi 0, %s203
      %s218 = sphi 0, %s204
      %s222 = sphi 0, %s222
      %s224 = sphi 0, %s222
      %s225 = sphi 0, %s224
      %s239 = sphi 0, %s225
      %s243 = sphi 0, %s243
      %s245 = sphi 0, %s243
      %s246 = sphi 0, %s245
      %s260 = sphi 0, %s246
      %s266 = sphi 0, %s268
      %s269 = sphi 0, %s266
      %s270 = sphi 0, %s269
      %s286 = sphi 0, %s270
    $region4: #{deep_q_forward.1} parent=1 // loop_header_branch
      %23 = sbr.rel (%p21) target = $region8
    $region5: #{deep_q_forward.1} parent=1 // loop_body
      %s25 = ssub.s32 %s20, 1
      %s26 = ssub.s32 %s20, 2
      %s27 = sadd.s32 %s20, 1
      %s28 = ssub.s32 %s20, %s27
      %p29 = scmp.eq.s32.totalorder %s28, 0
      %s31 = sadd.s32 %s30, 1
      %s32 = scalar_select %p29, %s30, %s31
      %p35 = pneg %p29
      %p36 = scmp.eq.s32.totalorder %s20, 1
      %p37 = por %p35, %p36
      %p38 = scmp.ne.s32.totalorder %s30, %s33
      %p39 = scmp.eq.s32.totalorder %s20, 0
      %p40 = por %p38, %p39
      %p41 = scmp.ne.s32.totalorder %s30, %s33
      %p42 = scmp.eq.s32.totalorder %s25, 1
      %p43 = por %p41, %p42
      %p44 = scmp.ne.s32.totalorder %s33, %s34
      %p45 = scmp.eq.s32.totalorder %s25, 0
      %p46 = por %p44, %p45
      %p47 = scmp.ne.s32.totalorder %s33, %s34
      %p48 = scmp.eq.s32.totalorder %s26, 1
      %p49 = por %p47, %p48
      %p51 = scmp.ne.s32.totalorder %s34, %s50
      %p52 = scmp.eq.s32.totalorder %s26, 0
      %p53 = por %p51, %p52
      %s55 = sadd.s32 %s54, 1
      %p58 = scmp.eq.s32.totalorder %s20, 1
      %p59 = scmp.ne.s32.totalorder %s54, %s56
      %p60 = scmp.eq.s32.totalorder %s20, 0
      %p61 = por %p59, %p60
      %p62 = scmp.ne.s32.totalorder %s54, %s56
      %p63 = scmp.eq.s32.totalorder %s25, 1
      %p64 = por %p62, %p63
      %p65 = scmp.ne.s32.totalorder %s56, %s57
      %p66 = scmp.eq.s32.totalorder %s25, 0
      %p67 = por %p65, %p66
      %p68 = scmp.ne.s32.totalorder %s56, %s57
      %p69 = scmp.eq.s32.totalorder %s26, 1
      %p70 = por %p68, %p69
      %p72 = scmp.ne.s32.totalorder %s57, %s71
      %p73 = scmp.eq.s32.totalorder %s26, 0
      %p74 = por %p72, %p73
      %s76 = sadd.s32 %s75, 1
      %p79 = scmp.eq.s32.totalorder %s20, 1
      %p80 = scmp.ne.s32.totalorder %s75, %s77
      %p81 = scmp.eq.s32.totalorder %s20, 0
      %p82 = por %p80, %p81
      %p83 = scmp.ne.s32.totalorder %s75, %s77
      %p84 = scmp.eq.s32.totalorder %s25, 1
      %p85 = por %p83, %p84
      %p86 = scmp.ne.s32.totalorder %s77, %s78
      %p87 = scmp.eq.s32.totalorder %s25, 0
      %p88 = por %p86, %p87
      %p89 = scmp.ne.s32.totalorder %s77, %s78
      %p90 = scmp.eq.s32.totalorder %s26, 1
      %p91 = por %p89, %p90
      %p93 = scmp.ne.s32.totalorder %s78, %s92
      %p94 = scmp.eq.s32.totalorder %s26, 0
      %p95 = por %p93, %p94
      %s97 = sadd.s32 %s96, 1
      %p100 = scmp.eq.s32.totalorder %s20, 1
      %p101 = scmp.ne.s32.totalorder %s96, %s98
      %p102 = scmp.eq.s32.totalorder %s20, 0
      %p103 = por %p101, %p102
      %p104 = scmp.ne.s32.totalorder %s96, %s98
      %p105 = scmp.eq.s32.totalorder %s25, 1
      %p106 = por %p104, %p105
      %p107 = scmp.ne.s32.totalorder %s98, %s99
      %p108 = scmp.eq.s32.totalorder %s25, 0
      %p109 = por %p107, %p108
      %p110 = scmp.ne.s32.totalorder %s98, %s99
      %p111 = scmp.eq.s32.totalorder %s26, 1
      %p112 = por %p110, %p111
      %p114 = scmp.ne.s32.totalorder %s99, %s113
      %p115 = scmp.eq.s32.totalorder %s26, 0
      %p116 = por %p114, %p115
      %s118 = sadd.s32 %s117, 1
      %p121 = scmp.eq.s32.totalorder %s20, 1
      %p122 = scmp.ne.s32.totalorder %s117, %s119
      %p123 = scmp.eq.s32.totalorder %s20, 0
      %p124 = por %p122, %p123
      %p125 = scmp.ne.s32.totalorder %s117, %s119
      %p126 = scmp.eq.s32.totalorder %s25, 1
      %p127 = por %p125, %p126
      %p128 = scmp.ne.s32.totalorder %s119, %s120
      %p129 = scmp.eq.s32.totalorder %s25, 0
      %p130 = por %p128, %p129
      %p131 = scmp.ne.s32.totalorder %s119, %s120
      %p132 = scmp.eq.s32.totalorder %s26, 1
      %p133 = por %p131, %p132
      %p135 = scmp.ne.s32.totalorder %s120, %s134
      %p136 = scmp.eq.s32.totalorder %s26, 0
      %p137 = por %p135, %p136
      %s139 = sadd.s32 %s138, 1
      %p142 = scmp.eq.s32.totalorder %s20, 1
      %p143 = scmp.ne.s32.totalorder %s138, %s140
      %p144 = scmp.eq.s32.totalorder %s20, 0
      %p145 = por %p143, %p144
      %p146 = scmp.ne.s32.totalorder %s138, %s140
      %p147 = scmp.eq.s32.totalorder %s25, 1
      %p148 = por %p146, %p147
      %p149 = scmp.ne.s32.totalorder %s140, %s141
      %p150 = scmp.eq.s32.totalorder %s25, 0
      %p151 = por %p149, %p150
      %p152 = scmp.ne.s32.totalorder %s140, %s141
      %p153 = scmp.eq.s32.totalorder %s26, 1
      %p154 = por %p152, %p153
      %p156 = scmp.ne.s32.totalorder %s141, %s155
      %p157 = scmp.eq.s32.totalorder %s26, 0
      %p158 = por %p156, %p157
      %s160 = sadd.s32 %s159, 1
      %p163 = scmp.eq.s32.totalorder %s20, 1
      %p164 = scmp.ne.s32.totalorder %s159, %s161
      %p165 = scmp.eq.s32.totalorder %s20, 0
      %p166 = por %p164, %p165
      %p167 = scmp.ne.s32.totalorder %s159, %s161
      %p168 = scmp.eq.s32.totalorder %s25, 1
      %p169 = por %p167, %p168
      %p170 = scmp.ne.s32.totalorder %s161, %s162
      %p171 = scmp.eq.s32.totalorder %s25, 0
      %p172 = por %p170, %p171
      %p173 = scmp.ne.s32.totalorder %s161, %s162
      %p174 = scmp.eq.s32.totalorder %s26, 1
      %p175 = por %p173, %p174
      %p177 = scmp.ne.s32.totalorder %s162, %s176
      %p178 = scmp.eq.s32.totalorder %s26, 0
      %p179 = por %p177, %p178
      %s181 = sadd.s32 %s180, 1
      %p184 = scmp.eq.s32.totalorder %s20, 1
      %p185 = scmp.ne.s32.totalorder %s180, %s182
      %p186 = scmp.eq.s32.totalorder %s20, 0
      %p187 = por %p185, %p186
      %p188 = scmp.ne.s32.totalorder %s180, %s182
      %p189 = scmp.eq.s32.totalorder %s25, 1
      %p190 = por %p188, %p189
      %p191 = scmp.ne.s32.totalorder %s182, %s183
      %p192 = scmp.eq.s32.totalorder %s25, 0
      %p193 = por %p191, %p192
      %p194 = scmp.ne.s32.totalorder %s182, %s183
      %p195 = scmp.eq.s32.totalorder %s26, 1
      %p196 = por %p194, %p195
      %p198 = scmp.ne.s32.totalorder %s183, %s197
      %p199 = scmp.eq.s32.totalorder %s26, 0
      %p200 = por %p198, %p199
      %s202 = sadd.s32 %s201, 1
      %p205 = scmp.eq.s32.totalorder %s20, 1
      %p206 = scmp.ne.s32.totalorder %s201, %s203
      %p207 = scmp.eq.s32.totalorder %s20, 0
      %p208 = por %p206, %p207
      %p209 = scmp.ne.s32.totalorder %s201, %s203
      %p210 = scmp.eq.s32.totalorder %s25, 1
      %p211 = por %p209, %p210
      %p212 = scmp.ne.s32.totalorder %s203, %s204
      %p213 = scmp.eq.s32.totalorder %s25, 0
      %p214 = por %p212, %p213
      %p215 = scmp.ne.s32.totalorder %s203, %s204
      %p216 = scmp.eq.s32.totalorder %s26, 1
      %p217 = por %p215, %p216
      %p219 = scmp.ne.s32.totalorder %s204, %s218
      %p220 = scmp.eq.s32.totalorder %s26, 0
      %p221 = por %p219, %p220
      %s223 = sadd.s32 %s222, 1
      %p226 = scmp.eq.s32.totalorder %s20, 1
      %p227 = scmp.ne.s32.totalorder %s222, %s224
      %p228 = scmp.eq.s32.totalorder %s20, 0
      %p229 = por %p227, %p228
      %p230 = scmp.ne.s32.totalorder %s222, %s224
      %p231 = scmp.eq.s32.totalorder %s25, 1
      %p232 = por %p230, %p231
      %p233 = scmp.ne.s32.totalorder %s224, %s225
      %p234 = scmp.eq.s32.totalorder %s25, 0
      %p235 = por %p233, %p234
      %p236 = scmp.ne.s32.totalorder %s224, %s225
      %p237 = scmp.eq.s32.totalorder %s26, 1
      %p238 = por %p236, %p237
      %p240 = scmp.ne.s32.totalorder %s225, %s239
      %p241 = scmp.eq.s32.totalorder %s26, 0
      %p242 = por %p240, %p241
      %s244 = sadd.s32 %s243, 1
      %p247 = scmp.eq.s32.totalorder %s20, 1
      %p248 = scmp.ne.s32.totalorder %s243, %s245
      %p249 = scmp.eq.s32.totalorder %s20, 0
      %p250 = por %p248, %p249
      %p251 = scmp.ne.s32.totalorder %s243, %s245
      %p252 = scmp.eq.s32.totalorder %s25, 1
      %p253 = por %p251, %p252
      %p254 = scmp.ne.s32.totalorder %s245, %s246
      %p255 = scmp.eq.s32.totalorder %s25, 0
      %p256 = por %p254, %p255
      %p257 = scmp.ne.s32.totalorder %s245, %s246
      %p258 = scmp.eq.s32.totalorder %s26, 1
      %p259 = por %p257, %p258
      %p261 = scmp.ne.s32.totalorder %s246, %s260
      %p262 = scmp.eq.s32.totalorder %s26, 0
      %p263 = por %p261, %p262
      %s264 = ssub.s32 %s20, %s27
      %p265 = scmp.eq.s32.totalorder %s264, 0
      %s267 = sadd.s32 %s266, 1
      %s268 = scalar_select %p265, %s266, %s267
      %p271 = pneg %p265
      %p272 = scmp.eq.s32.totalorder %s20, 1
      %p273 = por %p271, %p272
      %p274 = scmp.ne.s32.totalorder %s266, %s269
      %p275 = scmp.eq.s32.totalorder %s20, 0
      %p276 = por %p274, %p275
      %p277 = scmp.ne.s32.totalorder %s266, %s269
      %p278 = scmp.eq.s32.totalorder %s25, 1
      %p279 = por %p277, %p278
      %p280 = scmp.ne.s32.totalorder %s269, %s270
      %p281 = scmp.eq.s32.totalorder %s25, 0
      %p282 = por %p280, %p281
      %p283 = scmp.ne.s32.totalorder %s269, %s270
      %p284 = scmp.eq.s32.totalorder %s26, 1
      %p285 = por %p283, %p284
      %p287 = scmp.ne.s32.totalorder %s270, %s286
      %p288 = scmp.eq.s32.totalorder %s26, 0
      %p289 = por %p287, %p288
      %p290 = scmp.le.s32.totalorder 1, %s20
      %p291 = scmp.lt.s32.totalorder %s20, 3
      %p292 = pnand %p290, %p291
      %p293 = pneg %p292
      // Predicated region
      $region9: #{deep_q_forward.1} parent=5 // pred_check
        _
      $region10: #{deep_q_forward.1} parent=5 // pred_check_branch
        %295 = sbr.rel (%p292) target = $region12
      $region11: #{deep_q_forward.1} parent=5 // pred_region
        %s296 = ssub.s32 %s20, 1
        // Predicated region
        $region13: #{deep_q_forward.1} parent=11 // pred_check
          %p297 = pneg %p67
        $region14: #{deep_q_forward.1} parent=11 // pred_check_branch
          %299 = sbr.rel (%p297) target = $region16
        $region15: #{deep_q_forward.1} parent=11 // pred_region
          _
        $region16: #{deep_q_forward.1} parent=11 // pred_fallthru
          _
        // Predicated region
        $region17: #{deep_q_forward.1} parent=11 // pred_check
          %p300 = pneg %p88
        $region18: #{deep_q_forward.1} parent=11 // pred_check_branch
          %302 = sbr.rel (%p300) target = $region20
        $region19: #{deep_q_forward.1} parent=11 // pred_region
          _
        $region20: #{deep_q_forward.1} parent=11 // pred_fallthru
          _
        // Predicated region
        $region21: #{deep_q_forward.1} parent=11 // pred_check
          %p303 = pneg %p109
        $region22: #{deep_q_forward.1} parent=11 // pred_check_branch
          %305 = sbr.rel (%p303) target = $region24
        $region23: #{deep_q_forward.1} parent=11 // pred_region
          _
        $region24: #{deep_q_forward.1} parent=11 // pred_fallthru
          _
        // Predicated region
        $region25: #{deep_q_forward.1} parent=11 // pred_check
          %p306 = pneg %p130
        $region26: #{deep_q_forward.1} parent=11 // pred_check_branch
          %308 = sbr.rel (%p306) target = $region28
        $region27: #{deep_q_forward.1} parent=11 // pred_region
          _
        $region28: #{deep_q_forward.1} parent=11 // pred_fallthru
          _
        // Predicated region
        $region29: #{deep_q_forward.1} parent=11 // pred_check
          %p309 = pneg %p151
        $region30: #{deep_q_forward.1} parent=11 // pred_check_branch
          %311 = sbr.rel (%p309) target = $region32
        $region31: #{deep_q_forward.1} parent=11 // pred_region
          _
        $region32: #{deep_q_forward.1} parent=11 // pred_fallthru
          _
        // Predicated region
        $region33: #{deep_q_forward.1} parent=11 // pred_check
          %p312 = pneg %p172
        $region34: #{deep_q_forward.1} parent=11 // pred_check_branch
          %314 = sbr.rel (%p312) target = $region36
        $region35: #{deep_q_forward.1} parent=11 // pred_region
          _
        $region36: #{deep_q_forward.1} parent=11 // pred_fallthru
          _
        // Predicated region
        $region37: #{deep_q_forward.1} parent=11 // pred_check
          %p315 = pneg %p193
        $region38: #{deep_q_forward.1} parent=11 // pred_check_branch
          %317 = sbr.rel (%p315) target = $region40
        $region39: #{deep_q_forward.1} parent=11 // pred_region
          _
        $region40: #{deep_q_forward.1} parent=11 // pred_fallthru
          _
        // Predicated region
        $region41: #{deep_q_forward.1} parent=11 // pred_check
          %p318 = pneg %p214
        $region42: #{deep_q_forward.1} parent=11 // pred_check_branch
          %320 = sbr.rel (%p318) target = $region44
        $region43: #{deep_q_forward.1} parent=11 // pred_region
          _
        $region44: #{deep_q_forward.1} parent=11 // pred_fallthru
          _
        // Predicated region
        $region45: #{deep_q_forward.1} parent=11 // pred_check
          %p321 = pneg %p235
        $region46: #{deep_q_forward.1} parent=11 // pred_check_branch
          %323 = sbr.rel (%p321) target = $region48
        $region47: #{deep_q_forward.1} parent=11 // pred_region
          _
        $region48: #{deep_q_forward.1} parent=11 // pred_fallthru
          _
        // Predicated region
        $region49: #{deep_q_forward.1} parent=11 // pred_check
          %p324 = pneg %p256
        $region50: #{deep_q_forward.1} parent=11 // pred_check_branch
          %326 = sbr.rel (%p324) target = $region52
        $region51: #{deep_q_forward.1} parent=11 // pred_region
          _
        $region52: #{deep_q_forward.1} parent=11 // pred_fallthru
          _
      $region12: #{deep_q_forward.1} parent=5 // pred_fallthru
        _
      %p327 = scmp.lt.s32.totalorder %s20, 2
      // Predicated region
      $region53: #{deep_q_forward.1} parent=5 // pred_check
        %p328 = pneg %p327
      $region54: #{deep_q_forward.1} parent=5 // pred_check_branch
        %330 = sbr.rel (%p328) target = $region56
      $region55: #{deep_q_forward.1} parent=5 // pred_region
        // Predicated region
        $region57: #{deep_q_forward.1} parent=55 // pred_check
          %p331 = pneg %p40
        $region58: #{deep_q_forward.1} parent=55 // pred_check_branch
          %333 = sbr.rel (%p331) target = $region60
        $region59: #{deep_q_forward.1} parent=55 // pred_region
          %p334 = scmp.lt.s32.totalorder %s20, 1
          %s335 = scalar_select %p334, %s20, 1
          %s336 = smul.addr %s335, 50
          %s337 = smul.addr %s336, 4
          %s338 = scalar_lea.vmem %s0, %s337
        $region60: #{deep_q_forward.1} parent=55 // pred_fallthru
          _
      $region56: #{deep_q_forward.1} parent=5 // pred_fallthru
        _
      %p339 = scmp.le.s32.totalorder 1, %s20
      %p340 = scmp.lt.s32.totalorder %s20, 3
      %p341 = pnand %p339, %p340
      %p342 = pneg %p341
      // Predicated region
      $region61: #{deep_q_forward.1} parent=5 // pred_check
        _
      $region62: #{deep_q_forward.1} parent=5 // pred_check_branch
        %344 = sbr.rel (%p341) target = $region64
      $region63: #{deep_q_forward.1} parent=5 // pred_region
        %s345 = ssub.s32 %s20, 1
        %p346 = scmp.lt.s32.totalorder %s25, 1
        %s347 = scalar_select %p346, %s25, 1
        %s348 = smul.addr %s347, 50
        %s349 = smul.addr %s348, 4
        %s350 = scalar_lea.vmem %s0, %s349
        %p351 = pneg %p46
        %p352 = pneg %p43
        %p353 = pneg %p67
        %p354 = pneg %p64
        %p355 = pneg %p88
        %p356 = pneg %p85
        %p357 = pneg %p109
        %p358 = pneg %p106
        %p359 = pneg %p130
        %p360 = pneg %p127
        %p361 = pneg %p151
        %p362 = pneg %p148
        %p363 = pneg %p172
        %p364 = pneg %p169
        %p365 = pneg %p193
        %p366 = pneg %p190
        %p367 = pneg %p214
        %p368 = pneg %p211
        %p369 = pneg %p235
        %p370 = pneg %p232
        %p371 = pneg %p256
        %p372 = pneg %p253
        %p373 = pneg %p282
        %p374 = pneg %p279
        %s375 = sand.u32 %s269, 1
        %s376 = scalar_lea.sflag [#allocation3], %s375
        %s377 = sand.u32 %s269, 1
        %s378 = scalar_lea.vmem [#allocation2], %s377
        %p379 = scmp.lt.s32.totalorder %s25, 1
        %s380 = scalar_select %p379, %s25, 1
        %s381 = smul.addr %s380, 50
        %s382 = smul.addr %s381, 4
        %s383 = scalar_lea.vmem %s0, %s382
        %v385 = vld [vmem:[%s383] sm:$0xf]
        %v386 = vld [vmem:[%s383 + $0x4] sm:$0xf]
        %v387 = vld [vmem:[%s383 + $0x8] sm:$0xf]
        %v388 = vld [vmem:[%s383 + $0xc] sm:$0xf]
        %v389 = vld [vmem:[%s383 + $0x10] sm:$0xf]
        %v390 = vld [vmem:[%s383 + $0x14] sm:$0xf]
        %v391 = vld [vmem:[%s383 + $0x18] sm:$0xf]
        %v392 = vld [vmem:[%s383 + $0x1c] sm:$0xf]
        %v393 = vld [vmem:[%s383 + $0x20] sm:$0xf]
        %v394 = vld [vmem:[%s383 + $0x24] sm:$0xf]
        %v395 = vld [vmem:[%s383 + $0x28] sm:$0xf]
        %v396 = vld [vmem:[%s383 + $0x2c] sm:$0xf]
        %v397 = vld [vmem:[%s383 + $0x30] sm:$0xf]
        %v398 = vld [vmem:[%s383 + $0x34] sm:$0xf]
        %v399 = vld [vmem:[%s383 + $0x38] sm:$0xf]
        %v400 = vld [vmem:[%s383 + $0x3c] sm:$0xf]
        %v401 = vld [vmem:[%s383 + $0x40] sm:$0xf]
        %v402 = vld [vmem:[%s383 + $0x44] sm:$0xf]
        %v403 = vld [vmem:[%s383 + $0x48] sm:$0xf]
        %v404 = vld [vmem:[%s383 + $0x4c] sm:$0xf]
        %v405 = vld [vmem:[%s383 + $0x50] sm:$0xf]
        %v406 = vld [vmem:[%s383 + $0x54] sm:$0xf]
        %v407 = vld [vmem:[%s383 + $0x58] sm:$0xf]
        %v408 = vld [vmem:[%s383 + $0x5c] sm:$0xf]
        %v409 = vld [vmem:[%s383 + $0x60] sm:$0xf]
        %v410 = vld [vmem:[%s383 + $0x64] sm:$0xf]
        %v411 = vld [vmem:[%s383 + $0x68] sm:$0xf]
        %v412 = vld [vmem:[%s383 + $0x6c] sm:$0xf]
        %v413 = vld [vmem:[%s383 + $0x70] sm:$0xf]
        %v414 = vld [vmem:[%s383 + $0x74] sm:$0xf]
        %v415 = vld [vmem:[%s383 + $0x78] sm:$0xf]
        %v416 = vld [vmem:[%s383 + $0x7c] sm:$0xf]
        %v417 = vld [vmem:[%s383 + $0x80] sm:$0xf]
        %v418 = vld [vmem:[%s383 + $0x84] sm:$0xf]
        %v419 = vld [vmem:[%s383 + $0x88] sm:$0xf]
        %v420 = vld [vmem:[%s383 + $0x8c] sm:$0xf]
        %v421 = vld [vmem:[%s383 + $0x90] sm:$0xf]
        %v422 = vld [vmem:[%s383 + $0x94] sm:$0xf]
        %v423 = vld [vmem:[%s383 + $0x98] sm:$0xf]
        %v424 = vld [vmem:[%s383 + $0x9c] sm:$0xf]
        %v425 = vld [vmem:[%s383 + $0xa0] sm:$0xf]
        %v426 = vld [vmem:[%s383 + $0xa4] sm:$0xf]
        %v427 = vld [vmem:[%s383 + $0xa8] sm:$0xf]
        %v428 = vld [vmem:[%s383 + $0xac] sm:$0xf]
        %v429 = vld [vmem:[%s383 + $0xb0] sm:$0xf]
        %v430 = vld [vmem:[%s383 + $0xb4] sm:$0xf]
        %v431 = vld [vmem:[%s383 + $0xb8] sm:$0xf]
        %v432 = vld [vmem:[%s383 + $0xbc] sm:$0xf]
        %v433 = vld [vmem:[%s383 + $0xc0] sm:$0xf]
        %v434 = vld [vmem:[%s383 + $0xc4] sm:$0xf]
        %v435 = vld [vmem:[%s1] sm:$0xf]
        %v436 = vld [vmem:[%s1 + $0x4] sm:$0xf]
        %v437 = vld [vmem:[%s1 + $0x8] sm:$0xf]
        %v438 = vld [vmem:[%s1 + $0xc] sm:$0xf]
        %v439 = vld [vmem:[%s1 + $0x10] sm:$0xf]
        %v440 = vld [vmem:[%s1 + $0x14] sm:$0xf]
        %v441 = vld [vmem:[%s1 + $0x18] sm:$0xf]
        %v442 = vld [vmem:[%s1 + $0x1c] sm:$0xf]
        %v443 = vld [vmem:[%s2] sm:$0x1]
        %v445 = vlaneseq
        %v446 = vshrl.u32 %v445, 7
        %v447 = vsub.s32 0, %v446
        %v448 = vrot.slane %v443, %v447
        %v500 = vunpack.c.l.b16 %v385
        %v501 = vunpack.c.l.b16 %v386
        %v502 = vunpack.c.l.b16 %v387
        %v503 = vunpack.c.l.b16 %v388
        %v504 = vunpack.c.l.b16 %v389
        %v505 = vunpack.c.l.b16 %v390
        %v506 = vunpack.c.l.b16 %v391
        %v507 = vunpack.c.l.b16 %v392
        %v508 = vunpack.c.l.b16 %v393
        %v509 = vunpack.c.l.b16 %v394
        %v510 = vunpack.c.l.b16 %v395
        %v511 = vunpack.c.l.b16 %v396
        %v512 = vunpack.c.l.b16 %v397
        %v513 = vunpack.c.l.b16 %v398
        %v514 = vunpack.c.l.b16 %v399
        %v515 = vunpack.c.l.b16 %v400
        %v516 = vunpack.c.l.b16 %v401
        %v517 = vunpack.c.l.b16 %v402
        %v518 = vunpack.c.l.b16 %v403
        %v519 = vunpack.c.l.b16 %v404
        %v520 = vunpack.c.l.b16 %v405
        %v521 = vunpack.c.l.b16 %v406
        %v522 = vunpack.c.l.b16 %v407
        %v523 = vunpack.c.l.b16 %v408
        %v524 = vunpack.c.l.b16 %v409
        %v525 = vunpack.c.l.b16 %v410
        %v526 = vunpack.c.l.b16 %v411
        %v527 = vunpack.c.l.b16 %v412
        %v528 = vunpack.c.l.b16 %v413
        %v529 = vunpack.c.l.b16 %v414
        %v530 = vunpack.c.l.b16 %v415
        %v531 = vunpack.c.l.b16 %v416
        %v532 = vunpack.c.l.b16 %v417
        %v533 = vunpack.c.l.b16 %v418
        %v534 = vunpack.c.l.b16 %v419
        %v535 = vunpack.c.l.b16 %v420
        %v536 = vunpack.c.l.b16 %v421
        %v537 = vunpack.c.l.b16 %v422
        %v538 = vunpack.c.l.b16 %v423
        %v539 = vunpack.c.l.b16 %v424
        %v540 = vunpack.c.l.b16 %v425
        %v541 = vunpack.c.l.b16 %v426
        %v542 = vunpack.c.l.b16 %v427
        %v543 = vunpack.c.l.b16 %v428
        %v544 = vunpack.c.l.b16 %v429
        %v545 = vunpack.c.l.b16 %v430
        %v546 = vunpack.c.l.b16 %v431
        %v547 = vunpack.c.l.b16 %v432
        %v548 = vunpack.c.l.b16 %v433
        %v549 = vunpack.c.l.b16 %v434
        %v550 = vpack.c.b16 %v501, %v500
        %v551 = vpack.c.b16 %v503, %v502
        %v552 = vpack.c.b16 %v505, %v504
        %v553 = vpack.c.b16 %v507, %v506
        %v554 = vpack.c.b16 %v509, %v508
        %v555 = vpack.c.b16 %v511, %v510
        %v556 = vpack.c.b16 %v513, %v512
        %v557 = vpack.c.b16 %v515, %v514
        %v558 = vpack.c.b16 %v517, %v516
        %v559 = vpack.c.b16 %v519, %v518
        %v560 = vpack.c.b16 %v521, %v520
        %v561 = vpack.c.b16 %v523, %v522
        %v562 = vpack.c.b16 %v525, %v524
        %v563 = vpack.c.b16 %v527, %v526
        %v564 = vpack.c.b16 %v529, %v528
        %v565 = vpack.c.b16 %v531, %v530
        %v566 = vpack.c.b16 %v533, %v532
        %v567 = vpack.c.b16 %v535, %v534
        %v568 = vpack.c.b16 %v537, %v536
        %v569 = vpack.c.b16 %v539, %v538
        %v570 = vpack.c.b16 %v541, %v540
        %v571 = vpack.c.b16 %v543, %v542
        %v572 = vpack.c.b16 %v545, %v544
        %v573 = vpack.c.b16 %v547, %v546
        %v574 = vpack.c.b16 %v549, %v548
        %v583 = vunpack.c.l.b16 %v435
        %v584 = vunpack.c.l.b16 %v436
        %v585 = vunpack.c.l.b16 %v437
        %v586 = vunpack.c.l.b16 %v438
        %v587 = vunpack.c.l.b16 %v439
        %v588 = vunpack.c.l.b16 %v440
        %v589 = vunpack.c.l.b16 %v441
        %v590 = vunpack.c.l.b16 %v442
        %v591 = vpack.c.b16 %v584, %v583
        %v592 = vpack.c.b16 %v586, %v585
        %v593 = vpack.c.b16 %v588, %v587
        %v594 = vpack.c.b16 %v590, %v589
        %vm599 = vcmask 523264
        %v601 = vsel %vm599, %v550, 0
        %v604 = vsel %vm599, %v551, 0
        %v607 = vsel %vm599, %v552, 0
        %v610 = vsel %vm599, %v553, 0
        %v613 = vsel %vm599, %v554, 0
        %v616 = vsel %vm599, %v555, 0
        %v619 = vsel %vm599, %v556, 0
        %v622 = vsel %vm599, %v557, 0
        %v625 = vsel %vm599, %v558, 0
        %v628 = vsel %vm599, %v559, 0
        %v631 = vsel %vm599, %v560, 0
        %v634 = vsel %vm599, %v561, 0
        %v637 = vsel %vm599, %v562, 0
        %v640 = vsel %vm599, %v563, 0
        %v643 = vsel %vm599, %v564, 0
        %v646 = vsel %vm599, %v565, 0
        %v649 = vsel %vm599, %v566, 0
        %v652 = vsel %vm599, %v567, 0
        %v655 = vsel %vm599, %v568, 0
        %v658 = vsel %vm599, %v569, 0
        %v661 = vsel %vm599, %v570, 0
        %v664 = vsel %vm599, %v571, 0
        %v667 = vsel %vm599, %v572, 0
        %v670 = vsel %vm599, %v573, 0
        %v673 = vsel %vm599, %v574, 0
        %675 = vmatprep.subr.bf16.mxu0 0
        %676 = vmatpush1.bf16.msra.mxu0 0
        %677 = vmatprep.subr.bf16.mxu0 0
        %678 = vmatpush1.bf16.msra.mxu0 0
        %679 = vmatprep.subr.bf16.mxu0 0
        %680 = vmatpush1.bf16.msra.mxu0 0
        %681 = vmatprep.subr.bf16.mxu0 0
        %682 = vmatpush1.bf16.msra.mxu0 0
        %683 = vmatprep.subr.bf16.mxu0 0
        %684 = vmatpush1.bf16.msra.mxu0 %v594
        %685 = vmatprep.subr.bf16.mxu0 0
        %686 = vmatpush1.bf16.msra.mxu0 %v593
        %687 = vmatprep.subr.bf16.mxu0 0
        %688 = vmatpush1.bf16.msra.mxu0 %v592
        %689 = vmatprep.subr.bf16.mxu0 0
        %690 = vmatpush1.bf16.msra.mxu0 %v591
        %691 = vmatprep.subr.bf16.mxu0 0
        %692 = vmatpush2.bf16.msra.mxu0 0
        %693 = vmatprep.subr.bf16.mxu0 0
        %694 = vmatpush2.bf16.msra.mxu0 0
        %695 = vmatprep.subr.bf16.mxu0 0
        %696 = vmatpush2.bf16.msra.mxu0 0
        %697 = vmatprep.subr.bf16.mxu0 0
        %698 = vmatpush2.bf16.msra.mxu0 0
        %699 = vmatprep.subr.bf16.mxu0 0
        %700 = vmatpush2.bf16.msra.mxu0 0
        %701 = vmatprep.subr.bf16.mxu0 0
        %702 = vmatpush2.bf16.msra.mxu0 0
        %703 = vmatprep.subr.bf16.mxu0 0
        %704 = vmatpush2.bf16.msra.mxu0 0
        %705 = vmatprep.subr.bf16.mxu0 0
        %706 = vmatpush2.bf16.msra.mxu0 0
        %707 = vmatprep.mubr.bf16.mxu0 0
        %708 = vmatmul.mubr.bf16.gmra.mxu0 %v601
        %v709 = vpop.f32.mrf.mxu0
        %v710 = vadd.f32 %v448, %v709
        %v711 = vpop.f32.mrf.mxu0
        %v712 = vpop.f32.mrf.mxu0
        %v713 = vadd.f32 %v448, %v712
        %v714 = vpop.f32.mrf.mxu0
        %715 = vmatprep.mubr.bf16.mxu0 0
        %716 = vmatmul.mubr.bf16.gmra.mxu0 %v604
        %v717 = vpop.f32.mrf.mxu0
        %v718 = vadd.f32 %v448, %v717
        %v719 = vpop.f32.mrf.mxu0
        %v720 = vpop.f32.mrf.mxu0
        %v721 = vadd.f32 %v448, %v720
        %v722 = vpop.f32.mrf.mxu0
        %723 = vmatprep.mubr.bf16.mxu0 0
        %724 = vmatmul.mubr.bf16.gmra.mxu0 %v607
        %v725 = vpop.f32.mrf.mxu0
        %v726 = vadd.f32 %v448, %v725
        %v727 = vpop.f32.mrf.mxu0
        %v728 = vpop.f32.mrf.mxu0
        %v729 = vadd.f32 %v448, %v728
        %v730 = vpop.f32.mrf.mxu0
        %731 = vmatprep.mubr.bf16.mxu0 0
        %732 = vmatmul.mubr.bf16.gmra.mxu0 %v610
        %v733 = vpop.f32.mrf.mxu0
        %v734 = vadd.f32 %v448, %v733
        %v735 = vpop.f32.mrf.mxu0
        %v736 = vpop.f32.mrf.mxu0
        %v737 = vadd.f32 %v448, %v736
        %v738 = vpop.f32.mrf.mxu0
        %739 = vmatprep.mubr.bf16.mxu0 0
        %740 = vmatmul.mubr.bf16.gmra.mxu0 %v613
        %v741 = vpop.f32.mrf.mxu0
        %v742 = vadd.f32 %v448, %v741
        %v743 = vpop.f32.mrf.mxu0
        %v744 = vpop.f32.mrf.mxu0
        %v745 = vadd.f32 %v448, %v744
        %v746 = vpop.f32.mrf.mxu0
        %747 = vmatprep.mubr.bf16.mxu0 0
        %748 = vmatmul.mubr.bf16.gmra.mxu0 %v616
        %v749 = vpop.f32.mrf.mxu0
        %v750 = vadd.f32 %v448, %v749
        %v751 = vpop.f32.mrf.mxu0
        %v752 = vpop.f32.mrf.mxu0
        %v753 = vadd.f32 %v448, %v752
        %v754 = vpop.f32.mrf.mxu0
        %755 = vmatprep.mubr.bf16.mxu0 0
        %756 = vmatmul.mubr.bf16.gmra.mxu0 %v619
        %v757 = vpop.f32.mrf.mxu0
        %v758 = vadd.f32 %v448, %v757
        %v759 = vpop.f32.mrf.mxu0
        %v760 = vpop.f32.mrf.mxu0
        %v761 = vadd.f32 %v448, %v760
        %v762 = vpop.f32.mrf.mxu0
        %763 = vmatprep.mubr.bf16.mxu0 0
        %764 = vmatmul.mubr.bf16.gmra.mxu0 %v622
        %v765 = vpop.f32.mrf.mxu0
        %v766 = vadd.f32 %v448, %v765
        %v767 = vpop.f32.mrf.mxu0
        %v768 = vpop.f32.mrf.mxu0
        %v769 = vadd.f32 %v448, %v768
        %v770 = vpop.f32.mrf.mxu0
        %771 = vmatprep.mubr.bf16.mxu0 0
        %772 = vmatmul.mubr.bf16.gmra.mxu0 %v625
        %v773 = vpop.f32.mrf.mxu0
        %v774 = vadd.f32 %v448, %v773
        %v775 = vpop.f32.mrf.mxu0
        %v776 = vpop.f32.mrf.mxu0
        %v777 = vadd.f32 %v448, %v776
        %v778 = vpop.f32.mrf.mxu0
        %779 = vmatprep.mubr.bf16.mxu0 0
        %780 = vmatmul.mubr.bf16.gmra.mxu0 %v628
        %v781 = vpop.f32.mrf.mxu0
        %v782 = vadd.f32 %v448, %v781
        %v783 = vpop.f32.mrf.mxu0
        %v784 = vpop.f32.mrf.mxu0
        %v785 = vadd.f32 %v448, %v784
        %v786 = vpop.f32.mrf.mxu0
        %787 = vmatprep.mubr.bf16.mxu0 0
        %788 = vmatmul.mubr.bf16.gmra.mxu0 %v631
        %v789 = vpop.f32.mrf.mxu0
        %v790 = vadd.f32 %v448, %v789
        %v791 = vpop.f32.mrf.mxu0
        %v792 = vpop.f32.mrf.mxu0
        %v793 = vadd.f32 %v448, %v792
        %v794 = vpop.f32.mrf.mxu0
        %795 = vmatprep.mubr.bf16.mxu0 0
        %796 = vmatmul.mubr.bf16.gmra.mxu0 %v634
        %v797 = vpop.f32.mrf.mxu0
        %v798 = vadd.f32 %v448, %v797
        %v799 = vpop.f32.mrf.mxu0
        %v800 = vpop.f32.mrf.mxu0
        %v801 = vadd.f32 %v448, %v800
        %v802 = vpop.f32.mrf.mxu0
        %803 = vmatprep.mubr.bf16.mxu0 0
        %804 = vmatmul.mubr.bf16.gmra.mxu0 %v637
        %v805 = vpop.f32.mrf.mxu0
        %v806 = vadd.f32 %v448, %v805
        %v807 = vpop.f32.mrf.mxu0
        %v808 = vpop.f32.mrf.mxu0
        %v809 = vadd.f32 %v448, %v808
        %v810 = vpop.f32.mrf.mxu0
        %811 = vmatprep.mubr.bf16.mxu0 0
        %812 = vmatmul.mubr.bf16.gmra.mxu0 %v640
        %v813 = vpop.f32.mrf.mxu0
        %v814 = vadd.f32 %v448, %v813
        %v815 = vpop.f32.mrf.mxu0
        %v816 = vpop.f32.mrf.mxu0
        %v817 = vadd.f32 %v448, %v816
        %v818 = vpop.f32.mrf.mxu0
        %819 = vmatprep.mubr.bf16.mxu0 0
        %820 = vmatmul.mubr.bf16.gmra.mxu0 %v643
        %v821 = vpop.f32.mrf.mxu0
        %v822 = vadd.f32 %v448, %v821
        %v823 = vpop.f32.mrf.mxu0
        %v824 = vpop.f32.mrf.mxu0
        %v825 = vadd.f32 %v448, %v824
        %v826 = vpop.f32.mrf.mxu0
        %827 = vmatprep.mubr.bf16.mxu0 0
        %828 = vmatmul.mubr.bf16.gmra.mxu0 %v646
        %v829 = vpop.f32.mrf.mxu0
        %v830 = vadd.f32 %v448, %v829
        %v831 = vpop.f32.mrf.mxu0
        %v832 = vpop.f32.mrf.mxu0
        %v833 = vadd.f32 %v448, %v832
        %v834 = vpop.f32.mrf.mxu0
        %835 = vmatprep.mubr.bf16.mxu0 0
        %836 = vmatmul.mubr.bf16.gmra.mxu0 %v649
        %v837 = vpop.f32.mrf.mxu0
        %v838 = vadd.f32 %v448, %v837
        %v839 = vpop.f32.mrf.mxu0
        %v840 = vpop.f32.mrf.mxu0
        %v841 = vadd.f32 %v448, %v840
        %v842 = vpop.f32.mrf.mxu0
        %843 = vmatprep.mubr.bf16.mxu0 0
        %844 = vmatmul.mubr.bf16.gmra.mxu0 %v652
        %v845 = vpop.f32.mrf.mxu0
        %v846 = vadd.f32 %v448, %v845
        %v847 = vpop.f32.mrf.mxu0
        %v848 = vpop.f32.mrf.mxu0
        %v849 = vadd.f32 %v448, %v848
        %v850 = vpop.f32.mrf.mxu0
        %851 = vmatprep.mubr.bf16.mxu0 0
        %852 = vmatmul.mubr.bf16.gmra.mxu0 %v655
        %v853 = vpop.f32.mrf.mxu0
        %v854 = vadd.f32 %v448, %v853
        %v855 = vpop.f32.mrf.mxu0
        %v856 = vpop.f32.mrf.mxu0
        %v857 = vadd.f32 %v448, %v856
        %v858 = vpop.f32.mrf.mxu0
        %859 = vmatprep.mubr.bf16.mxu0 0
        %860 = vmatmul.mubr.bf16.gmra.mxu0 %v658
        %v861 = vpop.f32.mrf.mxu0
        %v862 = vadd.f32 %v448, %v861
        %v863 = vpop.f32.mrf.mxu0
        %v864 = vpop.f32.mrf.mxu0
        %v865 = vadd.f32 %v448, %v864
        %v866 = vpop.f32.mrf.mxu0
        %867 = vmatprep.mubr.bf16.mxu0 0
        %868 = vmatmul.mubr.bf16.gmra.mxu0 %v661
        %v869 = vpop.f32.mrf.mxu0
        %v870 = vadd.f32 %v448, %v869
        %v871 = vpop.f32.mrf.mxu0
        %v872 = vpop.f32.mrf.mxu0
        %v873 = vadd.f32 %v448, %v872
        %v874 = vpop.f32.mrf.mxu0
        %875 = vmatprep.mubr.bf16.mxu0 0
        %876 = vmatmul.mubr.bf16.gmra.mxu0 %v664
        %v877 = vpop.f32.mrf.mxu0
        %v878 = vadd.f32 %v448, %v877
        %v879 = vpop.f32.mrf.mxu0
        %v880 = vpop.f32.mrf.mxu0
        %v881 = vadd.f32 %v448, %v880
        %v882 = vpop.f32.mrf.mxu0
        %883 = vmatprep.mubr.bf16.mxu0 0
        %884 = vmatmul.mubr.bf16.gmra.mxu0 %v667
        %v885 = vpop.f32.mrf.mxu0
        %v886 = vadd.f32 %v448, %v885
        %v887 = vpop.f32.mrf.mxu0
        %v888 = vpop.f32.mrf.mxu0
        %v889 = vadd.f32 %v448, %v888
        %v890 = vpop.f32.mrf.mxu0
        %891 = vmatprep.mubr.bf16.mxu0 0
        %892 = vmatmul.mubr.bf16.gmra.mxu0 %v670
        %v893 = vpop.f32.mrf.mxu0
        %v894 = vadd.f32 %v448, %v893
        %v895 = vpop.f32.mrf.mxu0
        %v896 = vpop.f32.mrf.mxu0
        %v897 = vadd.f32 %v448, %v896
        %v898 = vpop.f32.mrf.mxu0
        %899 = vmatprep.mubr.bf16.mxu0 0
        %900 = vmatmul.mubr.bf16.gmra.mxu0 %v673
        %v901 = vpop.f32.mrf.mxu0
        %v902 = vadd.f32 %v448, %v901
        %v903 = vpop.f32.mrf.mxu0
        %v904 = vpop.f32.mrf.mxu0
        %v905 = vadd.f32 %v448, %v904
        %v906 = vpop.f32.mrf.mxu0
        %907 = vdwg.mxu0
        %v908 = vmax.f32 %v710, 0.0
        %v909 = vmax.f32 %v713, 0.0
        %v910 = vmax.f32 %v718, 0.0
        %v911 = vmax.f32 %v721, 0.0
        %v912 = vmax.f32 %v726, 0.0
        %v913 = vmax.f32 %v729, 0.0
        %v914 = vmax.f32 %v734, 0.0
        %v915 = vmax.f32 %v737, 0.0
        %v916 = vmax.f32 %v742, 0.0
        %v917 = vmax.f32 %v745, 0.0
        %v918 = vmax.f32 %v750, 0.0
        %v919 = vmax.f32 %v753, 0.0
        %v920 = vmax.f32 %v758, 0.0
        %v921 = vmax.f32 %v761, 0.0
        %v922 = vmax.f32 %v766, 0.0
        %v923 = vmax.f32 %v769, 0.0
        %v924 = vmax.f32 %v774, 0.0
        %v925 = vmax.f32 %v777, 0.0
        %v926 = vmax.f32 %v782, 0.0
        %v927 = vmax.f32 %v785, 0.0
        %v928 = vmax.f32 %v790, 0.0
        %v929 = vmax.f32 %v793, 0.0
        %v930 = vmax.f32 %v798, 0.0
        %v931 = vmax.f32 %v801, 0.0
        %v932 = vmax.f32 %v806, 0.0
        %v933 = vmax.f32 %v809, 0.0
        %v934 = vmax.f32 %v814, 0.0
        %v935 = vmax.f32 %v817, 0.0
        %v936 = vmax.f32 %v822, 0.0
        %v937 = vmax.f32 %v825, 0.0
        %v938 = vmax.f32 %v830, 0.0
        %v939 = vmax.f32 %v833, 0.0
        %v940 = vmax.f32 %v838, 0.0
        %v941 = vmax.f32 %v841, 0.0
        %v942 = vmax.f32 %v846, 0.0
        %v943 = vmax.f32 %v849, 0.0
        %v944 = vmax.f32 %v854, 0.0
        %v945 = vmax.f32 %v857, 0.0
        %v946 = vmax.f32 %v862, 0.0
        %v947 = vmax.f32 %v865, 0.0
        %v948 = vmax.f32 %v870, 0.0
        %v949 = vmax.f32 %v873, 0.0
        %v950 = vmax.f32 %v878, 0.0
        %v951 = vmax.f32 %v881, 0.0
        %v952 = vmax.f32 %v886, 0.0
        %v953 = vmax.f32 %v889, 0.0
        %v954 = vmax.f32 %v894, 0.0
        %v955 = vmax.f32 %v897, 0.0
        %v956 = vmax.f32 %v902, 0.0
        %v957 = vmax.f32 %v905, 0.0
        %vm961 = vcmask 1043456
        %v962 = vrot.slane %v910, 4
        %v963 = vrot.slane %v911, 4
        %v964 = vsel %vm961, %v962, %v963
        %v965 = vrot.slane %v912, 4
        %v966 = vsel %vm961, %v963, %v965
        %v970 = vmax.f32 %v908, %v964
        %v971 = vmax.f32 %v909, %v966
        %v972 = vmax.f32 %v910, %v965
        %vm975 = vcmask 1042432
        %v976 = vrot.slane %v970, 5
        %v977 = vrot.slane %v971, 5
        %v978 = vsel %vm975, %v976, %v977
        %v980 = vmax.f32 %v970, %v978
        %v982 = vrot.slane %v972, 5
        %v983 = vsel %vm975, %v977, %v982
        %v985 = vmax.f32 %v971, %v983
        %v989 = vrot.slane %v915, 4
        %v990 = vrot.slane %v916, 4
        %v991 = vsel %vm961, %v989, %v990
        %v992 = vrot.slane %v917, 4
        %v993 = vsel %vm961, %v990, %v992
        %v997 = vmax.f32 %v913, %v991
        %v998 = vmax.f32 %v914, %v993
        %v999 = vmax.f32 %v915, %v992
        %v1002 = vrot.slane %v997, 5
        %v1003 = vrot.slane %v998, 5
        %v1004 = vsel %vm975, %v1002, %v1003
        %v1006 = vmax.f32 %v997, %v1004
        %v1008 = vrot.slane %v999, 5
        %v1009 = vsel %vm975, %v1003, %v1008
        %v1011 = vmax.f32 %v998, %v1009
        %v1015 = vrot.slane %v920, 4
        %v1016 = vrot.slane %v921, 4
        %v1017 = vsel %vm961, %v1015, %v1016
        %v1018 = vrot.slane %v922, 4
        %v1019 = vsel %vm961, %v1016, %v1018
        %v1023 = vmax.f32 %v918, %v1017
        %v1024 = vmax.f32 %v919, %v1019
        %v1025 = vmax.f32 %v920, %v1018
        %v1028 = vrot.slane %v1023, 5
        %v1029 = vrot.slane %v1024, 5
        %v1030 = vsel %vm975, %v1028, %v1029
        %v1032 = vmax.f32 %v1023, %v1030
        %v1034 = vrot.slane %v1025, 5
        %v1035 = vsel %vm975, %v1029, %v1034
        %v1037 = vmax.f32 %v1024, %v1035
        %v1041 = vrot.slane %v925, 4
        %v1042 = vrot.slane %v926, 4
        %v1043 = vsel %vm961, %v1041, %v1042
        %v1044 = vrot.slane %v927, 4
        %v1045 = vsel %vm961, %v1042, %v1044
        %v1049 = vmax.f32 %v923, %v1043
        %v1050 = vmax.f32 %v924, %v1045
        %v1051 = vmax.f32 %v925, %v1044
        %v1054 = vrot.slane %v1049, 5
        %v1055 = vrot.slane %v1050, 5
        %v1056 = vsel %vm975, %v1054, %v1055
        %v1058 = vmax.f32 %v1049, %v1056
        %v1060 = vrot.slane %v1051, 5
        %v1061 = vsel %vm975, %v1055, %v1060
        %v1063 = vmax.f32 %v1050, %v1061
        %v1067 = vrot.slane %v930, 4
        %v1068 = vrot.slane %v931, 4
        %v1069 = vsel %vm961, %v1067, %v1068
        %v1070 = vrot.slane %v932, 4
        %v1071 = vsel %vm961, %v1068, %v1070
        %v1075 = vmax.f32 %v928, %v1069
        %v1076 = vmax.f32 %v929, %v1071
        %v1077 = vmax.f32 %v930, %v1070
        %v1080 = vrot.slane %v1075, 5
        %v1081 = vrot.slane %v1076, 5
        %v1082 = vsel %vm975, %v1080, %v1081
        %v1084 = vmax.f32 %v1075, %v1082
        %v1086 = vrot.slane %v1077, 5
        %v1087 = vsel %vm975, %v1081, %v1086
        %v1089 = vmax.f32 %v1076, %v1087
        %v1093 = vrot.slane %v935, 4
        %v1094 = vrot.slane %v936, 4
        %v1095 = vsel %vm961, %v1093, %v1094
        %v1096 = vrot.slane %v937, 4
        %v1097 = vsel %vm961, %v1094, %v1096
        %v1101 = vmax.f32 %v933, %v1095
        %v1102 = vmax.f32 %v934, %v1097
        %v1103 = vmax.f32 %v935, %v1096
        %v1106 = vrot.slane %v1101, 5
        %v1107 = vrot.slane %v1102, 5
        %v1108 = vsel %vm975, %v1106, %v1107
        %v1110 = vmax.f32 %v1101, %v1108
        %v1112 = vrot.slane %v1103, 5
        %v1113 = vsel %vm975, %v1107, %v1112
        %v1115 = vmax.f32 %v1102, %v1113
        %v1119 = vrot.slane %v940, 4
        %v1120 = vrot.slane %v941, 4
        %v1121 = vsel %vm961, %v1119, %v1120
        %v1122 = vrot.slane %v942, 4
        %v1123 = vsel %vm961, %v1120, %v1122
        %v1127 = vmax.f32 %v938, %v1121
        %v1128 = vmax.f32 %v939, %v1123
        %v1129 = vmax.f32 %v940, %v1122
        %v1132 = vrot.slane %v1127, 5
        %v1133 = vrot.slane %v1128, 5
        %v1134 = vsel %vm975, %v1132, %v1133
        %v1136 = vmax.f32 %v1127, %v1134
        %v1138 = vrot.slane %v1129, 5
        %v1139 = vsel %vm975, %v1133, %v1138
        %v1141 = vmax.f32 %v1128, %v1139
        %v1145 = vrot.slane %v945, 4
        %v1146 = vrot.slane %v946, 4
        %v1147 = vsel %vm961, %v1145, %v1146
        %v1148 = vrot.slane %v947, 4
        %v1149 = vsel %vm961, %v1146, %v1148
        %v1153 = vmax.f32 %v943, %v1147
        %v1154 = vmax.f32 %v944, %v1149
        %v1155 = vmax.f32 %v945, %v1148
        %v1158 = vrot.slane %v1153, 5
        %v1159 = vrot.slane %v1154, 5
        %v1160 = vsel %vm975, %v1158, %v1159
        %v1162 = vmax.f32 %v1153, %v1160
        %v1164 = vrot.slane %v1155, 5
        %v1165 = vsel %vm975, %v1159, %v1164
        %v1167 = vmax.f32 %v1154, %v1165
        %v1171 = vrot.slane %v950, 4
        %v1172 = vrot.slane %v951, 4
        %v1173 = vsel %vm961, %v1171, %v1172
        %v1174 = vrot.slane %v952, 4
        %v1175 = vsel %vm961, %v1172, %v1174
        %v1179 = vmax.f32 %v948, %v1173
        %v1180 = vmax.f32 %v949, %v1175
        %v1181 = vmax.f32 %v950, %v1174
        %v1184 = vrot.slane %v1179, 5
        %v1185 = vrot.slane %v1180, 5
        %v1186 = vsel %vm975, %v1184, %v1185
        %v1188 = vmax.f32 %v1179, %v1186
        %v1190 = vrot.slane %v1181, 5
        %v1191 = vsel %vm975, %v1185, %v1190
        %v1193 = vmax.f32 %v1180, %v1191
        %v1197 = vrot.slane %v955, 4
        %v1198 = vrot.slane %v956, 4
        %v1199 = vsel %vm961, %v1197, %v1198
        %v1200 = vrot.slane %v957, 4
        %v1201 = vsel %vm961, %v1198, %v1200
        %v1205 = vmax.f32 %v953, %v1199
        %v1206 = vmax.f32 %v954, %v1201
        %v1207 = vmax.f32 %v955, %v1200
        %v1210 = vrot.slane %v1205, 5
        %v1211 = vrot.slane %v1206, 5
        %v1212 = vsel %vm975, %v1210, %v1211
        %v1214 = vmax.f32 %v1205, %v1212
        %v1216 = vrot.slane %v1207, 5
        %v1217 = vsel %vm975, %v1211, %v1216
        %v1219 = vmax.f32 %v1206, %v1217
        %v1220 = vld [vmem:[%s3] sm:$0xf]
        %v1221 = vld [vmem:[%s3 + $0x4] sm:$0xf]
        %v1222 = vld [vmem:[%s3 + $0x8] sm:$0xf]
        %v1223 = vld [vmem:[%s3 + $0xc] sm:$0xf]
        %v1224 = vpack.c.bf16 %v980, %v980
        %v1225 = vpack.c.bf16 %v1032, %v1032
        %v1226 = vpack.c.bf16 %v1084, %v1084
        %v1227 = vpack.c.bf16 %v1136, %v1136
        %s1228 = scalar_lea.vmem %s3, 16
        %v1229 = vld [vmem:[%s1228] sm:$0xf]
        %v1230 = vld [vmem:[%s1228 + $0x4] sm:$0xf]
        %v1231 = vld [vmem:[%s1228 + $0x8] sm:$0xf]
        %v1232 = vld [vmem:[%s1228 + $0xc] sm:$0xf]
        %v1233 = vpack.c.bf16 %v985, %v985
        %v1235 = vrot.slane %v1233, 1
        %v1240 = vunpack.c.l.b16 %v1229
        %v1241 = vunpack.c.l.b16 %v1230
        %v1242 = vunpack.c.l.b16 %v1231
        %v1243 = vunpack.c.l.b16 %v1232
        %v1244 = vpack.c.b16 %v1241, %v1240
        %v1245 = vpack.c.b16 %v1243, %v1242
        %vm1248 = vcmask 261120
        %v1250 = vsel %vm1248, %v1235, 0
        %1252 = vmatprep.subr.bf16.mxu0 0
        %1253 = vmatpush1.bf16.msra.mxu0 0
        %1254 = vmatprep.subr.bf16.mxu0 0
        %1255 = vmatpush1.bf16.msra.mxu0 0
        %1256 = vmatprep.subr.bf16.mxu0 0
        %1257 = vmatpush1.bf16.msra.mxu0 0
        %1258 = vmatprep.subr.bf16.mxu0 0
        %1259 = vmatpush1.bf16.msra.mxu0 0
        %1260 = vmatprep.subr.bf16.mxu0 0
        %1261 = vmatpush1.bf16.msra.mxu0 0
        %1262 = vmatprep.subr.bf16.mxu0 0
        %1263 = vmatpush1.bf16.msra.mxu0 0
        %1264 = vmatprep.subr.bf16.mxu0 0
        %1265 = vmatpush1.bf16.msra.mxu0 %v1245
        %1266 = vmatprep.subr.bf16.mxu0 0
        %1267 = vmatpush1.bf16.msra.mxu0 %v1244
        %1268 = vmatprep.subr.bf16.mxu0 0
        %1269 = vmatpush2.bf16.msra.mxu0 0
        %1270 = vmatprep.subr.bf16.mxu0 0
        %1271 = vmatpush2.bf16.msra.mxu0 0
        %1272 = vmatprep.subr.bf16.mxu0 0
        %1273 = vmatpush2.bf16.msra.mxu0 0
        %1274 = vmatprep.subr.bf16.mxu0 0
        %1275 = vmatpush2.bf16.msra.mxu0 0
        %1276 = vmatprep.subr.bf16.mxu0 0
        %1277 = vmatpush2.bf16.msra.mxu0 0
        %1278 = vmatprep.subr.bf16.mxu0 0
        %1279 = vmatpush2.bf16.msra.mxu0 0
        %1280 = vmatprep.subr.bf16.mxu0 0
        %1281 = vmatpush2.bf16.msra.mxu0 0
        %1282 = vmatprep.subr.bf16.mxu0 0
        %1283 = vmatpush2.bf16.msra.mxu0 0
        %1284 = vmatprep.mubr.bf16.mxu0 0
        %1285 = vmatmul.mubr.bf16.gmra.mxu0 %v1250
        %v1286 = vpop.f32.mrf.mxu0
        %v1287 = vadd.f32 0.0, %v1286
        %v1288 = vpop.f32.mrf.mxu0
        %v1289 = vpop.f32.mrf.mxu0
        %v1290 = vpop.f32.mrf.mxu0
        %1291 = vdwg.mxu0
        %v1296 = vunpack.c.l.b16 %v1220
        %v1297 = vunpack.c.l.b16 %v1221
        %v1298 = vunpack.c.l.b16 %v1222
        %v1299 = vunpack.c.l.b16 %v1223
        %v1300 = vpack.c.b16 %v1297, %v1296
        %v1301 = vpack.c.b16 %v1299, %v1298
        %v1305 = vsel %vm1248, %v1224, 0
        %1307 = vmatprep.subr.bf16.mxu0 0
        %1308 = vmatpush1.bf16.msra.mxu0 0
        %1309 = vmatprep.subr.bf16.mxu0 0
        %1310 = vmatpush1.bf16.msra.mxu0 0
        %1311 = vmatprep.subr.bf16.mxu0 0
        %1312 = vmatpush1.bf16.msra.mxu0 0
        %1313 = vmatprep.subr.bf16.mxu0 0
        %1314 = vmatpush1.bf16.msra.mxu0 0
        %1315 = vmatprep.subr.bf16.mxu0 0
        %1316 = vmatpush1.bf16.msra.mxu0 0
        %1317 = vmatprep.subr.bf16.mxu0 0
        %1318 = vmatpush1.bf16.msra.mxu0 0
        %1319 = vmatprep.subr.bf16.mxu0 0
        %1320 = vmatpush1.bf16.msra.mxu0 %v1301
        %1321 = vmatprep.subr.bf16.mxu0 0
        %1322 = vmatpush1.bf16.msra.mxu0 %v1300
        %1323 = vmatprep.subr.bf16.mxu0 0
        %1324 = vmatpush2.bf16.msra.mxu0 0
        %1325 = vmatprep.subr.bf16.mxu0 0
        %1326 = vmatpush2.bf16.msra.mxu0 0
        %1327 = vmatprep.subr.bf16.mxu0 0
        %1328 = vmatpush2.bf16.msra.mxu0 0
        %1329 = vmatprep.subr.bf16.mxu0 0
        %1330 = vmatpush2.bf16.msra.mxu0 0
        %1331 = vmatprep.subr.bf16.mxu0 0
        %1332 = vmatpush2.bf16.msra.mxu0 0
        %1333 = vmatprep.subr.bf16.mxu0 0
        %1334 = vmatpush2.bf16.msra.mxu0 0
        %1335 = vmatprep.subr.bf16.mxu0 0
        %1336 = vmatpush2.bf16.msra.mxu0 0
        %1337 = vmatprep.subr.bf16.mxu0 0
        %1338 = vmatpush2.bf16.msra.mxu0 0
        %1339 = vmatprep.mubr.bf16.mxu0 0
        %1340 = vmatmul.mubr.bf16.gmra.mxu0 %v1305
        %v1341 = vpop.f32.mrf.mxu0
        %v1342 = vadd.f32 %v1287, %v1341
        %v1343 = vpop.f32.mrf.mxu0
        %v1344 = vpop.f32.mrf.mxu0
        %v1345 = vpop.f32.mrf.mxu0
        %1346 = vdwg.mxu0
        %v1347 = vpack.c.bf16 %v1037, %v1037
        %v1349 = vrot.slane %v1347, 1
        %v1351 = vsel %vm1248, %v1349, 0
        %1353 = vmatprep.subr.bf16.mxu0 0
        %1354 = vmatpush1.bf16.msra.mxu0 0
        %1355 = vmatprep.subr.bf16.mxu0 0
        %1356 = vmatpush1.bf16.msra.mxu0 0
        %1357 = vmatprep.subr.bf16.mxu0 0
        %1358 = vmatpush1.bf16.msra.mxu0 0
        %1359 = vmatprep.subr.bf16.mxu0 0
        %1360 = vmatpush1.bf16.msra.mxu0 0
        %1361 = vmatprep.subr.bf16.mxu0 0
        %1362 = vmatpush1.bf16.msra.mxu0 0
        %1363 = vmatprep.subr.bf16.mxu0 0
        %1364 = vmatpush1.bf16.msra.mxu0 0
        %1365 = vmatprep.subr.bf16.mxu0 0
        %1366 = vmatpush1.bf16.msra.mxu0 %v1245
        %1367 = vmatprep.subr.bf16.mxu0 0
        %1368 = vmatpush1.bf16.msra.mxu0 %v1244
        %1369 = vmatprep.subr.bf16.mxu0 0
        %1370 = vmatpush2.bf16.msra.mxu0 0
        %1371 = vmatprep.subr.bf16.mxu0 0
        %1372 = vmatpush2.bf16.msra.mxu0 0
        %1373 = vmatprep.subr.bf16.mxu0 0
        %1374 = vmatpush2.bf16.msra.mxu0 0
        %1375 = vmatprep.subr.bf16.mxu0 0
        %1376 = vmatpush2.bf16.msra.mxu0 0
        %1377 = vmatprep.subr.bf16.mxu0 0
        %1378 = vmatpush2.bf16.msra.mxu0 0
        %1379 = vmatprep.subr.bf16.mxu0 0
        %1380 = vmatpush2.bf16.msra.mxu0 0
        %1381 = vmatprep.subr.bf16.mxu0 0
        %1382 = vmatpush2.bf16.msra.mxu0 0
        %1383 = vmatprep.subr.bf16.mxu0 0
        %1384 = vmatpush2.bf16.msra.mxu0 0
        %1385 = vmatprep.mubr.bf16.mxu0 0
        %1386 = vmatmul.mubr.bf16.gmra.mxu0 %v1351
        %v1387 = vpop.f32.mrf.mxu0
        %v1388 = vadd.f32 0.0, %v1387
        %v1389 = vpop.f32.mrf.mxu0
        %v1390 = vpop.f32.mrf.mxu0
        %v1391 = vpop.f32.mrf.mxu0
        %1392 = vdwg.mxu0
        %v1394 = vsel %vm1248, %v1225, 0
        %1396 = vmatprep.subr.bf16.mxu0 0
        %1397 = vmatpush1.bf16.msra.mxu0 0
        %1398 = vmatprep.subr.bf16.mxu0 0
        %1399 = vmatpush1.bf16.msra.mxu0 0
        %1400 = vmatprep.subr.bf16.mxu0 0
        %1401 = vmatpush1.bf16.msra.mxu0 0
        %1402 = vmatprep.subr.bf16.mxu0 0
        %1403 = vmatpush1.bf16.msra.mxu0 0
        %1404 = vmatprep.subr.bf16.mxu0 0
        %1405 = vmatpush1.bf16.msra.mxu0 0
        %1406 = vmatprep.subr.bf16.mxu0 0
        %1407 = vmatpush1.bf16.msra.mxu0 0
        %1408 = vmatprep.subr.bf16.mxu0 0
        %1409 = vmatpush1.bf16.msra.mxu0 %v1301
        %1410 = vmatprep.subr.bf16.mxu0 0
        %1411 = vmatpush1.bf16.msra.mxu0 %v1300
        %1412 = vmatprep.subr.bf16.mxu0 0
        %1413 = vmatpush2.bf16.msra.mxu0 0
        %1414 = vmatprep.subr.bf16.mxu0 0
        %1415 = vmatpush2.bf16.msra.mxu0 0
        %1416 = vmatprep.subr.bf16.mxu0 0
        %1417 = vmatpush2.bf16.msra.mxu0 0
        %1418 = vmatprep.subr.bf16.mxu0 0
        %1419 = vmatpush2.bf16.msra.mxu0 0
        %1420 = vmatprep.subr.bf16.mxu0 0
        %1421 = vmatpush2.bf16.msra.mxu0 0
        %1422 = vmatprep.subr.bf16.mxu0 0
        %1423 = vmatpush2.bf16.msra.mxu0 0
        %1424 = vmatprep.subr.bf16.mxu0 0
        %1425 = vmatpush2.bf16.msra.mxu0 0
        %1426 = vmatprep.subr.bf16.mxu0 0
        %1427 = vmatpush2.bf16.msra.mxu0 0
        %1428 = vmatprep.mubr.bf16.mxu0 0
        %1429 = vmatmul.mubr.bf16.gmra.mxu0 %v1394
        %v1430 = vpop.f32.mrf.mxu0
        %v1431 = vadd.f32 %v1388, %v1430
        %v1432 = vpop.f32.mrf.mxu0
        %v1433 = vpop.f32.mrf.mxu0
        %v1434 = vpop.f32.mrf.mxu0
        %1435 = vdwg.mxu0
        %v1436 = vpack.c.bf16 %v1089, %v1089
        %v1438 = vrot.slane %v1436, 1
        %v1440 = vsel %vm1248, %v1438, 0
        %1442 = vmatprep.subr.bf16.mxu0 0
        %1443 = vmatpush1.bf16.msra.mxu0 0
        %1444 = vmatprep.subr.bf16.mxu0 0
        %1445 = vmatpush1.bf16.msra.mxu0 0
        %1446 = vmatprep.subr.bf16.mxu0 0
        %1447 = vmatpush1.bf16.msra.mxu0 0
        %1448 = vmatprep.subr.bf16.mxu0 0
        %1449 = vmatpush1.bf16.msra.mxu0 0
        %1450 = vmatprep.subr.bf16.mxu0 0
        %1451 = vmatpush1.bf16.msra.mxu0 0
        %1452 = vmatprep.subr.bf16.mxu0 0
        %1453 = vmatpush1.bf16.msra.mxu0 0
        %1454 = vmatprep.subr.bf16.mxu0 0
        %1455 = vmatpush1.bf16.msra.mxu0 %v1245
        %1456 = vmatprep.subr.bf16.mxu0 0
        %1457 = vmatpush1.bf16.msra.mxu0 %v1244
        %1458 = vmatprep.subr.bf16.mxu0 0
        %1459 = vmatpush2.bf16.msra.mxu0 0
        %1460 = vmatprep.subr.bf16.mxu0 0
        %1461 = vmatpush2.bf16.msra.mxu0 0
        %1462 = vmatprep.subr.bf16.mxu0 0
        %1463 = vmatpush2.bf16.msra.mxu0 0
        %1464 = vmatprep.subr.bf16.mxu0 0
        %1465 = vmatpush2.bf16.msra.mxu0 0
        %1466 = vmatprep.subr.bf16.mxu0 0
        %1467 = vmatpush2.bf16.msra.mxu0 0
        %1468 = vmatprep.subr.bf16.mxu0 0
        %1469 = vmatpush2.bf16.msra.mxu0 0
        %1470 = vmatprep.subr.bf16.mxu0 0
        %1471 = vmatpush2.bf16.msra.mxu0 0
        %1472 = vmatprep.subr.bf16.mxu0 0
        %1473 = vmatpush2.bf16.msra.mxu0 0
        %1474 = vmatprep.mubr.bf16.mxu0 0
        %1475 = vmatmul.mubr.bf16.gmra.mxu0 %v1440
        %v1476 = vpop.f32.mrf.mxu0
        %v1477 = vadd.f32 0.0, %v1476
        %v1478 = vpop.f32.mrf.mxu0
        %v1479 = vpop.f32.mrf.mxu0
        %v1480 = vpop.f32.mrf.mxu0
        %1481 = vdwg.mxu0
        %v1483 = vsel %vm1248, %v1226, 0
        %1485 = vmatprep.subr.bf16.mxu0 0
        %1486 = vmatpush1.bf16.msra.mxu0 0
        %1487 = vmatprep.subr.bf16.mxu0 0
        %1488 = vmatpush1.bf16.msra.mxu0 0
        %1489 = vmatprep.subr.bf16.mxu0 0
        %1490 = vmatpush1.bf16.msra.mxu0 0
        %1491 = vmatprep.subr.bf16.mxu0 0
        %1492 = vmatpush1.bf16.msra.mxu0 0
        %1493 = vmatprep.subr.bf16.mxu0 0
        %1494 = vmatpush1.bf16.msra.mxu0 0
        %1495 = vmatprep.subr.bf16.mxu0 0
        %1496 = vmatpush1.bf16.msra.mxu0 0
        %1497 = vmatprep.subr.bf16.mxu0 0
        %1498 = vmatpush1.bf16.msra.mxu0 %v1301
        %1499 = vmatprep.subr.bf16.mxu0 0
        %1500 = vmatpush1.bf16.msra.mxu0 %v1300
        %1501 = vmatprep.subr.bf16.mxu0 0
        %1502 = vmatpush2.bf16.msra.mxu0 0
        %1503 = vmatprep.subr.bf16.mxu0 0
        %1504 = vmatpush2.bf16.msra.mxu0 0
        %1505 = vmatprep.subr.bf16.mxu0 0
        %1506 = vmatpush2.bf16.msra.mxu0 0
        %1507 = vmatprep.subr.bf16.mxu0 0
        %1508 = vmatpush2.bf16.msra.mxu0 0
        %1509 = vmatprep.subr.bf16.mxu0 0
        %1510 = vmatpush2.bf16.msra.mxu0 0
        %1511 = vmatprep.subr.bf16.mxu0 0
        %1512 = vmatpush2.bf16.msra.mxu0 0
        %1513 = vmatprep.subr.bf16.mxu0 0
        %1514 = vmatpush2.bf16.msra.mxu0 0
        %1515 = vmatprep.subr.bf16.mxu0 0
        %1516 = vmatpush2.bf16.msra.mxu0 0
        %1517 = vmatprep.mubr.bf16.mxu0 0
        %1518 = vmatmul.mubr.bf16.gmra.mxu0 %v1483
        %v1519 = vpop.f32.mrf.mxu0
        %v1520 = vadd.f32 %v1477, %v1519
        %v1521 = vpop.f32.mrf.mxu0
        %v1522 = vpop.f32.mrf.mxu0
        %v1523 = vpop.f32.mrf.mxu0
        %1524 = vdwg.mxu0
        %v1525 = vpack.c.bf16 %v1141, %v1141
        %v1527 = vrot.slane %v1525, 1
        %v1529 = vsel %vm1248, %v1527, 0
        %1531 = vmatprep.subr.bf16.mxu0 0
        %1532 = vmatpush1.bf16.msra.mxu0 0
        %1533 = vmatprep.subr.bf16.mxu0 0
        %1534 = vmatpush1.bf16.msra.mxu0 0
        %1535 = vmatprep.subr.bf16.mxu0 0
        %1536 = vmatpush1.bf16.msra.mxu0 0
        %1537 = vmatprep.subr.bf16.mxu0 0
        %1538 = vmatpush1.bf16.msra.mxu0 0
        %1539 = vmatprep.subr.bf16.mxu0 0
        %1540 = vmatpush1.bf16.msra.mxu0 0
        %1541 = vmatprep.subr.bf16.mxu0 0
        %1542 = vmatpush1.bf16.msra.mxu0 0
        %1543 = vmatprep.subr.bf16.mxu0 0
        %1544 = vmatpush1.bf16.msra.mxu0 %v1245
        %1545 = vmatprep.subr.bf16.mxu0 0
        %1546 = vmatpush1.bf16.msra.mxu0 %v1244
        %1547 = vmatprep.subr.bf16.mxu0 0
        %1548 = vmatpush2.bf16.msra.mxu0 0
        %1549 = vmatprep.subr.bf16.mxu0 0
        %1550 = vmatpush2.bf16.msra.mxu0 0
        %1551 = vmatprep.subr.bf16.mxu0 0
        %1552 = vmatpush2.bf16.msra.mxu0 0
        %1553 = vmatprep.subr.bf16.mxu0 0
        %1554 = vmatpush2.bf16.msra.mxu0 0
        %1555 = vmatprep.subr.bf16.mxu0 0
        %1556 = vmatpush2.bf16.msra.mxu0 0
        %1557 = vmatprep.subr.bf16.mxu0 0
        %1558 = vmatpush2.bf16.msra.mxu0 0
        %1559 = vmatprep.subr.bf16.mxu0 0
        %1560 = vmatpush2.bf16.msra.mxu0 0
        %1561 = vmatprep.subr.bf16.mxu0 0
        %1562 = vmatpush2.bf16.msra.mxu0 0
        %1563 = vmatprep.mubr.bf16.mxu0 0
        %1564 = vmatmul.mubr.bf16.gmra.mxu0 %v1529
        %v1565 = vpop.f32.mrf.mxu0
        %v1566 = vadd.f32 0.0, %v1565
        %v1567 = vpop.f32.mrf.mxu0
        %v1568 = vpop.f32.mrf.mxu0
        %v1569 = vpop.f32.mrf.mxu0
        %1570 = vdwg.mxu0
        %v1572 = vsel %vm1248, %v1227, 0
        %1574 = vmatprep.subr.bf16.mxu0 0
        %1575 = vmatpush1.bf16.msra.mxu0 0
        %1576 = vmatprep.subr.bf16.mxu0 0
        %1577 = vmatpush1.bf16.msra.mxu0 0
        %1578 = vmatprep.subr.bf16.mxu0 0
        %1579 = vmatpush1.bf16.msra.mxu0 0
        %1580 = vmatprep.subr.bf16.mxu0 0
        %1581 = vmatpush1.bf16.msra.mxu0 0
        %1582 = vmatprep.subr.bf16.mxu0 0
        %1583 = vmatpush1.bf16.msra.mxu0 0
        %1584 = vmatprep.subr.bf16.mxu0 0
        %1585 = vmatpush1.bf16.msra.mxu0 0
        %1586 = vmatprep.subr.bf16.mxu0 0
        %1587 = vmatpush1.bf16.msra.mxu0 %v1301
        %1588 = vmatprep.subr.bf16.mxu0 0
        %1589 = vmatpush1.bf16.msra.mxu0 %v1300
        %1590 = vmatprep.subr.bf16.mxu0 0
        %1591 = vmatpush2.bf16.msra.mxu0 0
        %1592 = vmatprep.subr.bf16.mxu0 0
        %1593 = vmatpush2.bf16.msra.mxu0 0
        %1594 = vmatprep.subr.bf16.mxu0 0
        %1595 = vmatpush2.bf16.msra.mxu0 0
        %1596 = vmatprep.subr.bf16.mxu0 0
        %1597 = vmatpush2.bf16.msra.mxu0 0
        %1598 = vmatprep.subr.bf16.mxu0 0
        %1599 = vmatpush2.bf16.msra.mxu0 0
        %1600 = vmatprep.subr.bf16.mxu0 0
        %1601 = vmatpush2.bf16.msra.mxu0 0
        %1602 = vmatprep.subr.bf16.mxu0 0
        %1603 = vmatpush2.bf16.msra.mxu0 0
        %1604 = vmatprep.subr.bf16.mxu0 0
        %1605 = vmatpush2.bf16.msra.mxu0 0
        %1606 = vmatprep.mubr.bf16.mxu0 0
        %1607 = vmatmul.mubr.bf16.gmra.mxu0 %v1572
        %v1608 = vpop.f32.mrf.mxu0
        %v1609 = vadd.f32 %v1566, %v1608
        %v1610 = vpop.f32.mrf.mxu0
        %v1611 = vpop.f32.mrf.mxu0
        %v1612 = vpop.f32.mrf.mxu0
        %1613 = vdwg.mxu0
        %s1614 = scalar_lea.vmem %s3, 32
        %v1615 = vld [vmem:[%s1614] sm:$0xf]
        %v1616 = vld [vmem:[%s1614 + $0x4] sm:$0xf]
        %v1617 = vld [vmem:[%s1614 + $0x8] sm:$0xf]
        %v1618 = vld [vmem:[%s1614 + $0xc] sm:$0xf]
        %v1619 = vshrl.u32 %v1224, 16
        %v1621 = vshll.u32 %v1224, 16
        %v1623 = vrot.slane %v1621, 1
        %v1624 = vor.u32 %v1619, %v1623
        %v1629 = vunpack.c.l.b16 %v1615
        %v1630 = vunpack.c.l.b16 %v1616
        %v1631 = vunpack.c.l.b16 %v1617
        %v1632 = vunpack.c.l.b16 %v1618
        %v1633 = vpack.c.b16 %v1630, %v1629
        %v1634 = vpack.c.b16 %v1632, %v1631
        %v1638 = vsel %vm1248, %v1624, 0
        %1640 = vmatprep.subr.bf16.mxu0 0
        %1641 = vmatpush1.bf16.msra.mxu0 0
        %1642 = vmatprep.subr.bf16.mxu0 0
        %1643 = vmatpush1.bf16.msra.mxu0 0
        %1644 = vmatprep.subr.bf16.mxu0 0
        %1645 = vmatpush1.bf16.msra.mxu0 0
        %1646 = vmatprep.subr.bf16.mxu0 0
        %1647 = vmatpush1.bf16.msra.mxu0 0
        %1648 = vmatprep.subr.bf16.mxu0 0
        %1649 = vmatpush1.bf16.msra.mxu0 0
        %1650 = vmatprep.subr.bf16.mxu0 0
        %1651 = vmatpush1.bf16.msra.mxu0 0
        %1652 = vmatprep.subr.bf16.mxu0 0
        %1653 = vmatpush1.bf16.msra.mxu0 %v1634
        %1654 = vmatprep.subr.bf16.mxu0 0
        %1655 = vmatpush1.bf16.msra.mxu0 %v1633
        %1656 = vmatprep.subr.bf16.mxu0 0
        %1657 = vmatpush2.bf16.msra.mxu0 0
        %1658 = vmatprep.subr.bf16.mxu0 0
        %1659 = vmatpush2.bf16.msra.mxu0 0
        %1660 = vmatprep.subr.bf16.mxu0 0
        %1661 = vmatpush2.bf16.msra.mxu0 0
        %1662 = vmatprep.subr.bf16.mxu0 0
        %1663 = vmatpush2.bf16.msra.mxu0 0
        %1664 = vmatprep.subr.bf16.mxu0 0
        %1665 = vmatpush2.bf16.msra.mxu0 0
        %1666 = vmatprep.subr.bf16.mxu0 0
        %1667 = vmatpush2.bf16.msra.mxu0 0
        %1668 = vmatprep.subr.bf16.mxu0 0
        %1669 = vmatpush2.bf16.msra.mxu0 0
        %1670 = vmatprep.subr.bf16.mxu0 0
        %1671 = vmatpush2.bf16.msra.mxu0 0
        %1672 = vmatprep.mubr.bf16.mxu0 0
        %1673 = vmatmul.mubr.bf16.gmra.mxu0 %v1638
        %v1674 = vpop.f32.mrf.mxu0
        %v1675 = vadd.f32 0.0, %v1674
        %v1676 = vpop.f32.mrf.mxu0
        %v1677 = vpop.f32.mrf.mxu0
        %v1678 = vpop.f32.mrf.mxu0
        %1679 = vdwg.mxu0
        %v1680 = vadd.f32 %v1342, %v1675
        %v1681 = vshrl.u32 %v1225, 16
        %v1683 = vshll.u32 %v1225, 16
        %v1685 = vrot.slane %v1683, 1
        %v1686 = vor.u32 %v1681, %v1685
        %v1688 = vsel %vm1248, %v1686, 0
        %1690 = vmatprep.subr.bf16.mxu0 0
        %1691 = vmatpush1.bf16.msra.mxu0 0
        %1692 = vmatprep.subr.bf16.mxu0 0
        %1693 = vmatpush1.bf16.msra.mxu0 0
        %1694 = vmatprep.subr.bf16.mxu0 0
        %1695 = vmatpush1.bf16.msra.mxu0 0
        %1696 = vmatprep.subr.bf16.mxu0 0
        %1697 = vmatpush1.bf16.msra.mxu0 0
        %1698 = vmatprep.subr.bf16.mxu0 0
        %1699 = vmatpush1.bf16.msra.mxu0 0
        %1700 = vmatprep.subr.bf16.mxu0 0
        %1701 = vmatpush1.bf16.msra.mxu0 0
        %1702 = vmatprep.subr.bf16.mxu0 0
        %1703 = vmatpush1.bf16.msra.mxu0 %v1634
        %1704 = vmatprep.subr.bf16.mxu0 0
        %1705 = vmatpush1.bf16.msra.mxu0 %v1633
        %1706 = vmatprep.subr.bf16.mxu0 0
        %1707 = vmatpush2.bf16.msra.mxu0 0
        %1708 = vmatprep.subr.bf16.mxu0 0
        %1709 = vmatpush2.bf16.msra.mxu0 0
        %1710 = vmatprep.subr.bf16.mxu0 0
        %1711 = vmatpush2.bf16.msra.mxu0 0
        %1712 = vmatprep.subr.bf16.mxu0 0
        %1713 = vmatpush2.bf16.msra.mxu0 0
        %1714 = vmatprep.subr.bf16.mxu0 0
        %1715 = vmatpush2.bf16.msra.mxu0 0
        %1716 = vmatprep.subr.bf16.mxu0 0
        %1717 = vmatpush2.bf16.msra.mxu0 0
        %1718 = vmatprep.subr.bf16.mxu0 0
        %1719 = vmatpush2.bf16.msra.mxu0 0
        %1720 = vmatprep.subr.bf16.mxu0 0
        %1721 = vmatpush2.bf16.msra.mxu0 0
        %1722 = vmatprep.mubr.bf16.mxu0 0
        %1723 = vmatmul.mubr.bf16.gmra.mxu0 %v1688
        %v1724 = vpop.f32.mrf.mxu0
        %v1725 = vadd.f32 0.0, %v1724
        %v1726 = vpop.f32.mrf.mxu0
        %v1727 = vpop.f32.mrf.mxu0
        %v1728 = vpop.f32.mrf.mxu0
        %1729 = vdwg.mxu0
        %v1730 = vadd.f32 %v1431, %v1725
        %v1731 = vshrl.u32 %v1226, 16
        %v1733 = vshll.u32 %v1226, 16
        %v1735 = vrot.slane %v1733, 1
        %v1736 = vor.u32 %v1731, %v1735
        %v1738 = vsel %vm1248, %v1736, 0
        %1740 = vmatprep.subr.bf16.mxu0 0
        %1741 = vmatpush1.bf16.msra.mxu0 0
        %1742 = vmatprep.subr.bf16.mxu0 0
        %1743 = vmatpush1.bf16.msra.mxu0 0
        %1744 = vmatprep.subr.bf16.mxu0 0
        %1745 = vmatpush1.bf16.msra.mxu0 0
        %1746 = vmatprep.subr.bf16.mxu0 0
        %1747 = vmatpush1.bf16.msra.mxu0 0
        %1748 = vmatprep.subr.bf16.mxu0 0
        %1749 = vmatpush1.bf16.msra.mxu0 0
        %1750 = vmatprep.subr.bf16.mxu0 0
        %1751 = vmatpush1.bf16.msra.mxu0 0
        %1752 = vmatprep.subr.bf16.mxu0 0
        %1753 = vmatpush1.bf16.msra.mxu0 %v1634
        %1754 = vmatprep.subr.bf16.mxu0 0
        %1755 = vmatpush1.bf16.msra.mxu0 %v1633
        %1756 = vmatprep.subr.bf16.mxu0 0
        %1757 = vmatpush2.bf16.msra.mxu0 0
        %1758 = vmatprep.subr.bf16.mxu0 0
        %1759 = vmatpush2.bf16.msra.mxu0 0
        %1760 = vmatprep.subr.bf16.mxu0 0
        %1761 = vmatpush2.bf16.msra.mxu0 0
        %1762 = vmatprep.subr.bf16.mxu0 0
        %1763 = vmatpush2.bf16.msra.mxu0 0
        %1764 = vmatprep.subr.bf16.mxu0 0
        %1765 = vmatpush2.bf16.msra.mxu0 0
        %1766 = vmatprep.subr.bf16.mxu0 0
        %1767 = vmatpush2.bf16.msra.mxu0 0
        %1768 = vmatprep.subr.bf16.mxu0 0
        %1769 = vmatpush2.bf16.msra.mxu0 0
        %1770 = vmatprep.subr.bf16.mxu0 0
        %1771 = vmatpush2.bf16.msra.mxu0 0
        %1772 = vmatprep.mubr.bf16.mxu0 0
        %1773 = vmatmul.mubr.bf16.gmra.mxu0 %v1738
        %v1774 = vpop.f32.mrf.mxu0
        %v1775 = vadd.f32 0.0, %v1774
        %v1776 = vpop.f32.mrf.mxu0
        %v1777 = vpop.f32.mrf.mxu0
        %v1778 = vpop.f32.mrf.mxu0
        %1779 = vdwg.mxu0
        %v1780 = vadd.f32 %v1520, %v1775
        %v1781 = vshrl.u32 %v1227, 16
        %v1783 = vshll.u32 %v1227, 16
        %v1785 = vrot.slane %v1783, 1
        %v1786 = vor.u32 %v1781, %v1785
        %v1788 = vsel %vm1248, %v1786, 0
        %1790 = vmatprep.subr.bf16.mxu0 0
        %1791 = vmatpush1.bf16.msra.mxu0 0
        %1792 = vmatprep.subr.bf16.mxu0 0
        %1793 = vmatpush1.bf16.msra.mxu0 0
        %1794 = vmatprep.subr.bf16.mxu0 0
        %1795 = vmatpush1.bf16.msra.mxu0 0
        %1796 = vmatprep.subr.bf16.mxu0 0
        %1797 = vmatpush1.bf16.msra.mxu0 0
        %1798 = vmatprep.subr.bf16.mxu0 0
        %1799 = vmatpush1.bf16.msra.mxu0 0
        %1800 = vmatprep.subr.bf16.mxu0 0
        %1801 = vmatpush1.bf16.msra.mxu0 0
        %1802 = vmatprep.subr.bf16.mxu0 0
        %1803 = vmatpush1.bf16.msra.mxu0 %v1634
        %1804 = vmatprep.subr.bf16.mxu0 0
        %1805 = vmatpush1.bf16.msra.mxu0 %v1633
        %1806 = vmatprep.subr.bf16.mxu0 0
        %1807 = vmatpush2.bf16.msra.mxu0 0
        %1808 = vmatprep.subr.bf16.mxu0 0
        %1809 = vmatpush2.bf16.msra.mxu0 0
        %1810 = vmatprep.subr.bf16.mxu0 0
        %1811 = vmatpush2.bf16.msra.mxu0 0
        %1812 = vmatprep.subr.bf16.mxu0 0
        %1813 = vmatpush2.bf16.msra.mxu0 0
        %1814 = vmatprep.subr.bf16.mxu0 0
        %1815 = vmatpush2.bf16.msra.mxu0 0
        %1816 = vmatprep.subr.bf16.mxu0 0
        %1817 = vmatpush2.bf16.msra.mxu0 0
        %1818 = vmatprep.subr.bf16.mxu0 0
        %1819 = vmatpush2.bf16.msra.mxu0 0
        %1820 = vmatprep.subr.bf16.mxu0 0
        %1821 = vmatpush2.bf16.msra.mxu0 0
        %1822 = vmatprep.mubr.bf16.mxu0 0
        %1823 = vmatmul.mubr.bf16.gmra.mxu0 %v1788
        %v1824 = vpop.f32.mrf.mxu0
        %v1825 = vadd.f32 0.0, %v1824
        %v1826 = vpop.f32.mrf.mxu0
        %v1827 = vpop.f32.mrf.mxu0
        %v1828 = vpop.f32.mrf.mxu0
        %1829 = vdwg.mxu0
        %v1830 = vadd.f32 %v1609, %v1825
        %s1831 = scalar_lea.vmem %s3, 48
        %v1832 = vld [vmem:[%s1831] sm:$0xf]
        %v1833 = vld [vmem:[%s1831 + $0x4] sm:$0xf]
        %v1834 = vld [vmem:[%s1831 + $0x8] sm:$0xf]
        %v1835 = vld [vmem:[%s1831 + $0xc] sm:$0xf]
        %v1837 = vshrl.u32 %v1233, 16
        %v1839 = vrot.slane %v1837, 1
        %v1840 = vshll.u32 %v1233, 16
        %v1842 = vrot.slane %v1840, 2
        %v1843 = vor.u32 %v1839, %v1842
        %v1848 = vunpack.c.l.b16 %v1832
        %v1849 = vunpack.c.l.b16 %v1833
        %v1850 = vunpack.c.l.b16 %v1834
        %v1851 = vunpack.c.l.b16 %v1835
        %v1852 = vpack.c.b16 %v1849, %v1848
        %v1853 = vpack.c.b16 %v1851, %v1850
        %v1857 = vsel %vm1248, %v1843, 0
        %1859 = vmatprep.subr.bf16.mxu0 0
        %1860 = vmatpush1.bf16.msra.mxu0 0
        %1861 = vmatprep.subr.bf16.mxu0 0
        %1862 = vmatpush1.bf16.msra.mxu0 0
        %1863 = vmatprep.subr.bf16.mxu0 0
        %1864 = vmatpush1.bf16.msra.mxu0 0
        %1865 = vmatprep.subr.bf16.mxu0 0
        %1866 = vmatpush1.bf16.msra.mxu0 0
        %1867 = vmatprep.subr.bf16.mxu0 0
        %1868 = vmatpush1.bf16.msra.mxu0 0
        %1869 = vmatprep.subr.bf16.mxu0 0
        %1870 = vmatpush1.bf16.msra.mxu0 0
        %1871 = vmatprep.subr.bf16.mxu0 0
        %1872 = vmatpush1.bf16.msra.mxu0 %v1853
        %1873 = vmatprep.subr.bf16.mxu0 0
        %1874 = vmatpush1.bf16.msra.mxu0 %v1852
        %1875 = vmatprep.subr.bf16.mxu0 0
        %1876 = vmatpush2.bf16.msra.mxu0 0
        %1877 = vmatprep.subr.bf16.mxu0 0
        %1878 = vmatpush2.bf16.msra.mxu0 0
        %1879 = vmatprep.subr.bf16.mxu0 0
        %1880 = vmatpush2.bf16.msra.mxu0 0
        %1881 = vmatprep.subr.bf16.mxu0 0
        %1882 = vmatpush2.bf16.msra.mxu0 0
        %1883 = vmatprep.subr.bf16.mxu0 0
        %1884 = vmatpush2.bf16.msra.mxu0 0
        %1885 = vmatprep.subr.bf16.mxu0 0
        %1886 = vmatpush2.bf16.msra.mxu0 0
        %1887 = vmatprep.subr.bf16.mxu0 0
        %1888 = vmatpush2.bf16.msra.mxu0 0
        %1889 = vmatprep.subr.bf16.mxu0 0
        %1890 = vmatpush2.bf16.msra.mxu0 0
        %1891 = vmatprep.mubr.bf16.mxu0 0
        %1892 = vmatmul.mubr.bf16.gmra.mxu0 %v1857
        %v1893 = vpop.f32.mrf.mxu0
        %v1894 = vadd.f32 0.0, %v1893
        %v1895 = vpop.f32.mrf.mxu0
        %v1896 = vpop.f32.mrf.mxu0
        %v1897 = vpop.f32.mrf.mxu0
        %1898 = vdwg.mxu0
        %v1899 = vadd.f32 %v1680, %v1894
        %v1901 = vshrl.u32 %v1347, 16
        %v1903 = vrot.slane %v1901, 1
        %v1904 = vshll.u32 %v1347, 16
        %v1906 = vrot.slane %v1904, 2
        %v1907 = vor.u32 %v1903, %v1906
        %v1909 = vsel %vm1248, %v1907, 0
        %1911 = vmatprep.subr.bf16.mxu0 0
        %1912 = vmatpush1.bf16.msra.mxu0 0
        %1913 = vmatprep.subr.bf16.mxu0 0
        %1914 = vmatpush1.bf16.msra.mxu0 0
        %1915 = vmatprep.subr.bf16.mxu0 0
        %1916 = vmatpush1.bf16.msra.mxu0 0
        %1917 = vmatprep.subr.bf16.mxu0 0
        %1918 = vmatpush1.bf16.msra.mxu0 0
        %1919 = vmatprep.subr.bf16.mxu0 0
        %1920 = vmatpush1.bf16.msra.mxu0 0
        %1921 = vmatprep.subr.bf16.mxu0 0
        %1922 = vmatpush1.bf16.msra.mxu0 0
        %1923 = vmatprep.subr.bf16.mxu0 0
        %1924 = vmatpush1.bf16.msra.mxu0 %v1853
        %1925 = vmatprep.subr.bf16.mxu0 0
        %1926 = vmatpush1.bf16.msra.mxu0 %v1852
        %1927 = vmatprep.subr.bf16.mxu0 0
        %1928 = vmatpush2.bf16.msra.mxu0 0
        %1929 = vmatprep.subr.bf16.mxu0 0
        %1930 = vmatpush2.bf16.msra.mxu0 0
        %1931 = vmatprep.subr.bf16.mxu0 0
        %1932 = vmatpush2.bf16.msra.mxu0 0
        %1933 = vmatprep.subr.bf16.mxu0 0
        %1934 = vmatpush2.bf16.msra.mxu0 0
        %1935 = vmatprep.subr.bf16.mxu0 0
        %1936 = vmatpush2.bf16.msra.mxu0 0
        %1937 = vmatprep.subr.bf16.mxu0 0
        %1938 = vmatpush2.bf16.msra.mxu0 0
        %1939 = vmatprep.subr.bf16.mxu0 0
        %1940 = vmatpush2.bf16.msra.mxu0 0
        %1941 = vmatprep.subr.bf16.mxu0 0
        %1942 = vmatpush2.bf16.msra.mxu0 0
        %1943 = vmatprep.mubr.bf16.mxu0 0
        %1944 = vmatmul.mubr.bf16.gmra.mxu0 %v1909
        %v1945 = vpop.f32.mrf.mxu0
        %v1946 = vadd.f32 0.0, %v1945
        %v1947 = vpop.f32.mrf.mxu0
        %v1948 = vpop.f32.mrf.mxu0
        %v1949 = vpop.f32.mrf.mxu0
        %1950 = vdwg.mxu0
        %v1951 = vadd.f32 %v1730, %v1946
        %v1953 = vshrl.u32 %v1436, 16
        %v1955 = vrot.slane %v1953, 1
        %v1956 = vshll.u32 %v1436, 16
        %v1958 = vrot.slane %v1956, 2
        %v1959 = vor.u32 %v1955, %v1958
        %v1961 = vsel %vm1248, %v1959, 0
        %1963 = vmatprep.subr.bf16.mxu0 0
        %1964 = vmatpush1.bf16.msra.mxu0 0
        %1965 = vmatprep.subr.bf16.mxu0 0
        %1966 = vmatpush1.bf16.msra.mxu0 0
        %1967 = vmatprep.subr.bf16.mxu0 0
        %1968 = vmatpush1.bf16.msra.mxu0 0
        %1969 = vmatprep.subr.bf16.mxu0 0
        %1970 = vmatpush1.bf16.msra.mxu0 0
        %1971 = vmatprep.subr.bf16.mxu0 0
        %1972 = vmatpush1.bf16.msra.mxu0 0
        %1973 = vmatprep.subr.bf16.mxu0 0
        %1974 = vmatpush1.bf16.msra.mxu0 0
        %1975 = vmatprep.subr.bf16.mxu0 0
        %1976 = vmatpush1.bf16.msra.mxu0 %v1853
        %1977 = vmatprep.subr.bf16.mxu0 0
        %1978 = vmatpush1.bf16.msra.mxu0 %v1852
        %1979 = vmatprep.subr.bf16.mxu0 0
        %1980 = vmatpush2.bf16.msra.mxu0 0
        %1981 = vmatprep.subr.bf16.mxu0 0
        %1982 = vmatpush2.bf16.msra.mxu0 0
        %1983 = vmatprep.subr.bf16.mxu0 0
        %1984 = vmatpush2.bf16.msra.mxu0 0
        %1985 = vmatprep.subr.bf16.mxu0 0
        %1986 = vmatpush2.bf16.msra.mxu0 0
        %1987 = vmatprep.subr.bf16.mxu0 0
        %1988 = vmatpush2.bf16.msra.mxu0 0
        %1989 = vmatprep.subr.bf16.mxu0 0
        %1990 = vmatpush2.bf16.msra.mxu0 0
        %1991 = vmatprep.subr.bf16.mxu0 0
        %1992 = vmatpush2.bf16.msra.mxu0 0
        %1993 = vmatprep.subr.bf16.mxu0 0
        %1994 = vmatpush2.bf16.msra.mxu0 0
        %1995 = vmatprep.mubr.bf16.mxu0 0
        %1996 = vmatmul.mubr.bf16.gmra.mxu0 %v1961
        %v1997 = vpop.f32.mrf.mxu0
        %v1998 = vadd.f32 0.0, %v1997
        %v1999 = vpop.f32.mrf.mxu0
        %v2000 = vpop.f32.mrf.mxu0
        %v2001 = vpop.f32.mrf.mxu0
        %2002 = vdwg.mxu0
        %v2003 = vadd.f32 %v1780, %v1998
        %v2005 = vshrl.u32 %v1525, 16
        %v2007 = vrot.slane %v2005, 1
        %v2008 = vshll.u32 %v1525, 16
        %v2010 = vrot.slane %v2008, 2
        %v2011 = vor.u32 %v2007, %v2010
        %v2013 = vsel %vm1248, %v2011, 0
        %2015 = vmatprep.subr.bf16.mxu0 0
        %2016 = vmatpush1.bf16.msra.mxu0 0
        %2017 = vmatprep.subr.bf16.mxu0 0
        %2018 = vmatpush1.bf16.msra.mxu0 0
        %2019 = vmatprep.subr.bf16.mxu0 0
        %2020 = vmatpush1.bf16.msra.mxu0 0
        %2021 = vmatprep.subr.bf16.mxu0 0
        %2022 = vmatpush1.bf16.msra.mxu0 0
        %2023 = vmatprep.subr.bf16.mxu0 0
        %2024 = vmatpush1.bf16.msra.mxu0 0
        %2025 = vmatprep.subr.bf16.mxu0 0
        %2026 = vmatpush1.bf16.msra.mxu0 0
        %2027 = vmatprep.subr.bf16.mxu0 0
        %2028 = vmatpush1.bf16.msra.mxu0 %v1853
        %2029 = vmatprep.subr.bf16.mxu0 0
        %2030 = vmatpush1.bf16.msra.mxu0 %v1852
        %2031 = vmatprep.subr.bf16.mxu0 0
        %2032 = vmatpush2.bf16.msra.mxu0 0
        %2033 = vmatprep.subr.bf16.mxu0 0
        %2034 = vmatpush2.bf16.msra.mxu0 0
        %2035 = vmatprep.subr.bf16.mxu0 0
        %2036 = vmatpush2.bf16.msra.mxu0 0
        %2037 = vmatprep.subr.bf16.mxu0 0
        %2038 = vmatpush2.bf16.msra.mxu0 0
        %2039 = vmatprep.subr.bf16.mxu0 0
        %2040 = vmatpush2.bf16.msra.mxu0 0
        %2041 = vmatprep.subr.bf16.mxu0 0
        %2042 = vmatpush2.bf16.msra.mxu0 0
        %2043 = vmatprep.subr.bf16.mxu0 0
        %2044 = vmatpush2.bf16.msra.mxu0 0
        %2045 = vmatprep.subr.bf16.mxu0 0
        %2046 = vmatpush2.bf16.msra.mxu0 0
        %2047 = vmatprep.mubr.bf16.mxu0 0
        %2048 = vmatmul.mubr.bf16.gmra.mxu0 %v2013
        %v2049 = vpop.f32.mrf.mxu0
        %v2050 = vadd.f32 0.0, %v2049
        %v2051 = vpop.f32.mrf.mxu0
        %v2052 = vpop.f32.mrf.mxu0
        %v2053 = vpop.f32.mrf.mxu0
        %2054 = vdwg.mxu0
        %v2055 = vadd.f32 %v1830, %v2050
        %s2056 = scalar_lea.vmem %s3, 64
        %v2057 = vld [vmem:[%s2056] sm:$0xf]
        %v2058 = vld [vmem:[%s2056 + $0x4] sm:$0xf]
        %v2059 = vld [vmem:[%s2056 + $0x8] sm:$0xf]
        %v2060 = vld [vmem:[%s2056 + $0xc] sm:$0xf]
        %v2061 = vpack.c.bf16 %v1006, %v1006
        %v2066 = vunpack.c.l.b16 %v2057
        %v2067 = vunpack.c.l.b16 %v2058
        %v2068 = vunpack.c.l.b16 %v2059
        %v2069 = vunpack.c.l.b16 %v2060
        %v2070 = vpack.c.b16 %v2067, %v2066
        %v2071 = vpack.c.b16 %v2069, %v2068
        %v2075 = vsel %vm1248, %v2061, 0
        %2077 = vmatprep.subr.bf16.mxu0 0
        %2078 = vmatpush1.bf16.msra.mxu0 0
        %2079 = vmatprep.subr.bf16.mxu0 0
        %2080 = vmatpush1.bf16.msra.mxu0 0
        %2081 = vmatprep.subr.bf16.mxu0 0
        %2082 = vmatpush1.bf16.msra.mxu0 0
        %2083 = vmatprep.subr.bf16.mxu0 0
        %2084 = vmatpush1.bf16.msra.mxu0 0
        %2085 = vmatprep.subr.bf16.mxu0 0
        %2086 = vmatpush1.bf16.msra.mxu0 0
        %2087 = vmatprep.subr.bf16.mxu0 0
        %2088 = vmatpush1.bf16.msra.mxu0 0
        %2089 = vmatprep.subr.bf16.mxu0 0
        %2090 = vmatpush1.bf16.msra.mxu0 %v2071
        %2091 = vmatprep.subr.bf16.mxu0 0
        %2092 = vmatpush1.bf16.msra.mxu0 %v2070
        %2093 = vmatprep.subr.bf16.mxu0 0
        %2094 = vmatpush2.bf16.msra.mxu0 0
        %2095 = vmatprep.subr.bf16.mxu0 0
        %2096 = vmatpush2.bf16.msra.mxu0 0
        %2097 = vmatprep.subr.bf16.mxu0 0
        %2098 = vmatpush2.bf16.msra.mxu0 0
        %2099 = vmatprep.subr.bf16.mxu0 0
        %2100 = vmatpush2.bf16.msra.mxu0 0
        %2101 = vmatprep.subr.bf16.mxu0 0
        %2102 = vmatpush2.bf16.msra.mxu0 0
        %2103 = vmatprep.subr.bf16.mxu0 0
        %2104 = vmatpush2.bf16.msra.mxu0 0
        %2105 = vmatprep.subr.bf16.mxu0 0
        %2106 = vmatpush2.bf16.msra.mxu0 0
        %2107 = vmatprep.subr.bf16.mxu0 0
        %2108 = vmatpush2.bf16.msra.mxu0 0
        %2109 = vmatprep.mubr.bf16.mxu0 0
        %2110 = vmatmul.mubr.bf16.gmra.mxu0 %v2075
        %v2111 = vpop.f32.mrf.mxu0
        %v2112 = vadd.f32 0.0, %v2111
        %v2113 = vpop.f32.mrf.mxu0
        %v2114 = vpop.f32.mrf.mxu0
        %v2115 = vpop.f32.mrf.mxu0
        %2116 = vdwg.mxu0
        %v2117 = vadd.f32 %v1899, %v2112
        %v2118 = vpack.c.bf16 %v1058, %v1058
        %v2120 = vsel %vm1248, %v2118, 0
        %2122 = vmatprep.subr.bf16.mxu0 0
        %2123 = vmatpush1.bf16.msra.mxu0 0
        %2124 = vmatprep.subr.bf16.mxu0 0
        %2125 = vmatpush1.bf16.msra.mxu0 0
        %2126 = vmatprep.subr.bf16.mxu0 0
        %2127 = vmatpush1.bf16.msra.mxu0 0
        %2128 = vmatprep.subr.bf16.mxu0 0
        %2129 = vmatpush1.bf16.msra.mxu0 0
        %2130 = vmatprep.subr.bf16.mxu0 0
        %2131 = vmatpush1.bf16.msra.mxu0 0
        %2132 = vmatprep.subr.bf16.mxu0 0
        %2133 = vmatpush1.bf16.msra.mxu0 0
        %2134 = vmatprep.subr.bf16.mxu0 0
        %2135 = vmatpush1.bf16.msra.mxu0 %v2071
        %2136 = vmatprep.subr.bf16.mxu0 0
        %2137 = vmatpush1.bf16.msra.mxu0 %v2070
        %2138 = vmatprep.subr.bf16.mxu0 0
        %2139 = vmatpush2.bf16.msra.mxu0 0
        %2140 = vmatprep.subr.bf16.mxu0 0
        %2141 = vmatpush2.bf16.msra.mxu0 0
        %2142 = vmatprep.subr.bf16.mxu0 0
        %2143 = vmatpush2.bf16.msra.mxu0 0
        %2144 = vmatprep.subr.bf16.mxu0 0
        %2145 = vmatpush2.bf16.msra.mxu0 0
        %2146 = vmatprep.subr.bf16.mxu0 0
        %2147 = vmatpush2.bf16.msra.mxu0 0
        %2148 = vmatprep.subr.bf16.mxu0 0
        %2149 = vmatpush2.bf16.msra.mxu0 0
        %2150 = vmatprep.subr.bf16.mxu0 0
        %2151 = vmatpush2.bf16.msra.mxu0 0
        %2152 = vmatprep.subr.bf16.mxu0 0
        %2153 = vmatpush2.bf16.msra.mxu0 0
        %2154 = vmatprep.mubr.bf16.mxu0 0
        %2155 = vmatmul.mubr.bf16.gmra.mxu0 %v2120
        %v2156 = vpop.f32.mrf.mxu0
        %v2157 = vadd.f32 0.0, %v2156
        %v2158 = vpop.f32.mrf.mxu0
        %v2159 = vpop.f32.mrf.mxu0
        %v2160 = vpop.f32.mrf.mxu0
        %2161 = vdwg.mxu0
        %v2162 = vadd.f32 %v1951, %v2157
        %v2163 = vpack.c.bf16 %v1110, %v1110
        %v2165 = vsel %vm1248, %v2163, 0
        %2167 = vmatprep.subr.bf16.mxu0 0
        %2168 = vmatpush1.bf16.msra.mxu0 0
        %2169 = vmatprep.subr.bf16.mxu0 0
        %2170 = vmatpush1.bf16.msra.mxu0 0
        %2171 = vmatprep.subr.bf16.mxu0 0
        %2172 = vmatpush1.bf16.msra.mxu0 0
        %2173 = vmatprep.subr.bf16.mxu0 0
        %2174 = vmatpush1.bf16.msra.mxu0 0
        %2175 = vmatprep.subr.bf16.mxu0 0
        %2176 = vmatpush1.bf16.msra.mxu0 0
        %2177 = vmatprep.subr.bf16.mxu0 0
        %2178 = vmatpush1.bf16.msra.mxu0 0
        %2179 = vmatprep.subr.bf16.mxu0 0
        %2180 = vmatpush1.bf16.msra.mxu0 %v2071
        %2181 = vmatprep.subr.bf16.mxu0 0
        %2182 = vmatpush1.bf16.msra.mxu0 %v2070
        %2183 = vmatprep.subr.bf16.mxu0 0
        %2184 = vmatpush2.bf16.msra.mxu0 0
        %2185 = vmatprep.subr.bf16.mxu0 0
        %2186 = vmatpush2.bf16.msra.mxu0 0
        %2187 = vmatprep.subr.bf16.mxu0 0
        %2188 = vmatpush2.bf16.msra.mxu0 0
        %2189 = vmatprep.subr.bf16.mxu0 0
        %2190 = vmatpush2.bf16.msra.mxu0 0
        %2191 = vmatprep.subr.bf16.mxu0 0
        %2192 = vmatpush2.bf16.msra.mxu0 0
        %2193 = vmatprep.subr.bf16.mxu0 0
        %2194 = vmatpush2.bf16.msra.mxu0 0
        %2195 = vmatprep.subr.bf16.mxu0 0
        %2196 = vmatpush2.bf16.msra.mxu0 0
        %2197 = vmatprep.subr.bf16.mxu0 0
        %2198 = vmatpush2.bf16.msra.mxu0 0
        %2199 = vmatprep.mubr.bf16.mxu0 0
        %2200 = vmatmul.mubr.bf16.gmra.mxu0 %v2165
        %v2201 = vpop.f32.mrf.mxu0
        %v2202 = vadd.f32 0.0, %v2201
        %v2203 = vpop.f32.mrf.mxu0
        %v2204 = vpop.f32.mrf.mxu0
        %v2205 = vpop.f32.mrf.mxu0
        %2206 = vdwg.mxu0
        %v2207 = vadd.f32 %v2003, %v2202
        %v2208 = vpack.c.bf16 %v1162, %v1162
        %v2210 = vsel %vm1248, %v2208, 0
        %2212 = vmatprep.subr.bf16.mxu0 0
        %2213 = vmatpush1.bf16.msra.mxu0 0
        %2214 = vmatprep.subr.bf16.mxu0 0
        %2215 = vmatpush1.bf16.msra.mxu0 0
        %2216 = vmatprep.subr.bf16.mxu0 0
        %2217 = vmatpush1.bf16.msra.mxu0 0
        %2218 = vmatprep.subr.bf16.mxu0 0
        %2219 = vmatpush1.bf16.msra.mxu0 0
        %2220 = vmatprep.subr.bf16.mxu0 0
        %2221 = vmatpush1.bf16.msra.mxu0 0
        %2222 = vmatprep.subr.bf16.mxu0 0
        %2223 = vmatpush1.bf16.msra.mxu0 0
        %2224 = vmatprep.subr.bf16.mxu0 0
        %2225 = vmatpush1.bf16.msra.mxu0 %v2071
        %2226 = vmatprep.subr.bf16.mxu0 0
        %2227 = vmatpush1.bf16.msra.mxu0 %v2070
        %2228 = vmatprep.subr.bf16.mxu0 0
        %2229 = vmatpush2.bf16.msra.mxu0 0
        %2230 = vmatprep.subr.bf16.mxu0 0
        %2231 = vmatpush2.bf16.msra.mxu0 0
        %2232 = vmatprep.subr.bf16.mxu0 0
        %2233 = vmatpush2.bf16.msra.mxu0 0
        %2234 = vmatprep.subr.bf16.mxu0 0
        %2235 = vmatpush2.bf16.msra.mxu0 0
        %2236 = vmatprep.subr.bf16.mxu0 0
        %2237 = vmatpush2.bf16.msra.mxu0 0
        %2238 = vmatprep.subr.bf16.mxu0 0
        %2239 = vmatpush2.bf16.msra.mxu0 0
        %2240 = vmatprep.subr.bf16.mxu0 0
        %2241 = vmatpush2.bf16.msra.mxu0 0
        %2242 = vmatprep.subr.bf16.mxu0 0
        %2243 = vmatpush2.bf16.msra.mxu0 0
        %2244 = vmatprep.mubr.bf16.mxu0 0
        %2245 = vmatmul.mubr.bf16.gmra.mxu0 %v2210
        %v2246 = vpop.f32.mrf.mxu0
        %v2247 = vadd.f32 0.0, %v2246
        %v2248 = vpop.f32.mrf.mxu0
        %v2249 = vpop.f32.mrf.mxu0
        %v2250 = vpop.f32.mrf.mxu0
        %2251 = vdwg.mxu0
        %v2252 = vadd.f32 %v2055, %v2247
        %s2253 = scalar_lea.vmem %s3, 80
        %v2254 = vld [vmem:[%s2253] sm:$0xf]
        %v2255 = vld [vmem:[%s2253 + $0x4] sm:$0xf]
        %v2256 = vld [vmem:[%s2253 + $0x8] sm:$0xf]
        %v2257 = vld [vmem:[%s2253 + $0xc] sm:$0xf]
        %v2258 = vpack.c.bf16 %v1011, %v1011
        %v2260 = vrot.slane %v2258, 1
        %v2265 = vunpack.c.l.b16 %v2254
        %v2266 = vunpack.c.l.b16 %v2255
        %v2267 = vunpack.c.l.b16 %v2256
        %v2268 = vunpack.c.l.b16 %v2257
        %v2269 = vpack.c.b16 %v2266, %v2265
        %v2270 = vpack.c.b16 %v2268, %v2267
        %v2274 = vsel %vm1248, %v2260, 0
        %2276 = vmatprep.subr.bf16.mxu0 0
        %2277 = vmatpush1.bf16.msra.mxu0 0
        %2278 = vmatprep.subr.bf16.mxu0 0
        %2279 = vmatpush1.bf16.msra.mxu0 0
        %2280 = vmatprep.subr.bf16.mxu0 0
        %2281 = vmatpush1.bf16.msra.mxu0 0
        %2282 = vmatprep.subr.bf16.mxu0 0
        %2283 = vmatpush1.bf16.msra.mxu0 0
        %2284 = vmatprep.subr.bf16.mxu0 0
        %2285 = vmatpush1.bf16.msra.mxu0 0
        %2286 = vmatprep.subr.bf16.mxu0 0
        %2287 = vmatpush1.bf16.msra.mxu0 0
        %2288 = vmatprep.subr.bf16.mxu0 0
        %2289 = vmatpush1.bf16.msra.mxu0 %v2270
        %2290 = vmatprep.subr.bf16.mxu0 0
        %2291 = vmatpush1.bf16.msra.mxu0 %v2269
        %2292 = vmatprep.subr.bf16.mxu0 0
        %2293 = vmatpush2.bf16.msra.mxu0 0
        %2294 = vmatprep.subr.bf16.mxu0 0
        %2295 = vmatpush2.bf16.msra.mxu0 0
        %2296 = vmatprep.subr.bf16.mxu0 0
        %2297 = vmatpush2.bf16.msra.mxu0 0
        %2298 = vmatprep.subr.bf16.mxu0 0
        %2299 = vmatpush2.bf16.msra.mxu0 0
        %2300 = vmatprep.subr.bf16.mxu0 0
        %2301 = vmatpush2.bf16.msra.mxu0 0
        %2302 = vmatprep.subr.bf16.mxu0 0
        %2303 = vmatpush2.bf16.msra.mxu0 0
        %2304 = vmatprep.subr.bf16.mxu0 0
        %2305 = vmatpush2.bf16.msra.mxu0 0
        %2306 = vmatprep.subr.bf16.mxu0 0
        %2307 = vmatpush2.bf16.msra.mxu0 0
        %2308 = vmatprep.mubr.bf16.mxu0 0
        %2309 = vmatmul.mubr.bf16.gmra.mxu0 %v2274
        %v2310 = vpop.f32.mrf.mxu0
        %v2311 = vadd.f32 0.0, %v2310
        %v2312 = vpop.f32.mrf.mxu0
        %v2313 = vpop.f32.mrf.mxu0
        %v2314 = vpop.f32.mrf.mxu0
        %2315 = vdwg.mxu0
        %v2316 = vadd.f32 %v2117, %v2311
        %v2317 = vpack.c.bf16 %v1063, %v1063
        %v2319 = vrot.slane %v2317, 1
        %v2321 = vsel %vm1248, %v2319, 0
        %2323 = vmatprep.subr.bf16.mxu0 0
        %2324 = vmatpush1.bf16.msra.mxu0 0
        %2325 = vmatprep.subr.bf16.mxu0 0
        %2326 = vmatpush1.bf16.msra.mxu0 0
        %2327 = vmatprep.subr.bf16.mxu0 0
        %2328 = vmatpush1.bf16.msra.mxu0 0
        %2329 = vmatprep.subr.bf16.mxu0 0
        %2330 = vmatpush1.bf16.msra.mxu0 0
        %2331 = vmatprep.subr.bf16.mxu0 0
        %2332 = vmatpush1.bf16.msra.mxu0 0
        %2333 = vmatprep.subr.bf16.mxu0 0
        %2334 = vmatpush1.bf16.msra.mxu0 0
        %2335 = vmatprep.subr.bf16.mxu0 0
        %2336 = vmatpush1.bf16.msra.mxu0 %v2270
        %2337 = vmatprep.subr.bf16.mxu0 0
        %2338 = vmatpush1.bf16.msra.mxu0 %v2269
        %2339 = vmatprep.subr.bf16.mxu0 0
        %2340 = vmatpush2.bf16.msra.mxu0 0
        %2341 = vmatprep.subr.bf16.mxu0 0
        %2342 = vmatpush2.bf16.msra.mxu0 0
        %2343 = vmatprep.subr.bf16.mxu0 0
        %2344 = vmatpush2.bf16.msra.mxu0 0
        %2345 = vmatprep.subr.bf16.mxu0 0
        %2346 = vmatpush2.bf16.msra.mxu0 0
        %2347 = vmatprep.subr.bf16.mxu0 0
        %2348 = vmatpush2.bf16.msra.mxu0 0
        %2349 = vmatprep.subr.bf16.mxu0 0
        %2350 = vmatpush2.bf16.msra.mxu0 0
        %2351 = vmatprep.subr.bf16.mxu0 0
        %2352 = vmatpush2.bf16.msra.mxu0 0
        %2353 = vmatprep.subr.bf16.mxu0 0
        %2354 = vmatpush2.bf16.msra.mxu0 0
        %2355 = vmatprep.mubr.bf16.mxu0 0
        %2356 = vmatmul.mubr.bf16.gmra.mxu0 %v2321
        %v2357 = vpop.f32.mrf.mxu0
        %v2358 = vadd.f32 0.0, %v2357
        %v2359 = vpop.f32.mrf.mxu0
        %v2360 = vpop.f32.mrf.mxu0
        %v2361 = vpop.f32.mrf.mxu0
        %2362 = vdwg.mxu0
        %v2363 = vadd.f32 %v2162, %v2358
        %v2364 = vpack.c.bf16 %v1115, %v1115
        %v2366 = vrot.slane %v2364, 1
        %v2368 = vsel %vm1248, %v2366, 0
        %2370 = vmatprep.subr.bf16.mxu0 0
        %2371 = vmatpush1.bf16.msra.mxu0 0
        %2372 = vmatprep.subr.bf16.mxu0 0
        %2373 = vmatpush1.bf16.msra.mxu0 0
        %2374 = vmatprep.subr.bf16.mxu0 0
        %2375 = vmatpush1.bf16.msra.mxu0 0
        %2376 = vmatprep.subr.bf16.mxu0 0
        %2377 = vmatpush1.bf16.msra.mxu0 0
        %2378 = vmatprep.subr.bf16.mxu0 0
        %2379 = vmatpush1.bf16.msra.mxu0 0
        %2380 = vmatprep.subr.bf16.mxu0 0
        %2381 = vmatpush1.bf16.msra.mxu0 0
        %2382 = vmatprep.subr.bf16.mxu0 0
        %2383 = vmatpush1.bf16.msra.mxu0 %v2270
        %2384 = vmatprep.subr.bf16.mxu0 0
        %2385 = vmatpush1.bf16.msra.mxu0 %v2269
        %2386 = vmatprep.subr.bf16.mxu0 0
        %2387 = vmatpush2.bf16.msra.mxu0 0
        %2388 = vmatprep.subr.bf16.mxu0 0
        %2389 = vmatpush2.bf16.msra.mxu0 0
        %2390 = vmatprep.subr.bf16.mxu0 0
        %2391 = vmatpush2.bf16.msra.mxu0 0
        %2392 = vmatprep.subr.bf16.mxu0 0
        %2393 = vmatpush2.bf16.msra.mxu0 0
        %2394 = vmatprep.subr.bf16.mxu0 0
        %2395 = vmatpush2.bf16.msra.mxu0 0
        %2396 = vmatprep.subr.bf16.mxu0 0
        %2397 = vmatpush2.bf16.msra.mxu0 0
        %2398 = vmatprep.subr.bf16.mxu0 0
        %2399 = vmatpush2.bf16.msra.mxu0 0
        %2400 = vmatprep.subr.bf16.mxu0 0
        %2401 = vmatpush2.bf16.msra.mxu0 0
        %2402 = vmatprep.mubr.bf16.mxu0 0
        %2403 = vmatmul.mubr.bf16.gmra.mxu0 %v2368
        %v2404 = vpop.f32.mrf.mxu0
        %v2405 = vadd.f32 0.0, %v2404
        %v2406 = vpop.f32.mrf.mxu0
        %v2407 = vpop.f32.mrf.mxu0
        %v2408 = vpop.f32.mrf.mxu0
        %2409 = vdwg.mxu0
        %v2410 = vadd.f32 %v2207, %v2405
        %v2411 = vpack.c.bf16 %v1167, %v1167
        %v2413 = vrot.slane %v2411, 1
        %v2415 = vsel %vm1248, %v2413, 0
        %2417 = vmatprep.subr.bf16.mxu0 0
        %2418 = vmatpush1.bf16.msra.mxu0 0
        %2419 = vmatprep.subr.bf16.mxu0 0
        %2420 = vmatpush1.bf16.msra.mxu0 0
        %2421 = vmatprep.subr.bf16.mxu0 0
        %2422 = vmatpush1.bf16.msra.mxu0 0
        %2423 = vmatprep.subr.bf16.mxu0 0
        %2424 = vmatpush1.bf16.msra.mxu0 0
        %2425 = vmatprep.subr.bf16.mxu0 0
        %2426 = vmatpush1.bf16.msra.mxu0 0
        %2427 = vmatprep.subr.bf16.mxu0 0
        %2428 = vmatpush1.bf16.msra.mxu0 0
        %2429 = vmatprep.subr.bf16.mxu0 0
        %2430 = vmatpush1.bf16.msra.mxu0 %v2270
        %2431 = vmatprep.subr.bf16.mxu0 0
        %2432 = vmatpush1.bf16.msra.mxu0 %v2269
        %2433 = vmatprep.subr.bf16.mxu0 0
        %2434 = vmatpush2.bf16.msra.mxu0 0
        %2435 = vmatprep.subr.bf16.mxu0 0
        %2436 = vmatpush2.bf16.msra.mxu0 0
        %2437 = vmatprep.subr.bf16.mxu0 0
        %2438 = vmatpush2.bf16.msra.mxu0 0
        %2439 = vmatprep.subr.bf16.mxu0 0
        %2440 = vmatpush2.bf16.msra.mxu0 0
        %2441 = vmatprep.subr.bf16.mxu0 0
        %2442 = vmatpush2.bf16.msra.mxu0 0
        %2443 = vmatprep.subr.bf16.mxu0 0
        %2444 = vmatpush2.bf16.msra.mxu0 0
        %2445 = vmatprep.subr.bf16.mxu0 0
        %2446 = vmatpush2.bf16.msra.mxu0 0
        %2447 = vmatprep.subr.bf16.mxu0 0
        %2448 = vmatpush2.bf16.msra.mxu0 0
        %2449 = vmatprep.mubr.bf16.mxu0 0
        %2450 = vmatmul.mubr.bf16.gmra.mxu0 %v2415
        %v2451 = vpop.f32.mrf.mxu0
        %v2452 = vadd.f32 0.0, %v2451
        %v2453 = vpop.f32.mrf.mxu0
        %v2454 = vpop.f32.mrf.mxu0
        %v2455 = vpop.f32.mrf.mxu0
        %2456 = vdwg.mxu0
        %v2457 = vadd.f32 %v2252, %v2452
        %s2458 = scalar_lea.vmem %s3, 96
        %v2459 = vld [vmem:[%s2458] sm:$0xf]
        %v2460 = vld [vmem:[%s2458 + $0x4] sm:$0xf]
        %v2461 = vld [vmem:[%s2458 + $0x8] sm:$0xf]
        %v2462 = vld [vmem:[%s2458 + $0xc] sm:$0xf]
        %v2463 = vshrl.u32 %v2061, 16
        %v2465 = vshll.u32 %v2061, 16
        %v2467 = vrot.slane %v2465, 1
        %v2468 = vor.u32 %v2463, %v2467
        %v2473 = vunpack.c.l.b16 %v2459
        %v2474 = vunpack.c.l.b16 %v2460
        %v2475 = vunpack.c.l.b16 %v2461
        %v2476 = vunpack.c.l.b16 %v2462
        %v2477 = vpack.c.b16 %v2474, %v2473
        %v2478 = vpack.c.b16 %v2476, %v2475
        %v2482 = vsel %vm1248, %v2468, 0
        %2484 = vmatprep.subr.bf16.mxu0 0
        %2485 = vmatpush1.bf16.msra.mxu0 0
        %2486 = vmatprep.subr.bf16.mxu0 0
        %2487 = vmatpush1.bf16.msra.mxu0 0
        %2488 = vmatprep.subr.bf16.mxu0 0
        %2489 = vmatpush1.bf16.msra.mxu0 0
        %2490 = vmatprep.subr.bf16.mxu0 0
        %2491 = vmatpush1.bf16.msra.mxu0 0
        %2492 = vmatprep.subr.bf16.mxu0 0
        %2493 = vmatpush1.bf16.msra.mxu0 0
        %2494 = vmatprep.subr.bf16.mxu0 0
        %2495 = vmatpush1.bf16.msra.mxu0 0
        %2496 = vmatprep.subr.bf16.mxu0 0
        %2497 = vmatpush1.bf16.msra.mxu0 %v2478
        %2498 = vmatprep.subr.bf16.mxu0 0
        %2499 = vmatpush1.bf16.msra.mxu0 %v2477
        %2500 = vmatprep.subr.bf16.mxu0 0
        %2501 = vmatpush2.bf16.msra.mxu0 0
        %2502 = vmatprep.subr.bf16.mxu0 0
        %2503 = vmatpush2.bf16.msra.mxu0 0
        %2504 = vmatprep.subr.bf16.mxu0 0
        %2505 = vmatpush2.bf16.msra.mxu0 0
        %2506 = vmatprep.subr.bf16.mxu0 0
        %2507 = vmatpush2.bf16.msra.mxu0 0
        %2508 = vmatprep.subr.bf16.mxu0 0
        %2509 = vmatpush2.bf16.msra.mxu0 0
        %2510 = vmatprep.subr.bf16.mxu0 0
        %2511 = vmatpush2.bf16.msra.mxu0 0
        %2512 = vmatprep.subr.bf16.mxu0 0
        %2513 = vmatpush2.bf16.msra.mxu0 0
        %2514 = vmatprep.subr.bf16.mxu0 0
        %2515 = vmatpush2.bf16.msra.mxu0 0
        %2516 = vmatprep.mubr.bf16.mxu0 0
        %2517 = vmatmul.mubr.bf16.gmra.mxu0 %v2482
        %v2518 = vpop.f32.mrf.mxu0
        %v2519 = vadd.f32 0.0, %v2518
        %v2520 = vpop.f32.mrf.mxu0
        %v2521 = vpop.f32.mrf.mxu0
        %v2522 = vpop.f32.mrf.mxu0
        %2523 = vdwg.mxu0
        %v2524 = vadd.f32 %v2316, %v2519
        %v2525 = vshrl.u32 %v2118, 16
        %v2527 = vshll.u32 %v2118, 16
        %v2529 = vrot.slane %v2527, 1
        %v2530 = vor.u32 %v2525, %v2529
        %v2532 = vsel %vm1248, %v2530, 0
        %2534 = vmatprep.subr.bf16.mxu0 0
        %2535 = vmatpush1.bf16.msra.mxu0 0
        %2536 = vmatprep.subr.bf16.mxu0 0
        %2537 = vmatpush1.bf16.msra.mxu0 0
        %2538 = vmatprep.subr.bf16.mxu0 0
        %2539 = vmatpush1.bf16.msra.mxu0 0
        %2540 = vmatprep.subr.bf16.mxu0 0
        %2541 = vmatpush1.bf16.msra.mxu0 0
        %2542 = vmatprep.subr.bf16.mxu0 0
        %2543 = vmatpush1.bf16.msra.mxu0 0
        %2544 = vmatprep.subr.bf16.mxu0 0
        %2545 = vmatpush1.bf16.msra.mxu0 0
        %2546 = vmatprep.subr.bf16.mxu0 0
        %2547 = vmatpush1.bf16.msra.mxu0 %v2478
        %2548 = vmatprep.subr.bf16.mxu0 0
        %2549 = vmatpush1.bf16.msra.mxu0 %v2477
        %2550 = vmatprep.subr.bf16.mxu0 0
        %2551 = vmatpush2.bf16.msra.mxu0 0
        %2552 = vmatprep.subr.bf16.mxu0 0
        %2553 = vmatpush2.bf16.msra.mxu0 0
        %2554 = vmatprep.subr.bf16.mxu0 0
        %2555 = vmatpush2.bf16.msra.mxu0 0
        %2556 = vmatprep.subr.bf16.mxu0 0
        %2557 = vmatpush2.bf16.msra.mxu0 0
        %2558 = vmatprep.subr.bf16.mxu0 0
        %2559 = vmatpush2.bf16.msra.mxu0 0
        %2560 = vmatprep.subr.bf16.mxu0 0
        %2561 = vmatpush2.bf16.msra.mxu0 0
        %2562 = vmatprep.subr.bf16.mxu0 0
        %2563 = vmatpush2.bf16.msra.mxu0 0
        %2564 = vmatprep.subr.bf16.mxu0 0
        %2565 = vmatpush2.bf16.msra.mxu0 0
        %2566 = vmatprep.mubr.bf16.mxu0 0
        %2567 = vmatmul.mubr.bf16.gmra.mxu0 %v2532
        %v2568 = vpop.f32.mrf.mxu0
        %v2569 = vadd.f32 0.0, %v2568
        %v2570 = vpop.f32.mrf.mxu0
        %v2571 = vpop.f32.mrf.mxu0
        %v2572 = vpop.f32.mrf.mxu0
        %2573 = vdwg.mxu0
        %v2574 = vadd.f32 %v2363, %v2569
        %v2575 = vshrl.u32 %v2163, 16
        %v2577 = vshll.u32 %v2163, 16
        %v2579 = vrot.slane %v2577, 1
        %v2580 = vor.u32 %v2575, %v2579
        %v2582 = vsel %vm1248, %v2580, 0
        %2584 = vmatprep.subr.bf16.mxu0 0
        %2585 = vmatpush1.bf16.msra.mxu0 0
        %2586 = vmatprep.subr.bf16.mxu0 0
        %2587 = vmatpush1.bf16.msra.mxu0 0
        %2588 = vmatprep.subr.bf16.mxu0 0
        %2589 = vmatpush1.bf16.msra.mxu0 0
        %2590 = vmatprep.subr.bf16.mxu0 0
        %2591 = vmatpush1.bf16.msra.mxu0 0
        %2592 = vmatprep.subr.bf16.mxu0 0
        %2593 = vmatpush1.bf16.msra.mxu0 0
        %2594 = vmatprep.subr.bf16.mxu0 0
        %2595 = vmatpush1.bf16.msra.mxu0 0
        %2596 = vmatprep.subr.bf16.mxu0 0
        %2597 = vmatpush1.bf16.msra.mxu0 %v2478
        %2598 = vmatprep.subr.bf16.mxu0 0
        %2599 = vmatpush1.bf16.msra.mxu0 %v2477
        %2600 = vmatprep.subr.bf16.mxu0 0
        %2601 = vmatpush2.bf16.msra.mxu0 0
        %2602 = vmatprep.subr.bf16.mxu0 0
        %2603 = vmatpush2.bf16.msra.mxu0 0
        %2604 = vmatprep.subr.bf16.mxu0 0
        %2605 = vmatpush2.bf16.msra.mxu0 0
        %2606 = vmatprep.subr.bf16.mxu0 0
        %2607 = vmatpush2.bf16.msra.mxu0 0
        %2608 = vmatprep.subr.bf16.mxu0 0
        %2609 = vmatpush2.bf16.msra.mxu0 0
        %2610 = vmatprep.subr.bf16.mxu0 0
        %2611 = vmatpush2.bf16.msra.mxu0 0
        %2612 = vmatprep.subr.bf16.mxu0 0
        %2613 = vmatpush2.bf16.msra.mxu0 0
        %2614 = vmatprep.subr.bf16.mxu0 0
        %2615 = vmatpush2.bf16.msra.mxu0 0
        %2616 = vmatprep.mubr.bf16.mxu0 0
        %2617 = vmatmul.mubr.bf16.gmra.mxu0 %v2582
        %v2618 = vpop.f32.mrf.mxu0
        %v2619 = vadd.f32 0.0, %v2618
        %v2620 = vpop.f32.mrf.mxu0
        %v2621 = vpop.f32.mrf.mxu0
        %v2622 = vpop.f32.mrf.mxu0
        %2623 = vdwg.mxu0
        %v2624 = vadd.f32 %v2410, %v2619
        %v2625 = vshrl.u32 %v2208, 16
        %v2627 = vshll.u32 %v2208, 16
        %v2629 = vrot.slane %v2627, 1
        %v2630 = vor.u32 %v2625, %v2629
        %v2632 = vsel %vm1248, %v2630, 0
        %2634 = vmatprep.subr.bf16.mxu0 0
        %2635 = vmatpush1.bf16.msra.mxu0 0
        %2636 = vmatprep.subr.bf16.mxu0 0
        %2637 = vmatpush1.bf16.msra.mxu0 0
        %2638 = vmatprep.subr.bf16.mxu0 0
        %2639 = vmatpush1.bf16.msra.mxu0 0
        %2640 = vmatprep.subr.bf16.mxu0 0
        %2641 = vmatpush1.bf16.msra.mxu0 0
        %2642 = vmatprep.subr.bf16.mxu0 0
        %2643 = vmatpush1.bf16.msra.mxu0 0
        %2644 = vmatprep.subr.bf16.mxu0 0
        %2645 = vmatpush1.bf16.msra.mxu0 0
        %2646 = vmatprep.subr.bf16.mxu0 0
        %2647 = vmatpush1.bf16.msra.mxu0 %v2478
        %2648 = vmatprep.subr.bf16.mxu0 0
        %2649 = vmatpush1.bf16.msra.mxu0 %v2477
        %2650 = vmatprep.subr.bf16.mxu0 0
        %2651 = vmatpush2.bf16.msra.mxu0 0
        %2652 = vmatprep.subr.bf16.mxu0 0
        %2653 = vmatpush2.bf16.msra.mxu0 0
        %2654 = vmatprep.subr.bf16.mxu0 0
        %2655 = vmatpush2.bf16.msra.mxu0 0
        %2656 = vmatprep.subr.bf16.mxu0 0
        %2657 = vmatpush2.bf16.msra.mxu0 0
        %2658 = vmatprep.subr.bf16.mxu0 0
        %2659 = vmatpush2.bf16.msra.mxu0 0
        %2660 = vmatprep.subr.bf16.mxu0 0
        %2661 = vmatpush2.bf16.msra.mxu0 0
        %2662 = vmatprep.subr.bf16.mxu0 0
        %2663 = vmatpush2.bf16.msra.mxu0 0
        %2664 = vmatprep.subr.bf16.mxu0 0
        %2665 = vmatpush2.bf16.msra.mxu0 0
        %2666 = vmatprep.mubr.bf16.mxu0 0
        %2667 = vmatmul.mubr.bf16.gmra.mxu0 %v2632
        %v2668 = vpop.f32.mrf.mxu0
        %v2669 = vadd.f32 0.0, %v2668
        %v2670 = vpop.f32.mrf.mxu0
        %v2671 = vpop.f32.mrf.mxu0
        %v2672 = vpop.f32.mrf.mxu0
        %2673 = vdwg.mxu0
        %v2674 = vadd.f32 %v2457, %v2669
        %s2675 = scalar_lea.vmem %s3, 112
        %v2676 = vld [vmem:[%s2675] sm:$0xf]
        %v2677 = vld [vmem:[%s2675 + $0x4] sm:$0xf]
        %v2678 = vld [vmem:[%s2675 + $0x8] sm:$0xf]
        %v2679 = vld [vmem:[%s2675 + $0xc] sm:$0xf]
        %v2681 = vshrl.u32 %v2258, 16
        %v2683 = vrot.slane %v2681, 1
        %v2684 = vshll.u32 %v2258, 16
        %v2686 = vrot.slane %v2684, 2
        %v2687 = vor.u32 %v2683, %v2686
        %v2692 = vunpack.c.l.b16 %v2676
        %v2693 = vunpack.c.l.b16 %v2677
        %v2694 = vunpack.c.l.b16 %v2678
        %v2695 = vunpack.c.l.b16 %v2679
        %v2696 = vpack.c.b16 %v2693, %v2692
        %v2697 = vpack.c.b16 %v2695, %v2694
        %v2701 = vsel %vm1248, %v2687, 0
        %2703 = vmatprep.subr.bf16.mxu0 0
        %2704 = vmatpush1.bf16.msra.mxu0 0
        %2705 = vmatprep.subr.bf16.mxu0 0
        %2706 = vmatpush1.bf16.msra.mxu0 0
        %2707 = vmatprep.subr.bf16.mxu0 0
        %2708 = vmatpush1.bf16.msra.mxu0 0
        %2709 = vmatprep.subr.bf16.mxu0 0
        %2710 = vmatpush1.bf16.msra.mxu0 0
        %2711 = vmatprep.subr.bf16.mxu0 0
        %2712 = vmatpush1.bf16.msra.mxu0 0
        %2713 = vmatprep.subr.bf16.mxu0 0
        %2714 = vmatpush1.bf16.msra.mxu0 0
        %2715 = vmatprep.subr.bf16.mxu0 0
        %2716 = vmatpush1.bf16.msra.mxu0 %v2697
        %2717 = vmatprep.subr.bf16.mxu0 0
        %2718 = vmatpush1.bf16.msra.mxu0 %v2696
        %2719 = vmatprep.subr.bf16.mxu0 0
        %2720 = vmatpush2.bf16.msra.mxu0 0
        %2721 = vmatprep.subr.bf16.mxu0 0
        %2722 = vmatpush2.bf16.msra.mxu0 0
        %2723 = vmatprep.subr.bf16.mxu0 0
        %2724 = vmatpush2.bf16.msra.mxu0 0
        %2725 = vmatprep.subr.bf16.mxu0 0
        %2726 = vmatpush2.bf16.msra.mxu0 0
        %2727 = vmatprep.subr.bf16.mxu0 0
        %2728 = vmatpush2.bf16.msra.mxu0 0
        %2729 = vmatprep.subr.bf16.mxu0 0
        %2730 = vmatpush2.bf16.msra.mxu0 0
        %2731 = vmatprep.subr.bf16.mxu0 0
        %2732 = vmatpush2.bf16.msra.mxu0 0
        %2733 = vmatprep.subr.bf16.mxu0 0
        %2734 = vmatpush2.bf16.msra.mxu0 0
        %2735 = vmatprep.mubr.bf16.mxu0 0
        %2736 = vmatmul.mubr.bf16.gmra.mxu0 %v2701
        %v2737 = vpop.f32.mrf.mxu0
        %v2738 = vadd.f32 0.0, %v2737
        %v2739 = vpop.f32.mrf.mxu0
        %v2740 = vpop.f32.mrf.mxu0
        %v2741 = vpop.f32.mrf.mxu0
        %2742 = vdwg.mxu0
        %v2743 = vadd.f32 %v2524, %v2738
        %v2745 = vshrl.u32 %v2317, 16
        %v2747 = vrot.slane %v2745, 1
        %v2748 = vshll.u32 %v2317, 16
        %v2750 = vrot.slane %v2748, 2
        %v2751 = vor.u32 %v2747, %v2750
        %v2753 = vsel %vm1248, %v2751, 0
        %2755 = vmatprep.subr.bf16.mxu0 0
        %2756 = vmatpush1.bf16.msra.mxu0 0
        %2757 = vmatprep.subr.bf16.mxu0 0
        %2758 = vmatpush1.bf16.msra.mxu0 0
        %2759 = vmatprep.subr.bf16.mxu0 0
        %2760 = vmatpush1.bf16.msra.mxu0 0
        %2761 = vmatprep.subr.bf16.mxu0 0
        %2762 = vmatpush1.bf16.msra.mxu0 0
        %2763 = vmatprep.subr.bf16.mxu0 0
        %2764 = vmatpush1.bf16.msra.mxu0 0
        %2765 = vmatprep.subr.bf16.mxu0 0
        %2766 = vmatpush1.bf16.msra.mxu0 0
        %2767 = vmatprep.subr.bf16.mxu0 0
        %2768 = vmatpush1.bf16.msra.mxu0 %v2697
        %2769 = vmatprep.subr.bf16.mxu0 0
        %2770 = vmatpush1.bf16.msra.mxu0 %v2696
        %2771 = vmatprep.subr.bf16.mxu0 0
        %2772 = vmatpush2.bf16.msra.mxu0 0
        %2773 = vmatprep.subr.bf16.mxu0 0
        %2774 = vmatpush2.bf16.msra.mxu0 0
        %2775 = vmatprep.subr.bf16.mxu0 0
        %2776 = vmatpush2.bf16.msra.mxu0 0
        %2777 = vmatprep.subr.bf16.mxu0 0
        %2778 = vmatpush2.bf16.msra.mxu0 0
        %2779 = vmatprep.subr.bf16.mxu0 0
        %2780 = vmatpush2.bf16.msra.mxu0 0
        %2781 = vmatprep.subr.bf16.mxu0 0
        %2782 = vmatpush2.bf16.msra.mxu0 0
        %2783 = vmatprep.subr.bf16.mxu0 0
        %2784 = vmatpush2.bf16.msra.mxu0 0
        %2785 = vmatprep.subr.bf16.mxu0 0
        %2786 = vmatpush2.bf16.msra.mxu0 0
        %2787 = vmatprep.mubr.bf16.mxu0 0
        %2788 = vmatmul.mubr.bf16.gmra.mxu0 %v2753
        %v2789 = vpop.f32.mrf.mxu0
        %v2790 = vadd.f32 0.0, %v2789
        %v2791 = vpop.f32.mrf.mxu0
        %v2792 = vpop.f32.mrf.mxu0
        %v2793 = vpop.f32.mrf.mxu0
        %2794 = vdwg.mxu0
        %v2795 = vadd.f32 %v2574, %v2790
        %v2797 = vshrl.u32 %v2364, 16
        %v2799 = vrot.slane %v2797, 1
        %v2800 = vshll.u32 %v2364, 16
        %v2802 = vrot.slane %v2800, 2
        %v2803 = vor.u32 %v2799, %v2802
        %v2805 = vsel %vm1248, %v2803, 0
        %2807 = vmatprep.subr.bf16.mxu0 0
        %2808 = vmatpush1.bf16.msra.mxu0 0
        %2809 = vmatprep.subr.bf16.mxu0 0
        %2810 = vmatpush1.bf16.msra.mxu0 0
        %2811 = vmatprep.subr.bf16.mxu0 0
        %2812 = vmatpush1.bf16.msra.mxu0 0
        %2813 = vmatprep.subr.bf16.mxu0 0
        %2814 = vmatpush1.bf16.msra.mxu0 0
        %2815 = vmatprep.subr.bf16.mxu0 0
        %2816 = vmatpush1.bf16.msra.mxu0 0
        %2817 = vmatprep.subr.bf16.mxu0 0
        %2818 = vmatpush1.bf16.msra.mxu0 0
        %2819 = vmatprep.subr.bf16.mxu0 0
        %2820 = vmatpush1.bf16.msra.mxu0 %v2697
        %2821 = vmatprep.subr.bf16.mxu0 0
        %2822 = vmatpush1.bf16.msra.mxu0 %v2696
        %2823 = vmatprep.subr.bf16.mxu0 0
        %2824 = vmatpush2.bf16.msra.mxu0 0
        %2825 = vmatprep.subr.bf16.mxu0 0
        %2826 = vmatpush2.bf16.msra.mxu0 0
        %2827 = vmatprep.subr.bf16.mxu0 0
        %2828 = vmatpush2.bf16.msra.mxu0 0
        %2829 = vmatprep.subr.bf16.mxu0 0
        %2830 = vmatpush2.bf16.msra.mxu0 0
        %2831 = vmatprep.subr.bf16.mxu0 0
        %2832 = vmatpush2.bf16.msra.mxu0 0
        %2833 = vmatprep.subr.bf16.mxu0 0
        %2834 = vmatpush2.bf16.msra.mxu0 0
        %2835 = vmatprep.subr.bf16.mxu0 0
        %2836 = vmatpush2.bf16.msra.mxu0 0
        %2837 = vmatprep.subr.bf16.mxu0 0
        %2838 = vmatpush2.bf16.msra.mxu0 0
        %2839 = vmatprep.mubr.bf16.mxu0 0
        %2840 = vmatmul.mubr.bf16.gmra.mxu0 %v2805
        %v2841 = vpop.f32.mrf.mxu0
        %v2842 = vadd.f32 0.0, %v2841
        %v2843 = vpop.f32.mrf.mxu0
        %v2844 = vpop.f32.mrf.mxu0
        %v2845 = vpop.f32.mrf.mxu0
        %2846 = vdwg.mxu0
        %v2847 = vadd.f32 %v2624, %v2842
        %v2849 = vshrl.u32 %v2411, 16
        %v2851 = vrot.slane %v2849, 1
        %v2852 = vshll.u32 %v2411, 16
        %v2854 = vrot.slane %v2852, 2
        %v2855 = vor.u32 %v2851, %v2854
        %v2857 = vsel %vm1248, %v2855, 0
        %2859 = vmatprep.subr.bf16.mxu0 0
        %2860 = vmatpush1.bf16.msra.mxu0 0
        %2861 = vmatprep.subr.bf16.mxu0 0
        %2862 = vmatpush1.bf16.msra.mxu0 0
        %2863 = vmatprep.subr.bf16.mxu0 0
        %2864 = vmatpush1.bf16.msra.mxu0 0
        %2865 = vmatprep.subr.bf16.mxu0 0
        %2866 = vmatpush1.bf16.msra.mxu0 0
        %2867 = vmatprep.subr.bf16.mxu0 0
        %2868 = vmatpush1.bf16.msra.mxu0 0
        %2869 = vmatprep.subr.bf16.mxu0 0
        %2870 = vmatpush1.bf16.msra.mxu0 0
        %2871 = vmatprep.subr.bf16.mxu0 0
        %2872 = vmatpush1.bf16.msra.mxu0 %v2697
        %2873 = vmatprep.subr.bf16.mxu0 0
        %2874 = vmatpush1.bf16.msra.mxu0 %v2696
        %2875 = vmatprep.subr.bf16.mxu0 0
        %2876 = vmatpush2.bf16.msra.mxu0 0
        %2877 = vmatprep.subr.bf16.mxu0 0
        %2878 = vmatpush2.bf16.msra.mxu0 0
        %2879 = vmatprep.subr.bf16.mxu0 0
        %2880 = vmatpush2.bf16.msra.mxu0 0
        %2881 = vmatprep.subr.bf16.mxu0 0
        %2882 = vmatpush2.bf16.msra.mxu0 0
        %2883 = vmatprep.subr.bf16.mxu0 0
        %2884 = vmatpush2.bf16.msra.mxu0 0
        %2885 = vmatprep.subr.bf16.mxu0 0
        %2886 = vmatpush2.bf16.msra.mxu0 0
        %2887 = vmatprep.subr.bf16.mxu0 0
        %2888 = vmatpush2.bf16.msra.mxu0 0
        %2889 = vmatprep.subr.bf16.mxu0 0
        %2890 = vmatpush2.bf16.msra.mxu0 0
        %2891 = vmatprep.mubr.bf16.mxu0 0
        %2892 = vmatmul.mubr.bf16.gmra.mxu0 %v2857
        %v2893 = vpop.f32.mrf.mxu0
        %v2894 = vadd.f32 0.0, %v2893
        %v2895 = vpop.f32.mrf.mxu0
        %v2896 = vpop.f32.mrf.mxu0
        %v2897 = vpop.f32.mrf.mxu0
        %2898 = vdwg.mxu0
        %v2899 = vadd.f32 %v2674, %v2894
        %s2900 = scalar_lea.vmem %s3, 128
        %v2901 = vld [vmem:[%s2900] sm:$0xf]
        %v2902 = vld [vmem:[%s2900 + $0x4] sm:$0xf]
        %v2903 = vld [vmem:[%s2900 + $0x8] sm:$0xf]
        %v2904 = vld [vmem:[%s2900 + $0xc] sm:$0xf]
        %v2909 = vunpack.c.l.b16 %v2901
        %v2910 = vunpack.c.l.b16 %v2902
        %v2911 = vunpack.c.l.b16 %v2903
        %v2912 = vunpack.c.l.b16 %v2904
        %v2913 = vpack.c.b16 %v2910, %v2909
        %v2914 = vpack.c.b16 %v2912, %v2911
        %2917 = vmatprep.subr.bf16.mxu0 0
        %2918 = vmatpush1.bf16.msra.mxu0 0
        %2919 = vmatprep.subr.bf16.mxu0 0
        %2920 = vmatpush1.bf16.msra.mxu0 0
        %2921 = vmatprep.subr.bf16.mxu0 0
        %2922 = vmatpush1.bf16.msra.mxu0 0
        %2923 = vmatprep.subr.bf16.mxu0 0
        %2924 = vmatpush1.bf16.msra.mxu0 0
        %2925 = vmatprep.subr.bf16.mxu0 0
        %2926 = vmatpush1.bf16.msra.mxu0 0
        %2927 = vmatprep.subr.bf16.mxu0 0
        %2928 = vmatpush1.bf16.msra.mxu0 0
        %2929 = vmatprep.subr.bf16.mxu0 0
        %2930 = vmatpush1.bf16.msra.mxu0 %v2914
        %2931 = vmatprep.subr.bf16.mxu0 0
        %2932 = vmatpush1.bf16.msra.mxu0 %v2913
        %2933 = vmatprep.subr.bf16.mxu0 0
        %2934 = vmatpush2.bf16.msra.mxu0 0
        %2935 = vmatprep.subr.bf16.mxu0 0
        %2936 = vmatpush2.bf16.msra.mxu0 0
        %2937 = vmatprep.subr.bf16.mxu0 0
        %2938 = vmatpush2.bf16.msra.mxu0 0
        %2939 = vmatprep.subr.bf16.mxu0 0
        %2940 = vmatpush2.bf16.msra.mxu0 0
        %2941 = vmatprep.subr.bf16.mxu0 0
        %2942 = vmatpush2.bf16.msra.mxu0 0
        %2943 = vmatprep.subr.bf16.mxu0 0
        %2944 = vmatpush2.bf16.msra.mxu0 0
        %2945 = vmatprep.subr.bf16.mxu0 0
        %2946 = vmatpush2.bf16.msra.mxu0 0
        %2947 = vmatprep.subr.bf16.mxu0 0
        %2948 = vmatpush2.bf16.msra.mxu0 0
        %2949 = vmatprep.mubr.bf16.mxu0 0
        %2950 = vmatmul.mubr.bf16.gmra.mxu0 %v1394
        %v2951 = vpop.f32.mrf.mxu0
        %v2952 = vadd.f32 0.0, %v2951
        %v2953 = vpop.f32.mrf.mxu0
        %v2954 = vpop.f32.mrf.mxu0
        %v2955 = vpop.f32.mrf.mxu0
        %2956 = vdwg.mxu0
        %v2957 = vadd.f32 %v2743, %v2952
        %2958 = vmatprep.subr.bf16.mxu0 0
        %2959 = vmatpush1.bf16.msra.mxu0 0
        %2960 = vmatprep.subr.bf16.mxu0 0
        %2961 = vmatpush1.bf16.msra.mxu0 0
        %2962 = vmatprep.subr.bf16.mxu0 0
        %2963 = vmatpush1.bf16.msra.mxu0 0
        %2964 = vmatprep.subr.bf16.mxu0 0
        %2965 = vmatpush1.bf16.msra.mxu0 0
        %2966 = vmatprep.subr.bf16.mxu0 0
        %2967 = vmatpush1.bf16.msra.mxu0 0
        %2968 = vmatprep.subr.bf16.mxu0 0
        %2969 = vmatpush1.bf16.msra.mxu0 0
        %2970 = vmatprep.subr.bf16.mxu0 0
        %2971 = vmatpush1.bf16.msra.mxu0 %v2914
        %2972 = vmatprep.subr.bf16.mxu0 0
        %2973 = vmatpush1.bf16.msra.mxu0 %v2913
        %2974 = vmatprep.subr.bf16.mxu0 0
        %2975 = vmatpush2.bf16.msra.mxu0 0
        %2976 = vmatprep.subr.bf16.mxu0 0
        %2977 = vmatpush2.bf16.msra.mxu0 0
        %2978 = vmatprep.subr.bf16.mxu0 0
        %2979 = vmatpush2.bf16.msra.mxu0 0
        %2980 = vmatprep.subr.bf16.mxu0 0
        %2981 = vmatpush2.bf16.msra.mxu0 0
        %2982 = vmatprep.subr.bf16.mxu0 0
        %2983 = vmatpush2.bf16.msra.mxu0 0
        %2984 = vmatprep.subr.bf16.mxu0 0
        %2985 = vmatpush2.bf16.msra.mxu0 0
        %2986 = vmatprep.subr.bf16.mxu0 0
        %2987 = vmatpush2.bf16.msra.mxu0 0
        %2988 = vmatprep.subr.bf16.mxu0 0
        %2989 = vmatpush2.bf16.msra.mxu0 0
        %2990 = vmatprep.mubr.bf16.mxu0 0
        %2991 = vmatmul.mubr.bf16.gmra.mxu0 %v1483
        %v2992 = vpop.f32.mrf.mxu0
        %v2993 = vadd.f32 0.0, %v2992
        %v2994 = vpop.f32.mrf.mxu0
        %v2995 = vpop.f32.mrf.mxu0
        %v2996 = vpop.f32.mrf.mxu0
        %2997 = vdwg.mxu0
        %v2998 = vadd.f32 %v2795, %v2993
        %2999 = vmatprep.subr.bf16.mxu0 0
        %3000 = vmatpush1.bf16.msra.mxu0 0
        %3001 = vmatprep.subr.bf16.mxu0 0
        %3002 = vmatpush1.bf16.msra.mxu0 0
        %3003 = vmatprep.subr.bf16.mxu0 0
        %3004 = vmatpush1.bf16.msra.mxu0 0
        %3005 = vmatprep.subr.bf16.mxu0 0
        %3006 = vmatpush1.bf16.msra.mxu0 0
        %3007 = vmatprep.subr.bf16.mxu0 0
        %3008 = vmatpush1.bf16.msra.mxu0 0
        %3009 = vmatprep.subr.bf16.mxu0 0
        %3010 = vmatpush1.bf16.msra.mxu0 0
        %3011 = vmatprep.subr.bf16.mxu0 0
        %3012 = vmatpush1.bf16.msra.mxu0 %v2914
        %3013 = vmatprep.subr.bf16.mxu0 0
        %3014 = vmatpush1.bf16.msra.mxu0 %v2913
        %3015 = vmatprep.subr.bf16.mxu0 0
        %3016 = vmatpush2.bf16.msra.mxu0 0
        %3017 = vmatprep.subr.bf16.mxu0 0
        %3018 = vmatpush2.bf16.msra.mxu0 0
        %3019 = vmatprep.subr.bf16.mxu0 0
        %3020 = vmatpush2.bf16.msra.mxu0 0
        %3021 = vmatprep.subr.bf16.mxu0 0
        %3022 = vmatpush2.bf16.msra.mxu0 0
        %3023 = vmatprep.subr.bf16.mxu0 0
        %3024 = vmatpush2.bf16.msra.mxu0 0
        %3025 = vmatprep.subr.bf16.mxu0 0
        %3026 = vmatpush2.bf16.msra.mxu0 0
        %3027 = vmatprep.subr.bf16.mxu0 0
        %3028 = vmatpush2.bf16.msra.mxu0 0
        %3029 = vmatprep.subr.bf16.mxu0 0
        %3030 = vmatpush2.bf16.msra.mxu0 0
        %3031 = vmatprep.mubr.bf16.mxu0 0
        %3032 = vmatmul.mubr.bf16.gmra.mxu0 %v1572
        %v3033 = vpop.f32.mrf.mxu0
        %v3034 = vadd.f32 0.0, %v3033
        %v3035 = vpop.f32.mrf.mxu0
        %v3036 = vpop.f32.mrf.mxu0
        %v3037 = vpop.f32.mrf.mxu0
        %3038 = vdwg.mxu0
        %v3039 = vadd.f32 %v2847, %v3034
        %v3040 = vpack.c.bf16 %v1188, %v1188
        %v3042 = vsel %vm1248, %v3040, 0
        %3044 = vmatprep.subr.bf16.mxu0 0
        %3045 = vmatpush1.bf16.msra.mxu0 0
        %3046 = vmatprep.subr.bf16.mxu0 0
        %3047 = vmatpush1.bf16.msra.mxu0 0
        %3048 = vmatprep.subr.bf16.mxu0 0
        %3049 = vmatpush1.bf16.msra.mxu0 0
        %3050 = vmatprep.subr.bf16.mxu0 0
        %3051 = vmatpush1.bf16.msra.mxu0 0
        %3052 = vmatprep.subr.bf16.mxu0 0
        %3053 = vmatpush1.bf16.msra.mxu0 0
        %3054 = vmatprep.subr.bf16.mxu0 0
        %3055 = vmatpush1.bf16.msra.mxu0 0
        %3056 = vmatprep.subr.bf16.mxu0 0
        %3057 = vmatpush1.bf16.msra.mxu0 %v2914
        %3058 = vmatprep.subr.bf16.mxu0 0
        %3059 = vmatpush1.bf16.msra.mxu0 %v2913
        %3060 = vmatprep.subr.bf16.mxu0 0
        %3061 = vmatpush2.bf16.msra.mxu0 0
        %3062 = vmatprep.subr.bf16.mxu0 0
        %3063 = vmatpush2.bf16.msra.mxu0 0
        %3064 = vmatprep.subr.bf16.mxu0 0
        %3065 = vmatpush2.bf16.msra.mxu0 0
        %3066 = vmatprep.subr.bf16.mxu0 0
        %3067 = vmatpush2.bf16.msra.mxu0 0
        %3068 = vmatprep.subr.bf16.mxu0 0
        %3069 = vmatpush2.bf16.msra.mxu0 0
        %3070 = vmatprep.subr.bf16.mxu0 0
        %3071 = vmatpush2.bf16.msra.mxu0 0
        %3072 = vmatprep.subr.bf16.mxu0 0
        %3073 = vmatpush2.bf16.msra.mxu0 0
        %3074 = vmatprep.subr.bf16.mxu0 0
        %3075 = vmatpush2.bf16.msra.mxu0 0
        %3076 = vmatprep.mubr.bf16.mxu0 0
        %3077 = vmatmul.mubr.bf16.gmra.mxu0 %v3042
        %v3078 = vpop.f32.mrf.mxu0
        %v3079 = vadd.f32 0.0, %v3078
        %v3080 = vpop.f32.mrf.mxu0
        %v3081 = vpop.f32.mrf.mxu0
        %v3082 = vpop.f32.mrf.mxu0
        %3083 = vdwg.mxu0
        %v3084 = vadd.f32 %v2899, %v3079
        %s3085 = scalar_lea.vmem %s3, 144
        %v3086 = vld [vmem:[%s3085] sm:$0xf]
        %v3087 = vld [vmem:[%s3085 + $0x4] sm:$0xf]
        %v3088 = vld [vmem:[%s3085 + $0x8] sm:$0xf]
        %v3089 = vld [vmem:[%s3085 + $0xc] sm:$0xf]
        %v3094 = vunpack.c.l.b16 %v3086
        %v3095 = vunpack.c.l.b16 %v3087
        %v3096 = vunpack.c.l.b16 %v3088
        %v3097 = vunpack.c.l.b16 %v3089
        %v3098 = vpack.c.b16 %v3095, %v3094
        %v3099 = vpack.c.b16 %v3097, %v3096
        %3102 = vmatprep.subr.bf16.mxu0 0
        %3103 = vmatpush1.bf16.msra.mxu0 0
        %3104 = vmatprep.subr.bf16.mxu0 0
        %3105 = vmatpush1.bf16.msra.mxu0 0
        %3106 = vmatprep.subr.bf16.mxu0 0
        %3107 = vmatpush1.bf16.msra.mxu0 0
        %3108 = vmatprep.subr.bf16.mxu0 0
        %3109 = vmatpush1.bf16.msra.mxu0 0
        %3110 = vmatprep.subr.bf16.mxu0 0
        %3111 = vmatpush1.bf16.msra.mxu0 0
        %3112 = vmatprep.subr.bf16.mxu0 0
        %3113 = vmatpush1.bf16.msra.mxu0 0
        %3114 = vmatprep.subr.bf16.mxu0 0
        %3115 = vmatpush1.bf16.msra.mxu0 %v3099
        %3116 = vmatprep.subr.bf16.mxu0 0
        %3117 = vmatpush1.bf16.msra.mxu0 %v3098
        %3118 = vmatprep.subr.bf16.mxu0 0
        %3119 = vmatpush2.bf16.msra.mxu0 0
        %3120 = vmatprep.subr.bf16.mxu0 0
        %3121 = vmatpush2.bf16.msra.mxu0 0
        %3122 = vmatprep.subr.bf16.mxu0 0
        %3123 = vmatpush2.bf16.msra.mxu0 0
        %3124 = vmatprep.subr.bf16.mxu0 0
        %3125 = vmatpush2.bf16.msra.mxu0 0
        %3126 = vmatprep.subr.bf16.mxu0 0
        %3127 = vmatpush2.bf16.msra.mxu0 0
        %3128 = vmatprep.subr.bf16.mxu0 0
        %3129 = vmatpush2.bf16.msra.mxu0 0
        %3130 = vmatprep.subr.bf16.mxu0 0
        %3131 = vmatpush2.bf16.msra.mxu0 0
        %3132 = vmatprep.subr.bf16.mxu0 0
        %3133 = vmatpush2.bf16.msra.mxu0 0
        %3134 = vmatprep.mubr.bf16.mxu0 0
        %3135 = vmatmul.mubr.bf16.gmra.mxu0 %v1351
        %v3136 = vpop.f32.mrf.mxu0
        %v3137 = vadd.f32 0.0, %v3136
        %v3138 = vpop.f32.mrf.mxu0
        %v3139 = vpop.f32.mrf.mxu0
        %v3140 = vpop.f32.mrf.mxu0
        %3141 = vdwg.mxu0
        %v3142 = vadd.f32 %v2957, %v3137
        %3143 = vmatprep.subr.bf16.mxu0 0
        %3144 = vmatpush1.bf16.msra.mxu0 0
        %3145 = vmatprep.subr.bf16.mxu0 0
        %3146 = vmatpush1.bf16.msra.mxu0 0
        %3147 = vmatprep.subr.bf16.mxu0 0
        %3148 = vmatpush1.bf16.msra.mxu0 0
        %3149 = vmatprep.subr.bf16.mxu0 0
        %3150 = vmatpush1.bf16.msra.mxu0 0
        %3151 = vmatprep.subr.bf16.mxu0 0
        %3152 = vmatpush1.bf16.msra.mxu0 0
        %3153 = vmatprep.subr.bf16.mxu0 0
        %3154 = vmatpush1.bf16.msra.mxu0 0
        %3155 = vmatprep.subr.bf16.mxu0 0
        %3156 = vmatpush1.bf16.msra.mxu0 %v3099
        %3157 = vmatprep.subr.bf16.mxu0 0
        %3158 = vmatpush1.bf16.msra.mxu0 %v3098
        %3159 = vmatprep.subr.bf16.mxu0 0
        %3160 = vmatpush2.bf16.msra.mxu0 0
        %3161 = vmatprep.subr.bf16.mxu0 0
        %3162 = vmatpush2.bf16.msra.mxu0 0
        %3163 = vmatprep.subr.bf16.mxu0 0
        %3164 = vmatpush2.bf16.msra.mxu0 0
        %3165 = vmatprep.subr.bf16.mxu0 0
        %3166 = vmatpush2.bf16.msra.mxu0 0
        %3167 = vmatprep.subr.bf16.mxu0 0
        %3168 = vmatpush2.bf16.msra.mxu0 0
        %3169 = vmatprep.subr.bf16.mxu0 0
        %3170 = vmatpush2.bf16.msra.mxu0 0
        %3171 = vmatprep.subr.bf16.mxu0 0
        %3172 = vmatpush2.bf16.msra.mxu0 0
        %3173 = vmatprep.subr.bf16.mxu0 0
        %3174 = vmatpush2.bf16.msra.mxu0 0
        %3175 = vmatprep.mubr.bf16.mxu0 0
        %3176 = vmatmul.mubr.bf16.gmra.mxu0 %v1440
        %v3177 = vpop.f32.mrf.mxu0
        %v3178 = vadd.f32 0.0, %v3177
        %v3179 = vpop.f32.mrf.mxu0
        %v3180 = vpop.f32.mrf.mxu0
        %v3181 = vpop.f32.mrf.mxu0
        %3182 = vdwg.mxu0
        %v3183 = vadd.f32 %v2998, %v3178
        %3184 = vmatprep.subr.bf16.mxu0 0
        %3185 = vmatpush1.bf16.msra.mxu0 0
        %3186 = vmatprep.subr.bf16.mxu0 0
        %3187 = vmatpush1.bf16.msra.mxu0 0
        %3188 = vmatprep.subr.bf16.mxu0 0
        %3189 = vmatpush1.bf16.msra.mxu0 0
        %3190 = vmatprep.subr.bf16.mxu0 0
        %3191 = vmatpush1.bf16.msra.mxu0 0
        %3192 = vmatprep.subr.bf16.mxu0 0
        %3193 = vmatpush1.bf16.msra.mxu0 0
        %3194 = vmatprep.subr.bf16.mxu0 0
        %3195 = vmatpush1.bf16.msra.mxu0 0
        %3196 = vmatprep.subr.bf16.mxu0 0
        %3197 = vmatpush1.bf16.msra.mxu0 %v3099
        %3198 = vmatprep.subr.bf16.mxu0 0
        %3199 = vmatpush1.bf16.msra.mxu0 %v3098
        %3200 = vmatprep.subr.bf16.mxu0 0
        %3201 = vmatpush2.bf16.msra.mxu0 0
        %3202 = vmatprep.subr.bf16.mxu0 0
        %3203 = vmatpush2.bf16.msra.mxu0 0
        %3204 = vmatprep.subr.bf16.mxu0 0
        %3205 = vmatpush2.bf16.msra.mxu0 0
        %3206 = vmatprep.subr.bf16.mxu0 0
        %3207 = vmatpush2.bf16.msra.mxu0 0
        %3208 = vmatprep.subr.bf16.mxu0 0
        %3209 = vmatpush2.bf16.msra.mxu0 0
        %3210 = vmatprep.subr.bf16.mxu0 0
        %3211 = vmatpush2.bf16.msra.mxu0 0
        %3212 = vmatprep.subr.bf16.mxu0 0
        %3213 = vmatpush2.bf16.msra.mxu0 0
        %3214 = vmatprep.subr.bf16.mxu0 0
        %3215 = vmatpush2.bf16.msra.mxu0 0
        %3216 = vmatprep.mubr.bf16.mxu0 0
        %3217 = vmatmul.mubr.bf16.gmra.mxu0 %v1529
        %v3218 = vpop.f32.mrf.mxu0
        %v3219 = vadd.f32 0.0, %v3218
        %v3220 = vpop.f32.mrf.mxu0
        %v3221 = vpop.f32.mrf.mxu0
        %v3222 = vpop.f32.mrf.mxu0
        %3223 = vdwg.mxu0
        %v3224 = vadd.f32 %v3039, %v3219
        %v3225 = vpack.c.bf16 %v1193, %v1193
        %v3227 = vrot.slane %v3225, 1
        %v3229 = vsel %vm1248, %v3227, 0
        %3231 = vmatprep.subr.bf16.mxu0 0
        %3232 = vmatpush1.bf16.msra.mxu0 0
        %3233 = vmatprep.subr.bf16.mxu0 0
        %3234 = vmatpush1.bf16.msra.mxu0 0
        %3235 = vmatprep.subr.bf16.mxu0 0
        %3236 = vmatpush1.bf16.msra.mxu0 0
        %3237 = vmatprep.subr.bf16.mxu0 0
        %3238 = vmatpush1.bf16.msra.mxu0 0
        %3239 = vmatprep.subr.bf16.mxu0 0
        %3240 = vmatpush1.bf16.msra.mxu0 0
        %3241 = vmatprep.subr.bf16.mxu0 0
        %3242 = vmatpush1.bf16.msra.mxu0 0
        %3243 = vmatprep.subr.bf16.mxu0 0
        %3244 = vmatpush1.bf16.msra.mxu0 %v3099
        %3245 = vmatprep.subr.bf16.mxu0 0
        %3246 = vmatpush1.bf16.msra.mxu0 %v3098
        %3247 = vmatprep.subr.bf16.mxu0 0
        %3248 = vmatpush2.bf16.msra.mxu0 0
        %3249 = vmatprep.subr.bf16.mxu0 0
        %3250 = vmatpush2.bf16.msra.mxu0 0
        %3251 = vmatprep.subr.bf16.mxu0 0
        %3252 = vmatpush2.bf16.msra.mxu0 0
        %3253 = vmatprep.subr.bf16.mxu0 0
        %3254 = vmatpush2.bf16.msra.mxu0 0
        %3255 = vmatprep.subr.bf16.mxu0 0
        %3256 = vmatpush2.bf16.msra.mxu0 0
        %3257 = vmatprep.subr.bf16.mxu0 0
        %3258 = vmatpush2.bf16.msra.mxu0 0
        %3259 = vmatprep.subr.bf16.mxu0 0
        %3260 = vmatpush2.bf16.msra.mxu0 0
        %3261 = vmatprep.subr.bf16.mxu0 0
        %3262 = vmatpush2.bf16.msra.mxu0 0
        %3263 = vmatprep.mubr.bf16.mxu0 0
        %3264 = vmatmul.mubr.bf16.gmra.mxu0 %v3229
        %v3265 = vpop.f32.mrf.mxu0
        %v3266 = vadd.f32 0.0, %v3265
        %v3267 = vpop.f32.mrf.mxu0
        %v3268 = vpop.f32.mrf.mxu0
        %v3269 = vpop.f32.mrf.mxu0
        %3270 = vdwg.mxu0
        %v3271 = vadd.f32 %v3084, %v3266
        %s3272 = scalar_lea.vmem %s3, 160
        %v3273 = vld [vmem:[%s3272] sm:$0xf]
        %v3274 = vld [vmem:[%s3272 + $0x4] sm:$0xf]
        %v3275 = vld [vmem:[%s3272 + $0x8] sm:$0xf]
        %v3276 = vld [vmem:[%s3272 + $0xc] sm:$0xf]
        %v3281 = vunpack.c.l.b16 %v3273
        %v3282 = vunpack.c.l.b16 %v3274
        %v3283 = vunpack.c.l.b16 %v3275
        %v3284 = vunpack.c.l.b16 %v3276
        %v3285 = vpack.c.b16 %v3282, %v3281
        %v3286 = vpack.c.b16 %v3284, %v3283
        %3289 = vmatprep.subr.bf16.mxu0 0
        %3290 = vmatpush1.bf16.msra.mxu0 0
        %3291 = vmatprep.subr.bf16.mxu0 0
        %3292 = vmatpush1.bf16.msra.mxu0 0
        %3293 = vmatprep.subr.bf16.mxu0 0
        %3294 = vmatpush1.bf16.msra.mxu0 0
        %3295 = vmatprep.subr.bf16.mxu0 0
        %3296 = vmatpush1.bf16.msra.mxu0 0
        %3297 = vmatprep.subr.bf16.mxu0 0
        %3298 = vmatpush1.bf16.msra.mxu0 0
        %3299 = vmatprep.subr.bf16.mxu0 0
        %3300 = vmatpush1.bf16.msra.mxu0 0
        %3301 = vmatprep.subr.bf16.mxu0 0
        %3302 = vmatpush1.bf16.msra.mxu0 %v3286
        %3303 = vmatprep.subr.bf16.mxu0 0
        %3304 = vmatpush1.bf16.msra.mxu0 %v3285
        %3305 = vmatprep.subr.bf16.mxu0 0
        %3306 = vmatpush2.bf16.msra.mxu0 0
        %3307 = vmatprep.subr.bf16.mxu0 0
        %3308 = vmatpush2.bf16.msra.mxu0 0
        %3309 = vmatprep.subr.bf16.mxu0 0
        %3310 = vmatpush2.bf16.msra.mxu0 0
        %3311 = vmatprep.subr.bf16.mxu0 0
        %3312 = vmatpush2.bf16.msra.mxu0 0
        %3313 = vmatprep.subr.bf16.mxu0 0
        %3314 = vmatpush2.bf16.msra.mxu0 0
        %3315 = vmatprep.subr.bf16.mxu0 0
        %3316 = vmatpush2.bf16.msra.mxu0 0
        %3317 = vmatprep.subr.bf16.mxu0 0
        %3318 = vmatpush2.bf16.msra.mxu0 0
        %3319 = vmatprep.subr.bf16.mxu0 0
        %3320 = vmatpush2.bf16.msra.mxu0 0
        %3321 = vmatprep.mubr.bf16.mxu0 0
        %3322 = vmatmul.mubr.bf16.gmra.mxu0 %v1688
        %v3323 = vpop.f32.mrf.mxu0
        %v3324 = vadd.f32 0.0, %v3323
        %v3325 = vpop.f32.mrf.mxu0
        %v3326 = vpop.f32.mrf.mxu0
        %v3327 = vpop.f32.mrf.mxu0
        %3328 = vdwg.mxu0
        %v3329 = vadd.f32 %v3142, %v3324
        %3330 = vmatprep.subr.bf16.mxu0 0
        %3331 = vmatpush1.bf16.msra.mxu0 0
        %3332 = vmatprep.subr.bf16.mxu0 0
        %3333 = vmatpush1.bf16.msra.mxu0 0
        %3334 = vmatprep.subr.bf16.mxu0 0
        %3335 = vmatpush1.bf16.msra.mxu0 0
        %3336 = vmatprep.subr.bf16.mxu0 0
        %3337 = vmatpush1.bf16.msra.mxu0 0
        %3338 = vmatprep.subr.bf16.mxu0 0
        %3339 = vmatpush1.bf16.msra.mxu0 0
        %3340 = vmatprep.subr.bf16.mxu0 0
        %3341 = vmatpush1.bf16.msra.mxu0 0
        %3342 = vmatprep.subr.bf16.mxu0 0
        %3343 = vmatpush1.bf16.msra.mxu0 %v3286
        %3344 = vmatprep.subr.bf16.mxu0 0
        %3345 = vmatpush1.bf16.msra.mxu0 %v3285
        %3346 = vmatprep.subr.bf16.mxu0 0
        %3347 = vmatpush2.bf16.msra.mxu0 0
        %3348 = vmatprep.subr.bf16.mxu0 0
        %3349 = vmatpush2.bf16.msra.mxu0 0
        %3350 = vmatprep.subr.bf16.mxu0 0
        %3351 = vmatpush2.bf16.msra.mxu0 0
        %3352 = vmatprep.subr.bf16.mxu0 0
        %3353 = vmatpush2.bf16.msra.mxu0 0
        %3354 = vmatprep.subr.bf16.mxu0 0
        %3355 = vmatpush2.bf16.msra.mxu0 0
        %3356 = vmatprep.subr.bf16.mxu0 0
        %3357 = vmatpush2.bf16.msra.mxu0 0
        %3358 = vmatprep.subr.bf16.mxu0 0
        %3359 = vmatpush2.bf16.msra.mxu0 0
        %3360 = vmatprep.subr.bf16.mxu0 0
        %3361 = vmatpush2.bf16.msra.mxu0 0
        %3362 = vmatprep.mubr.bf16.mxu0 0
        %3363 = vmatmul.mubr.bf16.gmra.mxu0 %v1738
        %v3364 = vpop.f32.mrf.mxu0
        %v3365 = vadd.f32 0.0, %v3364
        %v3366 = vpop.f32.mrf.mxu0
        %v3367 = vpop.f32.mrf.mxu0
        %v3368 = vpop.f32.mrf.mxu0
        %3369 = vdwg.mxu0
        %v3370 = vadd.f32 %v3183, %v3365
        %3371 = vmatprep.subr.bf16.mxu0 0
        %3372 = vmatpush1.bf16.msra.mxu0 0
        %3373 = vmatprep.subr.bf16.mxu0 0
        %3374 = vmatpush1.bf16.msra.mxu0 0
        %3375 = vmatprep.subr.bf16.mxu0 0
        %3376 = vmatpush1.bf16.msra.mxu0 0
        %3377 = vmatprep.subr.bf16.mxu0 0
        %3378 = vmatpush1.bf16.msra.mxu0 0
        %3379 = vmatprep.subr.bf16.mxu0 0
        %3380 = vmatpush1.bf16.msra.mxu0 0
        %3381 = vmatprep.subr.bf16.mxu0 0
        %3382 = vmatpush1.bf16.msra.mxu0 0
        %3383 = vmatprep.subr.bf16.mxu0 0
        %3384 = vmatpush1.bf16.msra.mxu0 %v3286
        %3385 = vmatprep.subr.bf16.mxu0 0
        %3386 = vmatpush1.bf16.msra.mxu0 %v3285
        %3387 = vmatprep.subr.bf16.mxu0 0
        %3388 = vmatpush2.bf16.msra.mxu0 0
        %3389 = vmatprep.subr.bf16.mxu0 0
        %3390 = vmatpush2.bf16.msra.mxu0 0
        %3391 = vmatprep.subr.bf16.mxu0 0
        %3392 = vmatpush2.bf16.msra.mxu0 0
        %3393 = vmatprep.subr.bf16.mxu0 0
        %3394 = vmatpush2.bf16.msra.mxu0 0
        %3395 = vmatprep.subr.bf16.mxu0 0
        %3396 = vmatpush2.bf16.msra.mxu0 0
        %3397 = vmatprep.subr.bf16.mxu0 0
        %3398 = vmatpush2.bf16.msra.mxu0 0
        %3399 = vmatprep.subr.bf16.mxu0 0
        %3400 = vmatpush2.bf16.msra.mxu0 0
        %3401 = vmatprep.subr.bf16.mxu0 0
        %3402 = vmatpush2.bf16.msra.mxu0 0
        %3403 = vmatprep.mubr.bf16.mxu0 0
        %3404 = vmatmul.mubr.bf16.gmra.mxu0 %v1788
        %v3405 = vpop.f32.mrf.mxu0
        %v3406 = vadd.f32 0.0, %v3405
        %v3407 = vpop.f32.mrf.mxu0
        %v3408 = vpop.f32.mrf.mxu0
        %v3409 = vpop.f32.mrf.mxu0
        %3410 = vdwg.mxu0
        %v3411 = vadd.f32 %v3224, %v3406
        %v3412 = vshrl.u32 %v3040, 16
        %v3414 = vshll.u32 %v3040, 16
        %v3416 = vrot.slane %v3414, 1
        %v3417 = vor.u32 %v3412, %v3416
        %v3419 = vsel %vm1248, %v3417, 0
        %3421 = vmatprep.subr.bf16.mxu0 0
        %3422 = vmatpush1.bf16.msra.mxu0 0
        %3423 = vmatprep.subr.bf16.mxu0 0
        %3424 = vmatpush1.bf16.msra.mxu0 0
        %3425 = vmatprep.subr.bf16.mxu0 0
        %3426 = vmatpush1.bf16.msra.mxu0 0
        %3427 = vmatprep.subr.bf16.mxu0 0
        %3428 = vmatpush1.bf16.msra.mxu0 0
        %3429 = vmatprep.subr.bf16.mxu0 0
        %3430 = vmatpush1.bf16.msra.mxu0 0
        %3431 = vmatprep.subr.bf16.mxu0 0
        %3432 = vmatpush1.bf16.msra.mxu0 0
        %3433 = vmatprep.subr.bf16.mxu0 0
        %3434 = vmatpush1.bf16.msra.mxu0 %v3286
        %3435 = vmatprep.subr.bf16.mxu0 0
        %3436 = vmatpush1.bf16.msra.mxu0 %v3285
        %3437 = vmatprep.subr.bf16.mxu0 0
        %3438 = vmatpush2.bf16.msra.mxu0 0
        %3439 = vmatprep.subr.bf16.mxu0 0
        %3440 = vmatpush2.bf16.msra.mxu0 0
        %3441 = vmatprep.subr.bf16.mxu0 0
        %3442 = vmatpush2.bf16.msra.mxu0 0
        %3443 = vmatprep.subr.bf16.mxu0 0
        %3444 = vmatpush2.bf16.msra.mxu0 0
        %3445 = vmatprep.subr.bf16.mxu0 0
        %3446 = vmatpush2.bf16.msra.mxu0 0
        %3447 = vmatprep.subr.bf16.mxu0 0
        %3448 = vmatpush2.bf16.msra.mxu0 0
        %3449 = vmatprep.subr.bf16.mxu0 0
        %3450 = vmatpush2.bf16.msra.mxu0 0
        %3451 = vmatprep.subr.bf16.mxu0 0
        %3452 = vmatpush2.bf16.msra.mxu0 0
        %3453 = vmatprep.mubr.bf16.mxu0 0
        %3454 = vmatmul.mubr.bf16.gmra.mxu0 %v3419
        %v3455 = vpop.f32.mrf.mxu0
        %v3456 = vadd.f32 0.0, %v3455
        %v3457 = vpop.f32.mrf.mxu0
        %v3458 = vpop.f32.mrf.mxu0
        %v3459 = vpop.f32.mrf.mxu0
        %3460 = vdwg.mxu0
        %v3461 = vadd.f32 %v3271, %v3456
        %s3462 = scalar_lea.vmem %s3, 176
        %v3463 = vld [vmem:[%s3462] sm:$0xf]
        %v3464 = vld [vmem:[%s3462 + $0x4] sm:$0xf]
        %v3465 = vld [vmem:[%s3462 + $0x8] sm:$0xf]
        %v3466 = vld [vmem:[%s3462 + $0xc] sm:$0xf]
        %v3471 = vunpack.c.l.b16 %v3463
        %v3472 = vunpack.c.l.b16 %v3464
        %v3473 = vunpack.c.l.b16 %v3465
        %v3474 = vunpack.c.l.b16 %v3466
        %v3475 = vpack.c.b16 %v3472, %v3471
        %v3476 = vpack.c.b16 %v3474, %v3473
        %3479 = vmatprep.subr.bf16.mxu0 0
        %3480 = vmatpush1.bf16.msra.mxu0 0
        %3481 = vmatprep.subr.bf16.mxu0 0
        %3482 = vmatpush1.bf16.msra.mxu0 0
        %3483 = vmatprep.subr.bf16.mxu0 0
        %3484 = vmatpush1.bf16.msra.mxu0 0
        %3485 = vmatprep.subr.bf16.mxu0 0
        %3486 = vmatpush1.bf16.msra.mxu0 0
        %3487 = vmatprep.subr.bf16.mxu0 0
        %3488 = vmatpush1.bf16.msra.mxu0 0
        %3489 = vmatprep.subr.bf16.mxu0 0
        %3490 = vmatpush1.bf16.msra.mxu0 0
        %3491 = vmatprep.subr.bf16.mxu0 0
        %3492 = vmatpush1.bf16.msra.mxu0 %v3476
        %3493 = vmatprep.subr.bf16.mxu0 0
        %3494 = vmatpush1.bf16.msra.mxu0 %v3475
        %3495 = vmatprep.subr.bf16.mxu0 0
        %3496 = vmatpush2.bf16.msra.mxu0 0
        %3497 = vmatprep.subr.bf16.mxu0 0
        %3498 = vmatpush2.bf16.msra.mxu0 0
        %3499 = vmatprep.subr.bf16.mxu0 0
        %3500 = vmatpush2.bf16.msra.mxu0 0
        %3501 = vmatprep.subr.bf16.mxu0 0
        %3502 = vmatpush2.bf16.msra.mxu0 0
        %3503 = vmatprep.subr.bf16.mxu0 0
        %3504 = vmatpush2.bf16.msra.mxu0 0
        %3505 = vmatprep.subr.bf16.mxu0 0
        %3506 = vmatpush2.bf16.msra.mxu0 0
        %3507 = vmatprep.subr.bf16.mxu0 0
        %3508 = vmatpush2.bf16.msra.mxu0 0
        %3509 = vmatprep.subr.bf16.mxu0 0
        %3510 = vmatpush2.bf16.msra.mxu0 0
        %3511 = vmatprep.mubr.bf16.mxu0 0
        %3512 = vmatmul.mubr.bf16.gmra.mxu0 %v1909
        %v3513 = vpop.f32.mrf.mxu0
        %v3514 = vadd.f32 0.0, %v3513
        %v3515 = vpop.f32.mrf.mxu0
        %v3516 = vpop.f32.mrf.mxu0
        %v3517 = vpop.f32.mrf.mxu0
        %3518 = vdwg.mxu0
        %v3519 = vadd.f32 %v3329, %v3514
        %3520 = vmatprep.subr.bf16.mxu0 0
        %3521 = vmatpush1.bf16.msra.mxu0 0
        %3522 = vmatprep.subr.bf16.mxu0 0
        %3523 = vmatpush1.bf16.msra.mxu0 0
        %3524 = vmatprep.subr.bf16.mxu0 0
        %3525 = vmatpush1.bf16.msra.mxu0 0
        %3526 = vmatprep.subr.bf16.mxu0 0
        %3527 = vmatpush1.bf16.msra.mxu0 0
        %3528 = vmatprep.subr.bf16.mxu0 0
        %3529 = vmatpush1.bf16.msra.mxu0 0
        %3530 = vmatprep.subr.bf16.mxu0 0
        %3531 = vmatpush1.bf16.msra.mxu0 0
        %3532 = vmatprep.subr.bf16.mxu0 0
        %3533 = vmatpush1.bf16.msra.mxu0 %v3476
        %3534 = vmatprep.subr.bf16.mxu0 0
        %3535 = vmatpush1.bf16.msra.mxu0 %v3475
        %3536 = vmatprep.subr.bf16.mxu0 0
        %3537 = vmatpush2.bf16.msra.mxu0 0
        %3538 = vmatprep.subr.bf16.mxu0 0
        %3539 = vmatpush2.bf16.msra.mxu0 0
        %3540 = vmatprep.subr.bf16.mxu0 0
        %3541 = vmatpush2.bf16.msra.mxu0 0
        %3542 = vmatprep.subr.bf16.mxu0 0
        %3543 = vmatpush2.bf16.msra.mxu0 0
        %3544 = vmatprep.subr.bf16.mxu0 0
        %3545 = vmatpush2.bf16.msra.mxu0 0
        %3546 = vmatprep.subr.bf16.mxu0 0
        %3547 = vmatpush2.bf16.msra.mxu0 0
        %3548 = vmatprep.subr.bf16.mxu0 0
        %3549 = vmatpush2.bf16.msra.mxu0 0
        %3550 = vmatprep.subr.bf16.mxu0 0
        %3551 = vmatpush2.bf16.msra.mxu0 0
        %3552 = vmatprep.mubr.bf16.mxu0 0
        %3553 = vmatmul.mubr.bf16.gmra.mxu0 %v1961
        %v3554 = vpop.f32.mrf.mxu0
        %v3555 = vadd.f32 0.0, %v3554
        %v3556 = vpop.f32.mrf.mxu0
        %v3557 = vpop.f32.mrf.mxu0
        %v3558 = vpop.f32.mrf.mxu0
        %3559 = vdwg.mxu0
        %v3560 = vadd.f32 %v3370, %v3555
        %3561 = vmatprep.subr.bf16.mxu0 0
        %3562 = vmatpush1.bf16.msra.mxu0 0
        %3563 = vmatprep.subr.bf16.mxu0 0
        %3564 = vmatpush1.bf16.msra.mxu0 0
        %3565 = vmatprep.subr.bf16.mxu0 0
        %3566 = vmatpush1.bf16.msra.mxu0 0
        %3567 = vmatprep.subr.bf16.mxu0 0
        %3568 = vmatpush1.bf16.msra.mxu0 0
        %3569 = vmatprep.subr.bf16.mxu0 0
        %3570 = vmatpush1.bf16.msra.mxu0 0
        %3571 = vmatprep.subr.bf16.mxu0 0
        %3572 = vmatpush1.bf16.msra.mxu0 0
        %3573 = vmatprep.subr.bf16.mxu0 0
        %3574 = vmatpush1.bf16.msra.mxu0 %v3476
        %3575 = vmatprep.subr.bf16.mxu0 0
        %3576 = vmatpush1.bf16.msra.mxu0 %v3475
        %3577 = vmatprep.subr.bf16.mxu0 0
        %3578 = vmatpush2.bf16.msra.mxu0 0
        %3579 = vmatprep.subr.bf16.mxu0 0
        %3580 = vmatpush2.bf16.msra.mxu0 0
        %3581 = vmatprep.subr.bf16.mxu0 0
        %3582 = vmatpush2.bf16.msra.mxu0 0
        %3583 = vmatprep.subr.bf16.mxu0 0
        %3584 = vmatpush2.bf16.msra.mxu0 0
        %3585 = vmatprep.subr.bf16.mxu0 0
        %3586 = vmatpush2.bf16.msra.mxu0 0
        %3587 = vmatprep.subr.bf16.mxu0 0
        %3588 = vmatpush2.bf16.msra.mxu0 0
        %3589 = vmatprep.subr.bf16.mxu0 0
        %3590 = vmatpush2.bf16.msra.mxu0 0
        %3591 = vmatprep.subr.bf16.mxu0 0
        %3592 = vmatpush2.bf16.msra.mxu0 0
        %3593 = vmatprep.mubr.bf16.mxu0 0
        %3594 = vmatmul.mubr.bf16.gmra.mxu0 %v2013
        %v3595 = vpop.f32.mrf.mxu0
        %v3596 = vadd.f32 0.0, %v3595
        %v3597 = vpop.f32.mrf.mxu0
        %v3598 = vpop.f32.mrf.mxu0
        %v3599 = vpop.f32.mrf.mxu0
        %3600 = vdwg.mxu0
        %v3601 = vadd.f32 %v3411, %v3596
        %v3603 = vshrl.u32 %v3225, 16
        %v3605 = vrot.slane %v3603, 1
        %v3606 = vshll.u32 %v3225, 16
        %v3608 = vrot.slane %v3606, 2
        %v3609 = vor.u32 %v3605, %v3608
        %v3611 = vsel %vm1248, %v3609, 0
        %3613 = vmatprep.subr.bf16.mxu0 0
        %3614 = vmatpush1.bf16.msra.mxu0 0
        %3615 = vmatprep.subr.bf16.mxu0 0
        %3616 = vmatpush1.bf16.msra.mxu0 0
        %3617 = vmatprep.subr.bf16.mxu0 0
        %3618 = vmatpush1.bf16.msra.mxu0 0
        %3619 = vmatprep.subr.bf16.mxu0 0
        %3620 = vmatpush1.bf16.msra.mxu0 0
        %3621 = vmatprep.subr.bf16.mxu0 0
        %3622 = vmatpush1.bf16.msra.mxu0 0
        %3623 = vmatprep.subr.bf16.mxu0 0
        %3624 = vmatpush1.bf16.msra.mxu0 0
        %3625 = vmatprep.subr.bf16.mxu0 0
        %3626 = vmatpush1.bf16.msra.mxu0 %v3476
        %3627 = vmatprep.subr.bf16.mxu0 0
        %3628 = vmatpush1.bf16.msra.mxu0 %v3475
        %3629 = vmatprep.subr.bf16.mxu0 0
        %3630 = vmatpush2.bf16.msra.mxu0 0
        %3631 = vmatprep.subr.bf16.mxu0 0
        %3632 = vmatpush2.bf16.msra.mxu0 0
        %3633 = vmatprep.subr.bf16.mxu0 0
        %3634 = vmatpush2.bf16.msra.mxu0 0
        %3635 = vmatprep.subr.bf16.mxu0 0
        %3636 = vmatpush2.bf16.msra.mxu0 0
        %3637 = vmatprep.subr.bf16.mxu0 0
        %3638 = vmatpush2.bf16.msra.mxu0 0
        %3639 = vmatprep.subr.bf16.mxu0 0
        %3640 = vmatpush2.bf16.msra.mxu0 0
        %3641 = vmatprep.subr.bf16.mxu0 0
        %3642 = vmatpush2.bf16.msra.mxu0 0
        %3643 = vmatprep.subr.bf16.mxu0 0
        %3644 = vmatpush2.bf16.msra.mxu0 0
        %3645 = vmatprep.mubr.bf16.mxu0 0
        %3646 = vmatmul.mubr.bf16.gmra.mxu0 %v3611
        %v3647 = vpop.f32.mrf.mxu0
        %v3648 = vadd.f32 0.0, %v3647
        %v3649 = vpop.f32.mrf.mxu0
        %v3650 = vpop.f32.mrf.mxu0
        %v3651 = vpop.f32.mrf.mxu0
        %3652 = vdwg.mxu0
        %v3653 = vadd.f32 %v3461, %v3648
        %s3654 = scalar_lea.vmem %s3, 192
        %v3655 = vld [vmem:[%s3654] sm:$0xf]
        %v3656 = vld [vmem:[%s3654 + $0x4] sm:$0xf]
        %v3657 = vld [vmem:[%s3654 + $0x8] sm:$0xf]
        %v3658 = vld [vmem:[%s3654 + $0xc] sm:$0xf]
        %v3663 = vunpack.c.l.b16 %v3655
        %v3664 = vunpack.c.l.b16 %v3656
        %v3665 = vunpack.c.l.b16 %v3657
        %v3666 = vunpack.c.l.b16 %v3658
        %v3667 = vpack.c.b16 %v3664, %v3663
        %v3668 = vpack.c.b16 %v3666, %v3665
        %3671 = vmatprep.subr.bf16.mxu0 0
        %3672 = vmatpush1.bf16.msra.mxu0 0
        %3673 = vmatprep.subr.bf16.mxu0 0
        %3674 = vmatpush1.bf16.msra.mxu0 0
        %3675 = vmatprep.subr.bf16.mxu0 0
        %3676 = vmatpush1.bf16.msra.mxu0 0
        %3677 = vmatprep.subr.bf16.mxu0 0
        %3678 = vmatpush1.bf16.msra.mxu0 0
        %3679 = vmatprep.subr.bf16.mxu0 0
        %3680 = vmatpush1.bf16.msra.mxu0 0
        %3681 = vmatprep.subr.bf16.mxu0 0
        %3682 = vmatpush1.bf16.msra.mxu0 0
        %3683 = vmatprep.subr.bf16.mxu0 0
        %3684 = vmatpush1.bf16.msra.mxu0 %v3668
        %3685 = vmatprep.subr.bf16.mxu0 0
        %3686 = vmatpush1.bf16.msra.mxu0 %v3667
        %3687 = vmatprep.subr.bf16.mxu0 0
        %3688 = vmatpush2.bf16.msra.mxu0 0
        %3689 = vmatprep.subr.bf16.mxu0 0
        %3690 = vmatpush2.bf16.msra.mxu0 0
        %3691 = vmatprep.subr.bf16.mxu0 0
        %3692 = vmatpush2.bf16.msra.mxu0 0
        %3693 = vmatprep.subr.bf16.mxu0 0
        %3694 = vmatpush2.bf16.msra.mxu0 0
        %3695 = vmatprep.subr.bf16.mxu0 0
        %3696 = vmatpush2.bf16.msra.mxu0 0
        %3697 = vmatprep.subr.bf16.mxu0 0
        %3698 = vmatpush2.bf16.msra.mxu0 0
        %3699 = vmatprep.subr.bf16.mxu0 0
        %3700 = vmatpush2.bf16.msra.mxu0 0
        %3701 = vmatprep.subr.bf16.mxu0 0
        %3702 = vmatpush2.bf16.msra.mxu0 0
        %3703 = vmatprep.mubr.bf16.mxu0 0
        %3704 = vmatmul.mubr.bf16.gmra.mxu0 %v2120
        %v3705 = vpop.f32.mrf.mxu0
        %v3706 = vadd.f32 0.0, %v3705
        %v3707 = vpop.f32.mrf.mxu0
        %v3708 = vpop.f32.mrf.mxu0
        %v3709 = vpop.f32.mrf.mxu0
        %3710 = vdwg.mxu0
        %v3711 = vadd.f32 %v3519, %v3706
        %3712 = vmatprep.subr.bf16.mxu0 0
        %3713 = vmatpush1.bf16.msra.mxu0 0
        %3714 = vmatprep.subr.bf16.mxu0 0
        %3715 = vmatpush1.bf16.msra.mxu0 0
        %3716 = vmatprep.subr.bf16.mxu0 0
        %3717 = vmatpush1.bf16.msra.mxu0 0
        %3718 = vmatprep.subr.bf16.mxu0 0
        %3719 = vmatpush1.bf16.msra.mxu0 0
        %3720 = vmatprep.subr.bf16.mxu0 0
        %3721 = vmatpush1.bf16.msra.mxu0 0
        %3722 = vmatprep.subr.bf16.mxu0 0
        %3723 = vmatpush1.bf16.msra.mxu0 0
        %3724 = vmatprep.subr.bf16.mxu0 0
        %3725 = vmatpush1.bf16.msra.mxu0 %v3668
        %3726 = vmatprep.subr.bf16.mxu0 0
        %3727 = vmatpush1.bf16.msra.mxu0 %v3667
        %3728 = vmatprep.subr.bf16.mxu0 0
        %3729 = vmatpush2.bf16.msra.mxu0 0
        %3730 = vmatprep.subr.bf16.mxu0 0
        %3731 = vmatpush2.bf16.msra.mxu0 0
        %3732 = vmatprep.subr.bf16.mxu0 0
        %3733 = vmatpush2.bf16.msra.mxu0 0
        %3734 = vmatprep.subr.bf16.mxu0 0
        %3735 = vmatpush2.bf16.msra.mxu0 0
        %3736 = vmatprep.subr.bf16.mxu0 0
        %3737 = vmatpush2.bf16.msra.mxu0 0
        %3738 = vmatprep.subr.bf16.mxu0 0
        %3739 = vmatpush2.bf16.msra.mxu0 0
        %3740 = vmatprep.subr.bf16.mxu0 0
        %3741 = vmatpush2.bf16.msra.mxu0 0
        %3742 = vmatprep.subr.bf16.mxu0 0
        %3743 = vmatpush2.bf16.msra.mxu0 0
        %3744 = vmatprep.mubr.bf16.mxu0 0
        %3745 = vmatmul.mubr.bf16.gmra.mxu0 %v2165
        %v3746 = vpop.f32.mrf.mxu0
        %v3747 = vadd.f32 0.0, %v3746
        %v3748 = vpop.f32.mrf.mxu0
        %v3749 = vpop.f32.mrf.mxu0
        %v3750 = vpop.f32.mrf.mxu0
        %3751 = vdwg.mxu0
        %v3752 = vadd.f32 %v3560, %v3747
        %3753 = vmatprep.subr.bf16.mxu0 0
        %3754 = vmatpush1.bf16.msra.mxu0 0
        %3755 = vmatprep.subr.bf16.mxu0 0
        %3756 = vmatpush1.bf16.msra.mxu0 0
        %3757 = vmatprep.subr.bf16.mxu0 0
        %3758 = vmatpush1.bf16.msra.mxu0 0
        %3759 = vmatprep.subr.bf16.mxu0 0
        %3760 = vmatpush1.bf16.msra.mxu0 0
        %3761 = vmatprep.subr.bf16.mxu0 0
        %3762 = vmatpush1.bf16.msra.mxu0 0
        %3763 = vmatprep.subr.bf16.mxu0 0
        %3764 = vmatpush1.bf16.msra.mxu0 0
        %3765 = vmatprep.subr.bf16.mxu0 0
        %3766 = vmatpush1.bf16.msra.mxu0 %v3668
        %3767 = vmatprep.subr.bf16.mxu0 0
        %3768 = vmatpush1.bf16.msra.mxu0 %v3667
        %3769 = vmatprep.subr.bf16.mxu0 0
        %3770 = vmatpush2.bf16.msra.mxu0 0
        %3771 = vmatprep.subr.bf16.mxu0 0
        %3772 = vmatpush2.bf16.msra.mxu0 0
        %3773 = vmatprep.subr.bf16.mxu0 0
        %3774 = vmatpush2.bf16.msra.mxu0 0
        %3775 = vmatprep.subr.bf16.mxu0 0
        %3776 = vmatpush2.bf16.msra.mxu0 0
        %3777 = vmatprep.subr.bf16.mxu0 0
        %3778 = vmatpush2.bf16.msra.mxu0 0
        %3779 = vmatprep.subr.bf16.mxu0 0
        %3780 = vmatpush2.bf16.msra.mxu0 0
        %3781 = vmatprep.subr.bf16.mxu0 0
        %3782 = vmatpush2.bf16.msra.mxu0 0
        %3783 = vmatprep.subr.bf16.mxu0 0
        %3784 = vmatpush2.bf16.msra.mxu0 0
        %3785 = vmatprep.mubr.bf16.mxu0 0
        %3786 = vmatmul.mubr.bf16.gmra.mxu0 %v2210
        %v3787 = vpop.f32.mrf.mxu0
        %v3788 = vadd.f32 0.0, %v3787
        %v3789 = vpop.f32.mrf.mxu0
        %v3790 = vpop.f32.mrf.mxu0
        %v3791 = vpop.f32.mrf.mxu0
        %3792 = vdwg.mxu0
        %v3793 = vadd.f32 %v3601, %v3788
        %v3794 = vpack.c.bf16 %v1214, %v1214
        %v3796 = vsel %vm1248, %v3794, 0
        %3798 = vmatprep.subr.bf16.mxu0 0
        %3799 = vmatpush1.bf16.msra.mxu0 0
        %3800 = vmatprep.subr.bf16.mxu0 0
        %3801 = vmatpush1.bf16.msra.mxu0 0
        %3802 = vmatprep.subr.bf16.mxu0 0
        %3803 = vmatpush1.bf16.msra.mxu0 0
        %3804 = vmatprep.subr.bf16.mxu0 0
        %3805 = vmatpush1.bf16.msra.mxu0 0
        %3806 = vmatprep.subr.bf16.mxu0 0
        %3807 = vmatpush1.bf16.msra.mxu0 0
        %3808 = vmatprep.subr.bf16.mxu0 0
        %3809 = vmatpush1.bf16.msra.mxu0 0
        %3810 = vmatprep.subr.bf16.mxu0 0
        %3811 = vmatpush1.bf16.msra.mxu0 %v3668
        %3812 = vmatprep.subr.bf16.mxu0 0
        %3813 = vmatpush1.bf16.msra.mxu0 %v3667
        %3814 = vmatprep.subr.bf16.mxu0 0
        %3815 = vmatpush2.bf16.msra.mxu0 0
        %3816 = vmatprep.subr.bf16.mxu0 0
        %3817 = vmatpush2.bf16.msra.mxu0 0
        %3818 = vmatprep.subr.bf16.mxu0 0
        %3819 = vmatpush2.bf16.msra.mxu0 0
        %3820 = vmatprep.subr.bf16.mxu0 0
        %3821 = vmatpush2.bf16.msra.mxu0 0
        %3822 = vmatprep.subr.bf16.mxu0 0
        %3823 = vmatpush2.bf16.msra.mxu0 0
        %3824 = vmatprep.subr.bf16.mxu0 0
        %3825 = vmatpush2.bf16.msra.mxu0 0
        %3826 = vmatprep.subr.bf16.mxu0 0
        %3827 = vmatpush2.bf16.msra.mxu0 0
        %3828 = vmatprep.subr.bf16.mxu0 0
        %3829 = vmatpush2.bf16.msra.mxu0 0
        %3830 = vmatprep.mubr.bf16.mxu0 0
        %3831 = vmatmul.mubr.bf16.gmra.mxu0 %v3796
        %v3832 = vpop.f32.mrf.mxu0
        %v3833 = vadd.f32 0.0, %v3832
        %v3834 = vpop.f32.mrf.mxu0
        %v3835 = vpop.f32.mrf.mxu0
        %v3836 = vpop.f32.mrf.mxu0
        %3837 = vdwg.mxu0
        %v3838 = vadd.f32 %v3653, %v3833
        %s3839 = scalar_lea.vmem %s3, 208
        %v3840 = vld [vmem:[%s3839] sm:$0xf]
        %v3841 = vld [vmem:[%s3839 + $0x4] sm:$0xf]
        %v3842 = vld [vmem:[%s3839 + $0x8] sm:$0xf]
        %v3843 = vld [vmem:[%s3839 + $0xc] sm:$0xf]
        %v3848 = vunpack.c.l.b16 %v3840
        %v3849 = vunpack.c.l.b16 %v3841
        %v3850 = vunpack.c.l.b16 %v3842
        %v3851 = vunpack.c.l.b16 %v3843
        %v3852 = vpack.c.b16 %v3849, %v3848
        %v3853 = vpack.c.b16 %v3851, %v3850
        %3856 = vmatprep.subr.bf16.mxu0 0
        %3857 = vmatpush1.bf16.msra.mxu0 0
        %3858 = vmatprep.subr.bf16.mxu0 0
        %3859 = vmatpush1.bf16.msra.mxu0 0
        %3860 = vmatprep.subr.bf16.mxu0 0
        %3861 = vmatpush1.bf16.msra.mxu0 0
        %3862 = vmatprep.subr.bf16.mxu0 0
        %3863 = vmatpush1.bf16.msra.mxu0 0
        %3864 = vmatprep.subr.bf16.mxu0 0
        %3865 = vmatpush1.bf16.msra.mxu0 0
        %3866 = vmatprep.subr.bf16.mxu0 0
        %3867 = vmatpush1.bf16.msra.mxu0 0
        %3868 = vmatprep.subr.bf16.mxu0 0
        %3869 = vmatpush1.bf16.msra.mxu0 %v3853
        %3870 = vmatprep.subr.bf16.mxu0 0
        %3871 = vmatpush1.bf16.msra.mxu0 %v3852
        %3872 = vmatprep.subr.bf16.mxu0 0
        %3873 = vmatpush2.bf16.msra.mxu0 0
        %3874 = vmatprep.subr.bf16.mxu0 0
        %3875 = vmatpush2.bf16.msra.mxu0 0
        %3876 = vmatprep.subr.bf16.mxu0 0
        %3877 = vmatpush2.bf16.msra.mxu0 0
        %3878 = vmatprep.subr.bf16.mxu0 0
        %3879 = vmatpush2.bf16.msra.mxu0 0
        %3880 = vmatprep.subr.bf16.mxu0 0
        %3881 = vmatpush2.bf16.msra.mxu0 0
        %3882 = vmatprep.subr.bf16.mxu0 0
        %3883 = vmatpush2.bf16.msra.mxu0 0
        %3884 = vmatprep.subr.bf16.mxu0 0
        %3885 = vmatpush2.bf16.msra.mxu0 0
        %3886 = vmatprep.subr.bf16.mxu0 0
        %3887 = vmatpush2.bf16.msra.mxu0 0
        %3888 = vmatprep.mubr.bf16.mxu0 0
        %3889 = vmatmul.mubr.bf16.gmra.mxu0 %v2321
        %v3890 = vpop.f32.mrf.mxu0
        %v3891 = vadd.f32 0.0, %v3890
        %v3892 = vpop.f32.mrf.mxu0
        %v3893 = vpop.f32.mrf.mxu0
        %v3894 = vpop.f32.mrf.mxu0
        %3895 = vdwg.mxu0
        %v3896 = vadd.f32 %v3711, %v3891
        %3897 = vmatprep.subr.bf16.mxu0 0
        %3898 = vmatpush1.bf16.msra.mxu0 0
        %3899 = vmatprep.subr.bf16.mxu0 0
        %3900 = vmatpush1.bf16.msra.mxu0 0
        %3901 = vmatprep.subr.bf16.mxu0 0
        %3902 = vmatpush1.bf16.msra.mxu0 0
        %3903 = vmatprep.subr.bf16.mxu0 0
        %3904 = vmatpush1.bf16.msra.mxu0 0
        %3905 = vmatprep.subr.bf16.mxu0 0
        %3906 = vmatpush1.bf16.msra.mxu0 0
        %3907 = vmatprep.subr.bf16.mxu0 0
        %3908 = vmatpush1.bf16.msra.mxu0 0
        %3909 = vmatprep.subr.bf16.mxu0 0
        %3910 = vmatpush1.bf16.msra.mxu0 %v3853
        %3911 = vmatprep.subr.bf16.mxu0 0
        %3912 = vmatpush1.bf16.msra.mxu0 %v3852
        %3913 = vmatprep.subr.bf16.mxu0 0
        %3914 = vmatpush2.bf16.msra.mxu0 0
        %3915 = vmatprep.subr.bf16.mxu0 0
        %3916 = vmatpush2.bf16.msra.mxu0 0
        %3917 = vmatprep.subr.bf16.mxu0 0
        %3918 = vmatpush2.bf16.msra.mxu0 0
        %3919 = vmatprep.subr.bf16.mxu0 0
        %3920 = vmatpush2.bf16.msra.mxu0 0
        %3921 = vmatprep.subr.bf16.mxu0 0
        %3922 = vmatpush2.bf16.msra.mxu0 0
        %3923 = vmatprep.subr.bf16.mxu0 0
        %3924 = vmatpush2.bf16.msra.mxu0 0
        %3925 = vmatprep.subr.bf16.mxu0 0
        %3926 = vmatpush2.bf16.msra.mxu0 0
        %3927 = vmatprep.subr.bf16.mxu0 0
        %3928 = vmatpush2.bf16.msra.mxu0 0
        %3929 = vmatprep.mubr.bf16.mxu0 0
        %3930 = vmatmul.mubr.bf16.gmra.mxu0 %v2368
        %v3931 = vpop.f32.mrf.mxu0
        %v3932 = vadd.f32 0.0, %v3931
        %v3933 = vpop.f32.mrf.mxu0
        %v3934 = vpop.f32.mrf.mxu0
        %v3935 = vpop.f32.mrf.mxu0
        %3936 = vdwg.mxu0
        %v3937 = vadd.f32 %v3752, %v3932
        %3938 = vmatprep.subr.bf16.mxu0 0
        %3939 = vmatpush1.bf16.msra.mxu0 0
        %3940 = vmatprep.subr.bf16.mxu0 0
        %3941 = vmatpush1.bf16.msra.mxu0 0
        %3942 = vmatprep.subr.bf16.mxu0 0
        %3943 = vmatpush1.bf16.msra.mxu0 0
        %3944 = vmatprep.subr.bf16.mxu0 0
        %3945 = vmatpush1.bf16.msra.mxu0 0
        %3946 = vmatprep.subr.bf16.mxu0 0
        %3947 = vmatpush1.bf16.msra.mxu0 0
        %3948 = vmatprep.subr.bf16.mxu0 0
        %3949 = vmatpush1.bf16.msra.mxu0 0
        %3950 = vmatprep.subr.bf16.mxu0 0
        %3951 = vmatpush1.bf16.msra.mxu0 %v3853
        %3952 = vmatprep.subr.bf16.mxu0 0
        %3953 = vmatpush1.bf16.msra.mxu0 %v3852
        %3954 = vmatprep.subr.bf16.mxu0 0
        %3955 = vmatpush2.bf16.msra.mxu0 0
        %3956 = vmatprep.subr.bf16.mxu0 0
        %3957 = vmatpush2.bf16.msra.mxu0 0
        %3958 = vmatprep.subr.bf16.mxu0 0
        %3959 = vmatpush2.bf16.msra.mxu0 0
        %3960 = vmatprep.subr.bf16.mxu0 0
        %3961 = vmatpush2.bf16.msra.mxu0 0
        %3962 = vmatprep.subr.bf16.mxu0 0
        %3963 = vmatpush2.bf16.msra.mxu0 0
        %3964 = vmatprep.subr.bf16.mxu0 0
        %3965 = vmatpush2.bf16.msra.mxu0 0
        %3966 = vmatprep.subr.bf16.mxu0 0
        %3967 = vmatpush2.bf16.msra.mxu0 0
        %3968 = vmatprep.subr.bf16.mxu0 0
        %3969 = vmatpush2.bf16.msra.mxu0 0
        %3970 = vmatprep.mubr.bf16.mxu0 0
        %3971 = vmatmul.mubr.bf16.gmra.mxu0 %v2415
        %v3972 = vpop.f32.mrf.mxu0
        %v3973 = vadd.f32 0.0, %v3972
        %v3974 = vpop.f32.mrf.mxu0
        %v3975 = vpop.f32.mrf.mxu0
        %v3976 = vpop.f32.mrf.mxu0
        %3977 = vdwg.mxu0
        %v3978 = vadd.f32 %v3793, %v3973
        %v3979 = vpack.c.bf16 %v1219, %v1219
        %v3981 = vrot.slane %v3979, 1
        %v3983 = vsel %vm1248, %v3981, 0
        %3985 = vmatprep.subr.bf16.mxu0 0
        %3986 = vmatpush1.bf16.msra.mxu0 0
        %3987 = vmatprep.subr.bf16.mxu0 0
        %3988 = vmatpush1.bf16.msra.mxu0 0
        %3989 = vmatprep.subr.bf16.mxu0 0
        %3990 = vmatpush1.bf16.msra.mxu0 0
        %3991 = vmatprep.subr.bf16.mxu0 0
        %3992 = vmatpush1.bf16.msra.mxu0 0
        %3993 = vmatprep.subr.bf16.mxu0 0
        %3994 = vmatpush1.bf16.msra.mxu0 0
        %3995 = vmatprep.subr.bf16.mxu0 0
        %3996 = vmatpush1.bf16.msra.mxu0 0
        %3997 = vmatprep.subr.bf16.mxu0 0
        %3998 = vmatpush1.bf16.msra.mxu0 %v3853
        %3999 = vmatprep.subr.bf16.mxu0 0
        %4000 = vmatpush1.bf16.msra.mxu0 %v3852
        %4001 = vmatprep.subr.bf16.mxu0 0
        %4002 = vmatpush2.bf16.msra.mxu0 0
        %4003 = vmatprep.subr.bf16.mxu0 0
        %4004 = vmatpush2.bf16.msra.mxu0 0
        %4005 = vmatprep.subr.bf16.mxu0 0
        %4006 = vmatpush2.bf16.msra.mxu0 0
        %4007 = vmatprep.subr.bf16.mxu0 0
        %4008 = vmatpush2.bf16.msra.mxu0 0
        %4009 = vmatprep.subr.bf16.mxu0 0
        %4010 = vmatpush2.bf16.msra.mxu0 0
        %4011 = vmatprep.subr.bf16.mxu0 0
        %4012 = vmatpush2.bf16.msra.mxu0 0
        %4013 = vmatprep.subr.bf16.mxu0 0
        %4014 = vmatpush2.bf16.msra.mxu0 0
        %4015 = vmatprep.subr.bf16.mxu0 0
        %4016 = vmatpush2.bf16.msra.mxu0 0
        %4017 = vmatprep.mubr.bf16.mxu0 0
        %4018 = vmatmul.mubr.bf16.gmra.mxu0 %v3983
        %v4019 = vpop.f32.mrf.mxu0
        %v4020 = vadd.f32 0.0, %v4019
        %v4021 = vpop.f32.mrf.mxu0
        %v4022 = vpop.f32.mrf.mxu0
        %v4023 = vpop.f32.mrf.mxu0
        %4024 = vdwg.mxu0
        %v4025 = vadd.f32 %v3838, %v4020
        %s4026 = scalar_lea.vmem %s3, 224
        %v4027 = vld [vmem:[%s4026] sm:$0xf]
        %v4028 = vld [vmem:[%s4026 + $0x4] sm:$0xf]
        %v4029 = vld [vmem:[%s4026 + $0x8] sm:$0xf]
        %v4030 = vld [vmem:[%s4026 + $0xc] sm:$0xf]
        %v4035 = vunpack.c.l.b16 %v4027
        %v4036 = vunpack.c.l.b16 %v4028
        %v4037 = vunpack.c.l.b16 %v4029
        %v4038 = vunpack.c.l.b16 %v4030
        %v4039 = vpack.c.b16 %v4036, %v4035
        %v4040 = vpack.c.b16 %v4038, %v4037
        %4043 = vmatprep.subr.bf16.mxu0 0
        %4044 = vmatpush1.bf16.msra.mxu0 0
        %4045 = vmatprep.subr.bf16.mxu0 0
        %4046 = vmatpush1.bf16.msra.mxu0 0
        %4047 = vmatprep.subr.bf16.mxu0 0
        %4048 = vmatpush1.bf16.msra.mxu0 0
        %4049 = vmatprep.subr.bf16.mxu0 0
        %4050 = vmatpush1.bf16.msra.mxu0 0
        %4051 = vmatprep.subr.bf16.mxu0 0
        %4052 = vmatpush1.bf16.msra.mxu0 0
        %4053 = vmatprep.subr.bf16.mxu0 0
        %4054 = vmatpush1.bf16.msra.mxu0 0
        %4055 = vmatprep.subr.bf16.mxu0 0
        %4056 = vmatpush1.bf16.msra.mxu0 %v4040
        %4057 = vmatprep.subr.bf16.mxu0 0
        %4058 = vmatpush1.bf16.msra.mxu0 %v4039
        %4059 = vmatprep.subr.bf16.mxu0 0
        %4060 = vmatpush2.bf16.msra.mxu0 0
        %4061 = vmatprep.subr.bf16.mxu0 0
        %4062 = vmatpush2.bf16.msra.mxu0 0
        %4063 = vmatprep.subr.bf16.mxu0 0
        %4064 = vmatpush2.bf16.msra.mxu0 0
        %4065 = vmatprep.subr.bf16.mxu0 0
        %4066 = vmatpush2.bf16.msra.mxu0 0
        %4067 = vmatprep.subr.bf16.mxu0 0
        %4068 = vmatpush2.bf16.msra.mxu0 0
        %4069 = vmatprep.subr.bf16.mxu0 0
        %4070 = vmatpush2.bf16.msra.mxu0 0
        %4071 = vmatprep.subr.bf16.mxu0 0
        %4072 = vmatpush2.bf16.msra.mxu0 0
        %4073 = vmatprep.subr.bf16.mxu0 0
        %4074 = vmatpush2.bf16.msra.mxu0 0
        %4075 = vmatprep.mubr.bf16.mxu0 0
        %4076 = vmatmul.mubr.bf16.gmra.mxu0 %v2532
        %v4077 = vpop.f32.mrf.mxu0
        %v4078 = vadd.f32 0.0, %v4077
        %v4079 = vpop.f32.mrf.mxu0
        %v4080 = vpop.f32.mrf.mxu0
        %v4081 = vpop.f32.mrf.mxu0
        %4082 = vdwg.mxu0
        %v4083 = vadd.f32 %v3896, %v4078
        %4084 = vmatprep.subr.bf16.mxu0 0
        %4085 = vmatpush1.bf16.msra.mxu0 0
        %4086 = vmatprep.subr.bf16.mxu0 0
        %4087 = vmatpush1.bf16.msra.mxu0 0
        %4088 = vmatprep.subr.bf16.mxu0 0
        %4089 = vmatpush1.bf16.msra.mxu0 0
        %4090 = vmatprep.subr.bf16.mxu0 0
        %4091 = vmatpush1.bf16.msra.mxu0 0
        %4092 = vmatprep.subr.bf16.mxu0 0
        %4093 = vmatpush1.bf16.msra.mxu0 0
        %4094 = vmatprep.subr.bf16.mxu0 0
        %4095 = vmatpush1.bf16.msra.mxu0 0
        %4096 = vmatprep.subr.bf16.mxu0 0
        %4097 = vmatpush1.bf16.msra.mxu0 %v4040
        %4098 = vmatprep.subr.bf16.mxu0 0
        %4099 = vmatpush1.bf16.msra.mxu0 %v4039
        %4100 = vmatprep.subr.bf16.mxu0 0
        %4101 = vmatpush2.bf16.msra.mxu0 0
        %4102 = vmatprep.subr.bf16.mxu0 0
        %4103 = vmatpush2.bf16.msra.mxu0 0
        %4104 = vmatprep.subr.bf16.mxu0 0
        %4105 = vmatpush2.bf16.msra.mxu0 0
        %4106 = vmatprep.subr.bf16.mxu0 0
        %4107 = vmatpush2.bf16.msra.mxu0 0
        %4108 = vmatprep.subr.bf16.mxu0 0
        %4109 = vmatpush2.bf16.msra.mxu0 0
        %4110 = vmatprep.subr.bf16.mxu0 0
        %4111 = vmatpush2.bf16.msra.mxu0 0
        %4112 = vmatprep.subr.bf16.mxu0 0
        %4113 = vmatpush2.bf16.msra.mxu0 0
        %4114 = vmatprep.subr.bf16.mxu0 0
        %4115 = vmatpush2.bf16.msra.mxu0 0
        %4116 = vmatprep.mubr.bf16.mxu0 0
        %4117 = vmatmul.mubr.bf16.gmra.mxu0 %v2582
        %v4118 = vpop.f32.mrf.mxu0
        %v4119 = vadd.f32 0.0, %v4118
        %v4120 = vpop.f32.mrf.mxu0
        %v4121 = vpop.f32.mrf.mxu0
        %v4122 = vpop.f32.mrf.mxu0
        %4123 = vdwg.mxu0
        %v4124 = vadd.f32 %v3937, %v4119
        %4125 = vmatprep.subr.bf16.mxu0 0
        %4126 = vmatpush1.bf16.msra.mxu0 0
        %4127 = vmatprep.subr.bf16.mxu0 0
        %4128 = vmatpush1.bf16.msra.mxu0 0
        %4129 = vmatprep.subr.bf16.mxu0 0
        %4130 = vmatpush1.bf16.msra.mxu0 0
        %4131 = vmatprep.subr.bf16.mxu0 0
        %4132 = vmatpush1.bf16.msra.mxu0 0
        %4133 = vmatprep.subr.bf16.mxu0 0
        %4134 = vmatpush1.bf16.msra.mxu0 0
        %4135 = vmatprep.subr.bf16.mxu0 0
        %4136 = vmatpush1.bf16.msra.mxu0 0
        %4137 = vmatprep.subr.bf16.mxu0 0
        %4138 = vmatpush1.bf16.msra.mxu0 %v4040
        %4139 = vmatprep.subr.bf16.mxu0 0
        %4140 = vmatpush1.bf16.msra.mxu0 %v4039
        %4141 = vmatprep.subr.bf16.mxu0 0
        %4142 = vmatpush2.bf16.msra.mxu0 0
        %4143 = vmatprep.subr.bf16.mxu0 0
        %4144 = vmatpush2.bf16.msra.mxu0 0
        %4145 = vmatprep.subr.bf16.mxu0 0
        %4146 = vmatpush2.bf16.msra.mxu0 0
        %4147 = vmatprep.subr.bf16.mxu0 0
        %4148 = vmatpush2.bf16.msra.mxu0 0
        %4149 = vmatprep.subr.bf16.mxu0 0
        %4150 = vmatpush2.bf16.msra.mxu0 0
        %4151 = vmatprep.subr.bf16.mxu0 0
        %4152 = vmatpush2.bf16.msra.mxu0 0
        %4153 = vmatprep.subr.bf16.mxu0 0
        %4154 = vmatpush2.bf16.msra.mxu0 0
        %4155 = vmatprep.subr.bf16.mxu0 0
        %4156 = vmatpush2.bf16.msra.mxu0 0
        %4157 = vmatprep.mubr.bf16.mxu0 0
        %4158 = vmatmul.mubr.bf16.gmra.mxu0 %v2632
        %v4159 = vpop.f32.mrf.mxu0
        %v4160 = vadd.f32 0.0, %v4159
        %v4161 = vpop.f32.mrf.mxu0
        %v4162 = vpop.f32.mrf.mxu0
        %v4163 = vpop.f32.mrf.mxu0
        %4164 = vdwg.mxu0
        %v4165 = vadd.f32 %v3978, %v4160
        %v4166 = vshrl.u32 %v3794, 16
        %v4168 = vshll.u32 %v3794, 16
        %v4170 = vrot.slane %v4168, 1
        %v4171 = vor.u32 %v4166, %v4170
        %v4173 = vsel %vm1248, %v4171, 0
        %4175 = vmatprep.subr.bf16.mxu0 0
        %4176 = vmatpush1.bf16.msra.mxu0 0
        %4177 = vmatprep.subr.bf16.mxu0 0
        %4178 = vmatpush1.bf16.msra.mxu0 0
        %4179 = vmatprep.subr.bf16.mxu0 0
        %4180 = vmatpush1.bf16.msra.mxu0 0
        %4181 = vmatprep.subr.bf16.mxu0 0
        %4182 = vmatpush1.bf16.msra.mxu0 0
        %4183 = vmatprep.subr.bf16.mxu0 0
        %4184 = vmatpush1.bf16.msra.mxu0 0
        %4185 = vmatprep.subr.bf16.mxu0 0
        %4186 = vmatpush1.bf16.msra.mxu0 0
        %4187 = vmatprep.subr.bf16.mxu0 0
        %4188 = vmatpush1.bf16.msra.mxu0 %v4040
        %4189 = vmatprep.subr.bf16.mxu0 0
        %4190 = vmatpush1.bf16.msra.mxu0 %v4039
        %4191 = vmatprep.subr.bf16.mxu0 0
        %4192 = vmatpush2.bf16.msra.mxu0 0
        %4193 = vmatprep.subr.bf16.mxu0 0
        %4194 = vmatpush2.bf16.msra.mxu0 0
        %4195 = vmatprep.subr.bf16.mxu0 0
        %4196 = vmatpush2.bf16.msra.mxu0 0
        %4197 = vmatprep.subr.bf16.mxu0 0
        %4198 = vmatpush2.bf16.msra.mxu0 0
        %4199 = vmatprep.subr.bf16.mxu0 0
        %4200 = vmatpush2.bf16.msra.mxu0 0
        %4201 = vmatprep.subr.bf16.mxu0 0
        %4202 = vmatpush2.bf16.msra.mxu0 0
        %4203 = vmatprep.subr.bf16.mxu0 0
        %4204 = vmatpush2.bf16.msra.mxu0 0
        %4205 = vmatprep.subr.bf16.mxu0 0
        %4206 = vmatpush2.bf16.msra.mxu0 0
        %4207 = vmatprep.mubr.bf16.mxu0 0
        %4208 = vmatmul.mubr.bf16.gmra.mxu0 %v4173
        %v4209 = vpop.f32.mrf.mxu0
        %v4210 = vadd.f32 0.0, %v4209
        %v4211 = vpop.f32.mrf.mxu0
        %v4212 = vpop.f32.mrf.mxu0
        %v4213 = vpop.f32.mrf.mxu0
        %4214 = vdwg.mxu0
        %v4215 = vadd.f32 %v4025, %v4210
        %s4216 = scalar_lea.vmem %s3, 240
        %v4217 = vld [vmem:[%s4216] sm:$0xf]
        %v4218 = vld [vmem:[%s4216 + $0x4] sm:$0xf]
        %v4219 = vld [vmem:[%s4216 + $0x8] sm:$0xf]
        %v4220 = vld [vmem:[%s4216 + $0xc] sm:$0xf]
        %v4225 = vunpack.c.l.b16 %v4217
        %v4226 = vunpack.c.l.b16 %v4218
        %v4227 = vunpack.c.l.b16 %v4219
        %v4228 = vunpack.c.l.b16 %v4220
        %v4229 = vpack.c.b16 %v4226, %v4225
        %v4230 = vpack.c.b16 %v4228, %v4227
        %4233 = vmatprep.subr.bf16.mxu0 0
        %4234 = vmatpush1.bf16.msra.mxu0 0
        %4235 = vmatprep.subr.bf16.mxu0 0
        %4236 = vmatpush1.bf16.msra.mxu0 0
        %4237 = vmatprep.subr.bf16.mxu0 0
        %4238 = vmatpush1.bf16.msra.mxu0 0
        %4239 = vmatprep.subr.bf16.mxu0 0
        %4240 = vmatpush1.bf16.msra.mxu0 0
        %4241 = vmatprep.subr.bf16.mxu0 0
        %4242 = vmatpush1.bf16.msra.mxu0 0
        %4243 = vmatprep.subr.bf16.mxu0 0
        %4244 = vmatpush1.bf16.msra.mxu0 0
        %4245 = vmatprep.subr.bf16.mxu0 0
        %4246 = vmatpush1.bf16.msra.mxu0 %v4230
        %4247 = vmatprep.subr.bf16.mxu0 0
        %4248 = vmatpush1.bf16.msra.mxu0 %v4229
        %4249 = vmatprep.subr.bf16.mxu0 0
        %4250 = vmatpush2.bf16.msra.mxu0 0
        %4251 = vmatprep.subr.bf16.mxu0 0
        %4252 = vmatpush2.bf16.msra.mxu0 0
        %4253 = vmatprep.subr.bf16.mxu0 0
        %4254 = vmatpush2.bf16.msra.mxu0 0
        %4255 = vmatprep.subr.bf16.mxu0 0
        %4256 = vmatpush2.bf16.msra.mxu0 0
        %4257 = vmatprep.subr.bf16.mxu0 0
        %4258 = vmatpush2.bf16.msra.mxu0 0
        %4259 = vmatprep.subr.bf16.mxu0 0
        %4260 = vmatpush2.bf16.msra.mxu0 0
        %4261 = vmatprep.subr.bf16.mxu0 0
        %4262 = vmatpush2.bf16.msra.mxu0 0
        %4263 = vmatprep.subr.bf16.mxu0 0
        %4264 = vmatpush2.bf16.msra.mxu0 0
        %4265 = vmatprep.mubr.bf16.mxu0 0
        %4266 = vmatmul.mubr.bf16.gmra.mxu0 %v2753
        %v4267 = vpop.f32.mrf.mxu0
        %v4268 = vadd.f32 0.0, %v4267
        %v4269 = vpop.f32.mrf.mxu0
        %v4270 = vpop.f32.mrf.mxu0
        %v4271 = vpop.f32.mrf.mxu0
        %4272 = vdwg.mxu0
        %v4273 = vadd.f32 %v4083, %v4268
        %4274 = vmatprep.subr.bf16.mxu0 0
        %4275 = vmatpush1.bf16.msra.mxu0 0
        %4276 = vmatprep.subr.bf16.mxu0 0
        %4277 = vmatpush1.bf16.msra.mxu0 0
        %4278 = vmatprep.subr.bf16.mxu0 0
        %4279 = vmatpush1.bf16.msra.mxu0 0
        %4280 = vmatprep.subr.bf16.mxu0 0
        %4281 = vmatpush1.bf16.msra.mxu0 0
        %4282 = vmatprep.subr.bf16.mxu0 0
        %4283 = vmatpush1.bf16.msra.mxu0 0
        %4284 = vmatprep.subr.bf16.mxu0 0
        %4285 = vmatpush1.bf16.msra.mxu0 0
        %4286 = vmatprep.subr.bf16.mxu0 0
        %4287 = vmatpush1.bf16.msra.mxu0 %v4230
        %4288 = vmatprep.subr.bf16.mxu0 0
        %4289 = vmatpush1.bf16.msra.mxu0 %v4229
        %4290 = vmatprep.subr.bf16.mxu0 0
        %4291 = vmatpush2.bf16.msra.mxu0 0
        %4292 = vmatprep.subr.bf16.mxu0 0
        %4293 = vmatpush2.bf16.msra.mxu0 0
        %4294 = vmatprep.subr.bf16.mxu0 0
        %4295 = vmatpush2.bf16.msra.mxu0 0
        %4296 = vmatprep.subr.bf16.mxu0 0
        %4297 = vmatpush2.bf16.msra.mxu0 0
        %4298 = vmatprep.subr.bf16.mxu0 0
        %4299 = vmatpush2.bf16.msra.mxu0 0
        %4300 = vmatprep.subr.bf16.mxu0 0
        %4301 = vmatpush2.bf16.msra.mxu0 0
        %4302 = vmatprep.subr.bf16.mxu0 0
        %4303 = vmatpush2.bf16.msra.mxu0 0
        %4304 = vmatprep.subr.bf16.mxu0 0
        %4305 = vmatpush2.bf16.msra.mxu0 0
        %4306 = vmatprep.mubr.bf16.mxu0 0
        %4307 = vmatmul.mubr.bf16.gmra.mxu0 %v2805
        %v4308 = vpop.f32.mrf.mxu0
        %v4309 = vadd.f32 0.0, %v4308
        %v4310 = vpop.f32.mrf.mxu0
        %v4311 = vpop.f32.mrf.mxu0
        %v4312 = vpop.f32.mrf.mxu0
        %4313 = vdwg.mxu0
        %v4314 = vadd.f32 %v4124, %v4309
        %4315 = vmatprep.subr.bf16.mxu0 0
        %4316 = vmatpush1.bf16.msra.mxu0 0
        %4317 = vmatprep.subr.bf16.mxu0 0
        %4318 = vmatpush1.bf16.msra.mxu0 0
        %4319 = vmatprep.subr.bf16.mxu0 0
        %4320 = vmatpush1.bf16.msra.mxu0 0
        %4321 = vmatprep.subr.bf16.mxu0 0
        %4322 = vmatpush1.bf16.msra.mxu0 0
        %4323 = vmatprep.subr.bf16.mxu0 0
        %4324 = vmatpush1.bf16.msra.mxu0 0
        %4325 = vmatprep.subr.bf16.mxu0 0
        %4326 = vmatpush1.bf16.msra.mxu0 0
        %4327 = vmatprep.subr.bf16.mxu0 0
        %4328 = vmatpush1.bf16.msra.mxu0 %v4230
        %4329 = vmatprep.subr.bf16.mxu0 0
        %4330 = vmatpush1.bf16.msra.mxu0 %v4229
        %4331 = vmatprep.subr.bf16.mxu0 0
        %4332 = vmatpush2.bf16.msra.mxu0 0
        %4333 = vmatprep.subr.bf16.mxu0 0
        %4334 = vmatpush2.bf16.msra.mxu0 0
        %4335 = vmatprep.subr.bf16.mxu0 0
        %4336 = vmatpush2.bf16.msra.mxu0 0
        %4337 = vmatprep.subr.bf16.mxu0 0
        %4338 = vmatpush2.bf16.msra.mxu0 0
        %4339 = vmatprep.subr.bf16.mxu0 0
        %4340 = vmatpush2.bf16.msra.mxu0 0
        %4341 = vmatprep.subr.bf16.mxu0 0
        %4342 = vmatpush2.bf16.msra.mxu0 0
        %4343 = vmatprep.subr.bf16.mxu0 0
        %4344 = vmatpush2.bf16.msra.mxu0 0
        %4345 = vmatprep.subr.bf16.mxu0 0
        %4346 = vmatpush2.bf16.msra.mxu0 0
        %4347 = vmatprep.mubr.bf16.mxu0 0
        %4348 = vmatmul.mubr.bf16.gmra.mxu0 %v2857
        %v4349 = vpop.f32.mrf.mxu0
        %v4350 = vadd.f32 0.0, %v4349
        %v4351 = vpop.f32.mrf.mxu0
        %v4352 = vpop.f32.mrf.mxu0
        %v4353 = vpop.f32.mrf.mxu0
        %4354 = vdwg.mxu0
        %v4355 = vadd.f32 %v4165, %v4350
        %v4357 = vshrl.u32 %v3979, 16
        %v4359 = vrot.slane %v4357, 1
        %v4360 = vshll.u32 %v3979, 16
        %v4362 = vrot.slane %v4360, 2
        %v4363 = vor.u32 %v4359, %v4362
        %v4365 = vsel %vm1248, %v4363, 0
        %4367 = vmatprep.subr.bf16.mxu0 0
        %4368 = vmatpush1.bf16.msra.mxu0 0
        %4369 = vmatprep.subr.bf16.mxu0 0
        %4370 = vmatpush1.bf16.msra.mxu0 0
        %4371 = vmatprep.subr.bf16.mxu0 0
        %4372 = vmatpush1.bf16.msra.mxu0 0
        %4373 = vmatprep.subr.bf16.mxu0 0
        %4374 = vmatpush1.bf16.msra.mxu0 0
        %4375 = vmatprep.subr.bf16.mxu0 0
        %4376 = vmatpush1.bf16.msra.mxu0 0
        %4377 = vmatprep.subr.bf16.mxu0 0
        %4378 = vmatpush1.bf16.msra.mxu0 0
        %4379 = vmatprep.subr.bf16.mxu0 0
        %4380 = vmatpush1.bf16.msra.mxu0 %v4230
        %4381 = vmatprep.subr.bf16.mxu0 0
        %4382 = vmatpush1.bf16.msra.mxu0 %v4229
        %4383 = vmatprep.subr.bf16.mxu0 0
        %4384 = vmatpush2.bf16.msra.mxu0 0
        %4385 = vmatprep.subr.bf16.mxu0 0
        %4386 = vmatpush2.bf16.msra.mxu0 0
        %4387 = vmatprep.subr.bf16.mxu0 0
        %4388 = vmatpush2.bf16.msra.mxu0 0
        %4389 = vmatprep.subr.bf16.mxu0 0
        %4390 = vmatpush2.bf16.msra.mxu0 0
        %4391 = vmatprep.subr.bf16.mxu0 0
        %4392 = vmatpush2.bf16.msra.mxu0 0
        %4393 = vmatprep.subr.bf16.mxu0 0
        %4394 = vmatpush2.bf16.msra.mxu0 0
        %4395 = vmatprep.subr.bf16.mxu0 0
        %4396 = vmatpush2.bf16.msra.mxu0 0
        %4397 = vmatprep.subr.bf16.mxu0 0
        %4398 = vmatpush2.bf16.msra.mxu0 0
        %4399 = vmatprep.mubr.bf16.mxu0 0
        %4400 = vmatmul.mubr.bf16.gmra.mxu0 %v4365
        %v4401 = vpop.f32.mrf.mxu0
        %v4402 = vadd.f32 0.0, %v4401
        %v4403 = vpop.f32.mrf.mxu0
        %v4404 = vpop.f32.mrf.mxu0
        %v4405 = vpop.f32.mrf.mxu0
        %4406 = vdwg.mxu0
        %v4407 = vadd.f32 %v4215, %v4402
        %v4408 = vld [vmem:[%s4] sm:$0x1]
        %v4410 = vlaneseq
        %v4411 = vshrl.u32 %v4410, 7
        %v4412 = vsub.s32 0, %v4411
        %v4413 = vrot.slane %v4408, %v4412
        %v4415 = vadd.f32 %v4273, %v4413
        %v4416 = vmax.f32 %v4415, 0.0
        %v4417 = vadd.f32 %v4314, %v4413
        %v4418 = vmax.f32 %v4417, 0.0
        %v4419 = vadd.f32 %v4355, %v4413
        %v4420 = vmax.f32 %v4419, 0.0
        %v4421 = vadd.f32 %v4407, %v4413
        %v4422 = vmax.f32 %v4421, 0.0
        %v4423 = vld [vmem:[%s5] sm:$0xf]
        %v4424 = vld [vmem:[%s5 + $0x4] sm:$0xf]
        %v4425 = vld [vmem:[%s5 + $0x8] sm:$0xf]
        %v4426 = vld [vmem:[%s5 + $0xc] sm:$0xf]
        %v4427 = vld [vmem:[%s5 + $0x10] sm:$0xf]
        %v4428 = vld [vmem:[%s5 + $0x14] sm:$0xf]
        %v4429 = vld [vmem:[%s5 + $0x18] sm:$0xf]
        %v4430 = vld [vmem:[%s5 + $0x1c] sm:$0xf]
        %v4431 = vpack.c.bf16 %v4416, %v4416
        %v4432 = vpack.c.bf16 %v4418, %v4418
        %s4433 = scalar_lea.vmem %s5, 32
        %v4434 = vld [vmem:[%s4433] sm:$0xf]
        %v4435 = vld [vmem:[%s4433 + $0x4] sm:$0xf]
        %v4436 = vld [vmem:[%s4433 + $0x8] sm:$0xf]
        %v4437 = vld [vmem:[%s4433 + $0xc] sm:$0xf]
        %v4438 = vld [vmem:[%s4433 + $0x10] sm:$0xf]
        %v4439 = vld [vmem:[%s4433 + $0x14] sm:$0xf]
        %v4440 = vld [vmem:[%s4433 + $0x18] sm:$0xf]
        %v4441 = vld [vmem:[%s4433 + $0x1c] sm:$0xf]
        %v4443 = vshrl.u32 %v4431, 16
        %v4445 = vshll.u32 %v4431, 16
        %v4447 = vrot.slane %v4445, 1
        %v4448 = vor.u32 %v4443, %v4447
        %v4457 = vunpack.c.l.b16 %v4434
        %v4458 = vunpack.c.l.b16 %v4435
        %v4459 = vunpack.c.l.b16 %v4436
        %v4460 = vunpack.c.l.b16 %v4437
        %v4461 = vunpack.c.l.b16 %v4438
        %v4462 = vunpack.c.l.b16 %v4439
        %v4463 = vunpack.c.l.b16 %v4440
        %v4464 = vunpack.c.l.b16 %v4441
        %v4465 = vpack.c.b16 %v4458, %v4457
        %v4466 = vpack.c.b16 %v4460, %v4459
        %v4467 = vpack.c.b16 %v4462, %v4461
        %v4468 = vpack.c.b16 %v4464, %v4463
        %v4474 = vsel %vm599, %v4448, 0
        %4476 = vmatprep.subr.bf16.mxu0 0
        %4477 = vmatpush1.bf16.msra.mxu0 0
        %4478 = vmatprep.subr.bf16.mxu0 0
        %4479 = vmatpush1.bf16.msra.mxu0 0
        %4480 = vmatprep.subr.bf16.mxu0 0
        %4481 = vmatpush1.bf16.msra.mxu0 0
        %4482 = vmatprep.subr.bf16.mxu0 0
        %4483 = vmatpush1.bf16.msra.mxu0 0
        %4484 = vmatprep.subr.bf16.mxu0 0
        %4485 = vmatpush1.bf16.msra.mxu0 %v4468
        %4486 = vmatprep.subr.bf16.mxu0 0
        %4487 = vmatpush1.bf16.msra.mxu0 %v4467
        %4488 = vmatprep.subr.bf16.mxu0 0
        %4489 = vmatpush1.bf16.msra.mxu0 %v4466
        %4490 = vmatprep.subr.bf16.mxu0 0
        %4491 = vmatpush1.bf16.msra.mxu0 %v4465
        %4492 = vmatprep.subr.bf16.mxu0 0
        %4493 = vmatpush2.bf16.msra.mxu0 0
        %4494 = vmatprep.subr.bf16.mxu0 0
        %4495 = vmatpush2.bf16.msra.mxu0 0
        %4496 = vmatprep.subr.bf16.mxu0 0
        %4497 = vmatpush2.bf16.msra.mxu0 0
        %4498 = vmatprep.subr.bf16.mxu0 0
        %4499 = vmatpush2.bf16.msra.mxu0 0
        %4500 = vmatprep.subr.bf16.mxu0 0
        %4501 = vmatpush2.bf16.msra.mxu0 0
        %4502 = vmatprep.subr.bf16.mxu0 0
        %4503 = vmatpush2.bf16.msra.mxu0 0
        %4504 = vmatprep.subr.bf16.mxu0 0
        %4505 = vmatpush2.bf16.msra.mxu0 0
        %4506 = vmatprep.subr.bf16.mxu0 0
        %4507 = vmatpush2.bf16.msra.mxu0 0
        %4508 = vmatprep.mubr.bf16.mxu0 0
        %4509 = vmatmul.mubr.bf16.gmra.mxu0 %v4474
        %v4510 = vpop.f32.mrf.mxu0
        %v4511 = vadd.f32 0.0, %v4510
        %v4512 = vpop.f32.mrf.mxu0
        %v4513 = vpop.f32.mrf.mxu0
        %v4514 = vpop.f32.mrf.mxu0
        %4515 = vdwg.mxu0
        %v4524 = vunpack.c.l.b16 %v4423
        %v4525 = vunpack.c.l.b16 %v4424
        %v4526 = vunpack.c.l.b16 %v4425
        %v4527 = vunpack.c.l.b16 %v4426
        %v4528 = vunpack.c.l.b16 %v4427
        %v4529 = vunpack.c.l.b16 %v4428
        %v4530 = vunpack.c.l.b16 %v4429
        %v4531 = vunpack.c.l.b16 %v4430
        %v4532 = vpack.c.b16 %v4525, %v4524
        %v4533 = vpack.c.b16 %v4527, %v4526
        %v4534 = vpack.c.b16 %v4529, %v4528
        %v4535 = vpack.c.b16 %v4531, %v4530
        %v4540 = vsel %vm599, %v4431, 0
        %4542 = vmatprep.subr.bf16.mxu0 0
        %4543 = vmatpush1.bf16.msra.mxu0 0
        %4544 = vmatprep.subr.bf16.mxu0 0
        %4545 = vmatpush1.bf16.msra.mxu0 0
        %4546 = vmatprep.subr.bf16.mxu0 0
        %4547 = vmatpush1.bf16.msra.mxu0 0
        %4548 = vmatprep.subr.bf16.mxu0 0
        %4549 = vmatpush1.bf16.msra.mxu0 0
        %4550 = vmatprep.subr.bf16.mxu0 0
        %4551 = vmatpush1.bf16.msra.mxu0 %v4535
        %4552 = vmatprep.subr.bf16.mxu0 0
        %4553 = vmatpush1.bf16.msra.mxu0 %v4534
        %4554 = vmatprep.subr.bf16.mxu0 0
        %4555 = vmatpush1.bf16.msra.mxu0 %v4533
        %4556 = vmatprep.subr.bf16.mxu0 0
        %4557 = vmatpush1.bf16.msra.mxu0 %v4532
        %4558 = vmatprep.subr.bf16.mxu0 0
        %4559 = vmatpush2.bf16.msra.mxu0 0
        %4560 = vmatprep.subr.bf16.mxu0 0
        %4561 = vmatpush2.bf16.msra.mxu0 0
        %4562 = vmatprep.subr.bf16.mxu0 0
        %4563 = vmatpush2.bf16.msra.mxu0 0
        %4564 = vmatprep.subr.bf16.mxu0 0
        %4565 = vmatpush2.bf16.msra.mxu0 0
        %4566 = vmatprep.subr.bf16.mxu0 0
        %4567 = vmatpush2.bf16.msra.mxu0 0
        %4568 = vmatprep.subr.bf16.mxu0 0
        %4569 = vmatpush2.bf16.msra.mxu0 0
        %4570 = vmatprep.subr.bf16.mxu0 0
        %4571 = vmatpush2.bf16.msra.mxu0 0
        %4572 = vmatprep.subr.bf16.mxu0 0
        %4573 = vmatpush2.bf16.msra.mxu0 0
        %4574 = vmatprep.mubr.bf16.mxu0 0
        %4575 = vmatmul.mubr.bf16.gmra.mxu0 %v4540
        %v4576 = vpop.f32.mrf.mxu0
        %v4577 = vadd.f32 %v4511, %v4576
        %v4578 = vpop.f32.mrf.mxu0
        %v4579 = vpop.f32.mrf.mxu0
        %v4580 = vpop.f32.mrf.mxu0
        %4581 = vdwg.mxu0
        %v4583 = vshrl.u32 %v4432, 16
        %v4585 = vshll.u32 %v4432, 16
        %v4587 = vrot.slane %v4585, 1
        %v4588 = vor.u32 %v4583, %v4587
        %v4590 = vsel %vm599, %v4588, 0
        %4592 = vmatprep.subr.bf16.mxu0 0
        %4593 = vmatpush1.bf16.msra.mxu0 0
        %4594 = vmatprep.subr.bf16.mxu0 0
        %4595 = vmatpush1.bf16.msra.mxu0 0
        %4596 = vmatprep.subr.bf16.mxu0 0
        %4597 = vmatpush1.bf16.msra.mxu0 0
        %4598 = vmatprep.subr.bf16.mxu0 0
        %4599 = vmatpush1.bf16.msra.mxu0 0
        %4600 = vmatprep.subr.bf16.mxu0 0
        %4601 = vmatpush1.bf16.msra.mxu0 %v4468
        %4602 = vmatprep.subr.bf16.mxu0 0
        %4603 = vmatpush1.bf16.msra.mxu0 %v4467
        %4604 = vmatprep.subr.bf16.mxu0 0
        %4605 = vmatpush1.bf16.msra.mxu0 %v4466
        %4606 = vmatprep.subr.bf16.mxu0 0
        %4607 = vmatpush1.bf16.msra.mxu0 %v4465
        %4608 = vmatprep.subr.bf16.mxu0 0
        %4609 = vmatpush2.bf16.msra.mxu0 0
        %4610 = vmatprep.subr.bf16.mxu0 0
        %4611 = vmatpush2.bf16.msra.mxu0 0
        %4612 = vmatprep.subr.bf16.mxu0 0
        %4613 = vmatpush2.bf16.msra.mxu0 0
        %4614 = vmatprep.subr.bf16.mxu0 0
        %4615 = vmatpush2.bf16.msra.mxu0 0
        %4616 = vmatprep.subr.bf16.mxu0 0
        %4617 = vmatpush2.bf16.msra.mxu0 0
        %4618 = vmatprep.subr.bf16.mxu0 0
        %4619 = vmatpush2.bf16.msra.mxu0 0
        %4620 = vmatprep.subr.bf16.mxu0 0
        %4621 = vmatpush2.bf16.msra.mxu0 0
        %4622 = vmatprep.subr.bf16.mxu0 0
        %4623 = vmatpush2.bf16.msra.mxu0 0
        %4624 = vmatprep.mubr.bf16.mxu0 0
        %4625 = vmatmul.mubr.bf16.gmra.mxu0 %v4590
        %v4626 = vpop.f32.mrf.mxu0
        %v4627 = vadd.f32 0.0, %v4626
        %v4628 = vpop.f32.mrf.mxu0
        %v4629 = vpop.f32.mrf.mxu0
        %v4630 = vpop.f32.mrf.mxu0
        %4631 = vdwg.mxu0
        %v4632 = vsel %vm599, %v4432, 0
        %4634 = vmatprep.subr.bf16.mxu0 0
        %4635 = vmatpush1.bf16.msra.mxu0 0
        %4636 = vmatprep.subr.bf16.mxu0 0
        %4637 = vmatpush1.bf16.msra.mxu0 0
        %4638 = vmatprep.subr.bf16.mxu0 0
        %4639 = vmatpush1.bf16.msra.mxu0 0
        %4640 = vmatprep.subr.bf16.mxu0 0
        %4641 = vmatpush1.bf16.msra.mxu0 0
        %4642 = vmatprep.subr.bf16.mxu0 0
        %4643 = vmatpush1.bf16.msra.mxu0 %v4535
        %4644 = vmatprep.subr.bf16.mxu0 0
        %4645 = vmatpush1.bf16.msra.mxu0 %v4534
        %4646 = vmatprep.subr.bf16.mxu0 0
        %4647 = vmatpush1.bf16.msra.mxu0 %v4533
        %4648 = vmatprep.subr.bf16.mxu0 0
        %4649 = vmatpush1.bf16.msra.mxu0 %v4532
        %4650 = vmatprep.subr.bf16.mxu0 0
        %4651 = vmatpush2.bf16.msra.mxu0 0
        %4652 = vmatprep.subr.bf16.mxu0 0
        %4653 = vmatpush2.bf16.msra.mxu0 0
        %4654 = vmatprep.subr.bf16.mxu0 0
        %4655 = vmatpush2.bf16.msra.mxu0 0
        %4656 = vmatprep.subr.bf16.mxu0 0
        %4657 = vmatpush2.bf16.msra.mxu0 0
        %4658 = vmatprep.subr.bf16.mxu0 0
        %4659 = vmatpush2.bf16.msra.mxu0 0
        %4660 = vmatprep.subr.bf16.mxu0 0
        %4661 = vmatpush2.bf16.msra.mxu0 0
        %4662 = vmatprep.subr.bf16.mxu0 0
        %4663 = vmatpush2.bf16.msra.mxu0 0
        %4664 = vmatprep.subr.bf16.mxu0 0
        %4665 = vmatpush2.bf16.msra.mxu0 0
        %4666 = vmatprep.mubr.bf16.mxu0 0
        %4667 = vmatmul.mubr.bf16.gmra.mxu0 %v4632
        %v4668 = vpop.f32.mrf.mxu0
        %v4669 = vadd.f32 %v4627, %v4668
        %v4670 = vpop.f32.mrf.mxu0
        %v4671 = vpop.f32.mrf.mxu0
        %v4672 = vpop.f32.mrf.mxu0
        %4673 = vdwg.mxu0
        %s4674 = scalar_lea.vmem %s5, 64
        %v4675 = vld [vmem:[%s4674] sm:$0xf]
        %v4676 = vld [vmem:[%s4674 + $0x4] sm:$0xf]
        %v4677 = vld [vmem:[%s4674 + $0x8] sm:$0xf]
        %v4678 = vld [vmem:[%s4674 + $0xc] sm:$0xf]
        %v4679 = vld [vmem:[%s4674 + $0x10] sm:$0xf]
        %v4680 = vld [vmem:[%s4674 + $0x14] sm:$0xf]
        %v4681 = vld [vmem:[%s4674 + $0x18] sm:$0xf]
        %v4682 = vld [vmem:[%s4674 + $0x1c] sm:$0xf]
        %v4684 = vrot.slane %v4431, 1
        %v4693 = vunpack.c.l.b16 %v4675
        %v4694 = vunpack.c.l.b16 %v4676
        %v4695 = vunpack.c.l.b16 %v4677
        %v4696 = vunpack.c.l.b16 %v4678
        %v4697 = vunpack.c.l.b16 %v4679
        %v4698 = vunpack.c.l.b16 %v4680
        %v4699 = vunpack.c.l.b16 %v4681
        %v4700 = vunpack.c.l.b16 %v4682
        %v4701 = vpack.c.b16 %v4694, %v4693
        %v4702 = vpack.c.b16 %v4696, %v4695
        %v4703 = vpack.c.b16 %v4698, %v4697
        %v4704 = vpack.c.b16 %v4700, %v4699
        %v4710 = vsel %vm599, %v4684, 0
        %4712 = vmatprep.subr.bf16.mxu0 0
        %4713 = vmatpush1.bf16.msra.mxu0 0
        %4714 = vmatprep.subr.bf16.mxu0 0
        %4715 = vmatpush1.bf16.msra.mxu0 0
        %4716 = vmatprep.subr.bf16.mxu0 0
        %4717 = vmatpush1.bf16.msra.mxu0 0
        %4718 = vmatprep.subr.bf16.mxu0 0
        %4719 = vmatpush1.bf16.msra.mxu0 0
        %4720 = vmatprep.subr.bf16.mxu0 0
        %4721 = vmatpush1.bf16.msra.mxu0 %v4704
        %4722 = vmatprep.subr.bf16.mxu0 0
        %4723 = vmatpush1.bf16.msra.mxu0 %v4703
        %4724 = vmatprep.subr.bf16.mxu0 0
        %4725 = vmatpush1.bf16.msra.mxu0 %v4702
        %4726 = vmatprep.subr.bf16.mxu0 0
        %4727 = vmatpush1.bf16.msra.mxu0 %v4701
        %4728 = vmatprep.subr.bf16.mxu0 0
        %4729 = vmatpush2.bf16.msra.mxu0 0
        %4730 = vmatprep.subr.bf16.mxu0 0
        %4731 = vmatpush2.bf16.msra.mxu0 0
        %4732 = vmatprep.subr.bf16.mxu0 0
        %4733 = vmatpush2.bf16.msra.mxu0 0
        %4734 = vmatprep.subr.bf16.mxu0 0
        %4735 = vmatpush2.bf16.msra.mxu0 0
        %4736 = vmatprep.subr.bf16.mxu0 0
        %4737 = vmatpush2.bf16.msra.mxu0 0
        %4738 = vmatprep.subr.bf16.mxu0 0
        %4739 = vmatpush2.bf16.msra.mxu0 0
        %4740 = vmatprep.subr.bf16.mxu0 0
        %4741 = vmatpush2.bf16.msra.mxu0 0
        %4742 = vmatprep.subr.bf16.mxu0 0
        %4743 = vmatpush2.bf16.msra.mxu0 0
        %4744 = vmatprep.mubr.bf16.mxu0 0
        %4745 = vmatmul.mubr.bf16.gmra.mxu0 %v4710
        %v4746 = vpop.f32.mrf.mxu0
        %v4747 = vadd.f32 0.0, %v4746
        %v4748 = vpop.f32.mrf.mxu0
        %v4749 = vpop.f32.mrf.mxu0
        %v4750 = vpop.f32.mrf.mxu0
        %4751 = vdwg.mxu0
        %v4752 = vadd.f32 %v4577, %v4747
        %v4754 = vrot.slane %v4432, 1
        %v4756 = vsel %vm599, %v4754, 0
        %4758 = vmatprep.subr.bf16.mxu0 0
        %4759 = vmatpush1.bf16.msra.mxu0 0
        %4760 = vmatprep.subr.bf16.mxu0 0
        %4761 = vmatpush1.bf16.msra.mxu0 0
        %4762 = vmatprep.subr.bf16.mxu0 0
        %4763 = vmatpush1.bf16.msra.mxu0 0
        %4764 = vmatprep.subr.bf16.mxu0 0
        %4765 = vmatpush1.bf16.msra.mxu0 0
        %4766 = vmatprep.subr.bf16.mxu0 0
        %4767 = vmatpush1.bf16.msra.mxu0 %v4704
        %4768 = vmatprep.subr.bf16.mxu0 0
        %4769 = vmatpush1.bf16.msra.mxu0 %v4703
        %4770 = vmatprep.subr.bf16.mxu0 0
        %4771 = vmatpush1.bf16.msra.mxu0 %v4702
        %4772 = vmatprep.subr.bf16.mxu0 0
        %4773 = vmatpush1.bf16.msra.mxu0 %v4701
        %4774 = vmatprep.subr.bf16.mxu0 0
        %4775 = vmatpush2.bf16.msra.mxu0 0
        %4776 = vmatprep.subr.bf16.mxu0 0
        %4777 = vmatpush2.bf16.msra.mxu0 0
        %4778 = vmatprep.subr.bf16.mxu0 0
        %4779 = vmatpush2.bf16.msra.mxu0 0
        %4780 = vmatprep.subr.bf16.mxu0 0
        %4781 = vmatpush2.bf16.msra.mxu0 0
        %4782 = vmatprep.subr.bf16.mxu0 0
        %4783 = vmatpush2.bf16.msra.mxu0 0
        %4784 = vmatprep.subr.bf16.mxu0 0
        %4785 = vmatpush2.bf16.msra.mxu0 0
        %4786 = vmatprep.subr.bf16.mxu0 0
        %4787 = vmatpush2.bf16.msra.mxu0 0
        %4788 = vmatprep.subr.bf16.mxu0 0
        %4789 = vmatpush2.bf16.msra.mxu0 0
        %4790 = vmatprep.mubr.bf16.mxu0 0
        %4791 = vmatmul.mubr.bf16.gmra.mxu0 %v4756
        %v4792 = vpop.f32.mrf.mxu0
        %v4793 = vadd.f32 0.0, %v4792
        %v4794 = vpop.f32.mrf.mxu0
        %v4795 = vpop.f32.mrf.mxu0
        %v4796 = vpop.f32.mrf.mxu0
        %4797 = vdwg.mxu0
        %v4798 = vadd.f32 %v4669, %v4793
        %s4799 = scalar_lea.vmem %s5, 96
        %v4800 = vld [vmem:[%s4799] sm:$0xf]
        %v4801 = vld [vmem:[%s4799 + $0x4] sm:$0xf]
        %v4802 = vld [vmem:[%s4799 + $0x8] sm:$0xf]
        %v4803 = vld [vmem:[%s4799 + $0xc] sm:$0xf]
        %v4804 = vld [vmem:[%s4799 + $0x10] sm:$0xf]
        %v4805 = vld [vmem:[%s4799 + $0x14] sm:$0xf]
        %v4806 = vld [vmem:[%s4799 + $0x18] sm:$0xf]
        %v4807 = vld [vmem:[%s4799 + $0x1c] sm:$0xf]
        %v4816 = vunpack.c.l.b16 %v4800
        %v4817 = vunpack.c.l.b16 %v4801
        %v4818 = vunpack.c.l.b16 %v4802
        %v4819 = vunpack.c.l.b16 %v4803
        %v4820 = vunpack.c.l.b16 %v4804
        %v4821 = vunpack.c.l.b16 %v4805
        %v4822 = vunpack.c.l.b16 %v4806
        %v4823 = vunpack.c.l.b16 %v4807
        %v4824 = vpack.c.b16 %v4817, %v4816
        %v4825 = vpack.c.b16 %v4819, %v4818
        %v4826 = vpack.c.b16 %v4821, %v4820
        %v4827 = vpack.c.b16 %v4823, %v4822
        %4832 = vmatprep.subr.bf16.mxu0 0
        %4833 = vmatpush1.bf16.msra.mxu0 0
        %4834 = vmatprep.subr.bf16.mxu0 0
        %4835 = vmatpush1.bf16.msra.mxu0 0
        %4836 = vmatprep.subr.bf16.mxu0 0
        %4837 = vmatpush1.bf16.msra.mxu0 0
        %4838 = vmatprep.subr.bf16.mxu0 0
        %4839 = vmatpush1.bf16.msra.mxu0 0
        %4840 = vmatprep.subr.bf16.mxu0 0
        %4841 = vmatpush1.bf16.msra.mxu0 %v4827
        %4842 = vmatprep.subr.bf16.mxu0 0
        %4843 = vmatpush1.bf16.msra.mxu0 %v4826
        %4844 = vmatprep.subr.bf16.mxu0 0
        %4845 = vmatpush1.bf16.msra.mxu0 %v4825
        %4846 = vmatprep.subr.bf16.mxu0 0
        %4847 = vmatpush1.bf16.msra.mxu0 %v4824
        %4848 = vmatprep.subr.bf16.mxu0 0
        %4849 = vmatpush2.bf16.msra.mxu0 0
        %4850 = vmatprep.subr.bf16.mxu0 0
        %4851 = vmatpush2.bf16.msra.mxu0 0
        %4852 = vmatprep.subr.bf16.mxu0 0
        %4853 = vmatpush2.bf16.msra.mxu0 0
        %4854 = vmatprep.subr.bf16.mxu0 0
        %4855 = vmatpush2.bf16.msra.mxu0 0
        %4856 = vmatprep.subr.bf16.mxu0 0
        %4857 = vmatpush2.bf16.msra.mxu0 0
        %4858 = vmatprep.subr.bf16.mxu0 0
        %4859 = vmatpush2.bf16.msra.mxu0 0
        %4860 = vmatprep.subr.bf16.mxu0 0
        %4861 = vmatpush2.bf16.msra.mxu0 0
        %4862 = vmatprep.subr.bf16.mxu0 0
        %4863 = vmatpush2.bf16.msra.mxu0 0
        %4864 = vmatprep.mubr.bf16.mxu0 0
        %4865 = vmatmul.mubr.bf16.gmra.mxu0 %v4632
        %v4866 = vpop.f32.mrf.mxu0
        %v4867 = vadd.f32 0.0, %v4866
        %v4868 = vpop.f32.mrf.mxu0
        %v4869 = vpop.f32.mrf.mxu0
        %v4870 = vpop.f32.mrf.mxu0
        %4871 = vdwg.mxu0
        %v4872 = vadd.f32 %v4752, %v4867
        %v4873 = vpack.c.bf16 %v4420, %v4420
        %v4875 = vsel %vm599, %v4873, 0
        %4877 = vmatprep.subr.bf16.mxu0 0
        %4878 = vmatpush1.bf16.msra.mxu0 0
        %4879 = vmatprep.subr.bf16.mxu0 0
        %4880 = vmatpush1.bf16.msra.mxu0 0
        %4881 = vmatprep.subr.bf16.mxu0 0
        %4882 = vmatpush1.bf16.msra.mxu0 0
        %4883 = vmatprep.subr.bf16.mxu0 0
        %4884 = vmatpush1.bf16.msra.mxu0 0
        %4885 = vmatprep.subr.bf16.mxu0 0
        %4886 = vmatpush1.bf16.msra.mxu0 %v4827
        %4887 = vmatprep.subr.bf16.mxu0 0
        %4888 = vmatpush1.bf16.msra.mxu0 %v4826
        %4889 = vmatprep.subr.bf16.mxu0 0
        %4890 = vmatpush1.bf16.msra.mxu0 %v4825
        %4891 = vmatprep.subr.bf16.mxu0 0
        %4892 = vmatpush1.bf16.msra.mxu0 %v4824
        %4893 = vmatprep.subr.bf16.mxu0 0
        %4894 = vmatpush2.bf16.msra.mxu0 0
        %4895 = vmatprep.subr.bf16.mxu0 0
        %4896 = vmatpush2.bf16.msra.mxu0 0
        %4897 = vmatprep.subr.bf16.mxu0 0
        %4898 = vmatpush2.bf16.msra.mxu0 0
        %4899 = vmatprep.subr.bf16.mxu0 0
        %4900 = vmatpush2.bf16.msra.mxu0 0
        %4901 = vmatprep.subr.bf16.mxu0 0
        %4902 = vmatpush2.bf16.msra.mxu0 0
        %4903 = vmatprep.subr.bf16.mxu0 0
        %4904 = vmatpush2.bf16.msra.mxu0 0
        %4905 = vmatprep.subr.bf16.mxu0 0
        %4906 = vmatpush2.bf16.msra.mxu0 0
        %4907 = vmatprep.subr.bf16.mxu0 0
        %4908 = vmatpush2.bf16.msra.mxu0 0
        %4909 = vmatprep.mubr.bf16.mxu0 0
        %4910 = vmatmul.mubr.bf16.gmra.mxu0 %v4875
        %v4911 = vpop.f32.mrf.mxu0
        %v4912 = vadd.f32 0.0, %v4911
        %v4913 = vpop.f32.mrf.mxu0
        %v4914 = vpop.f32.mrf.mxu0
        %v4915 = vpop.f32.mrf.mxu0
        %4916 = vdwg.mxu0
        %v4917 = vadd.f32 %v4798, %v4912
        %s4918 = scalar_lea.vmem %s5, 128
        %v4919 = vld [vmem:[%s4918] sm:$0xf]
        %v4920 = vld [vmem:[%s4918 + $0x4] sm:$0xf]
        %v4921 = vld [vmem:[%s4918 + $0x8] sm:$0xf]
        %v4922 = vld [vmem:[%s4918 + $0xc] sm:$0xf]
        %v4923 = vld [vmem:[%s4918 + $0x10] sm:$0xf]
        %v4924 = vld [vmem:[%s4918 + $0x14] sm:$0xf]
        %v4925 = vld [vmem:[%s4918 + $0x18] sm:$0xf]
        %v4926 = vld [vmem:[%s4918 + $0x1c] sm:$0xf]
        %v4935 = vunpack.c.l.b16 %v4919
        %v4936 = vunpack.c.l.b16 %v4920
        %v4937 = vunpack.c.l.b16 %v4921
        %v4938 = vunpack.c.l.b16 %v4922
        %v4939 = vunpack.c.l.b16 %v4923
        %v4940 = vunpack.c.l.b16 %v4924
        %v4941 = vunpack.c.l.b16 %v4925
        %v4942 = vunpack.c.l.b16 %v4926
        %v4943 = vpack.c.b16 %v4936, %v4935
        %v4944 = vpack.c.b16 %v4938, %v4937
        %v4945 = vpack.c.b16 %v4940, %v4939
        %v4946 = vpack.c.b16 %v4942, %v4941
        %4951 = vmatprep.subr.bf16.mxu0 0
        %4952 = vmatpush1.bf16.msra.mxu0 0
        %4953 = vmatprep.subr.bf16.mxu0 0
        %4954 = vmatpush1.bf16.msra.mxu0 0
        %4955 = vmatprep.subr.bf16.mxu0 0
        %4956 = vmatpush1.bf16.msra.mxu0 0
        %4957 = vmatprep.subr.bf16.mxu0 0
        %4958 = vmatpush1.bf16.msra.mxu0 0
        %4959 = vmatprep.subr.bf16.mxu0 0
        %4960 = vmatpush1.bf16.msra.mxu0 %v4946
        %4961 = vmatprep.subr.bf16.mxu0 0
        %4962 = vmatpush1.bf16.msra.mxu0 %v4945
        %4963 = vmatprep.subr.bf16.mxu0 0
        %4964 = vmatpush1.bf16.msra.mxu0 %v4944
        %4965 = vmatprep.subr.bf16.mxu0 0
        %4966 = vmatpush1.bf16.msra.mxu0 %v4943
        %4967 = vmatprep.subr.bf16.mxu0 0
        %4968 = vmatpush2.bf16.msra.mxu0 0
        %4969 = vmatprep.subr.bf16.mxu0 0
        %4970 = vmatpush2.bf16.msra.mxu0 0
        %4971 = vmatprep.subr.bf16.mxu0 0
        %4972 = vmatpush2.bf16.msra.mxu0 0
        %4973 = vmatprep.subr.bf16.mxu0 0
        %4974 = vmatpush2.bf16.msra.mxu0 0
        %4975 = vmatprep.subr.bf16.mxu0 0
        %4976 = vmatpush2.bf16.msra.mxu0 0
        %4977 = vmatprep.subr.bf16.mxu0 0
        %4978 = vmatpush2.bf16.msra.mxu0 0
        %4979 = vmatprep.subr.bf16.mxu0 0
        %4980 = vmatpush2.bf16.msra.mxu0 0
        %4981 = vmatprep.subr.bf16.mxu0 0
        %4982 = vmatpush2.bf16.msra.mxu0 0
        %4983 = vmatprep.mubr.bf16.mxu0 0
        %4984 = vmatmul.mubr.bf16.gmra.mxu0 %v4590
        %v4985 = vpop.f32.mrf.mxu0
        %v4986 = vadd.f32 0.0, %v4985
        %v4987 = vpop.f32.mrf.mxu0
        %v4988 = vpop.f32.mrf.mxu0
        %v4989 = vpop.f32.mrf.mxu0
        %4990 = vdwg.mxu0
        %v4991 = vadd.f32 %v4872, %v4986
        %v4992 = vshrl.u32 %v4873, 16
        %v4994 = vshll.u32 %v4873, 16
        %v4996 = vrot.slane %v4994, 1
        %v4997 = vor.u32 %v4992, %v4996
        %v4999 = vsel %vm599, %v4997, 0
        %5001 = vmatprep.subr.bf16.mxu0 0
        %5002 = vmatpush1.bf16.msra.mxu0 0
        %5003 = vmatprep.subr.bf16.mxu0 0
        %5004 = vmatpush1.bf16.msra.mxu0 0
        %5005 = vmatprep.subr.bf16.mxu0 0
        %5006 = vmatpush1.bf16.msra.mxu0 0
        %5007 = vmatprep.subr.bf16.mxu0 0
        %5008 = vmatpush1.bf16.msra.mxu0 0
        %5009 = vmatprep.subr.bf16.mxu0 0
        %5010 = vmatpush1.bf16.msra.mxu0 %v4946
        %5011 = vmatprep.subr.bf16.mxu0 0
        %5012 = vmatpush1.bf16.msra.mxu0 %v4945
        %5013 = vmatprep.subr.bf16.mxu0 0
        %5014 = vmatpush1.bf16.msra.mxu0 %v4944
        %5015 = vmatprep.subr.bf16.mxu0 0
        %5016 = vmatpush1.bf16.msra.mxu0 %v4943
        %5017 = vmatprep.subr.bf16.mxu0 0
        %5018 = vmatpush2.bf16.msra.mxu0 0
        %5019 = vmatprep.subr.bf16.mxu0 0
        %5020 = vmatpush2.bf16.msra.mxu0 0
        %5021 = vmatprep.subr.bf16.mxu0 0
        %5022 = vmatpush2.bf16.msra.mxu0 0
        %5023 = vmatprep.subr.bf16.mxu0 0
        %5024 = vmatpush2.bf16.msra.mxu0 0
        %5025 = vmatprep.subr.bf16.mxu0 0
        %5026 = vmatpush2.bf16.msra.mxu0 0
        %5027 = vmatprep.subr.bf16.mxu0 0
        %5028 = vmatpush2.bf16.msra.mxu0 0
        %5029 = vmatprep.subr.bf16.mxu0 0
        %5030 = vmatpush2.bf16.msra.mxu0 0
        %5031 = vmatprep.subr.bf16.mxu0 0
        %5032 = vmatpush2.bf16.msra.mxu0 0
        %5033 = vmatprep.mubr.bf16.mxu0 0
        %5034 = vmatmul.mubr.bf16.gmra.mxu0 %v4999
        %v5035 = vpop.f32.mrf.mxu0
        %v5036 = vadd.f32 0.0, %v5035
        %v5037 = vpop.f32.mrf.mxu0
        %v5038 = vpop.f32.mrf.mxu0
        %v5039 = vpop.f32.mrf.mxu0
        %5040 = vdwg.mxu0
        %v5041 = vadd.f32 %v4917, %v5036
        %s5042 = scalar_lea.vmem %s5, 160
        %v5043 = vld [vmem:[%s5042] sm:$0xf]
        %v5044 = vld [vmem:[%s5042 + $0x4] sm:$0xf]
        %v5045 = vld [vmem:[%s5042 + $0x8] sm:$0xf]
        %v5046 = vld [vmem:[%s5042 + $0xc] sm:$0xf]
        %v5047 = vld [vmem:[%s5042 + $0x10] sm:$0xf]
        %v5048 = vld [vmem:[%s5042 + $0x14] sm:$0xf]
        %v5049 = vld [vmem:[%s5042 + $0x18] sm:$0xf]
        %v5050 = vld [vmem:[%s5042 + $0x1c] sm:$0xf]
        %v5059 = vunpack.c.l.b16 %v5043
        %v5060 = vunpack.c.l.b16 %v5044
        %v5061 = vunpack.c.l.b16 %v5045
        %v5062 = vunpack.c.l.b16 %v5046
        %v5063 = vunpack.c.l.b16 %v5047
        %v5064 = vunpack.c.l.b16 %v5048
        %v5065 = vunpack.c.l.b16 %v5049
        %v5066 = vunpack.c.l.b16 %v5050
        %v5067 = vpack.c.b16 %v5060, %v5059
        %v5068 = vpack.c.b16 %v5062, %v5061
        %v5069 = vpack.c.b16 %v5064, %v5063
        %v5070 = vpack.c.b16 %v5066, %v5065
        %5075 = vmatprep.subr.bf16.mxu0 0
        %5076 = vmatpush1.bf16.msra.mxu0 0
        %5077 = vmatprep.subr.bf16.mxu0 0
        %5078 = vmatpush1.bf16.msra.mxu0 0
        %5079 = vmatprep.subr.bf16.mxu0 0
        %5080 = vmatpush1.bf16.msra.mxu0 0
        %5081 = vmatprep.subr.bf16.mxu0 0
        %5082 = vmatpush1.bf16.msra.mxu0 0
        %5083 = vmatprep.subr.bf16.mxu0 0
        %5084 = vmatpush1.bf16.msra.mxu0 %v5070
        %5085 = vmatprep.subr.bf16.mxu0 0
        %5086 = vmatpush1.bf16.msra.mxu0 %v5069
        %5087 = vmatprep.subr.bf16.mxu0 0
        %5088 = vmatpush1.bf16.msra.mxu0 %v5068
        %5089 = vmatprep.subr.bf16.mxu0 0
        %5090 = vmatpush1.bf16.msra.mxu0 %v5067
        %5091 = vmatprep.subr.bf16.mxu0 0
        %5092 = vmatpush2.bf16.msra.mxu0 0
        %5093 = vmatprep.subr.bf16.mxu0 0
        %5094 = vmatpush2.bf16.msra.mxu0 0
        %5095 = vmatprep.subr.bf16.mxu0 0
        %5096 = vmatpush2.bf16.msra.mxu0 0
        %5097 = vmatprep.subr.bf16.mxu0 0
        %5098 = vmatpush2.bf16.msra.mxu0 0
        %5099 = vmatprep.subr.bf16.mxu0 0
        %5100 = vmatpush2.bf16.msra.mxu0 0
        %5101 = vmatprep.subr.bf16.mxu0 0
        %5102 = vmatpush2.bf16.msra.mxu0 0
        %5103 = vmatprep.subr.bf16.mxu0 0
        %5104 = vmatpush2.bf16.msra.mxu0 0
        %5105 = vmatprep.subr.bf16.mxu0 0
        %5106 = vmatpush2.bf16.msra.mxu0 0
        %5107 = vmatprep.mubr.bf16.mxu0 0
        %5108 = vmatmul.mubr.bf16.gmra.mxu0 %v4756
        %v5109 = vpop.f32.mrf.mxu0
        %v5110 = vadd.f32 0.0, %v5109
        %v5111 = vpop.f32.mrf.mxu0
        %v5112 = vpop.f32.mrf.mxu0
        %v5113 = vpop.f32.mrf.mxu0
        %5114 = vdwg.mxu0
        %v5115 = vadd.f32 %v4991, %v5110
        %v5117 = vrot.slane %v4873, 1
        %v5119 = vsel %vm599, %v5117, 0
        %5121 = vmatprep.subr.bf16.mxu0 0
        %5122 = vmatpush1.bf16.msra.mxu0 0
        %5123 = vmatprep.subr.bf16.mxu0 0
        %5124 = vmatpush1.bf16.msra.mxu0 0
        %5125 = vmatprep.subr.bf16.mxu0 0
        %5126 = vmatpush1.bf16.msra.mxu0 0
        %5127 = vmatprep.subr.bf16.mxu0 0
        %5128 = vmatpush1.bf16.msra.mxu0 0
        %5129 = vmatprep.subr.bf16.mxu0 0
        %5130 = vmatpush1.bf16.msra.mxu0 %v5070
        %5131 = vmatprep.subr.bf16.mxu0 0
        %5132 = vmatpush1.bf16.msra.mxu0 %v5069
        %5133 = vmatprep.subr.bf16.mxu0 0
        %5134 = vmatpush1.bf16.msra.mxu0 %v5068
        %5135 = vmatprep.subr.bf16.mxu0 0
        %5136 = vmatpush1.bf16.msra.mxu0 %v5067
        %5137 = vmatprep.subr.bf16.mxu0 0
        %5138 = vmatpush2.bf16.msra.mxu0 0
        %5139 = vmatprep.subr.bf16.mxu0 0
        %5140 = vmatpush2.bf16.msra.mxu0 0
        %5141 = vmatprep.subr.bf16.mxu0 0
        %5142 = vmatpush2.bf16.msra.mxu0 0
        %5143 = vmatprep.subr.bf16.mxu0 0
        %5144 = vmatpush2.bf16.msra.mxu0 0
        %5145 = vmatprep.subr.bf16.mxu0 0
        %5146 = vmatpush2.bf16.msra.mxu0 0
        %5147 = vmatprep.subr.bf16.mxu0 0
        %5148 = vmatpush2.bf16.msra.mxu0 0
        %5149 = vmatprep.subr.bf16.mxu0 0
        %5150 = vmatpush2.bf16.msra.mxu0 0
        %5151 = vmatprep.subr.bf16.mxu0 0
        %5152 = vmatpush2.bf16.msra.mxu0 0
        %5153 = vmatprep.mubr.bf16.mxu0 0
        %5154 = vmatmul.mubr.bf16.gmra.mxu0 %v5119
        %v5155 = vpop.f32.mrf.mxu0
        %v5156 = vadd.f32 0.0, %v5155
        %v5157 = vpop.f32.mrf.mxu0
        %v5158 = vpop.f32.mrf.mxu0
        %v5159 = vpop.f32.mrf.mxu0
        %5160 = vdwg.mxu0
        %v5161 = vadd.f32 %v5041, %v5156
        %s5162 = scalar_lea.vmem %s5, 192
        %v5163 = vld [vmem:[%s5162] sm:$0xf]
        %v5164 = vld [vmem:[%s5162 + $0x4] sm:$0xf]
        %v5165 = vld [vmem:[%s5162 + $0x8] sm:$0xf]
        %v5166 = vld [vmem:[%s5162 + $0xc] sm:$0xf]
        %v5167 = vld [vmem:[%s5162 + $0x10] sm:$0xf]
        %v5168 = vld [vmem:[%s5162 + $0x14] sm:$0xf]
        %v5169 = vld [vmem:[%s5162 + $0x18] sm:$0xf]
        %v5170 = vld [vmem:[%s5162 + $0x1c] sm:$0xf]
        %v5179 = vunpack.c.l.b16 %v5163
        %v5180 = vunpack.c.l.b16 %v5164
        %v5181 = vunpack.c.l.b16 %v5165
        %v5182 = vunpack.c.l.b16 %v5166
        %v5183 = vunpack.c.l.b16 %v5167
        %v5184 = vunpack.c.l.b16 %v5168
        %v5185 = vunpack.c.l.b16 %v5169
        %v5186 = vunpack.c.l.b16 %v5170
        %v5187 = vpack.c.b16 %v5180, %v5179
        %v5188 = vpack.c.b16 %v5182, %v5181
        %v5189 = vpack.c.b16 %v5184, %v5183
        %v5190 = vpack.c.b16 %v5186, %v5185
        %5195 = vmatprep.subr.bf16.mxu0 0
        %5196 = vmatpush1.bf16.msra.mxu0 0
        %5197 = vmatprep.subr.bf16.mxu0 0
        %5198 = vmatpush1.bf16.msra.mxu0 0
        %5199 = vmatprep.subr.bf16.mxu0 0
        %5200 = vmatpush1.bf16.msra.mxu0 0
        %5201 = vmatprep.subr.bf16.mxu0 0
        %5202 = vmatpush1.bf16.msra.mxu0 0
        %5203 = vmatprep.subr.bf16.mxu0 0
        %5204 = vmatpush1.bf16.msra.mxu0 %v5190
        %5205 = vmatprep.subr.bf16.mxu0 0
        %5206 = vmatpush1.bf16.msra.mxu0 %v5189
        %5207 = vmatprep.subr.bf16.mxu0 0
        %5208 = vmatpush1.bf16.msra.mxu0 %v5188
        %5209 = vmatprep.subr.bf16.mxu0 0
        %5210 = vmatpush1.bf16.msra.mxu0 %v5187
        %5211 = vmatprep.subr.bf16.mxu0 0
        %5212 = vmatpush2.bf16.msra.mxu0 0
        %5213 = vmatprep.subr.bf16.mxu0 0
        %5214 = vmatpush2.bf16.msra.mxu0 0
        %5215 = vmatprep.subr.bf16.mxu0 0
        %5216 = vmatpush2.bf16.msra.mxu0 0
        %5217 = vmatprep.subr.bf16.mxu0 0
        %5218 = vmatpush2.bf16.msra.mxu0 0
        %5219 = vmatprep.subr.bf16.mxu0 0
        %5220 = vmatpush2.bf16.msra.mxu0 0
        %5221 = vmatprep.subr.bf16.mxu0 0
        %5222 = vmatpush2.bf16.msra.mxu0 0
        %5223 = vmatprep.subr.bf16.mxu0 0
        %5224 = vmatpush2.bf16.msra.mxu0 0
        %5225 = vmatprep.subr.bf16.mxu0 0
        %5226 = vmatpush2.bf16.msra.mxu0 0
        %5227 = vmatprep.mubr.bf16.mxu0 0
        %5228 = vmatmul.mubr.bf16.gmra.mxu0 %v4875
        %v5229 = vpop.f32.mrf.mxu0
        %v5230 = vadd.f32 0.0, %v5229
        %v5231 = vpop.f32.mrf.mxu0
        %v5232 = vpop.f32.mrf.mxu0
        %v5233 = vpop.f32.mrf.mxu0
        %5234 = vdwg.mxu0
        %v5235 = vadd.f32 %v5115, %v5230
        %v5236 = vpack.c.bf16 %v4422, %v4422
        %v5238 = vsel %vm599, %v5236, 0
        %5240 = vmatprep.subr.bf16.mxu0 0
        %5241 = vmatpush1.bf16.msra.mxu0 0
        %5242 = vmatprep.subr.bf16.mxu0 0
        %5243 = vmatpush1.bf16.msra.mxu0 0
        %5244 = vmatprep.subr.bf16.mxu0 0
        %5245 = vmatpush1.bf16.msra.mxu0 0
        %5246 = vmatprep.subr.bf16.mxu0 0
        %5247 = vmatpush1.bf16.msra.mxu0 0
        %5248 = vmatprep.subr.bf16.mxu0 0
        %5249 = vmatpush1.bf16.msra.mxu0 %v5190
        %5250 = vmatprep.subr.bf16.mxu0 0
        %5251 = vmatpush1.bf16.msra.mxu0 %v5189
        %5252 = vmatprep.subr.bf16.mxu0 0
        %5253 = vmatpush1.bf16.msra.mxu0 %v5188
        %5254 = vmatprep.subr.bf16.mxu0 0
        %5255 = vmatpush1.bf16.msra.mxu0 %v5187
        %5256 = vmatprep.subr.bf16.mxu0 0
        %5257 = vmatpush2.bf16.msra.mxu0 0
        %5258 = vmatprep.subr.bf16.mxu0 0
        %5259 = vmatpush2.bf16.msra.mxu0 0
        %5260 = vmatprep.subr.bf16.mxu0 0
        %5261 = vmatpush2.bf16.msra.mxu0 0
        %5262 = vmatprep.subr.bf16.mxu0 0
        %5263 = vmatpush2.bf16.msra.mxu0 0
        %5264 = vmatprep.subr.bf16.mxu0 0
        %5265 = vmatpush2.bf16.msra.mxu0 0
        %5266 = vmatprep.subr.bf16.mxu0 0
        %5267 = vmatpush2.bf16.msra.mxu0 0
        %5268 = vmatprep.subr.bf16.mxu0 0
        %5269 = vmatpush2.bf16.msra.mxu0 0
        %5270 = vmatprep.subr.bf16.mxu0 0
        %5271 = vmatpush2.bf16.msra.mxu0 0
        %5272 = vmatprep.mubr.bf16.mxu0 0
        %5273 = vmatmul.mubr.bf16.gmra.mxu0 %v5238
        %v5274 = vpop.f32.mrf.mxu0
        %v5275 = vadd.f32 0.0, %v5274
        %v5276 = vpop.f32.mrf.mxu0
        %v5277 = vpop.f32.mrf.mxu0
        %v5278 = vpop.f32.mrf.mxu0
        %5279 = vdwg.mxu0
        %v5280 = vadd.f32 %v5161, %v5275
        %s5281 = scalar_lea.vmem %s5, 224
        %v5282 = vld [vmem:[%s5281] sm:$0xf]
        %v5283 = vld [vmem:[%s5281 + $0x4] sm:$0xf]
        %v5284 = vld [vmem:[%s5281 + $0x8] sm:$0xf]
        %v5285 = vld [vmem:[%s5281 + $0xc] sm:$0xf]
        %v5286 = vld [vmem:[%s5281 + $0x10] sm:$0xf]
        %v5287 = vld [vmem:[%s5281 + $0x14] sm:$0xf]
        %v5288 = vld [vmem:[%s5281 + $0x18] sm:$0xf]
        %v5289 = vld [vmem:[%s5281 + $0x1c] sm:$0xf]
        %v5298 = vunpack.c.l.b16 %v5282
        %v5299 = vunpack.c.l.b16 %v5283
        %v5300 = vunpack.c.l.b16 %v5284
        %v5301 = vunpack.c.l.b16 %v5285
        %v5302 = vunpack.c.l.b16 %v5286
        %v5303 = vunpack.c.l.b16 %v5287
        %v5304 = vunpack.c.l.b16 %v5288
        %v5305 = vunpack.c.l.b16 %v5289
        %v5306 = vpack.c.b16 %v5299, %v5298
        %v5307 = vpack.c.b16 %v5301, %v5300
        %v5308 = vpack.c.b16 %v5303, %v5302
        %v5309 = vpack.c.b16 %v5305, %v5304
        %5314 = vmatprep.subr.bf16.mxu0 0
        %5315 = vmatpush1.bf16.msra.mxu0 0
        %5316 = vmatprep.subr.bf16.mxu0 0
        %5317 = vmatpush1.bf16.msra.mxu0 0
        %5318 = vmatprep.subr.bf16.mxu0 0
        %5319 = vmatpush1.bf16.msra.mxu0 0
        %5320 = vmatprep.subr.bf16.mxu0 0
        %5321 = vmatpush1.bf16.msra.mxu0 0
        %5322 = vmatprep.subr.bf16.mxu0 0
        %5323 = vmatpush1.bf16.msra.mxu0 %v5309
        %5324 = vmatprep.subr.bf16.mxu0 0
        %5325 = vmatpush1.bf16.msra.mxu0 %v5308
        %5326 = vmatprep.subr.bf16.mxu0 0
        %5327 = vmatpush1.bf16.msra.mxu0 %v5307
        %5328 = vmatprep.subr.bf16.mxu0 0
        %5329 = vmatpush1.bf16.msra.mxu0 %v5306
        %5330 = vmatprep.subr.bf16.mxu0 0
        %5331 = vmatpush2.bf16.msra.mxu0 0
        %5332 = vmatprep.subr.bf16.mxu0 0
        %5333 = vmatpush2.bf16.msra.mxu0 0
        %5334 = vmatprep.subr.bf16.mxu0 0
        %5335 = vmatpush2.bf16.msra.mxu0 0
        %5336 = vmatprep.subr.bf16.mxu0 0
        %5337 = vmatpush2.bf16.msra.mxu0 0
        %5338 = vmatprep.subr.bf16.mxu0 0
        %5339 = vmatpush2.bf16.msra.mxu0 0
        %5340 = vmatprep.subr.bf16.mxu0 0
        %5341 = vmatpush2.bf16.msra.mxu0 0
        %5342 = vmatprep.subr.bf16.mxu0 0
        %5343 = vmatpush2.bf16.msra.mxu0 0
        %5344 = vmatprep.subr.bf16.mxu0 0
        %5345 = vmatpush2.bf16.msra.mxu0 0
        %5346 = vmatprep.mubr.bf16.mxu0 0
        %5347 = vmatmul.mubr.bf16.gmra.mxu0 %v4999
        %v5348 = vpop.f32.mrf.mxu0
        %v5349 = vadd.f32 0.0, %v5348
        %v5350 = vpop.f32.mrf.mxu0
        %v5351 = vpop.f32.mrf.mxu0
        %v5352 = vpop.f32.mrf.mxu0
        %5353 = vdwg.mxu0
        %v5354 = vadd.f32 %v5235, %v5349
        %v5355 = vshrl.u32 %v5236, 16
        %v5357 = vshll.u32 %v5236, 16
        %v5359 = vrot.slane %v5357, 1
        %v5360 = vor.u32 %v5355, %v5359
        %v5362 = vsel %vm599, %v5360, 0
        %5364 = vmatprep.subr.bf16.mxu0 0
        %5365 = vmatpush1.bf16.msra.mxu0 0
        %5366 = vmatprep.subr.bf16.mxu0 0
        %5367 = vmatpush1.bf16.msra.mxu0 0
        %5368 = vmatprep.subr.bf16.mxu0 0
        %5369 = vmatpush1.bf16.msra.mxu0 0
        %5370 = vmatprep.subr.bf16.mxu0 0
        %5371 = vmatpush1.bf16.msra.mxu0 0
        %5372 = vmatprep.subr.bf16.mxu0 0
        %5373 = vmatpush1.bf16.msra.mxu0 %v5309
        %5374 = vmatprep.subr.bf16.mxu0 0
        %5375 = vmatpush1.bf16.msra.mxu0 %v5308
        %5376 = vmatprep.subr.bf16.mxu0 0
        %5377 = vmatpush1.bf16.msra.mxu0 %v5307
        %5378 = vmatprep.subr.bf16.mxu0 0
        %5379 = vmatpush1.bf16.msra.mxu0 %v5306
        %5380 = vmatprep.subr.bf16.mxu0 0
        %5381 = vmatpush2.bf16.msra.mxu0 0
        %5382 = vmatprep.subr.bf16.mxu0 0
        %5383 = vmatpush2.bf16.msra.mxu0 0
        %5384 = vmatprep.subr.bf16.mxu0 0
        %5385 = vmatpush2.bf16.msra.mxu0 0
        %5386 = vmatprep.subr.bf16.mxu0 0
        %5387 = vmatpush2.bf16.msra.mxu0 0
        %5388 = vmatprep.subr.bf16.mxu0 0
        %5389 = vmatpush2.bf16.msra.mxu0 0
        %5390 = vmatprep.subr.bf16.mxu0 0
        %5391 = vmatpush2.bf16.msra.mxu0 0
        %5392 = vmatprep.subr.bf16.mxu0 0
        %5393 = vmatpush2.bf16.msra.mxu0 0
        %5394 = vmatprep.subr.bf16.mxu0 0
        %5395 = vmatpush2.bf16.msra.mxu0 0
        %5396 = vmatprep.mubr.bf16.mxu0 0
        %5397 = vmatmul.mubr.bf16.gmra.mxu0 %v5362
        %v5398 = vpop.f32.mrf.mxu0
        %v5399 = vadd.f32 0.0, %v5398
        %v5400 = vpop.f32.mrf.mxu0
        %v5401 = vpop.f32.mrf.mxu0
        %v5402 = vpop.f32.mrf.mxu0
        %5403 = vdwg.mxu0
        %v5404 = vadd.f32 %v5280, %v5399
        %s5405 = scalar_lea.vmem %s5, 256
        %v5406 = vld [vmem:[%s5405] sm:$0xf]
        %v5407 = vld [vmem:[%s5405 + $0x4] sm:$0xf]
        %v5408 = vld [vmem:[%s5405 + $0x8] sm:$0xf]
        %v5409 = vld [vmem:[%s5405 + $0xc] sm:$0xf]
        %v5410 = vld [vmem:[%s5405 + $0x10] sm:$0xf]
        %v5411 = vld [vmem:[%s5405 + $0x14] sm:$0xf]
        %v5412 = vld [vmem:[%s5405 + $0x18] sm:$0xf]
        %v5413 = vld [vmem:[%s5405 + $0x1c] sm:$0xf]
        %v5422 = vunpack.c.l.b16 %v5406
        %v5423 = vunpack.c.l.b16 %v5407
        %v5424 = vunpack.c.l.b16 %v5408
        %v5425 = vunpack.c.l.b16 %v5409
        %v5426 = vunpack.c.l.b16 %v5410
        %v5427 = vunpack.c.l.b16 %v5411
        %v5428 = vunpack.c.l.b16 %v5412
        %v5429 = vunpack.c.l.b16 %v5413
        %v5430 = vpack.c.b16 %v5423, %v5422
        %v5431 = vpack.c.b16 %v5425, %v5424
        %v5432 = vpack.c.b16 %v5427, %v5426
        %v5433 = vpack.c.b16 %v5429, %v5428
        %5438 = vmatprep.subr.bf16.mxu0 0
        %5439 = vmatpush1.bf16.msra.mxu0 0
        %5440 = vmatprep.subr.bf16.mxu0 0
        %5441 = vmatpush1.bf16.msra.mxu0 0
        %5442 = vmatprep.subr.bf16.mxu0 0
        %5443 = vmatpush1.bf16.msra.mxu0 0
        %5444 = vmatprep.subr.bf16.mxu0 0
        %5445 = vmatpush1.bf16.msra.mxu0 0
        %5446 = vmatprep.subr.bf16.mxu0 0
        %5447 = vmatpush1.bf16.msra.mxu0 %v5433
        %5448 = vmatprep.subr.bf16.mxu0 0
        %5449 = vmatpush1.bf16.msra.mxu0 %v5432
        %5450 = vmatprep.subr.bf16.mxu0 0
        %5451 = vmatpush1.bf16.msra.mxu0 %v5431
        %5452 = vmatprep.subr.bf16.mxu0 0
        %5453 = vmatpush1.bf16.msra.mxu0 %v5430
        %5454 = vmatprep.subr.bf16.mxu0 0
        %5455 = vmatpush2.bf16.msra.mxu0 0
        %5456 = vmatprep.subr.bf16.mxu0 0
        %5457 = vmatpush2.bf16.msra.mxu0 0
        %5458 = vmatprep.subr.bf16.mxu0 0
        %5459 = vmatpush2.bf16.msra.mxu0 0
        %5460 = vmatprep.subr.bf16.mxu0 0
        %5461 = vmatpush2.bf16.msra.mxu0 0
        %5462 = vmatprep.subr.bf16.mxu0 0
        %5463 = vmatpush2.bf16.msra.mxu0 0
        %5464 = vmatprep.subr.bf16.mxu0 0
        %5465 = vmatpush2.bf16.msra.mxu0 0
        %5466 = vmatprep.subr.bf16.mxu0 0
        %5467 = vmatpush2.bf16.msra.mxu0 0
        %5468 = vmatprep.subr.bf16.mxu0 0
        %5469 = vmatpush2.bf16.msra.mxu0 0
        %5470 = vmatprep.mubr.bf16.mxu0 0
        %5471 = vmatmul.mubr.bf16.gmra.mxu0 %v5119
        %v5472 = vpop.f32.mrf.mxu0
        %v5473 = vadd.f32 0.0, %v5472
        %v5474 = vpop.f32.mrf.mxu0
        %v5475 = vpop.f32.mrf.mxu0
        %v5476 = vpop.f32.mrf.mxu0
        %5477 = vdwg.mxu0
        %v5478 = vadd.f32 %v5354, %v5473
        %v5480 = vrot.slane %v5236, 1
        %v5482 = vsel %vm599, %v5480, 0
        %5484 = vmatprep.subr.bf16.mxu0 0
        %5485 = vmatpush1.bf16.msra.mxu0 0
        %5486 = vmatprep.subr.bf16.mxu0 0
        %5487 = vmatpush1.bf16.msra.mxu0 0
        %5488 = vmatprep.subr.bf16.mxu0 0
        %5489 = vmatpush1.bf16.msra.mxu0 0
        %5490 = vmatprep.subr.bf16.mxu0 0
        %5491 = vmatpush1.bf16.msra.mxu0 0
        %5492 = vmatprep.subr.bf16.mxu0 0
        %5493 = vmatpush1.bf16.msra.mxu0 %v5433
        %5494 = vmatprep.subr.bf16.mxu0 0
        %5495 = vmatpush1.bf16.msra.mxu0 %v5432
        %5496 = vmatprep.subr.bf16.mxu0 0
        %5497 = vmatpush1.bf16.msra.mxu0 %v5431
        %5498 = vmatprep.subr.bf16.mxu0 0
        %5499 = vmatpush1.bf16.msra.mxu0 %v5430
        %5500 = vmatprep.subr.bf16.mxu0 0
        %5501 = vmatpush2.bf16.msra.mxu0 0
        %5502 = vmatprep.subr.bf16.mxu0 0
        %5503 = vmatpush2.bf16.msra.mxu0 0
        %5504 = vmatprep.subr.bf16.mxu0 0
        %5505 = vmatpush2.bf16.msra.mxu0 0
        %5506 = vmatprep.subr.bf16.mxu0 0
        %5507 = vmatpush2.bf16.msra.mxu0 0
        %5508 = vmatprep.subr.bf16.mxu0 0
        %5509 = vmatpush2.bf16.msra.mxu0 0
        %5510 = vmatprep.subr.bf16.mxu0 0
        %5511 = vmatpush2.bf16.msra.mxu0 0
        %5512 = vmatprep.subr.bf16.mxu0 0
        %5513 = vmatpush2.bf16.msra.mxu0 0
        %5514 = vmatprep.subr.bf16.mxu0 0
        %5515 = vmatpush2.bf16.msra.mxu0 0
        %5516 = vmatprep.mubr.bf16.mxu0 0
        %5517 = vmatmul.mubr.bf16.gmra.mxu0 %v5482
        %v5518 = vpop.f32.mrf.mxu0
        %v5519 = vadd.f32 0.0, %v5518
        %v5520 = vpop.f32.mrf.mxu0
        %v5521 = vpop.f32.mrf.mxu0
        %v5522 = vpop.f32.mrf.mxu0
        %5523 = vdwg.mxu0
        %v5524 = vadd.f32 %v5404, %v5519
        %v5525 = vld [vmem:[%s6] sm:$0x1]
        %v5527 = vlaneseq
        %v5528 = vshrl.u32 %v5527, 7
        %v5529 = vsub.s32 0, %v5528
        %v5530 = vrot.slane %v5525, %v5529
        %v5532 = vadd.f32 %v5478, %v5530
        %v5533 = vmax.f32 %v5532, 0.0
        %v5534 = vadd.f32 %v5524, %v5530
        %v5535 = vmax.f32 %v5534, 0.0
        %v5536 = vpack.c.bf16 %v5533, %v5533
        %v5537 = vld [vmem:[%s7] sm:$0xff]
        %v5538 = vld [vmem:[%s7 + $0x8] sm:$0xff]
        %v5539 = vld [vmem:[%s7 + $0x10] sm:$0xff]
        %v5540 = vld [vmem:[%s7 + $0x18] sm:$0xff]
        %v5541 = vld [vmem:[%s7 + $0x20] sm:$0xff]
        %v5542 = vld [vmem:[%s7 + $0x28] sm:$0xff]
        %v5543 = vld [vmem:[%s7 + $0x30] sm:$0xff]
        %v5544 = vld [vmem:[%s7 + $0x38] sm:$0xff]
        %v5545 = vld [vmem:[%s7 + $0x40] sm:$0xff]
        %v5546 = vld [vmem:[%s7 + $0x48] sm:$0xff]
        %v5547 = vld [vmem:[%s7 + $0x50] sm:$0xff]
        %v5548 = vld [vmem:[%s7 + $0x58] sm:$0xff]
        %v5549 = vld [vmem:[%s7 + $0x60] sm:$0xff]
        %v5550 = vld [vmem:[%s7 + $0x68] sm:$0xff]
        %v5551 = vld [vmem:[%s7 + $0x70] sm:$0xff]
        %v5552 = vld [vmem:[%s7 + $0x78] sm:$0xff]
        %s5553 = scalar_lea.vmem %s7, 128
        %v5554 = vld [vmem:[%s5553] sm:$0xff]
        %v5555 = vld [vmem:[%s5553 + $0x8] sm:$0xff]
        %v5556 = vld [vmem:[%s5553 + $0x10] sm:$0xff]
        %v5557 = vld [vmem:[%s5553 + $0x18] sm:$0xff]
        %v5558 = vld [vmem:[%s5553 + $0x20] sm:$0xff]
        %v5559 = vld [vmem:[%s5553 + $0x28] sm:$0xff]
        %v5560 = vld [vmem:[%s5553 + $0x30] sm:$0xff]
        %v5561 = vld [vmem:[%s5553 + $0x38] sm:$0xff]
        %v5562 = vld [vmem:[%s5553 + $0x40] sm:$0xff]
        %v5563 = vld [vmem:[%s5553 + $0x48] sm:$0xff]
        %v5564 = vld [vmem:[%s5553 + $0x50] sm:$0xff]
        %v5565 = vld [vmem:[%s5553 + $0x58] sm:$0xff]
        %v5566 = vld [vmem:[%s5553 + $0x60] sm:$0xff]
        %v5567 = vld [vmem:[%s5553 + $0x68] sm:$0xff]
        %v5568 = vld [vmem:[%s5553 + $0x70] sm:$0xff]
        %v5569 = vld [vmem:[%s5553 + $0x78] sm:$0xff]
        %v5571 = vshrl.u32 %v5536, 16
        %v5589 = vunpack.c.l.b16 %v5554
        %v5590 = vunpack.c.h.b16 %v5554
        %v5591 = vunpack.c.l.b16 %v5555
        %v5592 = vunpack.c.h.b16 %v5555
        %v5593 = vunpack.c.l.b16 %v5556
        %v5594 = vunpack.c.h.b16 %v5556
        %v5595 = vunpack.c.l.b16 %v5557
        %v5596 = vunpack.c.h.b16 %v5557
        %v5597 = vunpack.c.l.b16 %v5558
        %v5598 = vunpack.c.h.b16 %v5558
        %v5599 = vunpack.c.l.b16 %v5559
        %v5600 = vunpack.c.h.b16 %v5559
        %v5601 = vunpack.c.l.b16 %v5560
        %v5602 = vunpack.c.h.b16 %v5560
        %v5603 = vunpack.c.l.b16 %v5561
        %v5604 = vunpack.c.h.b16 %v5561
        %v5605 = vunpack.c.l.b16 %v5562
        %v5606 = vunpack.c.h.b16 %v5562
        %v5607 = vunpack.c.l.b16 %v5563
        %v5608 = vunpack.c.h.b16 %v5563
        %v5609 = vunpack.c.l.b16 %v5564
        %v5610 = vunpack.c.h.b16 %v5564
        %v5611 = vunpack.c.l.b16 %v5565
        %v5612 = vunpack.c.h.b16 %v5565
        %v5613 = vunpack.c.l.b16 %v5566
        %v5614 = vunpack.c.h.b16 %v5566
        %v5615 = vunpack.c.l.b16 %v5567
        %v5616 = vunpack.c.h.b16 %v5567
        %v5617 = vunpack.c.l.b16 %v5568
        %v5618 = vunpack.c.h.b16 %v5568
        %v5619 = vunpack.c.l.b16 %v5569
        %v5620 = vunpack.c.h.b16 %v5569
        %v5621 = vpack.c.b16 %v5593, %v5589
        %v5622 = vpack.c.b16 %v5594, %v5590
        %v5623 = vpack.c.b16 %v5595, %v5591
        %v5624 = vpack.c.b16 %v5596, %v5592
        %v5625 = vpack.c.b16 %v5601, %v5597
        %v5626 = vpack.c.b16 %v5602, %v5598
        %v5627 = vpack.c.b16 %v5603, %v5599
        %v5628 = vpack.c.b16 %v5604, %v5600
        %v5629 = vpack.c.b16 %v5609, %v5605
        %v5630 = vpack.c.b16 %v5610, %v5606
        %v5631 = vpack.c.b16 %v5611, %v5607
        %v5632 = vpack.c.b16 %v5612, %v5608
        %v5633 = vpack.c.b16 %v5617, %v5613
        %v5634 = vpack.c.b16 %v5618, %v5614
        %v5635 = vpack.c.b16 %v5619, %v5615
        %v5636 = vpack.c.b16 %v5620, %v5616
        %v5654 = vsel %vm599, %v5571, 0
        %5656 = vmatprep.subr.bf16.mxu0 0
        %5657 = vmatpush1.bf16.msra.mxu0 0
        %5658 = vmatprep.subr.bf16.mxu0 0
        %5659 = vmatpush1.bf16.msra.mxu0 0
        %5660 = vmatprep.subr.bf16.mxu0 0
        %5661 = vmatpush1.bf16.msra.mxu0 0
        %5662 = vmatprep.subr.bf16.mxu0 0
        %5663 = vmatpush1.bf16.msra.mxu0 0
        %5664 = vmatprep.subr.bf16.mxu0 %v5634
        %5665 = vmatpush1.bf16.msra.mxu0 %v5633
        %5666 = vmatprep.subr.bf16.mxu0 %v5630
        %5667 = vmatpush1.bf16.msra.mxu0 %v5629
        %5668 = vmatprep.subr.bf16.mxu0 %v5626
        %5669 = vmatpush1.bf16.msra.mxu0 %v5625
        %5670 = vmatprep.subr.bf16.mxu0 %v5622
        %5671 = vmatpush1.bf16.msra.mxu0 %v5621
        %5672 = vmatprep.subr.bf16.mxu0 0
        %5673 = vmatpush2.bf16.msra.mxu0 0
        %5674 = vmatprep.subr.bf16.mxu0 0
        %5675 = vmatpush2.bf16.msra.mxu0 0
        %5676 = vmatprep.subr.bf16.mxu0 0
        %5677 = vmatpush2.bf16.msra.mxu0 0
        %5678 = vmatprep.subr.bf16.mxu0 0
        %5679 = vmatpush2.bf16.msra.mxu0 0
        %5680 = vmatprep.subr.bf16.mxu0 0
        %5681 = vmatpush2.bf16.msra.mxu0 0
        %5682 = vmatprep.subr.bf16.mxu0 0
        %5683 = vmatpush2.bf16.msra.mxu0 0
        %5684 = vmatprep.subr.bf16.mxu0 0
        %5685 = vmatpush2.bf16.msra.mxu0 0
        %5686 = vmatprep.subr.bf16.mxu0 0
        %5687 = vmatpush2.bf16.msra.mxu0 0
        %5688 = vmatprep.mubr.bf16.mxu0 0
        %5689 = vmatmul.mubr.bf16.gmra.mxu0 %v5654
        %v5690 = vpop.f32.mrf.mxu0
        %v5691 = vadd.f32 0.0, %v5690
        %v5692 = vpop.f32.mrf.mxu0
        %v5693 = vadd.f32 0.0, %v5692
        %v5694 = vpop.f32.mrf.mxu0
        %v5695 = vpop.f32.mrf.mxu0
        %5696 = vdwg.mxu0
        %5697 = vmatprep.subr.bf16.mxu0 0
        %5698 = vmatpush1.bf16.msra.mxu0 0
        %5699 = vmatprep.subr.bf16.mxu0 0
        %5700 = vmatpush1.bf16.msra.mxu0 0
        %5701 = vmatprep.subr.bf16.mxu0 0
        %5702 = vmatpush1.bf16.msra.mxu0 0
        %5703 = vmatprep.subr.bf16.mxu0 0
        %5704 = vmatpush1.bf16.msra.mxu0 0
        %5705 = vmatprep.subr.bf16.mxu0 %v5636
        %5706 = vmatpush1.bf16.msra.mxu0 %v5635
        %5707 = vmatprep.subr.bf16.mxu0 %v5632
        %5708 = vmatpush1.bf16.msra.mxu0 %v5631
        %5709 = vmatprep.subr.bf16.mxu0 %v5628
        %5710 = vmatpush1.bf16.msra.mxu0 %v5627
        %5711 = vmatprep.subr.bf16.mxu0 %v5624
        %5712 = vmatpush1.bf16.msra.mxu0 %v5623
        %5713 = vmatprep.subr.bf16.mxu0 0
        %5714 = vmatpush2.bf16.msra.mxu0 0
        %5715 = vmatprep.subr.bf16.mxu0 0
        %5716 = vmatpush2.bf16.msra.mxu0 0
        %5717 = vmatprep.subr.bf16.mxu0 0
        %5718 = vmatpush2.bf16.msra.mxu0 0
        %5719 = vmatprep.subr.bf16.mxu0 0
        %5720 = vmatpush2.bf16.msra.mxu0 0
        %5721 = vmatprep.subr.bf16.mxu0 0
        %5722 = vmatpush2.bf16.msra.mxu0 0
        %5723 = vmatprep.subr.bf16.mxu0 0
        %5724 = vmatpush2.bf16.msra.mxu0 0
        %5725 = vmatprep.subr.bf16.mxu0 0
        %5726 = vmatpush2.bf16.msra.mxu0 0
        %5727 = vmatprep.subr.bf16.mxu0 0
        %5728 = vmatpush2.bf16.msra.mxu0 0
        %5729 = vmatprep.mubr.bf16.mxu0 0
        %5730 = vmatmul.mubr.bf16.gmra.mxu0 %v5654
        %v5731 = vpop.f32.mrf.mxu0
        %v5732 = vadd.f32 0.0, %v5731
        %v5733 = vpop.f32.mrf.mxu0
        %v5734 = vadd.f32 0.0, %v5733
        %v5735 = vpop.f32.mrf.mxu0
        %v5736 = vpop.f32.mrf.mxu0
        %5737 = vdwg.mxu0
        %v5754 = vunpack.c.l.b16 %v5537
        %v5755 = vunpack.c.h.b16 %v5537
        %v5756 = vunpack.c.l.b16 %v5538
        %v5757 = vunpack.c.h.b16 %v5538
        %v5758 = vunpack.c.l.b16 %v5539
        %v5759 = vunpack.c.h.b16 %v5539
        %v5760 = vunpack.c.l.b16 %v5540
        %v5761 = vunpack.c.h.b16 %v5540
        %v5762 = vunpack.c.l.b16 %v5541
        %v5763 = vunpack.c.h.b16 %v5541
        %v5764 = vunpack.c.l.b16 %v5542
        %v5765 = vunpack.c.h.b16 %v5542
        %v5766 = vunpack.c.l.b16 %v5543
        %v5767 = vunpack.c.h.b16 %v5543
        %v5768 = vunpack.c.l.b16 %v5544
        %v5769 = vunpack.c.h.b16 %v5544
        %v5770 = vunpack.c.l.b16 %v5545
        %v5771 = vunpack.c.h.b16 %v5545
        %v5772 = vunpack.c.l.b16 %v5546
        %v5773 = vunpack.c.h.b16 %v5546
        %v5774 = vunpack.c.l.b16 %v5547
        %v5775 = vunpack.c.h.b16 %v5547
        %v5776 = vunpack.c.l.b16 %v5548
        %v5777 = vunpack.c.h.b16 %v5548
        %v5778 = vunpack.c.l.b16 %v5549
        %v5779 = vunpack.c.h.b16 %v5549
        %v5780 = vunpack.c.l.b16 %v5550
        %v5781 = vunpack.c.h.b16 %v5550
        %v5782 = vunpack.c.l.b16 %v5551
        %v5783 = vunpack.c.h.b16 %v5551
        %v5784 = vunpack.c.l.b16 %v5552
        %v5785 = vunpack.c.h.b16 %v5552
        %v5786 = vpack.c.b16 %v5758, %v5754
        %v5787 = vpack.c.b16 %v5759, %v5755
        %v5788 = vpack.c.b16 %v5760, %v5756
        %v5789 = vpack.c.b16 %v5761, %v5757
        %v5790 = vpack.c.b16 %v5766, %v5762
        %v5791 = vpack.c.b16 %v5767, %v5763
        %v5792 = vpack.c.b16 %v5768, %v5764
        %v5793 = vpack.c.b16 %v5769, %v5765
        %v5794 = vpack.c.b16 %v5774, %v5770
        %v5795 = vpack.c.b16 %v5775, %v5771
        %v5796 = vpack.c.b16 %v5776, %v5772
        %v5797 = vpack.c.b16 %v5777, %v5773
        %v5798 = vpack.c.b16 %v5782, %v5778
        %v5799 = vpack.c.b16 %v5783, %v5779
        %v5800 = vpack.c.b16 %v5784, %v5780
        %v5801 = vpack.c.b16 %v5785, %v5781
        %v5818 = vsel %vm599, %v5536, 0
        %5820 = vmatprep.subr.bf16.mxu0 0
        %5821 = vmatpush1.bf16.msra.mxu0 0
        %5822 = vmatprep.subr.bf16.mxu0 0
        %5823 = vmatpush1.bf16.msra.mxu0 0
        %5824 = vmatprep.subr.bf16.mxu0 0
        %5825 = vmatpush1.bf16.msra.mxu0 0
        %5826 = vmatprep.subr.bf16.mxu0 0
        %5827 = vmatpush1.bf16.msra.mxu0 0
        %5828 = vmatprep.subr.bf16.mxu0 %v5799
        %5829 = vmatpush1.bf16.msra.mxu0 %v5798
        %5830 = vmatprep.subr.bf16.mxu0 %v5795
        %5831 = vmatpush1.bf16.msra.mxu0 %v5794
        %5832 = vmatprep.subr.bf16.mxu0 %v5791
        %5833 = vmatpush1.bf16.msra.mxu0 %v5790
        %5834 = vmatprep.subr.bf16.mxu0 %v5787
        %5835 = vmatpush1.bf16.msra.mxu0 %v5786
        %5836 = vmatprep.subr.bf16.mxu0 0
        %5837 = vmatpush2.bf16.msra.mxu0 0
        %5838 = vmatprep.subr.bf16.mxu0 0
        %5839 = vmatpush2.bf16.msra.mxu0 0
        %5840 = vmatprep.subr.bf16.mxu0 0
        %5841 = vmatpush2.bf16.msra.mxu0 0
        %5842 = vmatprep.subr.bf16.mxu0 0
        %5843 = vmatpush2.bf16.msra.mxu0 0
        %5844 = vmatprep.subr.bf16.mxu0 0
        %5845 = vmatpush2.bf16.msra.mxu0 0
        %5846 = vmatprep.subr.bf16.mxu0 0
        %5847 = vmatpush2.bf16.msra.mxu0 0
        %5848 = vmatprep.subr.bf16.mxu0 0
        %5849 = vmatpush2.bf16.msra.mxu0 0
        %5850 = vmatprep.subr.bf16.mxu0 0
        %5851 = vmatpush2.bf16.msra.mxu0 0
        %5852 = vmatprep.mubr.bf16.mxu0 0
        %5853 = vmatmul.mubr.bf16.gmra.mxu0 %v5818
        %v5854 = vpop.f32.mrf.mxu0
        %v5855 = vadd.f32 %v5691, %v5854
        %v5856 = vpop.f32.mrf.mxu0
        %v5857 = vadd.f32 %v5693, %v5856
        %v5858 = vpop.f32.mrf.mxu0
        %v5859 = vpop.f32.mrf.mxu0
        %5860 = vdwg.mxu0
        %5861 = vmatprep.subr.bf16.mxu0 0
        %5862 = vmatpush1.bf16.msra.mxu0 0
        %5863 = vmatprep.subr.bf16.mxu0 0
        %5864 = vmatpush1.bf16.msra.mxu0 0
        %5865 = vmatprep.subr.bf16.mxu0 0
        %5866 = vmatpush1.bf16.msra.mxu0 0
        %5867 = vmatprep.subr.bf16.mxu0 0
        %5868 = vmatpush1.bf16.msra.mxu0 0
        %5869 = vmatprep.subr.bf16.mxu0 %v5801
        %5870 = vmatpush1.bf16.msra.mxu0 %v5800
        %5871 = vmatprep.subr.bf16.mxu0 %v5797
        %5872 = vmatpush1.bf16.msra.mxu0 %v5796
        %5873 = vmatprep.subr.bf16.mxu0 %v5793
        %5874 = vmatpush1.bf16.msra.mxu0 %v5792
        %5875 = vmatprep.subr.bf16.mxu0 %v5789
        %5876 = vmatpush1.bf16.msra.mxu0 %v5788
        %5877 = vmatprep.subr.bf16.mxu0 0
        %5878 = vmatpush2.bf16.msra.mxu0 0
        %5879 = vmatprep.subr.bf16.mxu0 0
        %5880 = vmatpush2.bf16.msra.mxu0 0
        %5881 = vmatprep.subr.bf16.mxu0 0
        %5882 = vmatpush2.bf16.msra.mxu0 0
        %5883 = vmatprep.subr.bf16.mxu0 0
        %5884 = vmatpush2.bf16.msra.mxu0 0
        %5885 = vmatprep.subr.bf16.mxu0 0
        %5886 = vmatpush2.bf16.msra.mxu0 0
        %5887 = vmatprep.subr.bf16.mxu0 0
        %5888 = vmatpush2.bf16.msra.mxu0 0
        %5889 = vmatprep.subr.bf16.mxu0 0
        %5890 = vmatpush2.bf16.msra.mxu0 0
        %5891 = vmatprep.subr.bf16.mxu0 0
        %5892 = vmatpush2.bf16.msra.mxu0 0
        %5893 = vmatprep.mubr.bf16.mxu0 0
        %5894 = vmatmul.mubr.bf16.gmra.mxu0 %v5818
        %v5895 = vpop.f32.mrf.mxu0
        %v5896 = vadd.f32 %v5732, %v5895
        %v5897 = vpop.f32.mrf.mxu0
        %v5898 = vadd.f32 %v5734, %v5897
        %v5899 = vpop.f32.mrf.mxu0
        %v5900 = vpop.f32.mrf.mxu0
        %5901 = vdwg.mxu0
        %v5902 = vpack.c.bf16 %v5535, %v5535
        %s5903 = scalar_lea.vmem %s7, 256
        %v5904 = vld [vmem:[%s5903] sm:$0xff]
        %v5905 = vld [vmem:[%s5903 + $0x8] sm:$0xff]
        %v5906 = vld [vmem:[%s5903 + $0x10] sm:$0xff]
        %v5907 = vld [vmem:[%s5903 + $0x18] sm:$0xff]
        %v5908 = vld [vmem:[%s5903 + $0x20] sm:$0xff]
        %v5909 = vld [vmem:[%s5903 + $0x28] sm:$0xff]
        %v5910 = vld [vmem:[%s5903 + $0x30] sm:$0xff]
        %v5911 = vld [vmem:[%s5903 + $0x38] sm:$0xff]
        %v5912 = vld [vmem:[%s5903 + $0x40] sm:$0xff]
        %v5913 = vld [vmem:[%s5903 + $0x48] sm:$0xff]
        %v5914 = vld [vmem:[%s5903 + $0x50] sm:$0xff]
        %v5915 = vld [vmem:[%s5903 + $0x58] sm:$0xff]
        %v5916 = vld [vmem:[%s5903 + $0x60] sm:$0xff]
        %v5917 = vld [vmem:[%s5903 + $0x68] sm:$0xff]
        %v5918 = vld [vmem:[%s5903 + $0x70] sm:$0xff]
        %v5919 = vld [vmem:[%s5903 + $0x78] sm:$0xff]
        %v5936 = vunpack.c.l.b16 %v5904
        %v5937 = vunpack.c.h.b16 %v5904
        %v5938 = vunpack.c.l.b16 %v5905
        %v5939 = vunpack.c.h.b16 %v5905
        %v5940 = vunpack.c.l.b16 %v5906
        %v5941 = vunpack.c.h.b16 %v5906
        %v5942 = vunpack.c.l.b16 %v5907
        %v5943 = vunpack.c.h.b16 %v5907
        %v5944 = vunpack.c.l.b16 %v5908
        %v5945 = vunpack.c.h.b16 %v5908
        %v5946 = vunpack.c.l.b16 %v5909
        %v5947 = vunpack.c.h.b16 %v5909
        %v5948 = vunpack.c.l.b16 %v5910
        %v5949 = vunpack.c.h.b16 %v5910
        %v5950 = vunpack.c.l.b16 %v5911
        %v5951 = vunpack.c.h.b16 %v5911
        %v5952 = vunpack.c.l.b16 %v5912
        %v5953 = vunpack.c.h.b16 %v5912
        %v5954 = vunpack.c.l.b16 %v5913
        %v5955 = vunpack.c.h.b16 %v5913
        %v5956 = vunpack.c.l.b16 %v5914
        %v5957 = vunpack.c.h.b16 %v5914
        %v5958 = vunpack.c.l.b16 %v5915
        %v5959 = vunpack.c.h.b16 %v5915
        %v5960 = vunpack.c.l.b16 %v5916
        %v5961 = vunpack.c.h.b16 %v5916
        %v5962 = vunpack.c.l.b16 %v5917
        %v5963 = vunpack.c.h.b16 %v5917
        %v5964 = vunpack.c.l.b16 %v5918
        %v5965 = vunpack.c.h.b16 %v5918
        %v5966 = vunpack.c.l.b16 %v5919
        %v5967 = vunpack.c.h.b16 %v5919
        %v5968 = vpack.c.b16 %v5940, %v5936
        %v5969 = vpack.c.b16 %v5941, %v5937
        %v5970 = vpack.c.b16 %v5942, %v5938
        %v5971 = vpack.c.b16 %v5943, %v5939
        %v5972 = vpack.c.b16 %v5948, %v5944
        %v5973 = vpack.c.b16 %v5949, %v5945
        %v5974 = vpack.c.b16 %v5950, %v5946
        %v5975 = vpack.c.b16 %v5951, %v5947
        %v5976 = vpack.c.b16 %v5956, %v5952
        %v5977 = vpack.c.b16 %v5957, %v5953
        %v5978 = vpack.c.b16 %v5958, %v5954
        %v5979 = vpack.c.b16 %v5959, %v5955
        %v5980 = vpack.c.b16 %v5964, %v5960
        %v5981 = vpack.c.b16 %v5965, %v5961
        %v5982 = vpack.c.b16 %v5966, %v5962
        %v5983 = vpack.c.b16 %v5967, %v5963
        %v6001 = vsel %vm599, %v5902, 0
        %6003 = vmatprep.subr.bf16.mxu0 0
        %6004 = vmatpush1.bf16.msra.mxu0 0
        %6005 = vmatprep.subr.bf16.mxu0 0
        %6006 = vmatpush1.bf16.msra.mxu0 0
        %6007 = vmatprep.subr.bf16.mxu0 0
        %6008 = vmatpush1.bf16.msra.mxu0 0
        %6009 = vmatprep.subr.bf16.mxu0 0
        %6010 = vmatpush1.bf16.msra.mxu0 0
        %6011 = vmatprep.subr.bf16.mxu0 %v5981
        %6012 = vmatpush1.bf16.msra.mxu0 %v5980
        %6013 = vmatprep.subr.bf16.mxu0 %v5977
        %6014 = vmatpush1.bf16.msra.mxu0 %v5976
        %6015 = vmatprep.subr.bf16.mxu0 %v5973
        %6016 = vmatpush1.bf16.msra.mxu0 %v5972
        %6017 = vmatprep.subr.bf16.mxu0 %v5969
        %6018 = vmatpush1.bf16.msra.mxu0 %v5968
        %6019 = vmatprep.subr.bf16.mxu0 0
        %6020 = vmatpush2.bf16.msra.mxu0 0
        %6021 = vmatprep.subr.bf16.mxu0 0
        %6022 = vmatpush2.bf16.msra.mxu0 0
        %6023 = vmatprep.subr.bf16.mxu0 0
        %6024 = vmatpush2.bf16.msra.mxu0 0
        %6025 = vmatprep.subr.bf16.mxu0 0
        %6026 = vmatpush2.bf16.msra.mxu0 0
        %6027 = vmatprep.subr.bf16.mxu0 0
        %6028 = vmatpush2.bf16.msra.mxu0 0
        %6029 = vmatprep.subr.bf16.mxu0 0
        %6030 = vmatpush2.bf16.msra.mxu0 0
        %6031 = vmatprep.subr.bf16.mxu0 0
        %6032 = vmatpush2.bf16.msra.mxu0 0
        %6033 = vmatprep.subr.bf16.mxu0 0
        %6034 = vmatpush2.bf16.msra.mxu0 0
        %6035 = vmatprep.mubr.bf16.mxu0 0
        %6036 = vmatmul.mubr.bf16.gmra.mxu0 %v6001
        %v6037 = vpop.f32.mrf.mxu0
        %v6038 = vadd.f32 0.0, %v6037
        %v6039 = vpop.f32.mrf.mxu0
        %v6040 = vadd.f32 0.0, %v6039
        %v6041 = vpop.f32.mrf.mxu0
        %v6042 = vpop.f32.mrf.mxu0
        %6043 = vdwg.mxu0
        %6044 = vmatprep.subr.bf16.mxu0 0
        %6045 = vmatpush1.bf16.msra.mxu0 0
        %6046 = vmatprep.subr.bf16.mxu0 0
        %6047 = vmatpush1.bf16.msra.mxu0 0
        %6048 = vmatprep.subr.bf16.mxu0 0
        %6049 = vmatpush1.bf16.msra.mxu0 0
        %6050 = vmatprep.subr.bf16.mxu0 0
        %6051 = vmatpush1.bf16.msra.mxu0 0
        %6052 = vmatprep.subr.bf16.mxu0 %v5983
        %6053 = vmatpush1.bf16.msra.mxu0 %v5982
        %6054 = vmatprep.subr.bf16.mxu0 %v5979
        %6055 = vmatpush1.bf16.msra.mxu0 %v5978
        %6056 = vmatprep.subr.bf16.mxu0 %v5975
        %6057 = vmatpush1.bf16.msra.mxu0 %v5974
        %6058 = vmatprep.subr.bf16.mxu0 %v5971
        %6059 = vmatpush1.bf16.msra.mxu0 %v5970
        %6060 = vmatprep.subr.bf16.mxu0 0
        %6061 = vmatpush2.bf16.msra.mxu0 0
        %6062 = vmatprep.subr.bf16.mxu0 0
        %6063 = vmatpush2.bf16.msra.mxu0 0
        %6064 = vmatprep.subr.bf16.mxu0 0
        %6065 = vmatpush2.bf16.msra.mxu0 0
        %6066 = vmatprep.subr.bf16.mxu0 0
        %6067 = vmatpush2.bf16.msra.mxu0 0
        %6068 = vmatprep.subr.bf16.mxu0 0
        %6069 = vmatpush2.bf16.msra.mxu0 0
        %6070 = vmatprep.subr.bf16.mxu0 0
        %6071 = vmatpush2.bf16.msra.mxu0 0
        %6072 = vmatprep.subr.bf16.mxu0 0
        %6073 = vmatpush2.bf16.msra.mxu0 0
        %6074 = vmatprep.subr.bf16.mxu0 0
        %6075 = vmatpush2.bf16.msra.mxu0 0
        %6076 = vmatprep.mubr.bf16.mxu0 0
        %6077 = vmatmul.mubr.bf16.gmra.mxu0 %v6001
        %v6078 = vpop.f32.mrf.mxu0
        %v6079 = vadd.f32 0.0, %v6078
        %v6080 = vpop.f32.mrf.mxu0
        %v6081 = vadd.f32 0.0, %v6080
        %v6082 = vpop.f32.mrf.mxu0
        %v6083 = vpop.f32.mrf.mxu0
        %6084 = vdwg.mxu0
        %v6085 = vadd.f32 %v5855, %v6038
        %v6086 = vadd.f32 %v5857, %v6040
        %v6087 = vadd.f32 %v5896, %v6079
        %v6088 = vadd.f32 %v5898, %v6081
        %s6089 = scalar_lea.vmem %s7, 384
        %v6090 = vld [vmem:[%s6089] sm:$0xff]
        %v6091 = vld [vmem:[%s6089 + $0x8] sm:$0xff]
        %v6092 = vld [vmem:[%s6089 + $0x10] sm:$0xff]
        %v6093 = vld [vmem:[%s6089 + $0x18] sm:$0xff]
        %v6094 = vld [vmem:[%s6089 + $0x20] sm:$0xff]
        %v6095 = vld [vmem:[%s6089 + $0x28] sm:$0xff]
        %v6096 = vld [vmem:[%s6089 + $0x30] sm:$0xff]
        %v6097 = vld [vmem:[%s6089 + $0x38] sm:$0xff]
        %v6098 = vld [vmem:[%s6089 + $0x40] sm:$0xff]
        %v6099 = vld [vmem:[%s6089 + $0x48] sm:$0xff]
        %v6100 = vld [vmem:[%s6089 + $0x50] sm:$0xff]
        %v6101 = vld [vmem:[%s6089 + $0x58] sm:$0xff]
        %v6102 = vld [vmem:[%s6089 + $0x60] sm:$0xff]
        %v6103 = vld [vmem:[%s6089 + $0x68] sm:$0xff]
        %v6104 = vld [vmem:[%s6089 + $0x70] sm:$0xff]
        %v6105 = vld [vmem:[%s6089 + $0x78] sm:$0xff]
        %v6106 = vshrl.u32 %v5902, 16
        %v6124 = vunpack.c.l.b16 %v6090
        %v6125 = vunpack.c.h.b16 %v6090
        %v6126 = vunpack.c.l.b16 %v6091
        %v6127 = vunpack.c.h.b16 %v6091
        %v6128 = vunpack.c.l.b16 %v6092
        %v6129 = vunpack.c.h.b16 %v6092
        %v6130 = vunpack.c.l.b16 %v6093
        %v6131 = vunpack.c.h.b16 %v6093
        %v6132 = vunpack.c.l.b16 %v6094
        %v6133 = vunpack.c.h.b16 %v6094
        %v6134 = vunpack.c.l.b16 %v6095
        %v6135 = vunpack.c.h.b16 %v6095
        %v6136 = vunpack.c.l.b16 %v6096
        %v6137 = vunpack.c.h.b16 %v6096
        %v6138 = vunpack.c.l.b16 %v6097
        %v6139 = vunpack.c.h.b16 %v6097
        %v6140 = vunpack.c.l.b16 %v6098
        %v6141 = vunpack.c.h.b16 %v6098
        %v6142 = vunpack.c.l.b16 %v6099
        %v6143 = vunpack.c.h.b16 %v6099
        %v6144 = vunpack.c.l.b16 %v6100
        %v6145 = vunpack.c.h.b16 %v6100
        %v6146 = vunpack.c.l.b16 %v6101
        %v6147 = vunpack.c.h.b16 %v6101
        %v6148 = vunpack.c.l.b16 %v6102
        %v6149 = vunpack.c.h.b16 %v6102
        %v6150 = vunpack.c.l.b16 %v6103
        %v6151 = vunpack.c.h.b16 %v6103
        %v6152 = vunpack.c.l.b16 %v6104
        %v6153 = vunpack.c.h.b16 %v6104
        %v6154 = vunpack.c.l.b16 %v6105
        %v6155 = vunpack.c.h.b16 %v6105
        %v6156 = vpack.c.b16 %v6128, %v6124
        %v6157 = vpack.c.b16 %v6129, %v6125
        %v6158 = vpack.c.b16 %v6130, %v6126
        %v6159 = vpack.c.b16 %v6131, %v6127
        %v6160 = vpack.c.b16 %v6136, %v6132
        %v6161 = vpack.c.b16 %v6137, %v6133
        %v6162 = vpack.c.b16 %v6138, %v6134
        %v6163 = vpack.c.b16 %v6139, %v6135
        %v6164 = vpack.c.b16 %v6144, %v6140
        %v6165 = vpack.c.b16 %v6145, %v6141
        %v6166 = vpack.c.b16 %v6146, %v6142
        %v6167 = vpack.c.b16 %v6147, %v6143
        %v6168 = vpack.c.b16 %v6152, %v6148
        %v6169 = vpack.c.b16 %v6153, %v6149
        %v6170 = vpack.c.b16 %v6154, %v6150
        %v6171 = vpack.c.b16 %v6155, %v6151
        %v6189 = vsel %vm599, %v6106, 0
        %6191 = vmatprep.subr.bf16.mxu0 0
        %6192 = vmatpush1.bf16.msra.mxu0 0
        %6193 = vmatprep.subr.bf16.mxu0 0
        %6194 = vmatpush1.bf16.msra.mxu0 0
        %6195 = vmatprep.subr.bf16.mxu0 0
        %6196 = vmatpush1.bf16.msra.mxu0 0
        %6197 = vmatprep.subr.bf16.mxu0 0
        %6198 = vmatpush1.bf16.msra.mxu0 0
        %6199 = vmatprep.subr.bf16.mxu0 %v6169
        %6200 = vmatpush1.bf16.msra.mxu0 %v6168
        %6201 = vmatprep.subr.bf16.mxu0 %v6165
        %6202 = vmatpush1.bf16.msra.mxu0 %v6164
        %6203 = vmatprep.subr.bf16.mxu0 %v6161
        %6204 = vmatpush1.bf16.msra.mxu0 %v6160
        %6205 = vmatprep.subr.bf16.mxu0 %v6157
        %6206 = vmatpush1.bf16.msra.mxu0 %v6156
        %6207 = vmatprep.subr.bf16.mxu0 0
        %6208 = vmatpush2.bf16.msra.mxu0 0
        %6209 = vmatprep.subr.bf16.mxu0 0
        %6210 = vmatpush2.bf16.msra.mxu0 0
        %6211 = vmatprep.subr.bf16.mxu0 0
        %6212 = vmatpush2.bf16.msra.mxu0 0
        %6213 = vmatprep.subr.bf16.mxu0 0
        %6214 = vmatpush2.bf16.msra.mxu0 0
        %6215 = vmatprep.subr.bf16.mxu0 0
        %6216 = vmatpush2.bf16.msra.mxu0 0
        %6217 = vmatprep.subr.bf16.mxu0 0
        %6218 = vmatpush2.bf16.msra.mxu0 0
        %6219 = vmatprep.subr.bf16.mxu0 0
        %6220 = vmatpush2.bf16.msra.mxu0 0
        %6221 = vmatprep.subr.bf16.mxu0 0
        %6222 = vmatpush2.bf16.msra.mxu0 0
        %6223 = vmatprep.mubr.bf16.mxu0 0
        %6224 = vmatmul.mubr.bf16.gmra.mxu0 %v6189
        %v6225 = vpop.f32.mrf.mxu0
        %v6226 = vadd.f32 0.0, %v6225
        %v6227 = vpop.f32.mrf.mxu0
        %v6228 = vadd.f32 0.0, %v6227
        %v6229 = vpop.f32.mrf.mxu0
        %v6230 = vpop.f32.mrf.mxu0
        %6231 = vdwg.mxu0
        %6232 = vmatprep.subr.bf16.mxu0 0
        %6233 = vmatpush1.bf16.msra.mxu0 0
        %6234 = vmatprep.subr.bf16.mxu0 0
        %6235 = vmatpush1.bf16.msra.mxu0 0
        %6236 = vmatprep.subr.bf16.mxu0 0
        %6237 = vmatpush1.bf16.msra.mxu0 0
        %6238 = vmatprep.subr.bf16.mxu0 0
        %6239 = vmatpush1.bf16.msra.mxu0 0
        %6240 = vmatprep.subr.bf16.mxu0 %v6171
        %6241 = vmatpush1.bf16.msra.mxu0 %v6170
        %6242 = vmatprep.subr.bf16.mxu0 %v6167
        %6243 = vmatpush1.bf16.msra.mxu0 %v6166
        %6244 = vmatprep.subr.bf16.mxu0 %v6163
        %6245 = vmatpush1.bf16.msra.mxu0 %v6162
        %6246 = vmatprep.subr.bf16.mxu0 %v6159
        %6247 = vmatpush1.bf16.msra.mxu0 %v6158
        %6248 = vmatprep.subr.bf16.mxu0 0
        %6249 = vmatpush2.bf16.msra.mxu0 0
        %6250 = vmatprep.subr.bf16.mxu0 0
        %6251 = vmatpush2.bf16.msra.mxu0 0
        %6252 = vmatprep.subr.bf16.mxu0 0
        %6253 = vmatpush2.bf16.msra.mxu0 0
        %6254 = vmatprep.subr.bf16.mxu0 0
        %6255 = vmatpush2.bf16.msra.mxu0 0
        %6256 = vmatprep.subr.bf16.mxu0 0
        %6257 = vmatpush2.bf16.msra.mxu0 0
        %6258 = vmatprep.subr.bf16.mxu0 0
        %6259 = vmatpush2.bf16.msra.mxu0 0
        %6260 = vmatprep.subr.bf16.mxu0 0
        %6261 = vmatpush2.bf16.msra.mxu0 0
        %6262 = vmatprep.subr.bf16.mxu0 0
        %6263 = vmatpush2.bf16.msra.mxu0 0
        %6264 = vmatprep.mubr.bf16.mxu0 0
        %6265 = vmatmul.mubr.bf16.gmra.mxu0 %v6189
        %v6266 = vpop.f32.mrf.mxu0
        %v6267 = vadd.f32 0.0, %v6266
        %v6268 = vpop.f32.mrf.mxu0
        %v6269 = vadd.f32 0.0, %v6268
        %v6270 = vpop.f32.mrf.mxu0
        %v6271 = vpop.f32.mrf.mxu0
        %6272 = vdwg.mxu0
        %v6273 = vadd.f32 %v6085, %v6226
        %v6274 = vadd.f32 %v6086, %v6228
        %v6275 = vadd.f32 %v6087, %v6267
        %v6276 = vadd.f32 %v6088, %v6269
        %v6277 = vld [vmem:[%s8] sm:$0xf]
        %v6279 = vlaneseq
        %v6280 = vshrl.u32 %v6279, 7
        %v6281 = vsub.s32 0, %v6280
        %v6282 = vrot.slane %v6277, %v6281
        %v6283 = vlaneseq
        %v6284 = vshrl.u32 %v6283, 7
        %v6285 = vsub.s32 1, %v6284
        %v6286 = vrot.slane %v6277, %v6285
        %v6287 = vlaneseq
        %v6288 = vshrl.u32 %v6287, 7
        %v6289 = vsub.s32 2, %v6288
        %v6290 = vrot.slane %v6277, %v6289
        %v6291 = vlaneseq
        %v6292 = vshrl.u32 %v6291, 7
        %v6293 = vsub.s32 3, %v6292
        %v6294 = vrot.slane %v6277, %v6293
        %v6299 = vadd.f32 %v6273, %v6282
        %v6300 = vadd.f32 %v6274, %v6286
        %v6301 = vadd.f32 %v6275, %v6290
        %v6302 = vadd.f32 %v6276, %v6294
        %v6303 = vmax.f32 %v6299, 0.0
        %v6304 = vmax.f32 %v6300, 0.0
        %v6305 = vmax.f32 %v6301, 0.0
        %v6306 = vmax.f32 %v6302, 0.0
        %v6307 = vpack.c.bf16 %v6303, %v6303
        %v6308 = vpack.c.bf16 %v6304, %v6304
        %v6309 = vpack.c.bf16 %v6305, %v6305
        %v6310 = vpack.c.bf16 %v6306, %v6306
        %v6311 = vld [vmem:[%s9] sm:$0xf]
        %v6312 = vld [vmem:[%s9 + $0x4] sm:$0xf]
        %v6313 = vld [vmem:[%s9 + $0x8] sm:$0xf]
        %v6314 = vld [vmem:[%s9 + $0xc] sm:$0xf]
        %v6315 = vld [vmem:[%s9 + $0x10] sm:$0xf]
        %v6316 = vld [vmem:[%s9 + $0x14] sm:$0xf]
        %v6317 = vld [vmem:[%s9 + $0x18] sm:$0xf]
        %v6318 = vld [vmem:[%s9 + $0x1c] sm:$0xf]
        %v6319 = vld [vmem:[%s9 + $0x20] sm:$0xf]
        %v6320 = vld [vmem:[%s9 + $0x24] sm:$0xf]
        %v6321 = vld [vmem:[%s9 + $0x28] sm:$0xf]
        %v6322 = vld [vmem:[%s9 + $0x2c] sm:$0xf]
        %v6323 = vld [vmem:[%s9 + $0x30] sm:$0xf]
        %v6324 = vld [vmem:[%s9 + $0x34] sm:$0xf]
        %v6325 = vld [vmem:[%s9 + $0x38] sm:$0xf]
        %v6326 = vld [vmem:[%s9 + $0x3c] sm:$0xf]
        %v6327 = vld [vmem:[%s9 + $0x40] sm:$0xf]
        %v6328 = vld [vmem:[%s9 + $0x44] sm:$0xf]
        %v6329 = vld [vmem:[%s9 + $0x48] sm:$0xf]
        %v6330 = vld [vmem:[%s9 + $0x4c] sm:$0xf]
        %v6331 = vld [vmem:[%s9 + $0x50] sm:$0xf]
        %v6332 = vld [vmem:[%s9 + $0x54] sm:$0xf]
        %v6333 = vld [vmem:[%s9 + $0x58] sm:$0xf]
        %v6334 = vld [vmem:[%s9 + $0x5c] sm:$0xf]
        %v6335 = vld [vmem:[%s9 + $0x60] sm:$0xf]
        %v6336 = vld [vmem:[%s9 + $0x64] sm:$0xf]
        %v6337 = vld [vmem:[%s9 + $0x68] sm:$0xf]
        %v6338 = vld [vmem:[%s9 + $0x6c] sm:$0xf]
        %v6339 = vld [vmem:[%s9 + $0x70] sm:$0xf]
        %v6340 = vld [vmem:[%s9 + $0x74] sm:$0xf]
        %v6341 = vld [vmem:[%s9 + $0x78] sm:$0xf]
        %v6342 = vld [vmem:[%s9 + $0x7c] sm:$0xf]
        %v6343 = vld [vmem:[%s9 + $0x80] sm:$0xf]
        %v6344 = vld [vmem:[%s9 + $0x84] sm:$0xf]
        %v6345 = vld [vmem:[%s9 + $0x88] sm:$0xf]
        %v6346 = vld [vmem:[%s9 + $0x8c] sm:$0xf]
        %v6347 = vld [vmem:[%s9 + $0x90] sm:$0xf]
        %v6348 = vld [vmem:[%s9 + $0x94] sm:$0xf]
        %v6349 = vld [vmem:[%s9 + $0x98] sm:$0xf]
        %v6350 = vld [vmem:[%s9 + $0x9c] sm:$0xf]
        %v6351 = vld [vmem:[%s9 + $0xa0] sm:$0xf]
        %v6352 = vld [vmem:[%s9 + $0xa4] sm:$0xf]
        %v6353 = vld [vmem:[%s9 + $0xa8] sm:$0xf]
        %v6354 = vld [vmem:[%s9 + $0xac] sm:$0xf]
        %v6355 = vld [vmem:[%s9 + $0xb0] sm:$0xf]
        %v6356 = vld [vmem:[%s9 + $0xb4] sm:$0xf]
        %v6357 = vld [vmem:[%s9 + $0xb8] sm:$0xf]
        %v6358 = vld [vmem:[%s9 + $0xbc] sm:$0xf]
        %v6359 = vld [vmem:[%s9 + $0xc0] sm:$0xf]
        %v6360 = vld [vmem:[%s9 + $0xc4] sm:$0xf]
        %v6361 = vld [vmem:[%s9 + $0xc8] sm:$0xf]
        %v6362 = vld [vmem:[%s9 + $0xcc] sm:$0xf]
        %v6363 = vld [vmem:[%s9 + $0xd0] sm:$0xf]
        %v6364 = vld [vmem:[%s9 + $0xd4] sm:$0xf]
        %v6365 = vld [vmem:[%s9 + $0xd8] sm:$0xf]
        %v6366 = vld [vmem:[%s9 + $0xdc] sm:$0xf]
        %v6367 = vld [vmem:[%s9 + $0xe0] sm:$0xf]
        %v6368 = vld [vmem:[%s9 + $0xe4] sm:$0xf]
        %v6369 = vld [vmem:[%s9 + $0xe8] sm:$0xf]
        %v6370 = vld [vmem:[%s9 + $0xec] sm:$0xf]
        %v6371 = vld [vmem:[%s9 + $0xf0] sm:$0xf]
        %v6372 = vld [vmem:[%s9 + $0xf4] sm:$0xf]
        %v6373 = vld [vmem:[%s9 + $0xf8] sm:$0xf]
        %v6374 = vld [vmem:[%s9 + $0xfc] sm:$0xf]
        %v6375 = vld [vmem:[%s10] sm:$0x1]
        %v6440 = vunpack.c.l.b16 %v6311
        %v6441 = vunpack.c.l.b16 %v6312
        %v6442 = vunpack.c.l.b16 %v6313
        %v6443 = vunpack.c.l.b16 %v6314
        %v6444 = vunpack.c.l.b16 %v6315
        %v6445 = vunpack.c.l.b16 %v6316
        %v6446 = vunpack.c.l.b16 %v6317
        %v6447 = vunpack.c.l.b16 %v6318
        %v6448 = vunpack.c.l.b16 %v6319
        %v6449 = vunpack.c.l.b16 %v6320
        %v6450 = vunpack.c.l.b16 %v6321
        %v6451 = vunpack.c.l.b16 %v6322
        %v6452 = vunpack.c.l.b16 %v6323
        %v6453 = vunpack.c.l.b16 %v6324
        %v6454 = vunpack.c.l.b16 %v6325
        %v6455 = vunpack.c.l.b16 %v6326
        %v6456 = vunpack.c.l.b16 %v6327
        %v6457 = vunpack.c.l.b16 %v6328
        %v6458 = vunpack.c.l.b16 %v6329
        %v6459 = vunpack.c.l.b16 %v6330
        %v6460 = vunpack.c.l.b16 %v6331
        %v6461 = vunpack.c.l.b16 %v6332
        %v6462 = vunpack.c.l.b16 %v6333
        %v6463 = vunpack.c.l.b16 %v6334
        %v6464 = vunpack.c.l.b16 %v6335
        %v6465 = vunpack.c.l.b16 %v6336
        %v6466 = vunpack.c.l.b16 %v6337
        %v6467 = vunpack.c.l.b16 %v6338
        %v6468 = vunpack.c.l.b16 %v6339
        %v6469 = vunpack.c.l.b16 %v6340
        %v6470 = vunpack.c.l.b16 %v6341
        %v6471 = vunpack.c.l.b16 %v6342
        %v6472 = vunpack.c.l.b16 %v6343
        %v6473 = vunpack.c.l.b16 %v6344
        %v6474 = vunpack.c.l.b16 %v6345
        %v6475 = vunpack.c.l.b16 %v6346
        %v6476 = vunpack.c.l.b16 %v6347
        %v6477 = vunpack.c.l.b16 %v6348
        %v6478 = vunpack.c.l.b16 %v6349
        %v6479 = vunpack.c.l.b16 %v6350
        %v6480 = vunpack.c.l.b16 %v6351
        %v6481 = vunpack.c.l.b16 %v6352
        %v6482 = vunpack.c.l.b16 %v6353
        %v6483 = vunpack.c.l.b16 %v6354
        %v6484 = vunpack.c.l.b16 %v6355
        %v6485 = vunpack.c.l.b16 %v6356
        %v6486 = vunpack.c.l.b16 %v6357
        %v6487 = vunpack.c.l.b16 %v6358
        %v6488 = vunpack.c.l.b16 %v6359
        %v6489 = vunpack.c.l.b16 %v6360
        %v6490 = vunpack.c.l.b16 %v6361
        %v6491 = vunpack.c.l.b16 %v6362
        %v6492 = vunpack.c.l.b16 %v6363
        %v6493 = vunpack.c.l.b16 %v6364
        %v6494 = vunpack.c.l.b16 %v6365
        %v6495 = vunpack.c.l.b16 %v6366
        %v6496 = vunpack.c.l.b16 %v6367
        %v6497 = vunpack.c.l.b16 %v6368
        %v6498 = vunpack.c.l.b16 %v6369
        %v6499 = vunpack.c.l.b16 %v6370
        %v6500 = vunpack.c.l.b16 %v6371
        %v6501 = vunpack.c.l.b16 %v6372
        %v6502 = vunpack.c.l.b16 %v6373
        %v6503 = vunpack.c.l.b16 %v6374
        %v6504 = vpack.c.b16 %v6441, %v6440
        %v6505 = vpack.c.b16 %v6443, %v6442
        %v6506 = vpack.c.b16 %v6445, %v6444
        %v6507 = vpack.c.b16 %v6447, %v6446
        %v6508 = vpack.c.b16 %v6449, %v6448
        %v6509 = vpack.c.b16 %v6451, %v6450
        %v6510 = vpack.c.b16 %v6453, %v6452
        %v6511 = vpack.c.b16 %v6455, %v6454
        %v6512 = vpack.c.b16 %v6457, %v6456
        %v6513 = vpack.c.b16 %v6459, %v6458
        %v6514 = vpack.c.b16 %v6461, %v6460
        %v6515 = vpack.c.b16 %v6463, %v6462
        %v6516 = vpack.c.b16 %v6465, %v6464
        %v6517 = vpack.c.b16 %v6467, %v6466
        %v6518 = vpack.c.b16 %v6469, %v6468
        %v6519 = vpack.c.b16 %v6471, %v6470
        %v6520 = vpack.c.b16 %v6473, %v6472
        %v6521 = vpack.c.b16 %v6475, %v6474
        %v6522 = vpack.c.b16 %v6477, %v6476
        %v6523 = vpack.c.b16 %v6479, %v6478
        %v6524 = vpack.c.b16 %v6481, %v6480
        %v6525 = vpack.c.b16 %v6483, %v6482
        %v6526 = vpack.c.b16 %v6485, %v6484
        %v6527 = vpack.c.b16 %v6487, %v6486
        %v6528 = vpack.c.b16 %v6489, %v6488
        %v6529 = vpack.c.b16 %v6491, %v6490
        %v6530 = vpack.c.b16 %v6493, %v6492
        %v6531 = vpack.c.b16 %v6495, %v6494
        %v6532 = vpack.c.b16 %v6497, %v6496
        %v6533 = vpack.c.b16 %v6499, %v6498
        %v6534 = vpack.c.b16 %v6501, %v6500
        %v6535 = vpack.c.b16 %v6503, %v6502
        %6568 = vmatprep.subr.bf16.mxu0 0
        %6569 = vmatpush1.bf16.msra.mxu0 %v6511
        %6570 = vmatprep.subr.bf16.mxu0 0
        %6571 = vmatpush1.bf16.msra.mxu0 %v6510
        %6572 = vmatprep.subr.bf16.mxu0 0
        %6573 = vmatpush1.bf16.msra.mxu0 %v6509
        %6574 = vmatprep.subr.bf16.mxu0 0
        %6575 = vmatpush1.bf16.msra.mxu0 %v6508
        %6576 = vmatprep.subr.bf16.mxu0 0
        %6577 = vmatpush1.bf16.msra.mxu0 %v6507
        %6578 = vmatprep.subr.bf16.mxu0 0
        %6579 = vmatpush1.bf16.msra.mxu0 %v6506
        %6580 = vmatprep.subr.bf16.mxu0 0
        %6581 = vmatpush1.bf16.msra.mxu0 %v6505
        %6582 = vmatprep.subr.bf16.mxu0 0
        %6583 = vmatpush1.bf16.msra.mxu0 %v6504
        %6584 = vmatprep.subr.bf16.mxu0 0
        %6585 = vmatpush2.bf16.msra.mxu0 %v6519
        %6586 = vmatprep.subr.bf16.mxu0 0
        %6587 = vmatpush2.bf16.msra.mxu0 %v6518
        %6588 = vmatprep.subr.bf16.mxu0 0
        %6589 = vmatpush2.bf16.msra.mxu0 %v6517
        %6590 = vmatprep.subr.bf16.mxu0 0
        %6591 = vmatpush2.bf16.msra.mxu0 %v6516
        %6592 = vmatprep.subr.bf16.mxu0 0
        %6593 = vmatpush2.bf16.msra.mxu0 %v6515
        %6594 = vmatprep.subr.bf16.mxu0 0
        %6595 = vmatpush2.bf16.msra.mxu0 %v6514
        %6596 = vmatprep.subr.bf16.mxu0 0
        %6597 = vmatpush2.bf16.msra.mxu0 %v6513
        %6598 = vmatprep.subr.bf16.mxu0 0
        %6599 = vmatpush2.bf16.msra.mxu0 %v6512
        %6600 = vmatprep.mubr.bf16.mxu0 %v6308
        %6601 = vmatmul.mubr.bf16.gmra.mxu0 %v6307
        %v6602 = vpop.f32.mrf.mxu0
        %v6603 = vadd.f32 %v6375, %v6602
        %v6604 = vpop.f32.mrf.mxu0
        %v6605 = vpop.f32.mrf.mxu0
        %v6606 = vpop.f32.mrf.mxu0
        %6607 = vdwg.mxu0
        %6608 = vmatprep.subr.bf16.mxu0 0
        %6609 = vmatpush1.bf16.msra.mxu0 %v6527
        %6610 = vmatprep.subr.bf16.mxu0 0
        %6611 = vmatpush1.bf16.msra.mxu0 %v6526
        %6612 = vmatprep.subr.bf16.mxu0 0
        %6613 = vmatpush1.bf16.msra.mxu0 %v6525
        %6614 = vmatprep.subr.bf16.mxu0 0
        %6615 = vmatpush1.bf16.msra.mxu0 %v6524
        %6616 = vmatprep.subr.bf16.mxu0 0
        %6617 = vmatpush1.bf16.msra.mxu0 %v6523
        %6618 = vmatprep.subr.bf16.mxu0 0
        %6619 = vmatpush1.bf16.msra.mxu0 %v6522
        %6620 = vmatprep.subr.bf16.mxu0 0
        %6621 = vmatpush1.bf16.msra.mxu0 %v6521
        %6622 = vmatprep.subr.bf16.mxu0 0
        %6623 = vmatpush1.bf16.msra.mxu0 %v6520
        %6624 = vmatprep.subr.bf16.mxu0 0
        %6625 = vmatpush2.bf16.msra.mxu0 %v6535
        %6626 = vmatprep.subr.bf16.mxu0 0
        %6627 = vmatpush2.bf16.msra.mxu0 %v6534
        %6628 = vmatprep.subr.bf16.mxu0 0
        %6629 = vmatpush2.bf16.msra.mxu0 %v6533
        %6630 = vmatprep.subr.bf16.mxu0 0
        %6631 = vmatpush2.bf16.msra.mxu0 %v6532
        %6632 = vmatprep.subr.bf16.mxu0 0
        %6633 = vmatpush2.bf16.msra.mxu0 %v6531
        %6634 = vmatprep.subr.bf16.mxu0 0
        %6635 = vmatpush2.bf16.msra.mxu0 %v6530
        %6636 = vmatprep.subr.bf16.mxu0 0
        %6637 = vmatpush2.bf16.msra.mxu0 %v6529
        %6638 = vmatprep.subr.bf16.mxu0 0
        %6639 = vmatpush2.bf16.msra.mxu0 %v6528
        %6640 = vmatprep.mubr.bf16.mxu0 %v6310
        %6641 = vmatmul.mubr.bf16.gmra.mxu0 %v6309
        %v6642 = vpop.f32.mrf.mxu0
        %v6643 = vadd.f32 %v6603, %v6642
        %v6644 = vpop.f32.mrf.mxu0
        %v6645 = vpop.f32.mrf.mxu0
        %v6646 = vpop.f32.mrf.mxu0
        %6647 = vdwg.mxu0
        %vm6648 = vcmask 8192
        %6649 = vst.msk [vmem:[%s378] sm:$0x1] %vm6648, %v6643
        %s6650 = sand.u32 %s269, 1
        %s6651 = scalar_lea.sflag [#allocation3], %s6650
        %s6652 = sand.u32 %s269, 1
        %s6653 = scalar_lea.vmem [#allocation2], %s6652
        // Predicated region
        $region65: #{deep_q_forward.1} parent=63 // pred_check
          %p6654 = pneg %p279
        $region66: #{deep_q_forward.1} parent=63 // pred_check_branch
          %6656 = sbr.rel (%p6654) target = $region68
        $region67: #{deep_q_forward.1} parent=63 // pred_region
          %s6658 = ssub.s32 16, 16
          %6659 = vsyncadd %s6651, %s6658
          %s6660 = smul.addr %s25, 16
          %s6661 = scalar_lea.hbm %s11, %s6660
          %s6663 = sshll.u32 %s6653, 4
          %s6664 = int_to_ptr.vmem [resolvable:$true] %s6663
          %6666 = dma.vmem_to_hbm [thread:$0]  %s6664, 16, %s6661, %s6651
        $region68: #{deep_q_forward.1} parent=63 // pred_fallthru
          _
      $region64: #{deep_q_forward.1} parent=5 // pred_fallthru
        _
      %p6667 = scmp.le.s32.totalorder 2, %s20
      // Predicated region
      $region69: #{deep_q_forward.1} parent=5 // pred_check
        %p6668 = pneg %p6667
      $region70: #{deep_q_forward.1} parent=5 // pred_check_branch
        %6670 = sbr.rel (%p6668) target = $region72
      $region71: #{deep_q_forward.1} parent=5 // pred_region
        %s6671 = ssub.s32 %s20, 2
        // Predicated region
        $region73: #{deep_q_forward.1} parent=71 // pred_check
          %p6672 = pneg %p285
        $region74: #{deep_q_forward.1} parent=71 // pred_check_branch
          %6674 = sbr.rel (%p6672) target = $region76
        $region75: #{deep_q_forward.1} parent=71 // pred_region
          %s6675 = sand.u32 %s270, 1
          %s6676 = scalar_lea.sflag [#allocation3], %s6675
          %s6677 = sand.u32 %s270, 1
          %s6678 = scalar_lea.vmem [#allocation2], %s6677
          %6679 = dma.done %s6676, 16
        $region76: #{deep_q_forward.1} parent=71 // pred_fallthru
          _
      $region72: #{deep_q_forward.1} parent=5 // pred_fallthru
        _
    $region6: #{deep_q_forward.1} parent=1 // loop_footer
      %s24 = sadd.s32 1, %s20
    $region7: #{deep_q_forward.1} parent=1 // loop_footer_branch
      %19 = sbr.rel target = $region3
    $region8: #{deep_q_forward.1} parent=1 // loop_exit
      _
    %6680 = vsyncpa [#allocation3], 1
    %s6681 = scalar_lea.sflag [#allocation3], 1
    %6682 = vsyncpa %s6681, 1

</llo_original>
